<compile_context>
chip_gen: v6e
topology: v6e:2x2x1
jax: 0.10.0
libtpu: 0.0.40
codegen_flags: <defaults>
</compile_context>

<pallas_src>
import functools

import numpy as np
import jax
import jax.numpy as jnp
from jax import lax
from jax.experimental import pallas as pl
from jax.experimental.pallas import tpu as pltpu


# ----------------------------- model geometry ------------------------------

H = W = 9
CIN = 3
NF = 128                    # n_filters
K1, PAD1 = 5, 2             # start_conv
K2, PAD2 = 3, 1             # mid_conv
HP = H + 2 * PAD1           # 13: padded frame height/width (reused by conv2)
NPIX = HP * HP              # 169 padded pixels per image
NOUT = H * W + 1 + 1        # 83
NOUT_PAD = 128              # lane-dense FC / softmax width
RB = 128                    # conv row-block size (16 f32 vregs per accumulator)
NCHUNKS = 3                 # FC weight streamed over this many grid steps
PIX_PER_CHUNK = (H * W) // NCHUNKS   # 27 output pixels per chunk

assert PIX_PER_CHUNK * NCHUNKS == H * W
assert PIX_PER_CHUNK % W == 0        # each chunk covers whole output rows


def _round_up(x, m):
    return ((x + m - 1) // m) * m


# ------------------------------ fused kernel -------------------------------

def _dqn_fused_kernel(x1_ref, mask_ref, w1_ref, b1_ref, w2_ref, b2_ref,
                      wfc_ref, bfc_ref, out_ref,
                      h1s_ref, h2_ref, logits_ref, *, batch, mpad, margin):
    f32, bf16 = jnp.float32, jnp.bfloat16
    k = pl.program_id(0)
    nblk = mpad // RB

    # ------------------ step 0: both convs + logit init ---------------------
    @pl.when(k == 0)
    def _convs():
        # Zero the halo so conv2's shifted reads past either end see zeros.
        h1s_ref[0:margin, :] = jnp.zeros((margin, NF), bf16)
        h1s_ref[margin + mpad:margin + mpad + margin, :] = (
            jnp.zeros((margin, NF), bf16))

        w1 = w1_ref[...]
        b1 = b1_ref[...]
        b2 = b2_ref[...]

        # conv1 (5x5, pad 2): one dense bf16 im2col matmul per 128-row block.
        # The interior mask zeroes the pad-ring rows so they act as conv2's
        # zero padding.
        for blk in range(nblk):
            r0 = blk * RB
            acc = jnp.dot(x1_ref[r0:r0 + RB, :], w1, preferred_element_type=f32)
            h1 = jnp.maximum(acc + b1, 0.0) * mask_ref[r0:r0 + RB, :]
            h1s_ref[margin + r0:margin + r0 + RB, :] = h1.astype(bf16)

        # conv2 (3x3, pad 1): 9 shifted bf16 tap matmuls per 128-row block.
        # Shifts are multiples of `batch` (batch-minor layout), so taps never
        # mix batch elements.
        for blk in range(nblk):
            r0 = blk * RB
            acc = jnp.zeros((RB, NF), f32)
            for t in range(K2 * K2):
                dh, dw = t // K2, t % K2
                shift = ((dh - PAD2) * HP + (dw - PAD2)) * batch
                lo = margin + shift + r0
                acc = acc + jnp.dot(h1s_ref[lo:lo + RB, :], w2_ref[t],
                                    preferred_element_type=f32)
            h2_ref[r0:r0 + RB, :] = jnp.maximum(acc + b2, 0.0)

        # Logit accumulator starts from the FC bias (pad lanes carry -1e30,
        # kept in f32 so they survive until the softmax).
        logits_ref[...] = jnp.broadcast_to(bfc_ref[...], (batch, NOUT_PAD))

    # ---- every step: FC contribution of this chunk's PIX_PER_CHUNK pixels --
    # pixel p = k*27 + p_local ; hh = 3*k + p_local//9 ; ww = p_local%9.
    # Row of h2 for (b, hh, ww) is ((hh+2)*13 + ww+2)*B + b  (contiguous in b).
    base = k * ((PIX_PER_CHUNK // W) * HP * batch)
    acc = jnp.zeros((batch, NOUT_PAD), f32)
    for p_local in range(PIX_PER_CHUNK):
        hh_l, ww = p_local // W, p_local % W
        off = ((hh_l + PAD1) * HP + (ww + PAD1)) * batch
        lhs = h2_ref[pl.ds(base + off, batch), :].astype(bf16)   # (B, 128)
        acc = acc + jnp.dot(lhs, wfc_ref[p_local], preferred_element_type=f32)
    logits_ref[...] += acc

    # --------------------------- last step: softmax -------------------------
    @pl.when(k == pl.num_programs(0) - 1)
    def _softmax():
        lg = logits_ref[...]
        m = jnp.max(lg, axis=1, keepdims=True)
        e = jnp.exp(lg - m)
        out_ref[...] = e / jnp.sum(e, axis=1, keepdims=True)


# ------------------------------- JAX wrapper --------------------------------

def prepare_params(params):
    """PyTorch-layout f32 params -> kernel-layout params (done once, offline)."""
    w1, b1 = params["start_conv"]          # (128, 3, 5, 5), (128,)
    w2, b2 = params["mid_conv"]            # (128, 128, 3, 3), (128,)
    wf, bf = params["fc"]                  # (83, 10368), (83,)

    # conv1 im2col weight: row = (dh*5 + dw)*3 + c, rows padded 75 -> 128.
    w1_r = jnp.transpose(w1, (2, 3, 1, 0)).reshape(K1 * K1 * CIN, NF)
    w1_r = jnp.pad(w1_r, ((0, NF - K1 * K1 * CIN), (0, 0)))

    # conv2 per-tap weights: (tap, c_in, c_out).
    w2_r = jnp.transpose(w2, (2, 3, 1, 0)).reshape(K2 * K2, NF, NF)

    # FC weight: PyTorch column = c*81 + hh*9 + ww (NCHW flatten).  Kernel
    # needs per-pixel blocks W_p[c, n] = wf[n, c*81 + p],  p = hh*9 + ww.
    wf_r = wf.reshape(NOUT, NF, H, W)                   # (n, c, h, w)
    wf_r = jnp.transpose(wf_r, (2, 3, 1, 0))            # (h, w, c, n)
    wf_r = wf_r.reshape(H * W, NF, NOUT)                # (p, c, n)
    wfc = jnp.pad(wf_r, ((0, 0), (0, 0), (0, NOUT_PAD - NOUT)))
    bfc = jnp.full((1, NOUT_PAD), -1e30, jnp.float32).at[0, :NOUT].set(bf)

    return dict(
        w1=w1_r.astype(jnp.bfloat16),
        b1=b1.reshape(1, NF).astype(jnp.float32),
        w2=w2_r.astype(jnp.bfloat16),
        b2=b2.reshape(1, NF).astype(jnp.float32),
        wfc=wfc.astype(jnp.bfloat16),
        bfc=bfc,                      # stays f32: -1e30 pad bias must not overflow
    )


@jax.jit
def dqn_forward(x_nchw, kp):
    B = x_nchw.shape[0]
    M = B * NPIX                                  # batch-minor rows: q*B + b
    Mpad = _round_up(M, RB)
    margin = _round_up((HP + 1) * B, 8)           # max conv2 tap shift = (HP+1)*B
    assert margin >= (HP + 1) * B and Mpad % RB == 0

    # conv1 im2col patches over the 13x13 padded frame (batch-minor rows,
    # lanes padded 75 -> 128, bf16).  Tiny: <= ~0.5 MB even at B = 10.
    x = jnp.transpose(x_nchw, (0, 2, 3, 1))                         # (B, 9, 9, 3)
    r = 2 * PAD1
    xp = jnp.pad(x, ((0, 0), (r, r), (r, r), (0, 0)))               # (B, 17, 17, 3)
    taps = [xp[:, dh:dh + HP, dw:dw + HP, :]
            for dh in range(K1) for dw in range(K1)]                # 25 x (B,13,13,3)
    pat = jnp.stack(taps, axis=3).reshape(B, HP, HP, K1 * K1 * CIN)
    pat = jnp.transpose(pat, (1, 2, 0, 3)).reshape(M, K1 * K1 * CIN)
    pat = jnp.pad(pat, ((0, Mpad - M), (0, NF - K1 * K1 * CIN)))
    x1 = pat.astype(jnp.bfloat16)

    # Interior-pixel mask (1 on the 9x9 interior, 0 on the pad ring), built at
    # trace time.
    mask_np = np.zeros((Mpad, 1), np.float32)
    for i in range(PAD1, PAD1 + H):
        for j in range(PAD1, PAD1 + W):
            q = i * HP + j
            mask_np[q * B:(q + 1) * B, 0] = 1.0
    mask = jnp.asarray(mask_np)

    kernel = functools.partial(_dqn_fused_kernel,
                               batch=B, mpad=Mpad, margin=margin)
    out = pl.pallas_call(
        kernel,
        out_shape=jax.ShapeDtypeStruct((B, NOUT_PAD), jnp.float32),
        grid=(NCHUNKS,),
        in_specs=[
            pl.BlockSpec((Mpad, NF), lambda k: (0, 0)),                       # x1
            pl.BlockSpec((Mpad, 1), lambda k: (0, 0)),                        # mask
            pl.BlockSpec((NF, NF), lambda k: (0, 0)),                         # w1
            pl.BlockSpec((1, NF), lambda k: (0, 0)),                          # b1
            pl.BlockSpec((K2 * K2, NF, NF), lambda k: (0, 0, 0)),             # w2
            pl.BlockSpec((1, NF), lambda k: (0, 0)),                          # b2
            pl.BlockSpec((PIX_PER_CHUNK, NF, NOUT_PAD), lambda k: (k, 0, 0)),  # wfc
            pl.BlockSpec((1, NOUT_PAD), lambda k: (0, 0)),                    # bfc
        ],
        out_specs=pl.BlockSpec((B, NOUT_PAD), lambda k: (0, 0)),
        scratch_shapes=[
            pltpu.VMEM((2 * margin + Mpad, NF), jnp.bfloat16),   # h1 (zero halo)
            pltpu.VMEM((Mpad, NF), jnp.float32),                 # h2
            pltpu.VMEM((B, NOUT_PAD), jnp.float32),              # logits accumulator
        ],
        compiler_params=pltpu.CompilerParams(dimension_semantics=("arbitrary",)),
    )(x1, mask, kp["w1"], kp["b1"], kp["w2"], kp["b2"], kp["wfc"], kp["bfc"])
    # TODO(synk): for tight inference loops, keep the ~3 MB of weights resident
    # across calls (cross-call VMEM futures) instead of re-fetching per call.
    return out[:, :NOUT]


# ------------------------------ parameter init ------------------------------

def _init_linear_like(key, shape_w, shape_b, fan_in):
    kw, kb = jax.random.split(key)
    bound = 1.0 / float(np.sqrt(fan_in))
    w = jax.random.uniform(kw, shape_w, jnp.float32, -bound, bound)
    b = jax.random.uniform(kb, shape_b, jnp.float32, -bound, bound)
    return w, b


def make_params(key):
    k1, k2, k3 = jax.random.split(key, 3)
    return {
        "start_conv": _init_linear_like(k1, (NF, CIN, K1, K1), (NF,), CIN * K1 * K1),
        "mid_conv":   _init_linear_like(k2, (NF, NF, K2, K2), (NF,), NF * K2 * K2),
        "fc":         _init_linear_like(k3, (NOUT, NF * H * W), (NOUT,), NF * H * W),
    }


# ---------------------------- pure-JAX reference ----------------------------

def dqn_reference(x, params):
    """f32 reference of the PyTorch forward pass (NCHW conv, NCHW flatten)."""
    w1, b1 = params["start_conv"]
    w2, b2 = params["mid_conv"]
    wf, bf = params["fc"]
    dn = lax.conv_dimension_numbers(x.shape, w1.shape, ("NCHW", "OIHW", "NCHW"))
    h = lax.conv_general_dilated(x, w1, (1, 1), ((PAD1, PAD1), (PAD1, PAD1)),
                                 dimension_numbers=dn)
    h = jax.nn.relu(h + b1[None, :, None, None])
    h = lax.conv_general_dilated(h, w2, (1, 1), ((PAD2, PAD2), (PAD2, PAD2)),
                                 dimension_numbers=dn)
    h = jax.nn.relu(h + b2[None, :, None, None])
    h = h.reshape(h.shape[0], -1)                     # NCHW flatten (== .view)
    logits = h @ wf.T + bf
    return jax.nn.softmax(logits, axis=1)


# ----------------------------------- main ------------------------------------

if __name__ == "__main__":
    key = jax.random.PRNGKey(0)
    kx, kp = jax.random.split(key)

    # Module nominal input_dim is (10, 3, 9, 9); use a small batch of 2.
    x = jax.random.normal(kx, (2, CIN, H, W), dtype=jnp.float32)
    params = make_params(kp)
    kparams = prepare_params(params)

    out = jax.block_until_ready(dqn_forward(x, kparams))

    assert out.shape == (2, NOUT), out.shape
    assert bool(jnp.all(jnp.isfinite(out)))
    assert bool(jnp.allclose(jnp.sum(out, axis=1), 1.0, atol=1e-3))

    ref = dqn_reference(x, params)
    err = float(jnp.max(jnp.abs(out - ref)))
    assert err < 1e-2, f"max |out - ref| = {err}"
    print("KERNEL_OK")
</pallas_src>

<mosaic_0001>
module attributes {stable_mosaic.version = 11 : i64} {
  func.func @_dqn_fused_kernel(%arg0: i32, %arg1: memref<384x128xbf16, #tpu.memory_space<vmem>>, %arg2: memref<384x1xf32, #tpu.memory_space<vmem>>, %arg3: memref<128x128xbf16, #tpu.memory_space<vmem>>, %arg4: memref<1x128xf32, #tpu.memory_space<vmem>>, %arg5: memref<9x128x128xbf16, #tpu.memory_space<vmem>>, %arg6: memref<1x128xf32, #tpu.memory_space<vmem>>, %arg7: memref<27x128x128xbf16, #tpu.memory_space<vmem>>, %arg8: memref<1x128xf32, #tpu.memory_space<vmem>>, %arg9: memref<2x128xf32, #tpu.memory_space<vmem>>, %arg10: memref<448x128xbf16, #tpu.memory_space<vmem>>, %arg11: memref<384x128xf32, #tpu.memory_space<vmem>>, %arg12: memref<2x128xf32, #tpu.memory_space<vmem>>) attributes {dimension_semantics = [#tpu.dimension_semantics<arbitrary>], iteration_bounds = array<i64: 3>, scalar_prefetch = 0 : i64, scratch_operands = 3 : i64, tpu.core_type = #tpu.core_type<tc>, window_params = [{pipeline_mode = #tpu.pipeline_mode<synchronous>, transform_indices = @transform_0, window_bounds = array<i64: 384, 128>}, {pipeline_mode = #tpu.pipeline_mode<synchronous>, transform_indices = @transform_1, window_bounds = array<i64: 384, 1>}, {pipeline_mode = #tpu.pipeline_mode<synchronous>, transform_indices = @transform_2, window_bounds = array<i64: 128, 128>}, {pipeline_mode = #tpu.pipeline_mode<synchronous>, transform_indices = @transform_3, window_bounds = array<i64: 1, 128>}, {pipeline_mode = #tpu.pipeline_mode<synchronous>, transform_indices = @transform_4, window_bounds = array<i64: 9, 128, 128>}, {pipeline_mode = #tpu.pipeline_mode<synchronous>, transform_indices = @transform_5, window_bounds = array<i64: 1, 128>}, {transform_indices = @transform_6, window_bounds = array<i64: 27, 128, 128>}, {pipeline_mode = #tpu.pipeline_mode<synchronous>, transform_indices = @transform_7, window_bounds = array<i64: 1, 128>}, {pipeline_mode = #tpu.pipeline_mode<synchronous>, transform_indices = @transform_8, window_bounds = array<i64: 2, 128>}]} {
    %c0_i32 = arith.constant 0 : i32
    %0 = arith.cmpi eq, %arg0, %c0_i32 : i32
    %1 = arith.extui %0 : i1 to i32
    %c0_i32_0 = arith.constant 0 : i32
    %2 = arith.cmpi ne, %1, %c0_i32_0 : i32
    scf.if %2 {
      %cst_114 = arith.constant 0.000000e+00 : bf16
      %227 = vector.broadcast %cst_114 : bf16 to vector<32x128xbf16>
      %c0_115 = arith.constant 0 : index
      %c0_116 = arith.constant 0 : index
      %228 = vector.load %arg10[%c0_115, %c0_116] : memref<448x128xbf16, #tpu.memory_space<vmem>>, vector<32x128xbf16>
      tpu.vector_store %arg10[%c0_115, %c0_116], %227 {strides = array<i32>} : memref<448x128xbf16, #tpu.memory_space<vmem>>, vector<32x128xbf16>,
      %cst_117 = arith.constant 0.000000e+00 : bf16
      %229 = vector.broadcast %cst_117 : bf16 to vector<32x128xbf16>
      %c416 = arith.constant 416 : index
      %c0_118 = arith.constant 0 : index
      %230 = vector.load %arg10[%c416, %c0_118] : memref<448x128xbf16, #tpu.memory_space<vmem>>, vector<32x128xbf16>
      tpu.vector_store %arg10[%c416, %c0_118], %229 {strides = array<i32>} : memref<448x128xbf16, #tpu.memory_space<vmem>>, vector<32x128xbf16>,
      %c0_119 = arith.constant 0 : index
      %c0_120 = arith.constant 0 : index
      %231 = vector.load %arg3[%c0_119, %c0_120] : memref<128x128xbf16, #tpu.memory_space<vmem>>, vector<128x128xbf16>
      %c0_121 = arith.constant 0 : index
      %c0_122 = arith.constant 0 : index
      %232 = vector.load %arg4[%c0_121, %c0_122] : memref<1x128xf32, #tpu.memory_space<vmem>>, vector<1x128xf32>
      %c0_123 = arith.constant 0 : index
      %c0_124 = arith.constant 0 : index
      %233 = vector.load %arg6[%c0_123, %c0_124] : memref<1x128xf32, #tpu.memory_space<vmem>>, vector<1x128xf32>
      %c0_125 = arith.constant 0 : index
      %c0_126 = arith.constant 0 : index
      %234 = vector.load %arg1[%c0_125, %c0_126] : memref<384x128xbf16, #tpu.memory_space<vmem>>, vector<128x128xbf16>
      %cst_127 = arith.constant dense<0.000000e+00> : vector<128x128xf32>
      %235 = tpu.matmul %234, %231, %cst_127 {dimension_numbers = #tpu.dot_dimension_numbers<[1], [0], [0], [1], [0, 0, 1, 1], [], []>} : vector<128x128xbf16>, vector<128x128xbf16>, vector<128x128xf32> -> vector<128x128xf32>
      %236 = vector.broadcast %232 : vector<1x128xf32> to vector<128x128xf32>
      %237 = arith.addf %235, %236 : vector<128x128xf32>
      %cst_128 = arith.constant 0.000000e+00 : f32
      %238 = vector.broadcast %cst_128 : f32 to vector<128x128xf32>
      %239 = arith.maximumf %237, %238 : vector<128x128xf32>
      %c0_129 = arith.constant 0 : index
      %c0_130 = arith.constant 0 : index
      %240 = vector.load %arg2[%c0_129, %c0_130] : memref<384x1xf32, #tpu.memory_space<vmem>>, vector<128x1xf32>
      %241 = vector.broadcast %240 : vector<128x1xf32> to vector<128x128xf32>
      %242 = arith.mulf %239, %241 : vector<128x128xf32>
      %243 = arith.truncf %242 : vector<128x128xf32> to vector<128x128xbf16>
      %c32 = arith.constant 32 : index
      %c0_131 = arith.constant 0 : index
      %244 = vector.load %arg10[%c32, %c0_131] : memref<448x128xbf16, #tpu.memory_space<vmem>>, vector<128x128xbf16>
      tpu.vector_store %arg10[%c32, %c0_131], %243 {strides = array<i32>} : memref<448x128xbf16, #tpu.memory_space<vmem>>, vector<128x128xbf16>,
      %c128 = arith.constant 128 : index
      %c0_132 = arith.constant 0 : index
      %245 = vector.load %arg1[%c128, %c0_132] : memref<384x128xbf16, #tpu.memory_space<vmem>>, vector<128x128xbf16>
      %cst_133 = arith.constant dense<0.000000e+00> : vector<128x128xf32>
      %246 = tpu.matmul %245, %231, %cst_133 {dimension_numbers = #tpu.dot_dimension_numbers<[1], [0], [0], [1], [0, 0, 1, 1], [], []>} : vector<128x128xbf16>, vector<128x128xbf16>, vector<128x128xf32> -> vector<128x128xf32>
      %247 = vector.broadcast %232 : vector<1x128xf32> to vector<128x128xf32>
      %248 = arith.addf %246, %247 : vector<128x128xf32>
      %cst_134 = arith.constant 0.000000e+00 : f32
      %249 = vector.broadcast %cst_134 : f32 to vector<128x128xf32>
      %250 = arith.maximumf %248, %249 : vector<128x128xf32>
      %c128_135 = arith.constant 128 : index
      %c0_136 = arith.constant 0 : index
      %251 = vector.load %arg2[%c128_135, %c0_136] : memref<384x1xf32, #tpu.memory_space<vmem>>, vector<128x1xf32>
      %252 = vector.broadcast %251 : vector<128x1xf32> to vector<128x128xf32>
      %253 = arith.mulf %250, %252 : vector<128x128xf32>
      %254 = arith.truncf %253 : vector<128x128xf32> to vector<128x128xbf16>
      %c160 = arith.constant 160 : index
      %c0_137 = arith.constant 0 : index
      %255 = vector.load %arg10[%c160, %c0_137] : memref<448x128xbf16, #tpu.memory_space<vmem>>, vector<128x128xbf16>
      tpu.vector_store %arg10[%c160, %c0_137], %254 {strides = array<i32>} : memref<448x128xbf16, #tpu.memory_space<vmem>>, vector<128x128xbf16>,
      %c256 = arith.constant 256 : index
      %c0_138 = arith.constant 0 : index
      %256 = vector.load %arg1[%c256, %c0_138] : memref<384x128xbf16, #tpu.memory_space<vmem>>, vector<128x128xbf16>
      %cst_139 = arith.constant dense<0.000000e+00> : vector<128x128xf32>
      %257 = tpu.matmul %256, %231, %cst_139 {dimension_numbers = #tpu.dot_dimension_numbers<[1], [0], [0], [1], [0, 0, 1, 1], [], []>} : vector<128x128xbf16>, vector<128x128xbf16>, vector<128x128xf32> -> vector<128x128xf32>
      %258 = vector.broadcast %232 : vector<1x128xf32> to vector<128x128xf32>
      %259 = arith.addf %257, %258 : vector<128x128xf32>
      %cst_140 = arith.constant 0.000000e+00 : f32
      %260 = vector.broadcast %cst_140 : f32 to vector<128x128xf32>
      %261 = arith.maximumf %259, %260 : vector<128x128xf32>
      %c256_141 = arith.constant 256 : index
      %c0_142 = arith.constant 0 : index
      %262 = vector.load %arg2[%c256_141, %c0_142] : memref<384x1xf32, #tpu.memory_space<vmem>>, vector<128x1xf32>
      %263 = vector.broadcast %262 : vector<128x1xf32> to vector<128x128xf32>
      %264 = arith.mulf %261, %263 : vector<128x128xf32>
      %265 = arith.truncf %264 : vector<128x128xf32> to vector<128x128xbf16>
      %c288 = arith.constant 288 : index
      %c0_143 = arith.constant 0 : index
      %266 = vector.load %arg10[%c288, %c0_143] : memref<448x128xbf16, #tpu.memory_space<vmem>>, vector<128x128xbf16>
      tpu.vector_store %arg10[%c288, %c0_143], %265 {strides = array<i32>} : memref<448x128xbf16, #tpu.memory_space<vmem>>, vector<128x128xbf16>,
      %cst_144 = arith.constant 0.000000e+00 : f32
      %267 = vector.broadcast %cst_144 : f32 to vector<128x128xf32>
      %c4_145 = arith.constant 4 : index
      %c0_146 = arith.constant 0 : index
      %268 = vector.load %arg10[%c4_145, %c0_146] : memref<448x128xbf16, #tpu.memory_space<vmem>>, vector<128x128xbf16>
      %c0_147 = arith.constant 0 : index
      %c0_148 = arith.constant 0 : index
      %c0_149 = arith.constant 0 : index
      %269 = vector.load %arg5[%c0_147, %c0_148, %c0_149] : memref<9x128x128xbf16, #tpu.memory_space<vmem>>, vector<1x128x128xbf16>
      %270 = vector.shape_cast %269 : vector<1x128x128xbf16> to vector<128x128xbf16>
      %cst_150 = arith.constant dense<0.000000e+00> : vector<128x128xf32>
      %271 = tpu.matmul %268, %270, %cst_150 {dimension_numbers = #tpu.dot_dimension_numbers<[1], [0], [0], [1], [0, 0, 1, 1], [], []>} : vector<128x128xbf16>, vector<128x128xbf16>, vector<128x128xf32> -> vector<128x128xf32>
      %272 = arith.addf %267, %271 : vector<128x128xf32>
      %c6_151 = arith.constant 6 : index
      %c0_152 = arith.constant 0 : index
      %273 = vector.load %arg10[%c6_151, %c0_152] : memref<448x128xbf16, #tpu.memory_space<vmem>>, vector<128x128xbf16>
      %c1_153 = arith.constant 1 : index
      %c0_154 = arith.constant 0 : index
      %c0_155 = arith.constant 0 : index
      %274 = vector.load %arg5[%c1_153, %c0_154, %c0_155] : memref<9x128x128xbf16, #tpu.memory_space<vmem>>, vector<1x128x128xbf16>
      %275 = vector.shape_cast %274 : vector<1x128x128xbf16> to vector<128x128xbf16>
      %cst_156 = arith.constant dense<0.000000e+00> : vector<128x128xf32>
      %276 = tpu.matmul %273, %275, %cst_156 {dimension_numbers = #tpu.dot_dimension_numbers<[1], [0], [0], [1], [0, 0, 1, 1], [], []>} : vector<128x128xbf16>, vector<128x128xbf16>, vector<128x128xf32> -> vector<128x128xf32>
      %277 = arith.addf %272, %276 : vector<128x128xf32>
      %c8_157 = arith.constant 8 : index
      %c0_158 = arith.constant 0 : index
      %278 = vector.load %arg10[%c8_157, %c0_158] : memref<448x128xbf16, #tpu.memory_space<vmem>>, vector<128x128xbf16>
      %c2_159 = arith.constant 2 : index
      %c0_160 = arith.constant 0 : index
      %c0_161 = arith.constant 0 : index
      %279 = vector.load %arg5[%c2_159, %c0_160, %c0_161] : memref<9x128x128xbf16, #tpu.memory_space<vmem>>, vector<1x128x128xbf16>
      %280 = vector.shape_cast %279 : vector<1x128x128xbf16> to vector<128x128xbf16>
      %cst_162 = arith.constant dense<0.000000e+00> : vector<128x128xf32>
      %281 = tpu.matmul %278, %280, %cst_162 {dimension_numbers = #tpu.dot_dimension_numbers<[1], [0], [0], [1], [0, 0, 1, 1], [], []>} : vector<128x128xbf16>, vector<128x128xbf16>, vector<128x128xf32> -> vector<128x128xf32>
      %282 = arith.addf %277, %281 : vector<128x128xf32>
      %c30 = arith.constant 30 : index
      %c0_163 = arith.constant 0 : index
      %283 = vector.load %arg10[%c30, %c0_163] : memref<448x128xbf16, #tpu.memory_space<vmem>>, vector<128x128xbf16>
      %c3_164 = arith.constant 3 : index
      %c0_165 = arith.constant 0 : index
      %c0_166 = arith.constant 0 : index
      %284 = vector.load %arg5[%c3_164, %c0_165, %c0_166] : memref<9x128x128xbf16, #tpu.memory_space<vmem>>, vector<1x128x128xbf16>
      %285 = vector.shape_cast %284 : vector<1x128x128xbf16> to vector<128x128xbf16>
      %cst_167 = arith.constant dense<0.000000e+00> : vector<128x128xf32>
      %286 = tpu.matmul %283, %285, %cst_167 {dimension_numbers = #tpu.dot_dimension_numbers<[1], [0], [0], [1], [0, 0, 1, 1], [], []>} : vector<128x128xbf16>, vector<128x128xbf16>, vector<128x128xf32> -> vector<128x128xf32>
      %287 = arith.addf %282, %286 : vector<128x128xf32>
      %c32_168 = arith.constant 32 : index
      %c0_169 = arith.constant 0 : index
      %288 = vector.load %arg10[%c32_168, %c0_169] : memref<448x128xbf16, #tpu.memory_space<vmem>>, vector<128x128xbf16>
      %c4_170 = arith.constant 4 : index
      %c0_171 = arith.constant 0 : index
      %c0_172 = arith.constant 0 : index
      %289 = vector.load %arg5[%c4_170, %c0_171, %c0_172] : memref<9x128x128xbf16, #tpu.memory_space<vmem>>, vector<1x128x128xbf16>
      %290 = vector.shape_cast %289 : vector<1x128x128xbf16> to vector<128x128xbf16>
      %cst_173 = arith.constant dense<0.000000e+00> : vector<128x128xf32>
      %291 = tpu.matmul %288, %290, %cst_173 {dimension_numbers = #tpu.dot_dimension_numbers<[1], [0], [0], [1], [0, 0, 1, 1], [], []>} : vector<128x128xbf16>, vector<128x128xbf16>, vector<128x128xf32> -> vector<128x128xf32>
      %292 = arith.addf %287, %291 : vector<128x128xf32>
      %c34 = arith.constant 34 : index
      %c0_174 = arith.constant 0 : index
      %293 = vector.load %arg10[%c34, %c0_174] : memref<448x128xbf16, #tpu.memory_space<vmem>>, vector<128x128xbf16>
      %c5_175 = arith.constant 5 : index
      %c0_176 = arith.constant 0 : index
      %c0_177 = arith.constant 0 : index
      %294 = vector.load %arg5[%c5_175, %c0_176, %c0_177] : memref<9x128x128xbf16, #tpu.memory_space<vmem>>, vector<1x128x128xbf16>
      %295 = vector.shape_cast %294 : vector<1x128x128xbf16> to vector<128x128xbf16>
      %cst_178 = arith.constant dense<0.000000e+00> : vector<128x128xf32>
      %296 = tpu.matmul %293, %295, %cst_178 {dimension_numbers = #tpu.dot_dimension_numbers<[1], [0], [0], [1], [0, 0, 1, 1], [], []>} : vector<128x128xbf16>, vector<128x128xbf16>, vector<128x128xf32> -> vector<128x128xf32>
      %297 = arith.addf %292, %296 : vector<128x128xf32>
      %c56 = arith.constant 56 : index
      %c0_179 = arith.constant 0 : index
      %298 = vector.load %arg10[%c56, %c0_179] : memref<448x128xbf16, #tpu.memory_space<vmem>>, vector<128x128xbf16>
      %c6_180 = arith.constant 6 : index
      %c0_181 = arith.constant 0 : index
      %c0_182 = arith.constant 0 : index
      %299 = vector.load %arg5[%c6_180, %c0_181, %c0_182] : memref<9x128x128xbf16, #tpu.memory_space<vmem>>, vector<1x128x128xbf16>
      %300 = vector.shape_cast %299 : vector<1x128x128xbf16> to vector<128x128xbf16>
      %cst_183 = arith.constant dense<0.000000e+00> : vector<128x128xf32>
      %301 = tpu.matmul %298, %300, %cst_183 {dimension_numbers = #tpu.dot_dimension_numbers<[1], [0], [0], [1], [0, 0, 1, 1], [], []>} : vector<128x128xbf16>, vector<128x128xbf16>, vector<128x128xf32> -> vector<128x128xf32>
      %302 = arith.addf %297, %301 : vector<128x128xf32>
      %c58 = arith.constant 58 : index
      %c0_184 = arith.constant 0 : index
      %303 = vector.load %arg10[%c58, %c0_184] : memref<448x128xbf16, #tpu.memory_space<vmem>>, vector<128x128xbf16>
      %c7_185 = arith.constant 7 : index
      %c0_186 = arith.constant 0 : index
      %c0_187 = arith.constant 0 : index
      %304 = vector.load %arg5[%c7_185, %c0_186, %c0_187] : memref<9x128x128xbf16, #tpu.memory_space<vmem>>, vector<1x128x128xbf16>
      %305 = vector.shape_cast %304 : vector<1x128x128xbf16> to vector<128x128xbf16>
      %cst_188 = arith.constant dense<0.000000e+00> : vector<128x128xf32>
      %306 = tpu.matmul %303, %305, %cst_188 {dimension_numbers = #tpu.dot_dimension_numbers<[1], [0], [0], [1], [0, 0, 1, 1], [], []>} : vector<128x128xbf16>, vector<128x128xbf16>, vector<128x128xf32> -> vector<128x128xf32>
      %307 = arith.addf %302, %306 : vector<128x128xf32>
      %c60 = arith.constant 60 : index
      %c0_189 = arith.constant 0 : index
      %308 = vector.load %arg10[%c60, %c0_189] : memref<448x128xbf16, #tpu.memory_space<vmem>>, vector<128x128xbf16>
      %c8_190 = arith.constant 8 : index
      %c0_191 = arith.constant 0 : index
      %c0_192 = arith.constant 0 : index
      %309 = vector.load %arg5[%c8_190, %c0_191, %c0_192] : memref<9x128x128xbf16, #tpu.memory_space<vmem>>, vector<1x128x128xbf16>
      %310 = vector.shape_cast %309 : vector<1x128x128xbf16> to vector<128x128xbf16>
      %cst_193 = arith.constant dense<0.000000e+00> : vector<128x128xf32>
      %311 = tpu.matmul %308, %310, %cst_193 {dimension_numbers = #tpu.dot_dimension_numbers<[1], [0], [0], [1], [0, 0, 1, 1], [], []>} : vector<128x128xbf16>, vector<128x128xbf16>, vector<128x128xf32> -> vector<128x128xf32>
      %312 = arith.addf %307, %311 : vector<128x128xf32>
      %313 = vector.broadcast %233 : vector<1x128xf32> to vector<128x128xf32>
      %314 = arith.addf %312, %313 : vector<128x128xf32>
      %cst_194 = arith.constant 0.000000e+00 : f32
      %315 = vector.broadcast %cst_194 : f32 to vector<128x128xf32>
      %316 = arith.maximumf %314, %315 : vector<128x128xf32>
      %c0_195 = arith.constant 0 : index
      %c0_196 = arith.constant 0 : index
      %317 = vector.load %arg11[%c0_195, %c0_196] : memref<384x128xf32, #tpu.memory_space<vmem>>, vector<128x128xf32>
      tpu.vector_store %arg11[%c0_195, %c0_196], %316 {strides = array<i32>} : memref<384x128xf32, #tpu.memory_space<vmem>>, vector<128x128xf32>,
      %cst_197 = arith.constant 0.000000e+00 : f32
      %318 = vector.broadcast %cst_197 : f32 to vector<128x128xf32>
      %c132 = arith.constant 132 : index
      %c0_198 = arith.constant 0 : index
      %319 = vector.load %arg10[%c132, %c0_198] : memref<448x128xbf16, #tpu.memory_space<vmem>>, vector<128x128xbf16>
      %c0_199 = arith.constant 0 : index
      %c0_200 = arith.constant 0 : index
      %c0_201 = arith.constant 0 : index
      %320 = vector.load %arg5[%c0_199, %c0_200, %c0_201] : memref<9x128x128xbf16, #tpu.memory_space<vmem>>, vector<1x128x128xbf16>
      %321 = vector.shape_cast %320 : vector<1x128x128xbf16> to vector<128x128xbf16>
      %cst_202 = arith.constant dense<0.000000e+00> : vector<128x128xf32>
      %322 = tpu.matmul %319, %321, %cst_202 {dimension_numbers = #tpu.dot_dimension_numbers<[1], [0], [0], [1], [0, 0, 1, 1], [], []>} : vector<128x128xbf16>, vector<128x128xbf16>, vector<128x128xf32> -> vector<128x128xf32>
      %323 = arith.addf %318, %322 : vector<128x128xf32>
      %c134 = arith.constant 134 : index
      %c0_203 = arith.constant 0 : index
      %324 = vector.load %arg10[%c134, %c0_203] : memref<448x128xbf16, #tpu.memory_space<vmem>>, vector<128x128xbf16>
      %c1_204 = arith.constant 1 : index
      %c0_205 = arith.constant 0 : index
      %c0_206 = arith.constant 0 : index
      %325 = vector.load %arg5[%c1_204, %c0_205, %c0_206] : memref<9x128x128xbf16, #tpu.memory_space<vmem>>, vector<1x128x128xbf16>
      %326 = vector.shape_cast %325 : vector<1x128x128xbf16> to vector<128x128xbf16>
      %cst_207 = arith.constant dense<0.000000e+00> : vector<128x128xf32>
      %327 = tpu.matmul %324, %326, %cst_207 {dimension_numbers = #tpu.dot_dimension_numbers<[1], [0], [0], [1], [0, 0, 1, 1], [], []>} : vector<128x128xbf16>, vector<128x128xbf16>, vector<128x128xf32> -> vector<128x128xf32>
      %328 = arith.addf %323, %327 : vector<128x128xf32>
      %c136 = arith.constant 136 : index
      %c0_208 = arith.constant 0 : index
      %329 = vector.load %arg10[%c136, %c0_208] : memref<448x128xbf16, #tpu.memory_space<vmem>>, vector<128x128xbf16>
      %c2_209 = arith.constant 2 : index
      %c0_210 = arith.constant 0 : index
      %c0_211 = arith.constant 0 : index
      %330 = vector.load %arg5[%c2_209, %c0_210, %c0_211] : memref<9x128x128xbf16, #tpu.memory_space<vmem>>, vector<1x128x128xbf16>
      %331 = vector.shape_cast %330 : vector<1x128x128xbf16> to vector<128x128xbf16>
      %cst_212 = arith.constant dense<0.000000e+00> : vector<128x128xf32>
      %332 = tpu.matmul %329, %331, %cst_212 {dimension_numbers = #tpu.dot_dimension_numbers<[1], [0], [0], [1], [0, 0, 1, 1], [], []>} : vector<128x128xbf16>, vector<128x128xbf16>, vector<128x128xf32> -> vector<128x128xf32>
      %333 = arith.addf %328, %332 : vector<128x128xf32>
      %c158 = arith.constant 158 : index
      %c0_213 = arith.constant 0 : index
      %334 = vector.load %arg10[%c158, %c0_213] : memref<448x128xbf16, #tpu.memory_space<vmem>>, vector<128x128xbf16>
      %c3_214 = arith.constant 3 : index
      %c0_215 = arith.constant 0 : index
      %c0_216 = arith.constant 0 : index
      %335 = vector.load %arg5[%c3_214, %c0_215, %c0_216] : memref<9x128x128xbf16, #tpu.memory_space<vmem>>, vector<1x128x128xbf16>
      %336 = vector.shape_cast %335 : vector<1x128x128xbf16> to vector<128x128xbf16>
      %cst_217 = arith.constant dense<0.000000e+00> : vector<128x128xf32>
      %337 = tpu.matmul %334, %336, %cst_217 {dimension_numbers = #tpu.dot_dimension_numbers<[1], [0], [0], [1], [0, 0, 1, 1], [], []>} : vector<128x128xbf16>, vector<128x128xbf16>, vector<128x128xf32> -> vector<128x128xf32>
      %338 = arith.addf %333, %337 : vector<128x128xf32>
      %c160_218 = arith.constant 160 : index
      %c0_219 = arith.constant 0 : index
      %339 = vector.load %arg10[%c160_218, %c0_219] : memref<448x128xbf16, #tpu.memory_space<vmem>>, vector<128x128xbf16>
      %c4_220 = arith.constant 4 : index
      %c0_221 = arith.constant 0 : index
      %c0_222 = arith.constant 0 : index
      %340 = vector.load %arg5[%c4_220, %c0_221, %c0_222] : memref<9x128x128xbf16, #tpu.memory_space<vmem>>, vector<1x128x128xbf16>
      %341 = vector.shape_cast %340 : vector<1x128x128xbf16> to vector<128x128xbf16>
      %cst_223 = arith.constant dense<0.000000e+00> : vector<128x128xf32>
      %342 = tpu.matmul %339, %341, %cst_223 {dimension_numbers = #tpu.dot_dimension_numbers<[1], [0], [0], [1], [0, 0, 1, 1], [], []>} : vector<128x128xbf16>, vector<128x128xbf16>, vector<128x128xf32> -> vector<128x128xf32>
      %343 = arith.addf %338, %342 : vector<128x128xf32>
      %c162 = arith.constant 162 : index
      %c0_224 = arith.constant 0 : index
      %344 = vector.load %arg10[%c162, %c0_224] : memref<448x128xbf16, #tpu.memory_space<vmem>>, vector<128x128xbf16>
      %c5_225 = arith.constant 5 : index
      %c0_226 = arith.constant 0 : index
      %c0_227 = arith.constant 0 : index
      %345 = vector.load %arg5[%c5_225, %c0_226, %c0_227] : memref<9x128x128xbf16, #tpu.memory_space<vmem>>, vector<1x128x128xbf16>
      %346 = vector.shape_cast %345 : vector<1x128x128xbf16> to vector<128x128xbf16>
      %cst_228 = arith.constant dense<0.000000e+00> : vector<128x128xf32>
      %347 = tpu.matmul %344, %346, %cst_228 {dimension_numbers = #tpu.dot_dimension_numbers<[1], [0], [0], [1], [0, 0, 1, 1], [], []>} : vector<128x128xbf16>, vector<128x128xbf16>, vector<128x128xf32> -> vector<128x128xf32>
      %348 = arith.addf %343, %347 : vector<128x128xf32>
      %c184 = arith.constant 184 : index
      %c0_229 = arith.constant 0 : index
      %349 = vector.load %arg10[%c184, %c0_229] : memref<448x128xbf16, #tpu.memory_space<vmem>>, vector<128x128xbf16>
      %c6_230 = arith.constant 6 : index
      %c0_231 = arith.constant 0 : index
      %c0_232 = arith.constant 0 : index
      %350 = vector.load %arg5[%c6_230, %c0_231, %c0_232] : memref<9x128x128xbf16, #tpu.memory_space<vmem>>, vector<1x128x128xbf16>
      %351 = vector.shape_cast %350 : vector<1x128x128xbf16> to vector<128x128xbf16>
      %cst_233 = arith.constant dense<0.000000e+00> : vector<128x128xf32>
      %352 = tpu.matmul %349, %351, %cst_233 {dimension_numbers = #tpu.dot_dimension_numbers<[1], [0], [0], [1], [0, 0, 1, 1], [], []>} : vector<128x128xbf16>, vector<128x128xbf16>, vector<128x128xf32> -> vector<128x128xf32>
      %353 = arith.addf %348, %352 : vector<128x128xf32>
      %c186 = arith.constant 186 : index
      %c0_234 = arith.constant 0 : index
      %354 = vector.load %arg10[%c186, %c0_234] : memref<448x128xbf16, #tpu.memory_space<vmem>>, vector<128x128xbf16>
      %c7_235 = arith.constant 7 : index
      %c0_236 = arith.constant 0 : index
      %c0_237 = arith.constant 0 : index
      %355 = vector.load %arg5[%c7_235, %c0_236, %c0_237] : memref<9x128x128xbf16, #tpu.memory_space<vmem>>, vector<1x128x128xbf16>
      %356 = vector.shape_cast %355 : vector<1x128x128xbf16> to vector<128x128xbf16>
      %cst_238 = arith.constant dense<0.000000e+00> : vector<128x128xf32>
      %357 = tpu.matmul %354, %356, %cst_238 {dimension_numbers = #tpu.dot_dimension_numbers<[1], [0], [0], [1], [0, 0, 1, 1], [], []>} : vector<128x128xbf16>, vector<128x128xbf16>, vector<128x128xf32> -> vector<128x128xf32>
      %358 = arith.addf %353, %357 : vector<128x128xf32>
      %c188 = arith.constant 188 : index
      %c0_239 = arith.constant 0 : index
      %359 = vector.load %arg10[%c188, %c0_239] : memref<448x128xbf16, #tpu.memory_space<vmem>>, vector<128x128xbf16>
      %c8_240 = arith.constant 8 : index
      %c0_241 = arith.constant 0 : index
      %c0_242 = arith.constant 0 : index
      %360 = vector.load %arg5[%c8_240, %c0_241, %c0_242] : memref<9x128x128xbf16, #tpu.memory_space<vmem>>, vector<1x128x128xbf16>
      %361 = vector.shape_cast %360 : vector<1x128x128xbf16> to vector<128x128xbf16>
      %cst_243 = arith.constant dense<0.000000e+00> : vector<128x128xf32>
      %362 = tpu.matmul %359, %361, %cst_243 {dimension_numbers = #tpu.dot_dimension_numbers<[1], [0], [0], [1], [0, 0, 1, 1], [], []>} : vector<128x128xbf16>, vector<128x128xbf16>, vector<128x128xf32> -> vector<128x128xf32>
      %363 = arith.addf %358, %362 : vector<128x128xf32>
      %364 = vector.broadcast %233 : vector<1x128xf32> to vector<128x128xf32>
      %365 = arith.addf %363, %364 : vector<128x128xf32>
      %cst_244 = arith.constant 0.000000e+00 : f32
      %366 = vector.broadcast %cst_244 : f32 to vector<128x128xf32>
      %367 = arith.maximumf %365, %366 : vector<128x128xf32>
      %c128_245 = arith.constant 128 : index
      %c0_246 = arith.constant 0 : index
      %368 = vector.load %arg11[%c128_245, %c0_246] : memref<384x128xf32, #tpu.memory_space<vmem>>, vector<128x128xf32>
      tpu.vector_store %arg11[%c128_245, %c0_246], %367 {strides = array<i32>} : memref<384x128xf32, #tpu.memory_space<vmem>>, vector<128x128xf32>,
      %cst_247 = arith.constant 0.000000e+00 : f32
      %369 = vector.broadcast %cst_247 : f32 to vector<128x128xf32>
      %c260 = arith.constant 260 : index
      %c0_248 = arith.constant 0 : index
      %370 = vector.load %arg10[%c260, %c0_248] : memref<448x128xbf16, #tpu.memory_space<vmem>>, vector<128x128xbf16>
      %c0_249 = arith.constant 0 : index
      %c0_250 = arith.constant 0 : index
      %c0_251 = arith.constant 0 : index
      %371 = vector.load %arg5[%c0_249, %c0_250, %c0_251] : memref<9x128x128xbf16, #tpu.memory_space<vmem>>, vector<1x128x128xbf16>
      %372 = vector.shape_cast %371 : vector<1x128x128xbf16> to vector<128x128xbf16>
      %cst_252 = arith.constant dense<0.000000e+00> : vector<128x128xf32>
      %373 = tpu.matmul %370, %372, %cst_252 {dimension_numbers = #tpu.dot_dimension_numbers<[1], [0], [0], [1], [0, 0, 1, 1], [], []>} : vector<128x128xbf16>, vector<128x128xbf16>, vector<128x128xf32> -> vector<128x128xf32>
      %374 = arith.addf %369, %373 : vector<128x128xf32>
      %c262 = arith.constant 262 : index
      %c0_253 = arith.constant 0 : index
      %375 = vector.load %arg10[%c262, %c0_253] : memref<448x128xbf16, #tpu.memory_space<vmem>>, vector<128x128xbf16>
      %c1_254 = arith.constant 1 : index
      %c0_255 = arith.constant 0 : index
      %c0_256 = arith.constant 0 : index
      %376 = vector.load %arg5[%c1_254, %c0_255, %c0_256] : memref<9x128x128xbf16, #tpu.memory_space<vmem>>, vector<1x128x128xbf16>
      %377 = vector.shape_cast %376 : vector<1x128x128xbf16> to vector<128x128xbf16>
      %cst_257 = arith.constant dense<0.000000e+00> : vector<128x128xf32>
      %378 = tpu.matmul %375, %377, %cst_257 {dimension_numbers = #tpu.dot_dimension_numbers<[1], [0], [0], [1], [0, 0, 1, 1], [], []>} : vector<128x128xbf16>, vector<128x128xbf16>, vector<128x128xf32> -> vector<128x128xf32>
      %379 = arith.addf %374, %378 : vector<128x128xf32>
      %c264 = arith.constant 264 : index
      %c0_258 = arith.constant 0 : index
      %380 = vector.load %arg10[%c264, %c0_258] : memref<448x128xbf16, #tpu.memory_space<vmem>>, vector<128x128xbf16>
      %c2_259 = arith.constant 2 : index
      %c0_260 = arith.constant 0 : index
      %c0_261 = arith.constant 0 : index
      %381 = vector.load %arg5[%c2_259, %c0_260, %c0_261] : memref<9x128x128xbf16, #tpu.memory_space<vmem>>, vector<1x128x128xbf16>
      %382 = vector.shape_cast %381 : vector<1x128x128xbf16> to vector<128x128xbf16>
      %cst_262 = arith.constant dense<0.000000e+00> : vector<128x128xf32>
      %383 = tpu.matmul %380, %382, %cst_262 {dimension_numbers = #tpu.dot_dimension_numbers<[1], [0], [0], [1], [0, 0, 1, 1], [], []>} : vector<128x128xbf16>, vector<128x128xbf16>, vector<128x128xf32> -> vector<128x128xf32>
      %384 = arith.addf %379, %383 : vector<128x128xf32>
      %c286 = arith.constant 286 : index
      %c0_263 = arith.constant 0 : index
      %385 = vector.load %arg10[%c286, %c0_263] : memref<448x128xbf16, #tpu.memory_space<vmem>>, vector<128x128xbf16>
      %c3_264 = arith.constant 3 : index
      %c0_265 = arith.constant 0 : index
      %c0_266 = arith.constant 0 : index
      %386 = vector.load %arg5[%c3_264, %c0_265, %c0_266] : memref<9x128x128xbf16, #tpu.memory_space<vmem>>, vector<1x128x128xbf16>
      %387 = vector.shape_cast %386 : vector<1x128x128xbf16> to vector<128x128xbf16>
      %cst_267 = arith.constant dense<0.000000e+00> : vector<128x128xf32>
      %388 = tpu.matmul %385, %387, %cst_267 {dimension_numbers = #tpu.dot_dimension_numbers<[1], [0], [0], [1], [0, 0, 1, 1], [], []>} : vector<128x128xbf16>, vector<128x128xbf16>, vector<128x128xf32> -> vector<128x128xf32>
      %389 = arith.addf %384, %388 : vector<128x128xf32>
      %c288_268 = arith.constant 288 : index
      %c0_269 = arith.constant 0 : index
      %390 = vector.load %arg10[%c288_268, %c0_269] : memref<448x128xbf16, #tpu.memory_space<vmem>>, vector<128x128xbf16>
      %c4_270 = arith.constant 4 : index
      %c0_271 = arith.constant 0 : index
      %c0_272 = arith.constant 0 : index
      %391 = vector.load %arg5[%c4_270, %c0_271, %c0_272] : memref<9x128x128xbf16, #tpu.memory_space<vmem>>, vector<1x128x128xbf16>
      %392 = vector.shape_cast %391 : vector<1x128x128xbf16> to vector<128x128xbf16>
      %cst_273 = arith.constant dense<0.000000e+00> : vector<128x128xf32>
      %393 = tpu.matmul %390, %392, %cst_273 {dimension_numbers = #tpu.dot_dimension_numbers<[1], [0], [0], [1], [0, 0, 1, 1], [], []>} : vector<128x128xbf16>, vector<128x128xbf16>, vector<128x128xf32> -> vector<128x128xf32>
      %394 = arith.addf %389, %393 : vector<128x128xf32>
      %c290 = arith.constant 290 : index
      %c0_274 = arith.constant 0 : index
      %395 = vector.load %arg10[%c290, %c0_274] : memref<448x128xbf16, #tpu.memory_space<vmem>>, vector<128x128xbf16>
      %c5_275 = arith.constant 5 : index
      %c0_276 = arith.constant 0 : index
      %c0_277 = arith.constant 0 : index
      %396 = vector.load %arg5[%c5_275, %c0_276, %c0_277] : memref<9x128x128xbf16, #tpu.memory_space<vmem>>, vector<1x128x128xbf16>
      %397 = vector.shape_cast %396 : vector<1x128x128xbf16> to vector<128x128xbf16>
      %cst_278 = arith.constant dense<0.000000e+00> : vector<128x128xf32>
      %398 = tpu.matmul %395, %397, %cst_278 {dimension_numbers = #tpu.dot_dimension_numbers<[1], [0], [0], [1], [0, 0, 1, 1], [], []>} : vector<128x128xbf16>, vector<128x128xbf16>, vector<128x128xf32> -> vector<128x128xf32>
      %399 = arith.addf %394, %398 : vector<128x128xf32>
      %c312 = arith.constant 312 : index
      %c0_279 = arith.constant 0 : index
      %400 = vector.load %arg10[%c312, %c0_279] : memref<448x128xbf16, #tpu.memory_space<vmem>>, vector<128x128xbf16>
      %c6_280 = arith.constant 6 : index
      %c0_281 = arith.constant 0 : index
      %c0_282 = arith.constant 0 : index
      %401 = vector.load %arg5[%c6_280, %c0_281, %c0_282] : memref<9x128x128xbf16, #tpu.memory_space<vmem>>, vector<1x128x128xbf16>
      %402 = vector.shape_cast %401 : vector<1x128x128xbf16> to vector<128x128xbf16>
      %cst_283 = arith.constant dense<0.000000e+00> : vector<128x128xf32>
      %403 = tpu.matmul %400, %402, %cst_283 {dimension_numbers = #tpu.dot_dimension_numbers<[1], [0], [0], [1], [0, 0, 1, 1], [], []>} : vector<128x128xbf16>, vector<128x128xbf16>, vector<128x128xf32> -> vector<128x128xf32>
      %404 = arith.addf %399, %403 : vector<128x128xf32>
      %c314 = arith.constant 314 : index
      %c0_284 = arith.constant 0 : index
      %405 = vector.load %arg10[%c314, %c0_284] : memref<448x128xbf16, #tpu.memory_space<vmem>>, vector<128x128xbf16>
      %c7_285 = arith.constant 7 : index
      %c0_286 = arith.constant 0 : index
      %c0_287 = arith.constant 0 : index
      %406 = vector.load %arg5[%c7_285, %c0_286, %c0_287] : memref<9x128x128xbf16, #tpu.memory_space<vmem>>, vector<1x128x128xbf16>
      %407 = vector.shape_cast %406 : vector<1x128x128xbf16> to vector<128x128xbf16>
      %cst_288 = arith.constant dense<0.000000e+00> : vector<128x128xf32>
      %408 = tpu.matmul %405, %407, %cst_288 {dimension_numbers = #tpu.dot_dimension_numbers<[1], [0], [0], [1], [0, 0, 1, 1], [], []>} : vector<128x128xbf16>, vector<128x128xbf16>, vector<128x128xf32> -> vector<128x128xf32>
      %409 = arith.addf %404, %408 : vector<128x128xf32>
      %c316 = arith.constant 316 : index
      %c0_289 = arith.constant 0 : index
      %410 = vector.load %arg10[%c316, %c0_289] : memref<448x128xbf16, #tpu.memory_space<vmem>>, vector<128x128xbf16>
      %c8_290 = arith.constant 8 : index
      %c0_291 = arith.constant 0 : index
      %c0_292 = arith.constant 0 : index
      %411 = vector.load %arg5[%c8_290, %c0_291, %c0_292] : memref<9x128x128xbf16, #tpu.memory_space<vmem>>, vector<1x128x128xbf16>
      %412 = vector.shape_cast %411 : vector<1x128x128xbf16> to vector<128x128xbf16>
      %cst_293 = arith.constant dense<0.000000e+00> : vector<128x128xf32>
      %413 = tpu.matmul %410, %412, %cst_293 {dimension_numbers = #tpu.dot_dimension_numbers<[1], [0], [0], [1], [0, 0, 1, 1], [], []>} : vector<128x128xbf16>, vector<128x128xbf16>, vector<128x128xf32> -> vector<128x128xf32>
      %414 = arith.addf %409, %413 : vector<128x128xf32>
      %415 = vector.broadcast %233 : vector<1x128xf32> to vector<128x128xf32>
      %416 = arith.addf %414, %415 : vector<128x128xf32>
      %cst_294 = arith.constant 0.000000e+00 : f32
      %417 = vector.broadcast %cst_294 : f32 to vector<128x128xf32>
      %418 = arith.maximumf %416, %417 : vector<128x128xf32>
      %c256_295 = arith.constant 256 : index
      %c0_296 = arith.constant 0 : index
      %419 = vector.load %arg11[%c256_295, %c0_296] : memref<384x128xf32, #tpu.memory_space<vmem>>, vector<128x128xf32>
      tpu.vector_store %arg11[%c256_295, %c0_296], %418 {strides = array<i32>} : memref<384x128xf32, #tpu.memory_space<vmem>>, vector<128x128xf32>,
      %c0_297 = arith.constant 0 : index
      %c0_298 = arith.constant 0 : index
      %420 = vector.load %arg8[%c0_297, %c0_298] : memref<1x128xf32, #tpu.memory_space<vmem>>, vector<1x128xf32>
      %421 = vector.shape_cast %420 : vector<1x128xf32> to vector<1x128xf32>
      %422 = vector.broadcast %421 : vector<1x128xf32> to vector<2x128xf32>
      %c0_299 = arith.constant 0 : index
      %c0_300 = arith.constant 0 : index
      %423 = vector.load %arg12[%c0_299, %c0_300] : memref<2x128xf32, #tpu.memory_space<vmem>>, vector<2x128xf32>
      tpu.vector_store %arg12[%c0_299, %c0_300], %422 {strides = array<i32>} : memref<2x128xf32, #tpu.memory_space<vmem>>, vector<2x128xf32>,
    } else {
    }
    %c78_i32 = arith.constant 78 : i32
    %3 = arith.muli %arg0, %c78_i32 : i32
    %cst = arith.constant 0.000000e+00 : f32
    %4 = vector.broadcast %cst : f32 to vector<2x128xf32>
    %c56_i32 = arith.constant 56 : i32
    %5 = arith.addi %3, %c56_i32 : i32
    %6 = arith.index_cast %5 : i32 to index
    %c0 = arith.constant 0 : index
    %7 = vector.load %arg11[%6, %c0] : memref<384x128xf32, #tpu.memory_space<vmem>>, vector<2x128xf32>
    %8 = arith.truncf %7 : vector<2x128xf32> to vector<2x128xbf16>
    %c0_1 = arith.constant 0 : index
    %c0_2 = arith.constant 0 : index
    %c0_3 = arith.constant 0 : index
    %9 = vector.load %arg7[%c0_1, %c0_2, %c0_3] : memref<27x128x128xbf16, #tpu.memory_space<vmem>>, vector<1x128x128xbf16>
    %10 = vector.shape_cast %9 : vector<1x128x128xbf16> to vector<128x128xbf16>
    %cst_4 = arith.constant dense<0.000000e+00> : vector<2x128xf32>
    %11 = tpu.matmul %8, %10, %cst_4 {dimension_numbers = #tpu.dot_dimension_numbers<[1], [0], [0], [1], [0, 0, 1, 1], [], []>} : vector<2x128xbf16>, vector<128x128xbf16>, vector<2x128xf32> -> vector<2x128xf32>
    %12 = arith.addf %4, %11 : vector<2x128xf32>
    %c58_i32 = arith.constant 58 : i32
    %13 = arith.addi %3, %c58_i32 : i32
    %14 = arith.index_cast %13 : i32 to index
    %c0_5 = arith.constant 0 : index
    %15 = vector.load %arg11[%14, %c0_5] : memref<384x128xf32, #tpu.memory_space<vmem>>, vector<2x128xf32>
    %16 = arith.truncf %15 : vector<2x128xf32> to vector<2x128xbf16>
    %c1 = arith.constant 1 : index
    %c0_6 = arith.constant 0 : index
    %c0_7 = arith.constant 0 : index
    %17 = vector.load %arg7[%c1, %c0_6, %c0_7] : memref<27x128x128xbf16, #tpu.memory_space<vmem>>, vector<1x128x128xbf16>
    %18 = vector.shape_cast %17 : vector<1x128x128xbf16> to vector<128x128xbf16>
    %cst_8 = arith.constant dense<0.000000e+00> : vector<2x128xf32>
    %19 = tpu.matmul %16, %18, %cst_8 {dimension_numbers = #tpu.dot_dimension_numbers<[1], [0], [0], [1], [0, 0, 1, 1], [], []>} : vector<2x128xbf16>, vector<128x128xbf16>, vector<2x128xf32> -> vector<2x128xf32>
    %20 = arith.addf %12, %19 : vector<2x128xf32>
    %c60_i32 = arith.constant 60 : i32
    %21 = arith.addi %3, %c60_i32 : i32
    %22 = arith.index_cast %21 : i32 to index
    %c0_9 = arith.constant 0 : index
    %23 = vector.load %arg11[%22, %c0_9] : memref<384x128xf32, #tpu.memory_space<vmem>>, vector<2x128xf32>
    %24 = arith.truncf %23 : vector<2x128xf32> to vector<2x128xbf16>
    %c2 = arith.constant 2 : index
    %c0_10 = arith.constant 0 : index
    %c0_11 = arith.constant 0 : index
    %25 = vector.load %arg7[%c2, %c0_10, %c0_11] : memref<27x128x128xbf16, #tpu.memory_space<vmem>>, vector<1x128x128xbf16>
    %26 = vector.shape_cast %25 : vector<1x128x128xbf16> to vector<128x128xbf16>
    %cst_12 = arith.constant dense<0.000000e+00> : vector<2x128xf32>
    %27 = tpu.matmul %24, %26, %cst_12 {dimension_numbers = #tpu.dot_dimension_numbers<[1], [0], [0], [1], [0, 0, 1, 1], [], []>} : vector<2x128xbf16>, vector<128x128xbf16>, vector<2x128xf32> -> vector<2x128xf32>
    %28 = arith.addf %20, %27 : vector<2x128xf32>
    %c62_i32 = arith.constant 62 : i32
    %29 = arith.addi %3, %c62_i32 : i32
    %30 = arith.index_cast %29 : i32 to index
    %c0_13 = arith.constant 0 : index
    %31 = vector.load %arg11[%30, %c0_13] : memref<384x128xf32, #tpu.memory_space<vmem>>, vector<2x128xf32>
    %32 = arith.truncf %31 : vector<2x128xf32> to vector<2x128xbf16>
    %c3 = arith.constant 3 : index
    %c0_14 = arith.constant 0 : index
    %c0_15 = arith.constant 0 : index
    %33 = vector.load %arg7[%c3, %c0_14, %c0_15] : memref<27x128x128xbf16, #tpu.memory_space<vmem>>, vector<1x128x128xbf16>
    %34 = vector.shape_cast %33 : vector<1x128x128xbf16> to vector<128x128xbf16>
    %cst_16 = arith.constant dense<0.000000e+00> : vector<2x128xf32>
    %35 = tpu.matmul %32, %34, %cst_16 {dimension_numbers = #tpu.dot_dimension_numbers<[1], [0], [0], [1], [0, 0, 1, 1], [], []>} : vector<2x128xbf16>, vector<128x128xbf16>, vector<2x128xf32> -> vector<2x128xf32>
    %36 = arith.addf %28, %35 : vector<2x128xf32>
    %c64_i32 = arith.constant 64 : i32
    %37 = arith.addi %3, %c64_i32 : i32
    %38 = arith.index_cast %37 : i32 to index
    %c0_17 = arith.constant 0 : index
    %39 = vector.load %arg11[%38, %c0_17] : memref<384x128xf32, #tpu.memory_space<vmem>>, vector<2x128xf32>
    %40 = arith.truncf %39 : vector<2x128xf32> to vector<2x128xbf16>
    %c4 = arith.constant 4 : index
    %c0_18 = arith.constant 0 : index
    %c0_19 = arith.constant 0 : index
    %41 = vector.load %arg7[%c4, %c0_18, %c0_19] : memref<27x128x128xbf16, #tpu.memory_space<vmem>>, vector<1x128x128xbf16>
    %42 = vector.shape_cast %41 : vector<1x128x128xbf16> to vector<128x128xbf16>
    %cst_20 = arith.constant dense<0.000000e+00> : vector<2x128xf32>
    %43 = tpu.matmul %40, %42, %cst_20 {dimension_numbers = #tpu.dot_dimension_numbers<[1], [0], [0], [1], [0, 0, 1, 1], [], []>} : vector<2x128xbf16>, vector<128x128xbf16>, vector<2x128xf32> -> vector<2x128xf32>
    %44 = arith.addf %36, %43 : vector<2x128xf32>
    %c66_i32 = arith.constant 66 : i32
    %45 = arith.addi %3, %c66_i32 : i32
    %46 = arith.index_cast %45 : i32 to index
    %c0_21 = arith.constant 0 : index
    %47 = vector.load %arg11[%46, %c0_21] : memref<384x128xf32, #tpu.memory_space<vmem>>, vector<2x128xf32>
    %48 = arith.truncf %47 : vector<2x128xf32> to vector<2x128xbf16>
    %c5 = arith.constant 5 : index
    %c0_22 = arith.constant 0 : index
    %c0_23 = arith.constant 0 : index
    %49 = vector.load %arg7[%c5, %c0_22, %c0_23] : memref<27x128x128xbf16, #tpu.memory_space<vmem>>, vector<1x128x128xbf16>
    %50 = vector.shape_cast %49 : vector<1x128x128xbf16> to vector<128x128xbf16>
    %cst_24 = arith.constant dense<0.000000e+00> : vector<2x128xf32>
    %51 = tpu.matmul %48, %50, %cst_24 {dimension_numbers = #tpu.dot_dimension_numbers<[1], [0], [0], [1], [0, 0, 1, 1], [], []>} : vector<2x128xbf16>, vector<128x128xbf16>, vector<2x128xf32> -> vector<2x128xf32>
    %52 = arith.addf %44, %51 : vector<2x128xf32>
    %c68_i32 = arith.constant 68 : i32
    %53 = arith.addi %3, %c68_i32 : i32
    %54 = arith.index_cast %53 : i32 to index
    %c0_25 = arith.constant 0 : index
    %55 = vector.load %arg11[%54, %c0_25] : memref<384x128xf32, #tpu.memory_space<vmem>>, vector<2x128xf32>
    %56 = arith.truncf %55 : vector<2x128xf32> to vector<2x128xbf16>
    %c6 = arith.constant 6 : index
    %c0_26 = arith.constant 0 : index
    %c0_27 = arith.constant 0 : index
    %57 = vector.load %arg7[%c6, %c0_26, %c0_27] : memref<27x128x128xbf16, #tpu.memory_space<vmem>>, vector<1x128x128xbf16>
    %58 = vector.shape_cast %57 : vector<1x128x128xbf16> to vector<128x128xbf16>
    %cst_28 = arith.constant dense<0.000000e+00> : vector<2x128xf32>
    %59 = tpu.matmul %56, %58, %cst_28 {dimension_numbers = #tpu.dot_dimension_numbers<[1], [0], [0], [1], [0, 0, 1, 1], [], []>} : vector<2x128xbf16>, vector<128x128xbf16>, vector<2x128xf32> -> vector<2x128xf32>
    %60 = arith.addf %52, %59 : vector<2x128xf32>
    %c70_i32 = arith.constant 70 : i32
    %61 = arith.addi %3, %c70_i32 : i32
    %62 = arith.index_cast %61 : i32 to index
    %c0_29 = arith.constant 0 : index
    %63 = vector.load %arg11[%62, %c0_29] : memref<384x128xf32, #tpu.memory_space<vmem>>, vector<2x128xf32>
    %64 = arith.truncf %63 : vector<2x128xf32> to vector<2x128xbf16>
    %c7 = arith.constant 7 : index
    %c0_30 = arith.constant 0 : index
    %c0_31 = arith.constant 0 : index
    %65 = vector.load %arg7[%c7, %c0_30, %c0_31] : memref<27x128x128xbf16, #tpu.memory_space<vmem>>, vector<1x128x128xbf16>
    %66 = vector.shape_cast %65 : vector<1x128x128xbf16> to vector<128x128xbf16>
    %cst_32 = arith.constant dense<0.000000e+00> : vector<2x128xf32>
    %67 = tpu.matmul %64, %66, %cst_32 {dimension_numbers = #tpu.dot_dimension_numbers<[1], [0], [0], [1], [0, 0, 1, 1], [], []>} : vector<2x128xbf16>, vector<128x128xbf16>, vector<2x128xf32> -> vector<2x128xf32>
    %68 = arith.addf %60, %67 : vector<2x128xf32>
    %c72_i32 = arith.constant 72 : i32
    %69 = arith.addi %3, %c72_i32 : i32
    %70 = arith.index_cast %69 : i32 to index
    %c0_33 = arith.constant 0 : index
    %71 = vector.load %arg11[%70, %c0_33] : memref<384x128xf32, #tpu.memory_space<vmem>>, vector<2x128xf32>
    %72 = arith.truncf %71 : vector<2x128xf32> to vector<2x128xbf16>
    %c8 = arith.constant 8 : index
    %c0_34 = arith.constant 0 : index
    %c0_35 = arith.constant 0 : index
    %73 = vector.load %arg7[%c8, %c0_34, %c0_35] : memref<27x128x128xbf16, #tpu.memory_space<vmem>>, vector<1x128x128xbf16>
    %74 = vector.shape_cast %73 : vector<1x128x128xbf16> to vector<128x128xbf16>
    %cst_36 = arith.constant dense<0.000000e+00> : vector<2x128xf32>
    %75 = tpu.matmul %72, %74, %cst_36 {dimension_numbers = #tpu.dot_dimension_numbers<[1], [0], [0], [1], [0, 0, 1, 1], [], []>} : vector<2x128xbf16>, vector<128x128xbf16>, vector<2x128xf32> -> vector<2x128xf32>
    %76 = arith.addf %68, %75 : vector<2x128xf32>
    %c82_i32 = arith.constant 82 : i32
    %77 = arith.addi %3, %c82_i32 : i32
    %78 = arith.index_cast %77 : i32 to index
    %c0_37 = arith.constant 0 : index
    %79 = vector.load %arg11[%78, %c0_37] : memref<384x128xf32, #tpu.memory_space<vmem>>, vector<2x128xf32>
    %80 = arith.truncf %79 : vector<2x128xf32> to vector<2x128xbf16>
    %c9 = arith.constant 9 : index
    %c0_38 = arith.constant 0 : index
    %c0_39 = arith.constant 0 : index
    %81 = vector.load %arg7[%c9, %c0_38, %c0_39] : memref<27x128x128xbf16, #tpu.memory_space<vmem>>, vector<1x128x128xbf16>
    %82 = vector.shape_cast %81 : vector<1x128x128xbf16> to vector<128x128xbf16>
    %cst_40 = arith.constant dense<0.000000e+00> : vector<2x128xf32>
    %83 = tpu.matmul %80, %82, %cst_40 {dimension_numbers = #tpu.dot_dimension_numbers<[1], [0], [0], [1], [0, 0, 1, 1], [], []>} : vector<2x128xbf16>, vector<128x128xbf16>, vector<2x128xf32> -> vector<2x128xf32>
    %84 = arith.addf %76, %83 : vector<2x128xf32>
    %c84_i32 = arith.constant 84 : i32
    %85 = arith.addi %3, %c84_i32 : i32
    %86 = arith.index_cast %85 : i32 to index
    %c0_41 = arith.constant 0 : index
    %87 = vector.load %arg11[%86, %c0_41] : memref<384x128xf32, #tpu.memory_space<vmem>>, vector<2x128xf32>
    %88 = arith.truncf %87 : vector<2x128xf32> to vector<2x128xbf16>
    %c10 = arith.constant 10 : index
    %c0_42 = arith.constant 0 : index
    %c0_43 = arith.constant 0 : index
    %89 = vector.load %arg7[%c10, %c0_42, %c0_43] : memref<27x128x128xbf16, #tpu.memory_space<vmem>>, vector<1x128x128xbf16>
    %90 = vector.shape_cast %89 : vector<1x128x128xbf16> to vector<128x128xbf16>
    %cst_44 = arith.constant dense<0.000000e+00> : vector<2x128xf32>
    %91 = tpu.matmul %88, %90, %cst_44 {dimension_numbers = #tpu.dot_dimension_numbers<[1], [0], [0], [1], [0, 0, 1, 1], [], []>} : vector<2x128xbf16>, vector<128x128xbf16>, vector<2x128xf32> -> vector<2x128xf32>
    %92 = arith.addf %84, %91 : vector<2x128xf32>
    %c86_i32 = arith.constant 86 : i32
    %93 = arith.addi %3, %c86_i32 : i32
    %94 = arith.index_cast %93 : i32 to index
    %c0_45 = arith.constant 0 : index
    %95 = vector.load %arg11[%94, %c0_45] : memref<384x128xf32, #tpu.memory_space<vmem>>, vector<2x128xf32>
    %96 = arith.truncf %95 : vector<2x128xf32> to vector<2x128xbf16>
    %c11 = arith.constant 11 : index
    %c0_46 = arith.constant 0 : index
    %c0_47 = arith.constant 0 : index
    %97 = vector.load %arg7[%c11, %c0_46, %c0_47] : memref<27x128x128xbf16, #tpu.memory_space<vmem>>, vector<1x128x128xbf16>
    %98 = vector.shape_cast %97 : vector<1x128x128xbf16> to vector<128x128xbf16>
    %cst_48 = arith.constant dense<0.000000e+00> : vector<2x128xf32>
    %99 = tpu.matmul %96, %98, %cst_48 {dimension_numbers = #tpu.dot_dimension_numbers<[1], [0], [0], [1], [0, 0, 1, 1], [], []>} : vector<2x128xbf16>, vector<128x128xbf16>, vector<2x128xf32> -> vector<2x128xf32>
    %100 = arith.addf %92, %99 : vector<2x128xf32>
    %c88_i32 = arith.constant 88 : i32
    %101 = arith.addi %3, %c88_i32 : i32
    %102 = arith.index_cast %101 : i32 to index
    %c0_49 = arith.constant 0 : index
    %103 = vector.load %arg11[%102, %c0_49] : memref<384x128xf32, #tpu.memory_space<vmem>>, vector<2x128xf32>
    %104 = arith.truncf %103 : vector<2x128xf32> to vector<2x128xbf16>
    %c12 = arith.constant 12 : index
    %c0_50 = arith.constant 0 : index
    %c0_51 = arith.constant 0 : index
    %105 = vector.load %arg7[%c12, %c0_50, %c0_51] : memref<27x128x128xbf16, #tpu.memory_space<vmem>>, vector<1x128x128xbf16>
    %106 = vector.shape_cast %105 : vector<1x128x128xbf16> to vector<128x128xbf16>
    %cst_52 = arith.constant dense<0.000000e+00> : vector<2x128xf32>
    %107 = tpu.matmul %104, %106, %cst_52 {dimension_numbers = #tpu.dot_dimension_numbers<[1], [0], [0], [1], [0, 0, 1, 1], [], []>} : vector<2x128xbf16>, vector<128x128xbf16>, vector<2x128xf32> -> vector<2x128xf32>
    %108 = arith.addf %100, %107 : vector<2x128xf32>
    %c90_i32 = arith.constant 90 : i32
    %109 = arith.addi %3, %c90_i32 : i32
    %110 = arith.index_cast %109 : i32 to index
    %c0_53 = arith.constant 0 : index
    %111 = vector.load %arg11[%110, %c0_53] : memref<384x128xf32, #tpu.memory_space<vmem>>, vector<2x128xf32>
    %112 = arith.truncf %111 : vector<2x128xf32> to vector<2x128xbf16>
    %c13 = arith.constant 13 : index
    %c0_54 = arith.constant 0 : index
    %c0_55 = arith.constant 0 : index
    %113 = vector.load %arg7[%c13, %c0_54, %c0_55] : memref<27x128x128xbf16, #tpu.memory_space<vmem>>, vector<1x128x128xbf16>
    %114 = vector.shape_cast %113 : vector<1x128x128xbf16> to vector<128x128xbf16>
    %cst_56 = arith.constant dense<0.000000e+00> : vector<2x128xf32>
    %115 = tpu.matmul %112, %114, %cst_56 {dimension_numbers = #tpu.dot_dimension_numbers<[1], [0], [0], [1], [0, 0, 1, 1], [], []>} : vector<2x128xbf16>, vector<128x128xbf16>, vector<2x128xf32> -> vector<2x128xf32>
    %116 = arith.addf %108, %115 : vector<2x128xf32>
    %c92_i32 = arith.constant 92 : i32
    %117 = arith.addi %3, %c92_i32 : i32
    %118 = arith.index_cast %117 : i32 to index
    %c0_57 = arith.constant 0 : index
    %119 = vector.load %arg11[%118, %c0_57] : memref<384x128xf32, #tpu.memory_space<vmem>>, vector<2x128xf32>
    %120 = arith.truncf %119 : vector<2x128xf32> to vector<2x128xbf16>
    %c14 = arith.constant 14 : index
    %c0_58 = arith.constant 0 : index
    %c0_59 = arith.constant 0 : index
    %121 = vector.load %arg7[%c14, %c0_58, %c0_59] : memref<27x128x128xbf16, #tpu.memory_space<vmem>>, vector<1x128x128xbf16>
    %122 = vector.shape_cast %121 : vector<1x128x128xbf16> to vector<128x128xbf16>
    %cst_60 = arith.constant dense<0.000000e+00> : vector<2x128xf32>
    %123 = tpu.matmul %120, %122, %cst_60 {dimension_numbers = #tpu.dot_dimension_numbers<[1], [0], [0], [1], [0, 0, 1, 1], [], []>} : vector<2x128xbf16>, vector<128x128xbf16>, vector<2x128xf32> -> vector<2x128xf32>
    %124 = arith.addf %116, %123 : vector<2x128xf32>
    %c94_i32 = arith.constant 94 : i32
    %125 = arith.addi %3, %c94_i32 : i32
    %126 = arith.index_cast %125 : i32 to index
    %c0_61 = arith.constant 0 : index
    %127 = vector.load %arg11[%126, %c0_61] : memref<384x128xf32, #tpu.memory_space<vmem>>, vector<2x128xf32>
    %128 = arith.truncf %127 : vector<2x128xf32> to vector<2x128xbf16>
    %c15 = arith.constant 15 : index
    %c0_62 = arith.constant 0 : index
    %c0_63 = arith.constant 0 : index
    %129 = vector.load %arg7[%c15, %c0_62, %c0_63] : memref<27x128x128xbf16, #tpu.memory_space<vmem>>, vector<1x128x128xbf16>
    %130 = vector.shape_cast %129 : vector<1x128x128xbf16> to vector<128x128xbf16>
    %cst_64 = arith.constant dense<0.000000e+00> : vector<2x128xf32>
    %131 = tpu.matmul %128, %130, %cst_64 {dimension_numbers = #tpu.dot_dimension_numbers<[1], [0], [0], [1], [0, 0, 1, 1], [], []>} : vector<2x128xbf16>, vector<128x128xbf16>, vector<2x128xf32> -> vector<2x128xf32>
    %132 = arith.addf %124, %131 : vector<2x128xf32>
    %c96_i32 = arith.constant 96 : i32
    %133 = arith.addi %3, %c96_i32 : i32
    %134 = arith.index_cast %133 : i32 to index
    %c0_65 = arith.constant 0 : index
    %135 = vector.load %arg11[%134, %c0_65] : memref<384x128xf32, #tpu.memory_space<vmem>>, vector<2x128xf32>
    %136 = arith.truncf %135 : vector<2x128xf32> to vector<2x128xbf16>
    %c16 = arith.constant 16 : index
    %c0_66 = arith.constant 0 : index
    %c0_67 = arith.constant 0 : index
    %137 = vector.load %arg7[%c16, %c0_66, %c0_67] : memref<27x128x128xbf16, #tpu.memory_space<vmem>>, vector<1x128x128xbf16>
    %138 = vector.shape_cast %137 : vector<1x128x128xbf16> to vector<128x128xbf16>
    %cst_68 = arith.constant dense<0.000000e+00> : vector<2x128xf32>
    %139 = tpu.matmul %136, %138, %cst_68 {dimension_numbers = #tpu.dot_dimension_numbers<[1], [0], [0], [1], [0, 0, 1, 1], [], []>} : vector<2x128xbf16>, vector<128x128xbf16>, vector<2x128xf32> -> vector<2x128xf32>
    %140 = arith.addf %132, %139 : vector<2x128xf32>
    %c98_i32 = arith.constant 98 : i32
    %141 = arith.addi %3, %c98_i32 : i32
    %142 = arith.index_cast %141 : i32 to index
    %c0_69 = arith.constant 0 : index
    %143 = vector.load %arg11[%142, %c0_69] : memref<384x128xf32, #tpu.memory_space<vmem>>, vector<2x128xf32>
    %144 = arith.truncf %143 : vector<2x128xf32> to vector<2x128xbf16>
    %c17 = arith.constant 17 : index
    %c0_70 = arith.constant 0 : index
    %c0_71 = arith.constant 0 : index
    %145 = vector.load %arg7[%c17, %c0_70, %c0_71] : memref<27x128x128xbf16, #tpu.memory_space<vmem>>, vector<1x128x128xbf16>
    %146 = vector.shape_cast %145 : vector<1x128x128xbf16> to vector<128x128xbf16>
    %cst_72 = arith.constant dense<0.000000e+00> : vector<2x128xf32>
    %147 = tpu.matmul %144, %146, %cst_72 {dimension_numbers = #tpu.dot_dimension_numbers<[1], [0], [0], [1], [0, 0, 1, 1], [], []>} : vector<2x128xbf16>, vector<128x128xbf16>, vector<2x128xf32> -> vector<2x128xf32>
    %148 = arith.addf %140, %147 : vector<2x128xf32>
    %c108_i32 = arith.constant 108 : i32
    %149 = arith.addi %3, %c108_i32 : i32
    %150 = arith.index_cast %149 : i32 to index
    %c0_73 = arith.constant 0 : index
    %151 = vector.load %arg11[%150, %c0_73] : memref<384x128xf32, #tpu.memory_space<vmem>>, vector<2x128xf32>
    %152 = arith.truncf %151 : vector<2x128xf32> to vector<2x128xbf16>
    %c18 = arith.constant 18 : index
    %c0_74 = arith.constant 0 : index
    %c0_75 = arith.constant 0 : index
    %153 = vector.load %arg7[%c18, %c0_74, %c0_75] : memref<27x128x128xbf16, #tpu.memory_space<vmem>>, vector<1x128x128xbf16>
    %154 = vector.shape_cast %153 : vector<1x128x128xbf16> to vector<128x128xbf16>
    %cst_76 = arith.constant dense<0.000000e+00> : vector<2x128xf32>
    %155 = tpu.matmul %152, %154, %cst_76 {dimension_numbers = #tpu.dot_dimension_numbers<[1], [0], [0], [1], [0, 0, 1, 1], [], []>} : vector<2x128xbf16>, vector<128x128xbf16>, vector<2x128xf32> -> vector<2x128xf32>
    %156 = arith.addf %148, %155 : vector<2x128xf32>
    %c110_i32 = arith.constant 110 : i32
    %157 = arith.addi %3, %c110_i32 : i32
    %158 = arith.index_cast %157 : i32 to index
    %c0_77 = arith.constant 0 : index
    %159 = vector.load %arg11[%158, %c0_77] : memref<384x128xf32, #tpu.memory_space<vmem>>, vector<2x128xf32>
    %160 = arith.truncf %159 : vector<2x128xf32> to vector<2x128xbf16>
    %c19 = arith.constant 19 : index
    %c0_78 = arith.constant 0 : index
    %c0_79 = arith.constant 0 : index
    %161 = vector.load %arg7[%c19, %c0_78, %c0_79] : memref<27x128x128xbf16, #tpu.memory_space<vmem>>, vector<1x128x128xbf16>
    %162 = vector.shape_cast %161 : vector<1x128x128xbf16> to vector<128x128xbf16>
    %cst_80 = arith.constant dense<0.000000e+00> : vector<2x128xf32>
    %163 = tpu.matmul %160, %162, %cst_80 {dimension_numbers = #tpu.dot_dimension_numbers<[1], [0], [0], [1], [0, 0, 1, 1], [], []>} : vector<2x128xbf16>, vector<128x128xbf16>, vector<2x128xf32> -> vector<2x128xf32>
    %164 = arith.addf %156, %163 : vector<2x128xf32>
    %c112_i32 = arith.constant 112 : i32
    %165 = arith.addi %3, %c112_i32 : i32
    %166 = arith.index_cast %165 : i32 to index
    %c0_81 = arith.constant 0 : index
    %167 = vector.load %arg11[%166, %c0_81] : memref<384x128xf32, #tpu.memory_space<vmem>>, vector<2x128xf32>
    %168 = arith.truncf %167 : vector<2x128xf32> to vector<2x128xbf16>
    %c20 = arith.constant 20 : index
    %c0_82 = arith.constant 0 : index
    %c0_83 = arith.constant 0 : index
    %169 = vector.load %arg7[%c20, %c0_82, %c0_83] : memref<27x128x128xbf16, #tpu.memory_space<vmem>>, vector<1x128x128xbf16>
    %170 = vector.shape_cast %169 : vector<1x128x128xbf16> to vector<128x128xbf16>
    %cst_84 = arith.constant dense<0.000000e+00> : vector<2x128xf32>
    %171 = tpu.matmul %168, %170, %cst_84 {dimension_numbers = #tpu.dot_dimension_numbers<[1], [0], [0], [1], [0, 0, 1, 1], [], []>} : vector<2x128xbf16>, vector<128x128xbf16>, vector<2x128xf32> -> vector<2x128xf32>
    %172 = arith.addf %164, %171 : vector<2x128xf32>
    %c114_i32 = arith.constant 114 : i32
    %173 = arith.addi %3, %c114_i32 : i32
    %174 = arith.index_cast %173 : i32 to index
    %c0_85 = arith.constant 0 : index
    %175 = vector.load %arg11[%174, %c0_85] : memref<384x128xf32, #tpu.memory_space<vmem>>, vector<2x128xf32>
    %176 = arith.truncf %175 : vector<2x128xf32> to vector<2x128xbf16>
    %c21 = arith.constant 21 : index
    %c0_86 = arith.constant 0 : index
    %c0_87 = arith.constant 0 : index
    %177 = vector.load %arg7[%c21, %c0_86, %c0_87] : memref<27x128x128xbf16, #tpu.memory_space<vmem>>, vector<1x128x128xbf16>
    %178 = vector.shape_cast %177 : vector<1x128x128xbf16> to vector<128x128xbf16>
    %cst_88 = arith.constant dense<0.000000e+00> : vector<2x128xf32>
    %179 = tpu.matmul %176, %178, %cst_88 {dimension_numbers = #tpu.dot_dimension_numbers<[1], [0], [0], [1], [0, 0, 1, 1], [], []>} : vector<2x128xbf16>, vector<128x128xbf16>, vector<2x128xf32> -> vector<2x128xf32>
    %180 = arith.addf %172, %179 : vector<2x128xf32>
    %c116_i32 = arith.constant 116 : i32
    %181 = arith.addi %3, %c116_i32 : i32
    %182 = arith.index_cast %181 : i32 to index
    %c0_89 = arith.constant 0 : index
    %183 = vector.load %arg11[%182, %c0_89] : memref<384x128xf32, #tpu.memory_space<vmem>>, vector<2x128xf32>
    %184 = arith.truncf %183 : vector<2x128xf32> to vector<2x128xbf16>
    %c22 = arith.constant 22 : index
    %c0_90 = arith.constant 0 : index
    %c0_91 = arith.constant 0 : index
    %185 = vector.load %arg7[%c22, %c0_90, %c0_91] : memref<27x128x128xbf16, #tpu.memory_space<vmem>>, vector<1x128x128xbf16>
    %186 = vector.shape_cast %185 : vector<1x128x128xbf16> to vector<128x128xbf16>
    %cst_92 = arith.constant dense<0.000000e+00> : vector<2x128xf32>
    %187 = tpu.matmul %184, %186, %cst_92 {dimension_numbers = #tpu.dot_dimension_numbers<[1], [0], [0], [1], [0, 0, 1, 1], [], []>} : vector<2x128xbf16>, vector<128x128xbf16>, vector<2x128xf32> -> vector<2x128xf32>
    %188 = arith.addf %180, %187 : vector<2x128xf32>
    %c118_i32 = arith.constant 118 : i32
    %189 = arith.addi %3, %c118_i32 : i32
    %190 = arith.index_cast %189 : i32 to index
    %c0_93 = arith.constant 0 : index
    %191 = vector.load %arg11[%190, %c0_93] : memref<384x128xf32, #tpu.memory_space<vmem>>, vector<2x128xf32>
    %192 = arith.truncf %191 : vector<2x128xf32> to vector<2x128xbf16>
    %c23 = arith.constant 23 : index
    %c0_94 = arith.constant 0 : index
    %c0_95 = arith.constant 0 : index
    %193 = vector.load %arg7[%c23, %c0_94, %c0_95] : memref<27x128x128xbf16, #tpu.memory_space<vmem>>, vector<1x128x128xbf16>
    %194 = vector.shape_cast %193 : vector<1x128x128xbf16> to vector<128x128xbf16>
    %cst_96 = arith.constant dense<0.000000e+00> : vector<2x128xf32>
    %195 = tpu.matmul %192, %194, %cst_96 {dimension_numbers = #tpu.dot_dimension_numbers<[1], [0], [0], [1], [0, 0, 1, 1], [], []>} : vector<2x128xbf16>, vector<128x128xbf16>, vector<2x128xf32> -> vector<2x128xf32>
    %196 = arith.addf %188, %195 : vector<2x128xf32>
    %c120_i32 = arith.constant 120 : i32
    %197 = arith.addi %3, %c120_i32 : i32
    %198 = arith.index_cast %197 : i32 to index
    %c0_97 = arith.constant 0 : index
    %199 = vector.load %arg11[%198, %c0_97] : memref<384x128xf32, #tpu.memory_space<vmem>>, vector<2x128xf32>
    %200 = arith.truncf %199 : vector<2x128xf32> to vector<2x128xbf16>
    %c24 = arith.constant 24 : index
    %c0_98 = arith.constant 0 : index
    %c0_99 = arith.constant 0 : index
    %201 = vector.load %arg7[%c24, %c0_98, %c0_99] : memref<27x128x128xbf16, #tpu.memory_space<vmem>>, vector<1x128x128xbf16>
    %202 = vector.shape_cast %201 : vector<1x128x128xbf16> to vector<128x128xbf16>
    %cst_100 = arith.constant dense<0.000000e+00> : vector<2x128xf32>
    %203 = tpu.matmul %200, %202, %cst_100 {dimension_numbers = #tpu.dot_dimension_numbers<[1], [0], [0], [1], [0, 0, 1, 1], [], []>} : vector<2x128xbf16>, vector<128x128xbf16>, vector<2x128xf32> -> vector<2x128xf32>
    %204 = arith.addf %196, %203 : vector<2x128xf32>
    %c122_i32 = arith.constant 122 : i32
    %205 = arith.addi %3, %c122_i32 : i32
    %206 = arith.index_cast %205 : i32 to index
    %c0_101 = arith.constant 0 : index
    %207 = vector.load %arg11[%206, %c0_101] : memref<384x128xf32, #tpu.memory_space<vmem>>, vector<2x128xf32>
    %208 = arith.truncf %207 : vector<2x128xf32> to vector<2x128xbf16>
    %c25 = arith.constant 25 : index
    %c0_102 = arith.constant 0 : index
    %c0_103 = arith.constant 0 : index
    %209 = vector.load %arg7[%c25, %c0_102, %c0_103] : memref<27x128x128xbf16, #tpu.memory_space<vmem>>, vector<1x128x128xbf16>
    %210 = vector.shape_cast %209 : vector<1x128x128xbf16> to vector<128x128xbf16>
    %cst_104 = arith.constant dense<0.000000e+00> : vector<2x128xf32>
    %211 = tpu.matmul %208, %210, %cst_104 {dimension_numbers = #tpu.dot_dimension_numbers<[1], [0], [0], [1], [0, 0, 1, 1], [], []>} : vector<2x128xbf16>, vector<128x128xbf16>, vector<2x128xf32> -> vector<2x128xf32>
    %212 = arith.addf %204, %211 : vector<2x128xf32>
    %c124_i32 = arith.constant 124 : i32
    %213 = arith.addi %3, %c124_i32 : i32
    %214 = arith.index_cast %213 : i32 to index
    %c0_105 = arith.constant 0 : index
    %215 = vector.load %arg11[%214, %c0_105] : memref<384x128xf32, #tpu.memory_space<vmem>>, vector<2x128xf32>
    %216 = arith.truncf %215 : vector<2x128xf32> to vector<2x128xbf16>
    %c26 = arith.constant 26 : index
    %c0_106 = arith.constant 0 : index
    %c0_107 = arith.constant 0 : index
    %217 = vector.load %arg7[%c26, %c0_106, %c0_107] : memref<27x128x128xbf16, #tpu.memory_space<vmem>>, vector<1x128x128xbf16>
    %218 = vector.shape_cast %217 : vector<1x128x128xbf16> to vector<128x128xbf16>
    %cst_108 = arith.constant dense<0.000000e+00> : vector<2x128xf32>
    %219 = tpu.matmul %216, %218, %cst_108 {dimension_numbers = #tpu.dot_dimension_numbers<[1], [0], [0], [1], [0, 0, 1, 1], [], []>} : vector<2x128xbf16>, vector<128x128xbf16>, vector<2x128xf32> -> vector<2x128xf32>
    %220 = arith.addf %212, %219 : vector<2x128xf32>
    %c0_109 = arith.constant 0 : index
    %c0_110 = arith.constant 0 : index
    %221 = vector.load %arg12[%c0_109, %c0_110] : memref<2x128xf32, #tpu.memory_space<vmem>>, vector<2x128xf32>
    %222 = arith.addf %221, %220 : vector<2x128xf32>
    %c0_111 = arith.constant 0 : index
    %c0_112 = arith.constant 0 : index
    %223 = vector.load %arg12[%c0_111, %c0_112] : memref<2x128xf32, #tpu.memory_space<vmem>>, vector<2x128xf32>
    tpu.vector_store %arg12[%c0_111, %c0_112], %222 {strides = array<i32>} : memref<2x128xf32, #tpu.memory_space<vmem>>, vector<2x128xf32>,
    %c2_i32 = arith.constant 2 : i32
    %224 = arith.cmpi eq, %arg0, %c2_i32 : i32
    %225 = arith.extui %224 : i1 to i32
    %c0_i32_113 = arith.constant 0 : i32
    %226 = arith.cmpi ne, %225, %c0_i32_113 : i32
    scf.if %226 {
      %c0_114 = arith.constant 0 : index
      %c0_115 = arith.constant 0 : index
      %227 = vector.load %arg12[%c0_114, %c0_115] : memref<2x128xf32, #tpu.memory_space<vmem>>, vector<2x128xf32>
      %cst_116 = arith.constant dense<0xFF800000> : vector<2xf32>
      %228 = vector.multi_reduction <maximumf>, %227, %cst_116 [1] : vector<2x128xf32> to vector<2xf32>
      %229 = vector.shape_cast %228 : vector<2xf32> to vector<2x1xf32>
      %230 = vector.broadcast %229 : vector<2x1xf32> to vector<2x128xf32>
      %231 = arith.subf %227, %230 : vector<2x128xf32>
      %232 = math.exp %231 : vector<2x128xf32>
      %cst_117 = arith.constant dense<0.000000e+00> : vector<2xf32>
      %233 = vector.multi_reduction <add>, %232, %cst_117 [1] : vector<2x128xf32> to vector<2xf32>
      %234 = vector.shape_cast %233 : vector<2xf32> to vector<2x1xf32>
      %235 = vector.broadcast %234 : vector<2x1xf32> to vector<2x128xf32>
      %236 = arith.divf %232, %235 : vector<2x128xf32>
      %c0_118 = arith.constant 0 : index
      %c0_119 = arith.constant 0 : index
      %237 = vector.load %arg9[%c0_118, %c0_119] : memref<2x128xf32, #tpu.memory_space<vmem>>, vector<2x128xf32>
      tpu.vector_store %arg9[%c0_118, %c0_119], %236 {strides = array<i32>} : memref<2x128xf32, #tpu.memory_space<vmem>>, vector<2x128xf32>,
    } else {
    }
    return
  }
  func.func @transform_0(%arg0: i32) -> (i32, i32) {
    %c0_i32 = arith.constant 0 : i32
    %c0_i32_0 = arith.constant 0 : i32
    %c0_i32_1 = arith.constant 0 : i32
    return %c0_i32, %c0_i32_0 : i32, i32
  }
  func.func @transform_1(%arg0: i32) -> (i32, i32) {
    %c0_i32 = arith.constant 0 : i32
    %c0_i32_0 = arith.constant 0 : i32
    %c0_i32_1 = arith.constant 0 : i32
    return %c0_i32, %c0_i32_0 : i32, i32
  }
  func.func @transform_2(%arg0: i32) -> (i32, i32) {
    %c0_i32 = arith.constant 0 : i32
    %c0_i32_0 = arith.constant 0 : i32
    %c0_i32_1 = arith.constant 0 : i32
    return %c0_i32, %c0_i32_0 : i32, i32
  }
  func.func @transform_3(%arg0: i32) -> (i32, i32) {
    %c0_i32 = arith.constant 0 : i32
    %c0_i32_0 = arith.constant 0 : i32
    %c0_i32_1 = arith.constant 0 : i32
    return %c0_i32, %c0_i32_0 : i32, i32
  }
  func.func @transform_4(%arg0: i32) -> (i32, i32, i32) {
    %c0_i32 = arith.constant 0 : i32
    %c0_i32_0 = arith.constant 0 : i32
    %c0_i32_1 = arith.constant 0 : i32
    %c0_i32_2 = arith.constant 0 : i32
    return %c0_i32, %c0_i32_0, %c0_i32_1 : i32, i32, i32
  }
  func.func @transform_5(%arg0: i32) -> (i32, i32) {
    %c0_i32 = arith.constant 0 : i32
    %c0_i32_0 = arith.constant 0 : i32
    %c0_i32_1 = arith.constant 0 : i32
    return %c0_i32, %c0_i32_0 : i32, i32
  }
  func.func @transform_6(%arg0: i32) -> (i32, i32, i32) {
    %c0_i32 = arith.constant 0 : i32
    %c0_i32_0 = arith.constant 0 : i32
    %c0_i32_1 = arith.constant 0 : i32
    return %arg0, %c0_i32, %c0_i32_0 : i32, i32, i32
  }
  func.func @transform_7(%arg0: i32) -> (i32, i32) {
    %c0_i32 = arith.constant 0 : i32
    %c0_i32_0 = arith.constant 0 : i32
    %c0_i32_1 = arith.constant 0 : i32
    return %c0_i32, %c0_i32_0 : i32, i32
  }
  func.func @transform_8(%arg0: i32) -> (i32, i32) {
    %c0_i32 = arith.constant 0 : i32
    %c0_i32_0 = arith.constant 0 : i32
    %c0_i32_1 = arith.constant 0 : i32
    return %c0_i32, %c0_i32_0 : i32, i32
  }
}

</mosaic_0001>

<llo_original>
// kernel: dqn_forward.1
$region0: #{dqn_forward.1}
  #allocation0 [shape = 'u32[]', space=smem, size = 0x4, offset = 0x4, fixed_abs, tag = 'smem constant byte address 0x4 - core index']
  #allocation1 [shape = 'u32[144,128]{1,0:T(1,128)}', space=vmem, size = 0x12000, scoped, tag = 'internal scratch']
  #allocation2 [shape = 'bf16[448,128]{1,0:T(8,128)(2,1)}', space=vmem, size = 0x1c000, scoped, tag = 'scratch operand']
  #allocation3 [shape = 'f32[384,128]{1,0:T(8,128)}', space=vmem, size = 0x30000, scoped, tag = 'scratch operand']
  #allocation4 [shape = 'f32[2,128]{1,0:T(2,128)}', space=vmem, size = 0x400, scoped, tag = 'scratch operand']
  %s0 = inlined_call_operand.vmem [shape: bf16[384,128], index: 0, kind: input, shape index: {}]
  %s1 = inlined_call_operand.hbm [shape: f32[384,1], index: 1, kind: input, shape index: {}]
  %s2 = inlined_call_operand.hbm [shape: bf16[128,128], index: 2, kind: input, shape index: {}]
  %s3 = inlined_call_operand.hbm [shape: f32[1,128], index: 3, kind: input, shape index: {}]
  %s4 = inlined_call_operand.hbm [shape: bf16[9,128,128], index: 4, kind: input, shape index: {}]
  %s5 = inlined_call_operand.hbm [shape: f32[1,128], index: 5, kind: input, shape index: {}]
  %s6 = inlined_call_operand.hbm [shape: bf16[81,128,128], index: 6, kind: input, shape index: {}]
  %s7 = inlined_call_operand.hbm [shape: f32[1,128], index: 7, kind: input, shape index: {}]
  %s8 = inlined_call_operand.hbm [shape: f32[2,128], index: 8, kind: output, shape index: {}]
  %s9 = sld [smem:[#allocation0]]
  $region101: #{dqn_forward.1} parent=0
    _
  %s11 = ssub.s32 1, %s9
  %s12 = scalar_select 0, %s11, %s9
  $region1: #{dqn_forward.1} parent=0
    #allocation5 [shape = 'u8[196608]{0}', space=vmem, size = 0x30000, scoped, tag = 'input window, operand 1, single buffered']
    #allocation6 [shape = 's32[2]{0}', space=sflag, size = 0x8, scoped, tag = 'scoped memory for dqn_forward.1']
    #allocation7 [shape = 's32[2]{0}', space=sflag, size = 0x8, scoped, tag = 'scoped memory for dqn_forward.1']
    #allocation8 [shape = 'u8[32768]{0}', space=vmem, size = 0x8000, scoped, tag = 'input window, operand 2, single buffered']
    #allocation9 [shape = 's32[1]{0}', space=sflag, size = 0x4, scoped, tag = 'scoped memory for dqn_forward.1']
    #allocation10 [shape = 'u8[512]{0}', space=vmem, size = 0x400, scoped, tag = 'input window, operand 3, single buffered']
    #allocation11 [shape = 'u8[294912]{0}', space=vmem, size = 0x48000, scoped, tag = 'input window, operand 4, single buffered']
    #allocation12 [shape = 's32[1]{0}', space=sflag, size = 0x4, scoped, tag = 'scoped memory for dqn_forward.1']
    #allocation13 [shape = 'u8[512]{0}', space=vmem, size = 0x400, scoped, tag = 'input window, operand 5, single buffered']
    #allocation14 [shape = 'u8[1769472]{0}', space=vmem, size = 0x1b0000, scoped, tag = 'input window, operand 6']
    #allocation15 [shape = 's32[2]{0}', space=sflag, size = 0x8, scoped, tag = 'scoped memory for dqn_forward.1']
    #allocation16 [shape = 'u8[512]{0}', space=vmem, size = 0x400, scoped, tag = 'input window, operand 7, single buffered']
    #allocation17 [shape = 'u8[1024]{0}', space=vmem, size = 0x400, scoped, tag = 'output window, operand 0, single buffered']
    %13 = vsyncpa [#allocation6], 0
    %14 = vsyncpa [#allocation9], 0
    %15 = vsyncpa [#allocation12], 0
    %16 = vsyncpa [#allocation15], 0
    %s17 = scalar_lea.sflag [#allocation15], 1
    %18 = vsyncpa %s17, 0
    %19 = vsyncpa [#allocation7], 0
    loop: start=0, step=1, limit=5
    $region2: #{dqn_forward.1} parent=1 // loop_pre_header
      _
    $region3: #{dqn_forward.1} parent=1 // loop_header
      %s21 = sphi 0, %s25
      %p22 = scmp.ge.s32.totalorder %s21, 5
      %s29 = sphi 0, %s29
      %s31 = sphi 0, %s29
      %s32 = sphi 0, %s31
      %s46 = sphi 0, %s32
      %s50 = sphi 0, %s50
      %s52 = sphi 0, %s50
      %s53 = sphi 0, %s52
      %s67 = sphi 0, %s53
      %s71 = sphi 0, %s71
      %s73 = sphi 0, %s71
      %s74 = sphi 0, %s73
      %s88 = sphi 0, %s74
      %s92 = sphi 0, %s92
      %s94 = sphi 0, %s92
      %s95 = sphi 0, %s94
      %s109 = sphi 0, %s95
      %s113 = sphi 0, %s113
      %s115 = sphi 0, %s113
      %s116 = sphi 0, %s115
      %s130 = sphi 0, %s116
      %s134 = sphi 0, %s134
      %s136 = sphi 0, %s134
      %s137 = sphi 0, %s136
      %s151 = sphi 0, %s137
      %s157 = sphi 0, %s159
      %s160 = sphi 0, %s157
      %s161 = sphi 0, %s160
      %s177 = sphi 0, %s161
      %s181 = sphi 0, %s181
      %s183 = sphi 0, %s181
      %s184 = sphi 0, %s183
      %s198 = sphi 0, %s184
      %s202 = sphi 0, %s202
      %s204 = sphi 0, %s202
      %s205 = sphi 0, %s204
      %s219 = sphi 0, %s205
    $region4: #{dqn_forward.1} parent=1 // loop_header_branch
      %24 = sbr.rel (%p22) target = $region8
    $region5: #{dqn_forward.1} parent=1 // loop_body
      %s26 = ssub.s32 %s21, 1
      %s27 = ssub.s32 %s21, 2
      %s28 = sadd.s32 %s21, 1
      %s30 = sadd.s32 %s29, 1
      %p33 = scmp.eq.s32.totalorder %s21, 2
      %p34 = scmp.ne.s32.totalorder %s29, %s31
      %p35 = scmp.eq.s32.totalorder %s21, 0
      %p36 = por %p34, %p35
      %p37 = scmp.ne.s32.totalorder %s29, %s31
      %p38 = scmp.eq.s32.totalorder %s26, 2
      %p39 = por %p37, %p38
      %p40 = scmp.ne.s32.totalorder %s31, %s32
      %p41 = scmp.eq.s32.totalorder %s26, 0
      %p42 = por %p40, %p41
      %p43 = scmp.ne.s32.totalorder %s31, %s32
      %p44 = scmp.eq.s32.totalorder %s27, 2
      %p45 = por %p43, %p44
      %p47 = scmp.ne.s32.totalorder %s32, %s46
      %p48 = scmp.eq.s32.totalorder %s27, 0
      %p49 = por %p47, %p48
      %s51 = sadd.s32 %s50, 1
      %p54 = scmp.eq.s32.totalorder %s21, 2
      %p55 = scmp.ne.s32.totalorder %s50, %s52
      %p56 = scmp.eq.s32.totalorder %s21, 0
      %p57 = por %p55, %p56
      %p58 = scmp.ne.s32.totalorder %s50, %s52
      %p59 = scmp.eq.s32.totalorder %s26, 2
      %p60 = por %p58, %p59
      %p61 = scmp.ne.s32.totalorder %s52, %s53
      %p62 = scmp.eq.s32.totalorder %s26, 0
      %p63 = por %p61, %p62
      %p64 = scmp.ne.s32.totalorder %s52, %s53
      %p65 = scmp.eq.s32.totalorder %s27, 2
      %p66 = por %p64, %p65
      %p68 = scmp.ne.s32.totalorder %s53, %s67
      %p69 = scmp.eq.s32.totalorder %s27, 0
      %p70 = por %p68, %p69
      %s72 = sadd.s32 %s71, 1
      %p75 = scmp.eq.s32.totalorder %s21, 2
      %p76 = scmp.ne.s32.totalorder %s71, %s73
      %p77 = scmp.eq.s32.totalorder %s21, 0
      %p78 = por %p76, %p77
      %p79 = scmp.ne.s32.totalorder %s71, %s73
      %p80 = scmp.eq.s32.totalorder %s26, 2
      %p81 = por %p79, %p80
      %p82 = scmp.ne.s32.totalorder %s73, %s74
      %p83 = scmp.eq.s32.totalorder %s26, 0
      %p84 = por %p82, %p83
      %p85 = scmp.ne.s32.totalorder %s73, %s74
      %p86 = scmp.eq.s32.totalorder %s27, 2
      %p87 = por %p85, %p86
      %p89 = scmp.ne.s32.totalorder %s74, %s88
      %p90 = scmp.eq.s32.totalorder %s27, 0
      %p91 = por %p89, %p90
      %s93 = sadd.s32 %s92, 1
      %p96 = scmp.eq.s32.totalorder %s21, 2
      %p97 = scmp.ne.s32.totalorder %s92, %s94
      %p98 = scmp.eq.s32.totalorder %s21, 0
      %p99 = por %p97, %p98
      %p100 = scmp.ne.s32.totalorder %s92, %s94
      %p101 = scmp.eq.s32.totalorder %s26, 2
      %p102 = por %p100, %p101
      %p103 = scmp.ne.s32.totalorder %s94, %s95
      %p104 = scmp.eq.s32.totalorder %s26, 0
      %p105 = por %p103, %p104
      %p106 = scmp.ne.s32.totalorder %s94, %s95
      %p107 = scmp.eq.s32.totalorder %s27, 2
      %p108 = por %p106, %p107
      %p110 = scmp.ne.s32.totalorder %s95, %s109
      %p111 = scmp.eq.s32.totalorder %s27, 0
      %p112 = por %p110, %p111
      %s114 = sadd.s32 %s113, 1
      %p117 = scmp.eq.s32.totalorder %s21, 2
      %p118 = scmp.ne.s32.totalorder %s113, %s115
      %p119 = scmp.eq.s32.totalorder %s21, 0
      %p120 = por %p118, %p119
      %p121 = scmp.ne.s32.totalorder %s113, %s115
      %p122 = scmp.eq.s32.totalorder %s26, 2
      %p123 = por %p121, %p122
      %p124 = scmp.ne.s32.totalorder %s115, %s116
      %p125 = scmp.eq.s32.totalorder %s26, 0
      %p126 = por %p124, %p125
      %p127 = scmp.ne.s32.totalorder %s115, %s116
      %p128 = scmp.eq.s32.totalorder %s27, 2
      %p129 = por %p127, %p128
      %p131 = scmp.ne.s32.totalorder %s116, %s130
      %p132 = scmp.eq.s32.totalorder %s27, 0
      %p133 = por %p131, %p132
      %s135 = sadd.s32 %s134, 1
      %p138 = scmp.eq.s32.totalorder %s21, 2
      %p139 = scmp.ne.s32.totalorder %s134, %s136
      %p140 = scmp.eq.s32.totalorder %s21, 0
      %p141 = por %p139, %p140
      %p142 = scmp.ne.s32.totalorder %s134, %s136
      %p143 = scmp.eq.s32.totalorder %s26, 2
      %p144 = por %p142, %p143
      %p145 = scmp.ne.s32.totalorder %s136, %s137
      %p146 = scmp.eq.s32.totalorder %s26, 0
      %p147 = por %p145, %p146
      %p148 = scmp.ne.s32.totalorder %s136, %s137
      %p149 = scmp.eq.s32.totalorder %s27, 2
      %p150 = por %p148, %p149
      %p152 = scmp.ne.s32.totalorder %s137, %s151
      %p153 = scmp.eq.s32.totalorder %s27, 0
      %p154 = por %p152, %p153
      %s155 = ssub.s32 %s21, %s28
      %p156 = scmp.eq.s32.totalorder %s155, 0
      %s158 = sadd.s32 %s157, 1
      %s159 = scalar_select %p156, %s157, %s158
      %p162 = pneg %p156
      %p163 = scmp.eq.s32.totalorder %s21, 2
      %p164 = por %p162, %p163
      %p165 = scmp.ne.s32.totalorder %s157, %s160
      %p166 = scmp.eq.s32.totalorder %s21, 0
      %p167 = por %p165, %p166
      %p168 = scmp.ne.s32.totalorder %s157, %s160
      %p169 = scmp.eq.s32.totalorder %s26, 2
      %p170 = por %p168, %p169
      %p171 = scmp.ne.s32.totalorder %s160, %s161
      %p172 = scmp.eq.s32.totalorder %s26, 0
      %p173 = por %p171, %p172
      %p174 = scmp.ne.s32.totalorder %s160, %s161
      %p175 = scmp.eq.s32.totalorder %s27, 2
      %p176 = por %p174, %p175
      %p178 = scmp.ne.s32.totalorder %s161, %s177
      %p179 = scmp.eq.s32.totalorder %s27, 0
      %p180 = por %p178, %p179
      %s182 = sadd.s32 %s181, 1
      %p185 = scmp.eq.s32.totalorder %s21, 2
      %p186 = scmp.ne.s32.totalorder %s181, %s183
      %p187 = scmp.eq.s32.totalorder %s21, 0
      %p188 = por %p186, %p187
      %p189 = scmp.ne.s32.totalorder %s181, %s183
      %p190 = scmp.eq.s32.totalorder %s26, 2
      %p191 = por %p189, %p190
      %p192 = scmp.ne.s32.totalorder %s183, %s184
      %p193 = scmp.eq.s32.totalorder %s26, 0
      %p194 = por %p192, %p193
      %p195 = scmp.ne.s32.totalorder %s183, %s184
      %p196 = scmp.eq.s32.totalorder %s27, 2
      %p197 = por %p195, %p196
      %p199 = scmp.ne.s32.totalorder %s184, %s198
      %p200 = scmp.eq.s32.totalorder %s27, 0
      %p201 = por %p199, %p200
      %s203 = sadd.s32 %s202, 1
      %p206 = scmp.eq.s32.totalorder %s21, 2
      %p207 = scmp.ne.s32.totalorder %s202, %s204
      %p208 = scmp.eq.s32.totalorder %s21, 0
      %p209 = por %p207, %p208
      %p210 = scmp.ne.s32.totalorder %s202, %s204
      %p211 = scmp.eq.s32.totalorder %s26, 2
      %p212 = por %p210, %p211
      %p213 = scmp.ne.s32.totalorder %s204, %s205
      %p214 = scmp.eq.s32.totalorder %s26, 0
      %p215 = por %p213, %p214
      %p216 = scmp.ne.s32.totalorder %s204, %s205
      %p217 = scmp.eq.s32.totalorder %s27, 2
      %p218 = por %p216, %p217
      %p220 = scmp.ne.s32.totalorder %s205, %s219
      %p221 = scmp.eq.s32.totalorder %s27, 0
      %p222 = por %p220, %p221
      %p223 = scmp.le.s32.totalorder 1, %s21
      %p224 = scmp.lt.s32.totalorder %s21, 4
      %p225 = pnand %p223, %p224
      %p226 = pneg %p225
      // Predicated region
      $region9: #{dqn_forward.1} parent=5 // pred_check
        _
      $region10: #{dqn_forward.1} parent=5 // pred_check_branch
        %228 = sbr.rel (%p225) target = $region12
      $region11: #{dqn_forward.1} parent=5 // pred_region
        %s229 = ssub.s32 %s21, 1
        // Predicated region
        $region13: #{dqn_forward.1} parent=11 // pred_check
          %p230 = pneg %p42
        $region14: #{dqn_forward.1} parent=11 // pred_check_branch
          %232 = sbr.rel (%p230) target = $region16
        $region15: #{dqn_forward.1} parent=11 // pred_region
          _
        $region16: #{dqn_forward.1} parent=11 // pred_fallthru
          _
        // Predicated region
        $region17: #{dqn_forward.1} parent=11 // pred_check
          %p233 = pneg %p63
        $region18: #{dqn_forward.1} parent=11 // pred_check_branch
          %235 = sbr.rel (%p233) target = $region20
        $region19: #{dqn_forward.1} parent=11 // pred_region
          %s237 = ssub.s32 6144, 6144
          %238 = vsyncadd [#allocation6], %s237
          %s239 = sshll.u32 [#allocation5], 4
          %s240 = int_to_ptr.vmem [resolvable:$true] %s239
          %245 = dma.hbm_to_vmem [thread:$0]  %s1, 6144, %s240, [#allocation6], 128, 128, 8
        $region20: #{dqn_forward.1} parent=11 // pred_fallthru
          _
        // Predicated region
        $region21: #{dqn_forward.1} parent=11 // pred_check
          %p246 = pneg %p84
        $region22: #{dqn_forward.1} parent=11 // pred_check_branch
          %248 = sbr.rel (%p246) target = $region24
        $region23: #{dqn_forward.1} parent=11 // pred_region
          %s250 = ssub.s32 1024, 1024
          %251 = vsyncadd [#allocation9], %s250
          %s252 = sshll.u32 [#allocation8], 4
          %s253 = int_to_ptr.vmem [resolvable:$true] %s252
          %258 = dma.hbm_to_vmem [thread:$0]  %s2, 1024, %s253, [#allocation9], 64, 64, 4
        $region24: #{dqn_forward.1} parent=11 // pred_fallthru
          _
        // Predicated region
        $region25: #{dqn_forward.1} parent=11 // pred_check
          %p259 = pneg %p105
        $region26: #{dqn_forward.1} parent=11 // pred_check_branch
          %261 = sbr.rel (%p259) target = $region28
        $region27: #{dqn_forward.1} parent=11 // pred_region
          %s263 = ssub.s32 16, 16
          %264 = vsyncadd [#allocation9], %s263
          %s266 = sshll.u32 [#allocation10], 4
          %s267 = int_to_ptr.vmem [resolvable:$true] %s266
          %269 = dma.hbm_to_vmem [thread:$0]  %s3, 16, %s267, [#allocation9]
        $region28: #{dqn_forward.1} parent=11 // pred_fallthru
          _
        // Predicated region
        $region29: #{dqn_forward.1} parent=11 // pred_check
          %p270 = pneg %p126
        $region30: #{dqn_forward.1} parent=11 // pred_check_branch
          %272 = sbr.rel (%p270) target = $region32
        $region31: #{dqn_forward.1} parent=11 // pred_region
          %s274 = ssub.s32 9216, 9216
          %275 = vsyncadd [#allocation12], %s274
          %s276 = sshll.u32 [#allocation11], 4
          %s277 = int_to_ptr.vmem [resolvable:$true] %s276
          %282 = dma.hbm_to_vmem [thread:$0]  %s4, 9216, %s277, [#allocation12], 64, 64, 4
        $region32: #{dqn_forward.1} parent=11 // pred_fallthru
          _
        // Predicated region
        $region33: #{dqn_forward.1} parent=11 // pred_check
          %p283 = pneg %p147
        $region34: #{dqn_forward.1} parent=11 // pred_check_branch
          %285 = sbr.rel (%p283) target = $region36
        $region35: #{dqn_forward.1} parent=11 // pred_region
          %s287 = ssub.s32 16, 16
          %288 = vsyncadd [#allocation12], %s287
          %s290 = sshll.u32 [#allocation13], 4
          %s291 = int_to_ptr.vmem [resolvable:$true] %s290
          %293 = dma.hbm_to_vmem [thread:$0]  %s5, 16, %s291, [#allocation12]
        $region36: #{dqn_forward.1} parent=11 // pred_fallthru
          _
        // Predicated region
        $region37: #{dqn_forward.1} parent=11 // pred_check
          %p294 = pneg %p194
        $region38: #{dqn_forward.1} parent=11 // pred_check_branch
          %296 = sbr.rel (%p294) target = $region40
        $region39: #{dqn_forward.1} parent=11 // pred_region
          %s298 = ssub.s32 16, 16
          %299 = vsyncadd [#allocation15], %s298
          %s301 = sshll.u32 [#allocation16], 4
          %s302 = int_to_ptr.vmem [resolvable:$true] %s301
          %304 = dma.hbm_to_vmem [thread:$0]  %s7, 16, %s302, [#allocation15]
        $region40: #{dqn_forward.1} parent=11 // pred_fallthru
          _
      $region12: #{dqn_forward.1} parent=5 // pred_fallthru
        _
      %p305 = scmp.lt.s32.totalorder %s21, 3
      // Predicated region
      $region41: #{dqn_forward.1} parent=5 // pred_check
        %p306 = pneg %p305
      $region42: #{dqn_forward.1} parent=5 // pred_check_branch
        %308 = sbr.rel (%p306) target = $region44
      $region43: #{dqn_forward.1} parent=5 // pred_region
        // Predicated region
        $region45: #{dqn_forward.1} parent=43 // pred_check
          %p309 = pneg %p167
        $region46: #{dqn_forward.1} parent=43 // pred_check_branch
          %311 = sbr.rel (%p309) target = $region48
        $region47: #{dqn_forward.1} parent=43 // pred_region
          %s312 = sand.u32 %s21, 1
          %s313 = scalar_lea.sflag [#allocation15], %s312
          %s314 = sand.u32 %s157, 1
          %s315 = smul.addr %s314, 1728
          %s316 = scalar_lea.vmem [#allocation14], %s315
          %s317 = smul.u32 27, %s21
          %s319 = ssub.s32 27648, 27648
          %320 = vsyncadd %s313, %s319
          %s321 = smul.addr %s317, 16
          %s322 = smul.addr %s321, 64
          %s323 = scalar_lea.hbm %s6, %s322
          %s324 = sshll.u32 %s316, 4
          %s325 = int_to_ptr.vmem [resolvable:$true] %s324
          %330 = dma.hbm_to_vmem [thread:$0]  %s323, 27648, %s325, %s313, 64, 64, 4
        $region48: #{dqn_forward.1} parent=43 // pred_fallthru
          _
      $region44: #{dqn_forward.1} parent=5 // pred_fallthru
        _
      %p331 = scmp.le.s32.totalorder 1, %s21
      %p332 = scmp.lt.s32.totalorder %s21, 4
      %p333 = pnand %p331, %p332
      %p334 = pneg %p333
      // Predicated region
      $region49: #{dqn_forward.1} parent=5 // pred_check
        _
      $region50: #{dqn_forward.1} parent=5 // pred_check_branch
        %336 = sbr.rel (%p333) target = $region52
      $region51: #{dqn_forward.1} parent=5 // pred_region
        %s337 = ssub.s32 %s21, 1
        // Predicated region
        $region53: #{dqn_forward.1} parent=51 // pred_check
          %p338 = pneg %p63
        $region54: #{dqn_forward.1} parent=51 // pred_check_branch
          %340 = sbr.rel (%p338) target = $region56
        $region55: #{dqn_forward.1} parent=51 // pred_region
          %341 = dma.done [#allocation6], 6144
        $region56: #{dqn_forward.1} parent=51 // pred_fallthru
          _
        // Predicated region
        $region57: #{dqn_forward.1} parent=51 // pred_check
          %p342 = pneg %p84
        $region58: #{dqn_forward.1} parent=51 // pred_check_branch
          %344 = sbr.rel (%p342) target = $region60
        $region59: #{dqn_forward.1} parent=51 // pred_region
          %345 = dma.done [#allocation9], 1024
        $region60: #{dqn_forward.1} parent=51 // pred_fallthru
          _
        // Predicated region
        $region61: #{dqn_forward.1} parent=51 // pred_check
          %p346 = pneg %p105
        $region62: #{dqn_forward.1} parent=51 // pred_check_branch
          %348 = sbr.rel (%p346) target = $region64
        $region63: #{dqn_forward.1} parent=51 // pred_region
          %349 = dma.done [#allocation9], 16
        $region64: #{dqn_forward.1} parent=51 // pred_fallthru
          _
        // Predicated region
        $region65: #{dqn_forward.1} parent=51 // pred_check
          %p350 = pneg %p126
        $region66: #{dqn_forward.1} parent=51 // pred_check_branch
          %352 = sbr.rel (%p350) target = $region68
        $region67: #{dqn_forward.1} parent=51 // pred_region
          %353 = dma.done [#allocation12], 9216
        $region68: #{dqn_forward.1} parent=51 // pred_fallthru
          _
        // Predicated region
        $region69: #{dqn_forward.1} parent=51 // pred_check
          %p354 = pneg %p147
        $region70: #{dqn_forward.1} parent=51 // pred_check_branch
          %356 = sbr.rel (%p354) target = $region72
        $region71: #{dqn_forward.1} parent=51 // pred_region
          %357 = dma.done [#allocation12], 16
        $region72: #{dqn_forward.1} parent=51 // pred_fallthru
          _
        %s358 = sand.u32 %s26, 1
        %s359 = scalar_lea.sflag [#allocation15], %s358
        %s360 = sand.u32 %s160, 1
        %s361 = smul.addr %s360, 1728
        %s362 = scalar_lea.vmem [#allocation14], %s361
        // Predicated region
        $region73: #{dqn_forward.1} parent=51 // pred_check
          %p363 = pneg %p173
        $region74: #{dqn_forward.1} parent=51 // pred_check_branch
          %365 = sbr.rel (%p363) target = $region76
        $region75: #{dqn_forward.1} parent=51 // pred_region
          %366 = dma.done %s359, 27648
        $region76: #{dqn_forward.1} parent=51 // pred_fallthru
          _
        // Predicated region
        $region77: #{dqn_forward.1} parent=51 // pred_check
          %p367 = pneg %p194
        $region78: #{dqn_forward.1} parent=51 // pred_check_branch
          %369 = sbr.rel (%p367) target = $region80
        $region79: #{dqn_forward.1} parent=51 // pred_region
          %370 = dma.done [#allocation15], 16
        $region80: #{dqn_forward.1} parent=51 // pred_fallthru
          _
        %p371 = pneg %p42
        %p372 = pneg %p39
        %p373 = pneg %p63
        %p374 = pneg %p60
        %p375 = pneg %p84
        %p376 = pneg %p81
        %p377 = pneg %p105
        %p378 = pneg %p102
        %p379 = pneg %p126
        %p380 = pneg %p123
        %p381 = pneg %p147
        %p382 = pneg %p144
        %s383 = sand.u32 %s26, 1
        %s384 = scalar_lea.sflag [#allocation15], %s383
        %s385 = sand.u32 %s160, 1
        %s386 = smul.addr %s385, 1728
        %s387 = scalar_lea.vmem [#allocation14], %s386
        %p388 = pneg %p173
        %p389 = pneg %p170
        %p390 = pneg %p194
        %p391 = pneg %p191
        %p392 = pneg %p215
        %p393 = pneg %p212
        %s394 = smul.u32 27, %s26
        %p396 = scmp.eq.s32.totalorder %s26, 0
        // Predicated region
        $region81: #{dqn_forward.1} parent=51 // pred_check
          %p397 = pneg %p396
        $region82: #{dqn_forward.1} parent=51 // pred_check_branch
          %399 = sbr.rel (%p397) target = $region84
        $region83: #{dqn_forward.1} parent=51 // pred_region
          %400 = vst [vmem:[#allocation2] sm:$0xf] 0
          %401 = vst [vmem:[#allocation2 + $0x4] sm:$0xf] 0
          %402 = vst [vmem:[#allocation2 + $0x8] sm:$0xf] 0
          %403 = vst [vmem:[#allocation2 + $0xc] sm:$0xf] 0
          %404 = vst [vmem:[#allocation2 + $0xd0] sm:$0xf] 0
          %405 = vst [vmem:[#allocation2 + $0xd4] sm:$0xf] 0
          %406 = vst [vmem:[#allocation2 + $0xd8] sm:$0xf] 0
          %407 = vst [vmem:[#allocation2 + $0xdc] sm:$0xf] 0
          %v408 = vld [vmem:[#allocation8] sm:$0xf]
          %v409 = vld [vmem:[#allocation8 + $0x4] sm:$0xf]
          %v410 = vld [vmem:[#allocation8 + $0x8] sm:$0xf]
          %v411 = vld [vmem:[#allocation8 + $0xc] sm:$0xf]
          %v412 = vld [vmem:[#allocation8 + $0x10] sm:$0xf]
          %v413 = vld [vmem:[#allocation8 + $0x14] sm:$0xf]
          %v414 = vld [vmem:[#allocation8 + $0x18] sm:$0xf]
          %v415 = vld [vmem:[#allocation8 + $0x1c] sm:$0xf]
          %v416 = vld [vmem:[#allocation8 + $0x20] sm:$0xf]
          %v417 = vld [vmem:[#allocation8 + $0x24] sm:$0xf]
          %v418 = vld [vmem:[#allocation8 + $0x28] sm:$0xf]
          %v419 = vld [vmem:[#allocation8 + $0x2c] sm:$0xf]
          %v420 = vld [vmem:[#allocation8 + $0x30] sm:$0xf]
          %v421 = vld [vmem:[#allocation8 + $0x34] sm:$0xf]
          %v422 = vld [vmem:[#allocation8 + $0x38] sm:$0xf]
          %v423 = vld [vmem:[#allocation8 + $0x3c] sm:$0xf]
          %v424 = vld [vmem:[#allocation10] sm:$0x1]
          %v425 = vld [vmem:[#allocation13] sm:$0x1]
          %v426 = vld [vmem:[%s0] sm:$0xf]
          %v427 = vld [vmem:[%s0 + $0x4] sm:$0xf]
          %v428 = vld [vmem:[%s0 + $0x8] sm:$0xf]
          %v429 = vld [vmem:[%s0 + $0xc] sm:$0xf]
          %v430 = vld [vmem:[%s0 + $0x10] sm:$0xf]
          %v431 = vld [vmem:[%s0 + $0x14] sm:$0xf]
          %v432 = vld [vmem:[%s0 + $0x18] sm:$0xf]
          %v433 = vld [vmem:[%s0 + $0x1c] sm:$0xf]
          %v434 = vld [vmem:[%s0 + $0x20] sm:$0xf]
          %v435 = vld [vmem:[%s0 + $0x24] sm:$0xf]
          %v436 = vld [vmem:[%s0 + $0x28] sm:$0xf]
          %v437 = vld [vmem:[%s0 + $0x2c] sm:$0xf]
          %v438 = vld [vmem:[%s0 + $0x30] sm:$0xf]
          %v439 = vld [vmem:[%s0 + $0x34] sm:$0xf]
          %v440 = vld [vmem:[%s0 + $0x38] sm:$0xf]
          %v441 = vld [vmem:[%s0 + $0x3c] sm:$0xf]
          %v443 = vlaneseq
          %v444 = vshrl.u32 %v443, 7
          %v445 = vsub.s32 0, %v444
          %v446 = vrot.slane %v424, %v445
          %v464 = vunpack.c.l.b16 %v426
          %v465 = vunpack.c.l.b16 %v427
          %v466 = vunpack.c.l.b16 %v428
          %v467 = vunpack.c.l.b16 %v429
          %v468 = vunpack.c.l.b16 %v430
          %v469 = vunpack.c.l.b16 %v431
          %v470 = vunpack.c.l.b16 %v432
          %v471 = vunpack.c.l.b16 %v433
          %v472 = vunpack.c.l.b16 %v434
          %v473 = vunpack.c.l.b16 %v435
          %v474 = vunpack.c.l.b16 %v436
          %v475 = vunpack.c.l.b16 %v437
          %v476 = vunpack.c.l.b16 %v438
          %v477 = vunpack.c.l.b16 %v439
          %v478 = vunpack.c.l.b16 %v440
          %v479 = vunpack.c.l.b16 %v441
          %v480 = vpack.c.b16 %v465, %v464
          %v481 = vpack.c.b16 %v467, %v466
          %v482 = vpack.c.b16 %v469, %v468
          %v483 = vpack.c.b16 %v471, %v470
          %v484 = vpack.c.b16 %v473, %v472
          %v485 = vpack.c.b16 %v475, %v474
          %v486 = vpack.c.b16 %v477, %v476
          %v487 = vpack.c.b16 %v479, %v478
          %v512 = vunpack.c.l.b16 %v408
          %v513 = vunpack.c.l.b16 %v409
          %v514 = vunpack.c.l.b16 %v410
          %v515 = vunpack.c.l.b16 %v411
          %v516 = vunpack.c.l.b16 %v412
          %v517 = vunpack.c.l.b16 %v413
          %v518 = vunpack.c.l.b16 %v414
          %v519 = vunpack.c.l.b16 %v415
          %v520 = vunpack.c.l.b16 %v416
          %v521 = vunpack.c.l.b16 %v417
          %v522 = vunpack.c.l.b16 %v418
          %v523 = vunpack.c.l.b16 %v419
          %v524 = vunpack.c.l.b16 %v420
          %v525 = vunpack.c.l.b16 %v421
          %v526 = vunpack.c.l.b16 %v422
          %v527 = vunpack.c.l.b16 %v423
          %v528 = vpack.c.b16 %v513, %v512
          %v529 = vpack.c.b16 %v515, %v514
          %v530 = vpack.c.b16 %v517, %v516
          %v531 = vpack.c.b16 %v519, %v518
          %v532 = vpack.c.b16 %v521, %v520
          %v533 = vpack.c.b16 %v523, %v522
          %v534 = vpack.c.b16 %v525, %v524
          %v535 = vpack.c.b16 %v527, %v526
          %544 = vmatprep.subr.bf16.mxu0 0
          %545 = vmatpush1.bf16.msra.mxu0 %v535
          %546 = vmatprep.subr.bf16.mxu0 0
          %547 = vmatpush1.bf16.msra.mxu0 %v534
          %548 = vmatprep.subr.bf16.mxu0 0
          %549 = vmatpush1.bf16.msra.mxu0 %v533
          %550 = vmatprep.subr.bf16.mxu0 0
          %551 = vmatpush1.bf16.msra.mxu0 %v532
          %552 = vmatprep.subr.bf16.mxu0 0
          %553 = vmatpush1.bf16.msra.mxu0 %v531
          %554 = vmatprep.subr.bf16.mxu0 0
          %555 = vmatpush1.bf16.msra.mxu0 %v530
          %556 = vmatprep.subr.bf16.mxu0 0
          %557 = vmatpush1.bf16.msra.mxu0 %v529
          %558 = vmatprep.subr.bf16.mxu0 0
          %559 = vmatpush1.bf16.msra.mxu0 %v528
          %560 = vmatprep.subr.bf16.mxu0 0
          %561 = vmatpush2.bf16.msra.mxu0 0
          %562 = vmatprep.subr.bf16.mxu0 0
          %563 = vmatpush2.bf16.msra.mxu0 0
          %564 = vmatprep.subr.bf16.mxu0 0
          %565 = vmatpush2.bf16.msra.mxu0 0
          %566 = vmatprep.subr.bf16.mxu0 0
          %567 = vmatpush2.bf16.msra.mxu0 0
          %568 = vmatprep.subr.bf16.mxu0 0
          %569 = vmatpush2.bf16.msra.mxu0 0
          %570 = vmatprep.subr.bf16.mxu0 0
          %571 = vmatpush2.bf16.msra.mxu0 0
          %572 = vmatprep.subr.bf16.mxu0 0
          %573 = vmatpush2.bf16.msra.mxu0 0
          %574 = vmatprep.subr.bf16.mxu0 0
          %575 = vmatpush2.bf16.msra.mxu0 0
          %576 = vmatprep.mubr.bf16.mxu0 0
          %577 = vmatmul.mubr.bf16.gmra.mxu0 %v480
          %v578 = vpop.f32.mrf.mxu0
          %v579 = vadd.f32 %v446, %v578
          %v580 = vpop.f32.mrf.mxu0
          %v581 = vpop.f32.mrf.mxu0
          %v582 = vadd.f32 %v446, %v581
          %v583 = vpop.f32.mrf.mxu0
          %584 = vmatprep.mubr.bf16.mxu0 0
          %585 = vmatmul.mubr.bf16.gmra.mxu0 %v481
          %v586 = vpop.f32.mrf.mxu0
          %v587 = vadd.f32 %v446, %v586
          %v588 = vpop.f32.mrf.mxu0
          %v589 = vpop.f32.mrf.mxu0
          %v590 = vadd.f32 %v446, %v589
          %v591 = vpop.f32.mrf.mxu0
          %592 = vmatprep.mubr.bf16.mxu0 0
          %593 = vmatmul.mubr.bf16.gmra.mxu0 %v482
          %v594 = vpop.f32.mrf.mxu0
          %v595 = vadd.f32 %v446, %v594
          %v596 = vpop.f32.mrf.mxu0
          %v597 = vpop.f32.mrf.mxu0
          %v598 = vadd.f32 %v446, %v597
          %v599 = vpop.f32.mrf.mxu0
          %600 = vmatprep.mubr.bf16.mxu0 0
          %601 = vmatmul.mubr.bf16.gmra.mxu0 %v483
          %v602 = vpop.f32.mrf.mxu0
          %v603 = vadd.f32 %v446, %v602
          %v604 = vpop.f32.mrf.mxu0
          %v605 = vpop.f32.mrf.mxu0
          %v606 = vadd.f32 %v446, %v605
          %v607 = vpop.f32.mrf.mxu0
          %608 = vmatprep.mubr.bf16.mxu0 0
          %609 = vmatmul.mubr.bf16.gmra.mxu0 %v484
          %v610 = vpop.f32.mrf.mxu0
          %v611 = vadd.f32 %v446, %v610
          %v612 = vpop.f32.mrf.mxu0
          %v613 = vpop.f32.mrf.mxu0
          %v614 = vadd.f32 %v446, %v613
          %v615 = vpop.f32.mrf.mxu0
          %616 = vmatprep.mubr.bf16.mxu0 0
          %617 = vmatmul.mubr.bf16.gmra.mxu0 %v485
          %v618 = vpop.f32.mrf.mxu0
          %v619 = vadd.f32 %v446, %v618
          %v620 = vpop.f32.mrf.mxu0
          %v621 = vpop.f32.mrf.mxu0
          %v622 = vadd.f32 %v446, %v621
          %v623 = vpop.f32.mrf.mxu0
          %624 = vmatprep.mubr.bf16.mxu0 0
          %625 = vmatmul.mubr.bf16.gmra.mxu0 %v486
          %v626 = vpop.f32.mrf.mxu0
          %v627 = vadd.f32 %v446, %v626
          %v628 = vpop.f32.mrf.mxu0
          %v629 = vpop.f32.mrf.mxu0
          %v630 = vadd.f32 %v446, %v629
          %v631 = vpop.f32.mrf.mxu0
          %632 = vmatprep.mubr.bf16.mxu0 0
          %633 = vmatmul.mubr.bf16.gmra.mxu0 %v487
          %v634 = vpop.f32.mrf.mxu0
          %v635 = vadd.f32 %v446, %v634
          %v636 = vpop.f32.mrf.mxu0
          %v637 = vpop.f32.mrf.mxu0
          %v638 = vadd.f32 %v446, %v637
          %v639 = vpop.f32.mrf.mxu0
          %640 = vdwg.mxu0
          %v641 = vmax.f32 %v579, 0.0
          %v642 = vmax.f32 %v582, 0.0
          %v643 = vmax.f32 %v587, 0.0
          %v644 = vmax.f32 %v590, 0.0
          %v645 = vmax.f32 %v595, 0.0
          %v646 = vmax.f32 %v598, 0.0
          %v647 = vmax.f32 %v603, 0.0
          %v648 = vmax.f32 %v606, 0.0
          %v649 = vmax.f32 %v611, 0.0
          %v650 = vmax.f32 %v614, 0.0
          %v651 = vmax.f32 %v619, 0.0
          %v652 = vmax.f32 %v622, 0.0
          %v653 = vmax.f32 %v627, 0.0
          %v654 = vmax.f32 %v630, 0.0
          %v655 = vmax.f32 %v635, 0.0
          %v656 = vmax.f32 %v638, 0.0
          %v657 = vld [vmem:[#allocation5] sm:$0xff]
          %v658 = vld [vmem:[#allocation5 + $0x8] sm:$0xff]
          %v659 = vld [vmem:[#allocation5 + $0x10] sm:$0xff]
          %v660 = vld [vmem:[#allocation5 + $0x18] sm:$0xff]
          %v661 = vld [vmem:[#allocation5 + $0x20] sm:$0xff]
          %v662 = vld [vmem:[#allocation5 + $0x28] sm:$0xff]
          %v663 = vld [vmem:[#allocation5 + $0x30] sm:$0xff]
          %v664 = vld [vmem:[#allocation5 + $0x38] sm:$0xff]
          %v665 = vld [vmem:[#allocation5 + $0x40] sm:$0xff]
          %v666 = vld [vmem:[#allocation5 + $0x48] sm:$0xff]
          %v667 = vld [vmem:[#allocation5 + $0x50] sm:$0xff]
          %v668 = vld [vmem:[#allocation5 + $0x58] sm:$0xff]
          %v669 = vld [vmem:[#allocation5 + $0x60] sm:$0xff]
          %v670 = vld [vmem:[#allocation5 + $0x68] sm:$0xff]
          %v671 = vld [vmem:[#allocation5 + $0x70] sm:$0xff]
          %v672 = vld [vmem:[#allocation5 + $0x78] sm:$0xff]
          %674 = vset.pattern.permute.xlu0 0
          %675 = vperm.xlu0 %674, %v657
          %v676 = vpop.permute.xlu0 %675
          %679 = vset.pattern.permute.xlu0 0
          %680 = vperm.xlu0 %679, %v658
          %v681 = vpop.permute.xlu0 %680
          %684 = vset.pattern.permute.xlu0 0
          %685 = vperm.xlu0 %684, %v659
          %v686 = vpop.permute.xlu0 %685
          %689 = vset.pattern.permute.xlu0 0
          %690 = vperm.xlu0 %689, %v660
          %v691 = vpop.permute.xlu0 %690
          %694 = vset.pattern.permute.xlu0 0
          %695 = vperm.xlu0 %694, %v661
          %v696 = vpop.permute.xlu0 %695
          %699 = vset.pattern.permute.xlu0 0
          %700 = vperm.xlu0 %699, %v662
          %v701 = vpop.permute.xlu0 %700
          %704 = vset.pattern.permute.xlu0 0
          %705 = vperm.xlu0 %704, %v663
          %v706 = vpop.permute.xlu0 %705
          %709 = vset.pattern.permute.xlu0 0
          %710 = vperm.xlu0 %709, %v664
          %v711 = vpop.permute.xlu0 %710
          %714 = vset.pattern.permute.xlu0 0
          %715 = vperm.xlu0 %714, %v665
          %v716 = vpop.permute.xlu0 %715
          %719 = vset.pattern.permute.xlu0 0
          %720 = vperm.xlu0 %719, %v666
          %v721 = vpop.permute.xlu0 %720
          %724 = vset.pattern.permute.xlu0 0
          %725 = vperm.xlu0 %724, %v667
          %v726 = vpop.permute.xlu0 %725
          %729 = vset.pattern.permute.xlu0 0
          %730 = vperm.xlu0 %729, %v668
          %v731 = vpop.permute.xlu0 %730
          %734 = vset.pattern.permute.xlu0 0
          %735 = vperm.xlu0 %734, %v669
          %v736 = vpop.permute.xlu0 %735
          %739 = vset.pattern.permute.xlu0 0
          %740 = vperm.xlu0 %739, %v670
          %v741 = vpop.permute.xlu0 %740
          %744 = vset.pattern.permute.xlu0 0
          %745 = vperm.xlu0 %744, %v671
          %v746 = vpop.permute.xlu0 %745
          %749 = vset.pattern.permute.xlu0 0
          %750 = vperm.xlu0 %749, %v672
          %v751 = vpop.permute.xlu0 %750
          %v753 = vmul.f32 %v641, %v676
          %v754 = vmul.f32 %v642, %v681
          %v755 = vmul.f32 %v643, %v686
          %v756 = vmul.f32 %v644, %v691
          %v757 = vmul.f32 %v645, %v696
          %v758 = vmul.f32 %v646, %v701
          %v759 = vmul.f32 %v647, %v706
          %v760 = vmul.f32 %v648, %v711
          %v761 = vmul.f32 %v649, %v716
          %v762 = vmul.f32 %v650, %v721
          %v763 = vmul.f32 %v651, %v726
          %v764 = vmul.f32 %v652, %v731
          %v765 = vmul.f32 %v653, %v736
          %v766 = vmul.f32 %v654, %v741
          %v767 = vmul.f32 %v655, %v746
          %v768 = vmul.f32 %v656, %v751
          %v769 = vpack.c.bf16 %v754, %v753
          %v770 = vpack.c.bf16 %v756, %v755
          %v771 = vpack.c.bf16 %v758, %v757
          %v772 = vpack.c.bf16 %v760, %v759
          %v773 = vpack.c.bf16 %v762, %v761
          %v774 = vpack.c.bf16 %v764, %v763
          %v775 = vpack.c.bf16 %v766, %v765
          %v776 = vpack.c.bf16 %v768, %v767
          %v785 = vunpack.c.l.b16 %v769
          %v786 = vunpack.c.h.b16 %v769
          %v787 = vunpack.c.l.b16 %v770
          %v788 = vunpack.c.h.b16 %v770
          %v789 = vunpack.c.l.b16 %v771
          %v790 = vunpack.c.h.b16 %v771
          %v791 = vunpack.c.l.b16 %v772
          %v792 = vunpack.c.h.b16 %v772
          %v793 = vunpack.c.l.b16 %v773
          %v794 = vunpack.c.h.b16 %v773
          %v795 = vunpack.c.l.b16 %v774
          %v796 = vunpack.c.h.b16 %v774
          %v797 = vunpack.c.l.b16 %v775
          %v798 = vunpack.c.h.b16 %v775
          %v799 = vunpack.c.l.b16 %v776
          %v800 = vunpack.c.h.b16 %v776
          %v801 = vpack.c.b16 %v785, %v785
          %v802 = vpack.c.b16 %v786, %v786
          %v803 = vpack.c.b16 %v787, %v787
          %v804 = vpack.c.b16 %v788, %v788
          %v805 = vpack.c.b16 %v789, %v789
          %v806 = vpack.c.b16 %v790, %v790
          %v807 = vpack.c.b16 %v791, %v791
          %v808 = vpack.c.b16 %v792, %v792
          %v809 = vpack.c.b16 %v793, %v793
          %v810 = vpack.c.b16 %v794, %v794
          %v811 = vpack.c.b16 %v795, %v795
          %v812 = vpack.c.b16 %v796, %v796
          %v813 = vpack.c.b16 %v797, %v797
          %v814 = vpack.c.b16 %v798, %v798
          %v815 = vpack.c.b16 %v799, %v799
          %v816 = vpack.c.b16 %v800, %v800
          %833 = vst [vmem:[#allocation2 + $0x10] sm:$0xf] %v801
          %834 = vst [vmem:[#allocation2 + $0x14] sm:$0xf] %v802
          %835 = vst [vmem:[#allocation2 + $0x18] sm:$0xf] %v803
          %836 = vst [vmem:[#allocation2 + $0x1c] sm:$0xf] %v804
          %837 = vst [vmem:[#allocation2 + $0x20] sm:$0xf] %v805
          %838 = vst [vmem:[#allocation2 + $0x24] sm:$0xf] %v806
          %839 = vst [vmem:[#allocation2 + $0x28] sm:$0xf] %v807
          %840 = vst [vmem:[#allocation2 + $0x2c] sm:$0xf] %v808
          %841 = vst [vmem:[#allocation2 + $0x30] sm:$0xf] %v809
          %842 = vst [vmem:[#allocation2 + $0x34] sm:$0xf] %v810
          %843 = vst [vmem:[#allocation2 + $0x38] sm:$0xf] %v811
          %844 = vst [vmem:[#allocation2 + $0x3c] sm:$0xf] %v812
          %845 = vst [vmem:[#allocation2 + $0x40] sm:$0xf] %v813
          %846 = vst [vmem:[#allocation2 + $0x44] sm:$0xf] %v814
          %847 = vst [vmem:[#allocation2 + $0x48] sm:$0xf] %v815
          %848 = vst [vmem:[#allocation2 + $0x4c] sm:$0xf] %v816
          %v849 = vld [vmem:[%s0 + $0x40] sm:$0xf]
          %v850 = vld [vmem:[%s0 + $0x44] sm:$0xf]
          %v851 = vld [vmem:[%s0 + $0x48] sm:$0xf]
          %v852 = vld [vmem:[%s0 + $0x4c] sm:$0xf]
          %v853 = vld [vmem:[%s0 + $0x50] sm:$0xf]
          %v854 = vld [vmem:[%s0 + $0x54] sm:$0xf]
          %v855 = vld [vmem:[%s0 + $0x58] sm:$0xf]
          %v856 = vld [vmem:[%s0 + $0x5c] sm:$0xf]
          %v857 = vld [vmem:[%s0 + $0x60] sm:$0xf]
          %v858 = vld [vmem:[%s0 + $0x64] sm:$0xf]
          %v859 = vld [vmem:[%s0 + $0x68] sm:$0xf]
          %v860 = vld [vmem:[%s0 + $0x6c] sm:$0xf]
          %v861 = vld [vmem:[%s0 + $0x70] sm:$0xf]
          %v862 = vld [vmem:[%s0 + $0x74] sm:$0xf]
          %v863 = vld [vmem:[%s0 + $0x78] sm:$0xf]
          %v864 = vld [vmem:[%s0 + $0x7c] sm:$0xf]
          %v881 = vunpack.c.l.b16 %v849
          %v882 = vunpack.c.l.b16 %v850
          %v883 = vunpack.c.l.b16 %v851
          %v884 = vunpack.c.l.b16 %v852
          %v885 = vunpack.c.l.b16 %v853
          %v886 = vunpack.c.l.b16 %v854
          %v887 = vunpack.c.l.b16 %v855
          %v888 = vunpack.c.l.b16 %v856
          %v889 = vunpack.c.l.b16 %v857
          %v890 = vunpack.c.l.b16 %v858
          %v891 = vunpack.c.l.b16 %v859
          %v892 = vunpack.c.l.b16 %v860
          %v893 = vunpack.c.l.b16 %v861
          %v894 = vunpack.c.l.b16 %v862
          %v895 = vunpack.c.l.b16 %v863
          %v896 = vunpack.c.l.b16 %v864
          %v897 = vpack.c.b16 %v882, %v881
          %v898 = vpack.c.b16 %v884, %v883
          %v899 = vpack.c.b16 %v886, %v885
          %v900 = vpack.c.b16 %v888, %v887
          %v901 = vpack.c.b16 %v890, %v889
          %v902 = vpack.c.b16 %v892, %v891
          %v903 = vpack.c.b16 %v894, %v893
          %v904 = vpack.c.b16 %v896, %v895
          %913 = vmatprep.subr.bf16.mxu0 0
          %914 = vmatpush1.bf16.msra.mxu0 %v535
          %915 = vmatprep.subr.bf16.mxu0 0
          %916 = vmatpush1.bf16.msra.mxu0 %v534
          %917 = vmatprep.subr.bf16.mxu0 0
          %918 = vmatpush1.bf16.msra.mxu0 %v533
          %919 = vmatprep.subr.bf16.mxu0 0
          %920 = vmatpush1.bf16.msra.mxu0 %v532
          %921 = vmatprep.subr.bf16.mxu0 0
          %922 = vmatpush1.bf16.msra.mxu0 %v531
          %923 = vmatprep.subr.bf16.mxu0 0
          %924 = vmatpush1.bf16.msra.mxu0 %v530
          %925 = vmatprep.subr.bf16.mxu0 0
          %926 = vmatpush1.bf16.msra.mxu0 %v529
          %927 = vmatprep.subr.bf16.mxu0 0
          %928 = vmatpush1.bf16.msra.mxu0 %v528
          %929 = vmatprep.subr.bf16.mxu0 0
          %930 = vmatpush2.bf16.msra.mxu0 0
          %931 = vmatprep.subr.bf16.mxu0 0
          %932 = vmatpush2.bf16.msra.mxu0 0
          %933 = vmatprep.subr.bf16.mxu0 0
          %934 = vmatpush2.bf16.msra.mxu0 0
          %935 = vmatprep.subr.bf16.mxu0 0
          %936 = vmatpush2.bf16.msra.mxu0 0
          %937 = vmatprep.subr.bf16.mxu0 0
          %938 = vmatpush2.bf16.msra.mxu0 0
          %939 = vmatprep.subr.bf16.mxu0 0
          %940 = vmatpush2.bf16.msra.mxu0 0
          %941 = vmatprep.subr.bf16.mxu0 0
          %942 = vmatpush2.bf16.msra.mxu0 0
          %943 = vmatprep.subr.bf16.mxu0 0
          %944 = vmatpush2.bf16.msra.mxu0 0
          %945 = vmatprep.mubr.bf16.mxu0 0
          %946 = vmatmul.mubr.bf16.gmra.mxu0 %v897
          %v947 = vpop.f32.mrf.mxu0
          %v948 = vadd.f32 %v446, %v947
          %v949 = vpop.f32.mrf.mxu0
          %v950 = vpop.f32.mrf.mxu0
          %v951 = vadd.f32 %v446, %v950
          %v952 = vpop.f32.mrf.mxu0
          %953 = vmatprep.mubr.bf16.mxu0 0
          %954 = vmatmul.mubr.bf16.gmra.mxu0 %v898
          %v955 = vpop.f32.mrf.mxu0
          %v956 = vadd.f32 %v446, %v955
          %v957 = vpop.f32.mrf.mxu0
          %v958 = vpop.f32.mrf.mxu0
          %v959 = vadd.f32 %v446, %v958
          %v960 = vpop.f32.mrf.mxu0
          %961 = vmatprep.mubr.bf16.mxu0 0
          %962 = vmatmul.mubr.bf16.gmra.mxu0 %v899
          %v963 = vpop.f32.mrf.mxu0
          %v964 = vadd.f32 %v446, %v963
          %v965 = vpop.f32.mrf.mxu0
          %v966 = vpop.f32.mrf.mxu0
          %v967 = vadd.f32 %v446, %v966
          %v968 = vpop.f32.mrf.mxu0
          %969 = vmatprep.mubr.bf16.mxu0 0
          %970 = vmatmul.mubr.bf16.gmra.mxu0 %v900
          %v971 = vpop.f32.mrf.mxu0
          %v972 = vadd.f32 %v446, %v971
          %v973 = vpop.f32.mrf.mxu0
          %v974 = vpop.f32.mrf.mxu0
          %v975 = vadd.f32 %v446, %v974
          %v976 = vpop.f32.mrf.mxu0
          %977 = vmatprep.mubr.bf16.mxu0 0
          %978 = vmatmul.mubr.bf16.gmra.mxu0 %v901
          %v979 = vpop.f32.mrf.mxu0
          %v980 = vadd.f32 %v446, %v979
          %v981 = vpop.f32.mrf.mxu0
          %v982 = vpop.f32.mrf.mxu0
          %v983 = vadd.f32 %v446, %v982
          %v984 = vpop.f32.mrf.mxu0
          %985 = vmatprep.mubr.bf16.mxu0 0
          %986 = vmatmul.mubr.bf16.gmra.mxu0 %v902
          %v987 = vpop.f32.mrf.mxu0
          %v988 = vadd.f32 %v446, %v987
          %v989 = vpop.f32.mrf.mxu0
          %v990 = vpop.f32.mrf.mxu0
          %v991 = vadd.f32 %v446, %v990
          %v992 = vpop.f32.mrf.mxu0
          %993 = vmatprep.mubr.bf16.mxu0 0
          %994 = vmatmul.mubr.bf16.gmra.mxu0 %v903
          %v995 = vpop.f32.mrf.mxu0
          %v996 = vadd.f32 %v446, %v995
          %v997 = vpop.f32.mrf.mxu0
          %v998 = vpop.f32.mrf.mxu0
          %v999 = vadd.f32 %v446, %v998
          %v1000 = vpop.f32.mrf.mxu0
          %1001 = vmatprep.mubr.bf16.mxu0 0
          %1002 = vmatmul.mubr.bf16.gmra.mxu0 %v904
          %v1003 = vpop.f32.mrf.mxu0
          %v1004 = vadd.f32 %v446, %v1003
          %v1005 = vpop.f32.mrf.mxu0
          %v1006 = vpop.f32.mrf.mxu0
          %v1007 = vadd.f32 %v446, %v1006
          %v1008 = vpop.f32.mrf.mxu0
          %1009 = vdwg.mxu0
          %v1010 = vmax.f32 %v948, 0.0
          %v1011 = vmax.f32 %v951, 0.0
          %v1012 = vmax.f32 %v956, 0.0
          %v1013 = vmax.f32 %v959, 0.0
          %v1014 = vmax.f32 %v964, 0.0
          %v1015 = vmax.f32 %v967, 0.0
          %v1016 = vmax.f32 %v972, 0.0
          %v1017 = vmax.f32 %v975, 0.0
          %v1018 = vmax.f32 %v980, 0.0
          %v1019 = vmax.f32 %v983, 0.0
          %v1020 = vmax.f32 %v988, 0.0
          %v1021 = vmax.f32 %v991, 0.0
          %v1022 = vmax.f32 %v996, 0.0
          %v1023 = vmax.f32 %v999, 0.0
          %v1024 = vmax.f32 %v1004, 0.0
          %v1025 = vmax.f32 %v1007, 0.0
          %v1026 = vld [vmem:[#allocation5 + $0x80] sm:$0xff]
          %v1027 = vld [vmem:[#allocation5 + $0x88] sm:$0xff]
          %v1028 = vld [vmem:[#allocation5 + $0x90] sm:$0xff]
          %v1029 = vld [vmem:[#allocation5 + $0x98] sm:$0xff]
          %v1030 = vld [vmem:[#allocation5 + $0xa0] sm:$0xff]
          %v1031 = vld [vmem:[#allocation5 + $0xa8] sm:$0xff]
          %v1032 = vld [vmem:[#allocation5 + $0xb0] sm:$0xff]
          %v1033 = vld [vmem:[#allocation5 + $0xb8] sm:$0xff]
          %v1034 = vld [vmem:[#allocation5 + $0xc0] sm:$0xff]
          %v1035 = vld [vmem:[#allocation5 + $0xc8] sm:$0xff]
          %v1036 = vld [vmem:[#allocation5 + $0xd0] sm:$0xff]
          %v1037 = vld [vmem:[#allocation5 + $0xd8] sm:$0xff]
          %v1038 = vld [vmem:[#allocation5 + $0xe0] sm:$0xff]
          %v1039 = vld [vmem:[#allocation5 + $0xe8] sm:$0xff]
          %v1040 = vld [vmem:[#allocation5 + $0xf0] sm:$0xff]
          %v1041 = vld [vmem:[#allocation5 + $0xf8] sm:$0xff]
          %1043 = vset.pattern.permute.xlu0 0
          %1044 = vperm.xlu0 %1043, %v1026
          %v1045 = vpop.permute.xlu0 %1044
          %1048 = vset.pattern.permute.xlu0 0
          %1049 = vperm.xlu0 %1048, %v1027
          %v1050 = vpop.permute.xlu0 %1049
          %1053 = vset.pattern.permute.xlu0 0
          %1054 = vperm.xlu0 %1053, %v1028
          %v1055 = vpop.permute.xlu0 %1054
          %1058 = vset.pattern.permute.xlu0 0
          %1059 = vperm.xlu0 %1058, %v1029
          %v1060 = vpop.permute.xlu0 %1059
          %1063 = vset.pattern.permute.xlu0 0
          %1064 = vperm.xlu0 %1063, %v1030
          %v1065 = vpop.permute.xlu0 %1064
          %1068 = vset.pattern.permute.xlu0 0
          %1069 = vperm.xlu0 %1068, %v1031
          %v1070 = vpop.permute.xlu0 %1069
          %1073 = vset.pattern.permute.xlu0 0
          %1074 = vperm.xlu0 %1073, %v1032
          %v1075 = vpop.permute.xlu0 %1074
          %1078 = vset.pattern.permute.xlu0 0
          %1079 = vperm.xlu0 %1078, %v1033
          %v1080 = vpop.permute.xlu0 %1079
          %1083 = vset.pattern.permute.xlu0 0
          %1084 = vperm.xlu0 %1083, %v1034
          %v1085 = vpop.permute.xlu0 %1084
          %1088 = vset.pattern.permute.xlu0 0
          %1089 = vperm.xlu0 %1088, %v1035
          %v1090 = vpop.permute.xlu0 %1089
          %1093 = vset.pattern.permute.xlu0 0
          %1094 = vperm.xlu0 %1093, %v1036
          %v1095 = vpop.permute.xlu0 %1094
          %1098 = vset.pattern.permute.xlu0 0
          %1099 = vperm.xlu0 %1098, %v1037
          %v1100 = vpop.permute.xlu0 %1099
          %1103 = vset.pattern.permute.xlu0 0
          %1104 = vperm.xlu0 %1103, %v1038
          %v1105 = vpop.permute.xlu0 %1104
          %1108 = vset.pattern.permute.xlu0 0
          %1109 = vperm.xlu0 %1108, %v1039
          %v1110 = vpop.permute.xlu0 %1109
          %1113 = vset.pattern.permute.xlu0 0
          %1114 = vperm.xlu0 %1113, %v1040
          %v1115 = vpop.permute.xlu0 %1114
          %1118 = vset.pattern.permute.xlu0 0
          %1119 = vperm.xlu0 %1118, %v1041
          %v1120 = vpop.permute.xlu0 %1119
          %v1122 = vmul.f32 %v1010, %v1045
          %v1123 = vmul.f32 %v1011, %v1050
          %v1124 = vmul.f32 %v1012, %v1055
          %v1125 = vmul.f32 %v1013, %v1060
          %v1126 = vmul.f32 %v1014, %v1065
          %v1127 = vmul.f32 %v1015, %v1070
          %v1128 = vmul.f32 %v1016, %v1075
          %v1129 = vmul.f32 %v1017, %v1080
          %v1130 = vmul.f32 %v1018, %v1085
          %v1131 = vmul.f32 %v1019, %v1090
          %v1132 = vmul.f32 %v1020, %v1095
          %v1133 = vmul.f32 %v1021, %v1100
          %v1134 = vmul.f32 %v1022, %v1105
          %v1135 = vmul.f32 %v1023, %v1110
          %v1136 = vmul.f32 %v1024, %v1115
          %v1137 = vmul.f32 %v1025, %v1120
          %v1138 = vpack.c.bf16 %v1123, %v1122
          %v1139 = vpack.c.bf16 %v1125, %v1124
          %v1140 = vpack.c.bf16 %v1127, %v1126
          %v1141 = vpack.c.bf16 %v1129, %v1128
          %v1142 = vpack.c.bf16 %v1131, %v1130
          %v1143 = vpack.c.bf16 %v1133, %v1132
          %v1144 = vpack.c.bf16 %v1135, %v1134
          %v1145 = vpack.c.bf16 %v1137, %v1136
          %v1154 = vunpack.c.l.b16 %v1138
          %v1155 = vunpack.c.h.b16 %v1138
          %v1156 = vunpack.c.l.b16 %v1139
          %v1157 = vunpack.c.h.b16 %v1139
          %v1158 = vunpack.c.l.b16 %v1140
          %v1159 = vunpack.c.h.b16 %v1140
          %v1160 = vunpack.c.l.b16 %v1141
          %v1161 = vunpack.c.h.b16 %v1141
          %v1162 = vunpack.c.l.b16 %v1142
          %v1163 = vunpack.c.h.b16 %v1142
          %v1164 = vunpack.c.l.b16 %v1143
          %v1165 = vunpack.c.h.b16 %v1143
          %v1166 = vunpack.c.l.b16 %v1144
          %v1167 = vunpack.c.h.b16 %v1144
          %v1168 = vunpack.c.l.b16 %v1145
          %v1169 = vunpack.c.h.b16 %v1145
          %v1170 = vpack.c.b16 %v1154, %v1154
          %v1171 = vpack.c.b16 %v1155, %v1155
          %v1172 = vpack.c.b16 %v1156, %v1156
          %v1173 = vpack.c.b16 %v1157, %v1157
          %v1174 = vpack.c.b16 %v1158, %v1158
          %v1175 = vpack.c.b16 %v1159, %v1159
          %v1176 = vpack.c.b16 %v1160, %v1160
          %v1177 = vpack.c.b16 %v1161, %v1161
          %v1178 = vpack.c.b16 %v1162, %v1162
          %v1179 = vpack.c.b16 %v1163, %v1163
          %v1180 = vpack.c.b16 %v1164, %v1164
          %v1181 = vpack.c.b16 %v1165, %v1165
          %v1182 = vpack.c.b16 %v1166, %v1166
          %v1183 = vpack.c.b16 %v1167, %v1167
          %v1184 = vpack.c.b16 %v1168, %v1168
          %v1185 = vpack.c.b16 %v1169, %v1169
          %1202 = vst [vmem:[#allocation2 + $0x50] sm:$0xf] %v1170
          %1203 = vst [vmem:[#allocation2 + $0x54] sm:$0xf] %v1171
          %1204 = vst [vmem:[#allocation2 + $0x58] sm:$0xf] %v1172
          %1205 = vst [vmem:[#allocation2 + $0x5c] sm:$0xf] %v1173
          %1206 = vst [vmem:[#allocation2 + $0x60] sm:$0xf] %v1174
          %1207 = vst [vmem:[#allocation2 + $0x64] sm:$0xf] %v1175
          %1208 = vst [vmem:[#allocation2 + $0x68] sm:$0xf] %v1176
          %1209 = vst [vmem:[#allocation2 + $0x6c] sm:$0xf] %v1177
          %1210 = vst [vmem:[#allocation2 + $0x70] sm:$0xf] %v1178
          %1211 = vst [vmem:[#allocation2 + $0x74] sm:$0xf] %v1179
          %1212 = vst [vmem:[#allocation2 + $0x78] sm:$0xf] %v1180
          %1213 = vst [vmem:[#allocation2 + $0x7c] sm:$0xf] %v1181
          %1214 = vst [vmem:[#allocation2 + $0x80] sm:$0xf] %v1182
          %1215 = vst [vmem:[#allocation2 + $0x84] sm:$0xf] %v1183
          %1216 = vst [vmem:[#allocation2 + $0x88] sm:$0xf] %v1184
          %1217 = vst [vmem:[#allocation2 + $0x8c] sm:$0xf] %v1185
          %v1218 = vld [vmem:[%s0 + $0x80] sm:$0xf]
          %v1219 = vld [vmem:[%s0 + $0x84] sm:$0xf]
          %v1220 = vld [vmem:[%s0 + $0x88] sm:$0xf]
          %v1221 = vld [vmem:[%s0 + $0x8c] sm:$0xf]
          %v1222 = vld [vmem:[%s0 + $0x90] sm:$0xf]
          %v1223 = vld [vmem:[%s0 + $0x94] sm:$0xf]
          %v1224 = vld [vmem:[%s0 + $0x98] sm:$0xf]
          %v1225 = vld [vmem:[%s0 + $0x9c] sm:$0xf]
          %v1226 = vld [vmem:[%s0 + $0xa0] sm:$0xf]
          %v1227 = vld [vmem:[%s0 + $0xa4] sm:$0xf]
          %v1228 = vld [vmem:[%s0 + $0xa8] sm:$0xf]
          %v1229 = vld [vmem:[%s0 + $0xac] sm:$0xf]
          %v1230 = vld [vmem:[%s0 + $0xb0] sm:$0xf]
          %v1231 = vld [vmem:[%s0 + $0xb4] sm:$0xf]
          %v1232 = vld [vmem:[%s0 + $0xb8] sm:$0xf]
          %v1233 = vld [vmem:[%s0 + $0xbc] sm:$0xf]
          %v1250 = vunpack.c.l.b16 %v1218
          %v1251 = vunpack.c.l.b16 %v1219
          %v1252 = vunpack.c.l.b16 %v1220
          %v1253 = vunpack.c.l.b16 %v1221
          %v1254 = vunpack.c.l.b16 %v1222
          %v1255 = vunpack.c.l.b16 %v1223
          %v1256 = vunpack.c.l.b16 %v1224
          %v1257 = vunpack.c.l.b16 %v1225
          %v1258 = vunpack.c.l.b16 %v1226
          %v1259 = vunpack.c.l.b16 %v1227
          %v1260 = vunpack.c.l.b16 %v1228
          %v1261 = vunpack.c.l.b16 %v1229
          %v1262 = vunpack.c.l.b16 %v1230
          %v1263 = vunpack.c.l.b16 %v1231
          %v1264 = vunpack.c.l.b16 %v1232
          %v1265 = vunpack.c.l.b16 %v1233
          %v1266 = vpack.c.b16 %v1251, %v1250
          %v1267 = vpack.c.b16 %v1253, %v1252
          %v1268 = vpack.c.b16 %v1255, %v1254
          %v1269 = vpack.c.b16 %v1257, %v1256
          %v1270 = vpack.c.b16 %v1259, %v1258
          %v1271 = vpack.c.b16 %v1261, %v1260
          %v1272 = vpack.c.b16 %v1263, %v1262
          %v1273 = vpack.c.b16 %v1265, %v1264
          %1282 = vmatprep.subr.bf16.mxu0 0
          %1283 = vmatpush1.bf16.msra.mxu0 %v535
          %1284 = vmatprep.subr.bf16.mxu0 0
          %1285 = vmatpush1.bf16.msra.mxu0 %v534
          %1286 = vmatprep.subr.bf16.mxu0 0
          %1287 = vmatpush1.bf16.msra.mxu0 %v533
          %1288 = vmatprep.subr.bf16.mxu0 0
          %1289 = vmatpush1.bf16.msra.mxu0 %v532
          %1290 = vmatprep.subr.bf16.mxu0 0
          %1291 = vmatpush1.bf16.msra.mxu0 %v531
          %1292 = vmatprep.subr.bf16.mxu0 0
          %1293 = vmatpush1.bf16.msra.mxu0 %v530
          %1294 = vmatprep.subr.bf16.mxu0 0
          %1295 = vmatpush1.bf16.msra.mxu0 %v529
          %1296 = vmatprep.subr.bf16.mxu0 0
          %1297 = vmatpush1.bf16.msra.mxu0 %v528
          %1298 = vmatprep.subr.bf16.mxu0 0
          %1299 = vmatpush2.bf16.msra.mxu0 0
          %1300 = vmatprep.subr.bf16.mxu0 0
          %1301 = vmatpush2.bf16.msra.mxu0 0
          %1302 = vmatprep.subr.bf16.mxu0 0
          %1303 = vmatpush2.bf16.msra.mxu0 0
          %1304 = vmatprep.subr.bf16.mxu0 0
          %1305 = vmatpush2.bf16.msra.mxu0 0
          %1306 = vmatprep.subr.bf16.mxu0 0
          %1307 = vmatpush2.bf16.msra.mxu0 0
          %1308 = vmatprep.subr.bf16.mxu0 0
          %1309 = vmatpush2.bf16.msra.mxu0 0
          %1310 = vmatprep.subr.bf16.mxu0 0
          %1311 = vmatpush2.bf16.msra.mxu0 0
          %1312 = vmatprep.subr.bf16.mxu0 0
          %1313 = vmatpush2.bf16.msra.mxu0 0
          %1314 = vmatprep.mubr.bf16.mxu0 0
          %1315 = vmatmul.mubr.bf16.gmra.mxu0 %v1266
          %v1316 = vpop.f32.mrf.mxu0
          %v1317 = vadd.f32 %v446, %v1316
          %v1318 = vpop.f32.mrf.mxu0
          %v1319 = vpop.f32.mrf.mxu0
          %v1320 = vadd.f32 %v446, %v1319
          %v1321 = vpop.f32.mrf.mxu0
          %1322 = vmatprep.mubr.bf16.mxu0 0
          %1323 = vmatmul.mubr.bf16.gmra.mxu0 %v1267
          %v1324 = vpop.f32.mrf.mxu0
          %v1325 = vadd.f32 %v446, %v1324
          %v1326 = vpop.f32.mrf.mxu0
          %v1327 = vpop.f32.mrf.mxu0
          %v1328 = vadd.f32 %v446, %v1327
          %v1329 = vpop.f32.mrf.mxu0
          %1330 = vmatprep.mubr.bf16.mxu0 0
          %1331 = vmatmul.mubr.bf16.gmra.mxu0 %v1268
          %v1332 = vpop.f32.mrf.mxu0
          %v1333 = vadd.f32 %v446, %v1332
          %v1334 = vpop.f32.mrf.mxu0
          %v1335 = vpop.f32.mrf.mxu0
          %v1336 = vadd.f32 %v446, %v1335
          %v1337 = vpop.f32.mrf.mxu0
          %1338 = vmatprep.mubr.bf16.mxu0 0
          %1339 = vmatmul.mubr.bf16.gmra.mxu0 %v1269
          %v1340 = vpop.f32.mrf.mxu0
          %v1341 = vadd.f32 %v446, %v1340
          %v1342 = vpop.f32.mrf.mxu0
          %v1343 = vpop.f32.mrf.mxu0
          %v1344 = vadd.f32 %v446, %v1343
          %v1345 = vpop.f32.mrf.mxu0
          %1346 = vmatprep.mubr.bf16.mxu0 0
          %1347 = vmatmul.mubr.bf16.gmra.mxu0 %v1270
          %v1348 = vpop.f32.mrf.mxu0
          %v1349 = vadd.f32 %v446, %v1348
          %v1350 = vpop.f32.mrf.mxu0
          %v1351 = vpop.f32.mrf.mxu0
          %v1352 = vadd.f32 %v446, %v1351
          %v1353 = vpop.f32.mrf.mxu0
          %1354 = vmatprep.mubr.bf16.mxu0 0
          %1355 = vmatmul.mubr.bf16.gmra.mxu0 %v1271
          %v1356 = vpop.f32.mrf.mxu0
          %v1357 = vadd.f32 %v446, %v1356
          %v1358 = vpop.f32.mrf.mxu0
          %v1359 = vpop.f32.mrf.mxu0
          %v1360 = vadd.f32 %v446, %v1359
          %v1361 = vpop.f32.mrf.mxu0
          %1362 = vmatprep.mubr.bf16.mxu0 0
          %1363 = vmatmul.mubr.bf16.gmra.mxu0 %v1272
          %v1364 = vpop.f32.mrf.mxu0
          %v1365 = vadd.f32 %v446, %v1364
          %v1366 = vpop.f32.mrf.mxu0
          %v1367 = vpop.f32.mrf.mxu0
          %v1368 = vadd.f32 %v446, %v1367
          %v1369 = vpop.f32.mrf.mxu0
          %1370 = vmatprep.mubr.bf16.mxu0 0
          %1371 = vmatmul.mubr.bf16.gmra.mxu0 %v1273
          %v1372 = vpop.f32.mrf.mxu0
          %v1373 = vadd.f32 %v446, %v1372
          %v1374 = vpop.f32.mrf.mxu0
          %v1375 = vpop.f32.mrf.mxu0
          %v1376 = vadd.f32 %v446, %v1375
          %v1377 = vpop.f32.mrf.mxu0
          %1378 = vdwg.mxu0
          %v1379 = vmax.f32 %v1317, 0.0
          %v1380 = vmax.f32 %v1320, 0.0
          %v1381 = vmax.f32 %v1325, 0.0
          %v1382 = vmax.f32 %v1328, 0.0
          %v1383 = vmax.f32 %v1333, 0.0
          %v1384 = vmax.f32 %v1336, 0.0
          %v1385 = vmax.f32 %v1341, 0.0
          %v1386 = vmax.f32 %v1344, 0.0
          %v1387 = vmax.f32 %v1349, 0.0
          %v1388 = vmax.f32 %v1352, 0.0
          %v1389 = vmax.f32 %v1357, 0.0
          %v1390 = vmax.f32 %v1360, 0.0
          %v1391 = vmax.f32 %v1365, 0.0
          %v1392 = vmax.f32 %v1368, 0.0
          %v1393 = vmax.f32 %v1373, 0.0
          %v1394 = vmax.f32 %v1376, 0.0
          %v1395 = vld [vmem:[#allocation5 + $0x100] sm:$0xff]
          %v1396 = vld [vmem:[#allocation5 + $0x108] sm:$0xff]
          %v1397 = vld [vmem:[#allocation5 + $0x110] sm:$0xff]
          %v1398 = vld [vmem:[#allocation5 + $0x118] sm:$0xff]
          %v1399 = vld [vmem:[#allocation5 + $0x120] sm:$0xff]
          %v1400 = vld [vmem:[#allocation5 + $0x128] sm:$0xff]
          %v1401 = vld [vmem:[#allocation5 + $0x130] sm:$0xff]
          %v1402 = vld [vmem:[#allocation5 + $0x138] sm:$0xff]
          %v1403 = vld [vmem:[#allocation5 + $0x140] sm:$0xff]
          %v1404 = vld [vmem:[#allocation5 + $0x148] sm:$0xff]
          %v1405 = vld [vmem:[#allocation5 + $0x150] sm:$0xff]
          %v1406 = vld [vmem:[#allocation5 + $0x158] sm:$0xff]
          %v1407 = vld [vmem:[#allocation5 + $0x160] sm:$0xff]
          %v1408 = vld [vmem:[#allocation5 + $0x168] sm:$0xff]
          %v1409 = vld [vmem:[#allocation5 + $0x170] sm:$0xff]
          %v1410 = vld [vmem:[#allocation5 + $0x178] sm:$0xff]
          %1412 = vset.pattern.permute.xlu0 0
          %1413 = vperm.xlu0 %1412, %v1395
          %v1414 = vpop.permute.xlu0 %1413
          %1417 = vset.pattern.permute.xlu0 0
          %1418 = vperm.xlu0 %1417, %v1396
          %v1419 = vpop.permute.xlu0 %1418
          %1422 = vset.pattern.permute.xlu0 0
          %1423 = vperm.xlu0 %1422, %v1397
          %v1424 = vpop.permute.xlu0 %1423
          %1427 = vset.pattern.permute.xlu0 0
          %1428 = vperm.xlu0 %1427, %v1398
          %v1429 = vpop.permute.xlu0 %1428
          %1432 = vset.pattern.permute.xlu0 0
          %1433 = vperm.xlu0 %1432, %v1399
          %v1434 = vpop.permute.xlu0 %1433
          %1437 = vset.pattern.permute.xlu0 0
          %1438 = vperm.xlu0 %1437, %v1400
          %v1439 = vpop.permute.xlu0 %1438
          %1442 = vset.pattern.permute.xlu0 0
          %1443 = vperm.xlu0 %1442, %v1401
          %v1444 = vpop.permute.xlu0 %1443
          %1447 = vset.pattern.permute.xlu0 0
          %1448 = vperm.xlu0 %1447, %v1402
          %v1449 = vpop.permute.xlu0 %1448
          %1452 = vset.pattern.permute.xlu0 0
          %1453 = vperm.xlu0 %1452, %v1403
          %v1454 = vpop.permute.xlu0 %1453
          %1457 = vset.pattern.permute.xlu0 0
          %1458 = vperm.xlu0 %1457, %v1404
          %v1459 = vpop.permute.xlu0 %1458
          %1462 = vset.pattern.permute.xlu0 0
          %1463 = vperm.xlu0 %1462, %v1405
          %v1464 = vpop.permute.xlu0 %1463
          %1467 = vset.pattern.permute.xlu0 0
          %1468 = vperm.xlu0 %1467, %v1406
          %v1469 = vpop.permute.xlu0 %1468
          %1472 = vset.pattern.permute.xlu0 0
          %1473 = vperm.xlu0 %1472, %v1407
          %v1474 = vpop.permute.xlu0 %1473
          %1477 = vset.pattern.permute.xlu0 0
          %1478 = vperm.xlu0 %1477, %v1408
          %v1479 = vpop.permute.xlu0 %1478
          %1482 = vset.pattern.permute.xlu0 0
          %1483 = vperm.xlu0 %1482, %v1409
          %v1484 = vpop.permute.xlu0 %1483
          %1487 = vset.pattern.permute.xlu0 0
          %1488 = vperm.xlu0 %1487, %v1410
          %v1489 = vpop.permute.xlu0 %1488
          %v1491 = vmul.f32 %v1379, %v1414
          %v1492 = vmul.f32 %v1380, %v1419
          %v1493 = vmul.f32 %v1381, %v1424
          %v1494 = vmul.f32 %v1382, %v1429
          %v1495 = vmul.f32 %v1383, %v1434
          %v1496 = vmul.f32 %v1384, %v1439
          %v1497 = vmul.f32 %v1385, %v1444
          %v1498 = vmul.f32 %v1386, %v1449
          %v1499 = vmul.f32 %v1387, %v1454
          %v1500 = vmul.f32 %v1388, %v1459
          %v1501 = vmul.f32 %v1389, %v1464
          %v1502 = vmul.f32 %v1390, %v1469
          %v1503 = vmul.f32 %v1391, %v1474
          %v1504 = vmul.f32 %v1392, %v1479
          %v1505 = vmul.f32 %v1393, %v1484
          %v1506 = vmul.f32 %v1394, %v1489
          %v1507 = vpack.c.bf16 %v1492, %v1491
          %v1508 = vpack.c.bf16 %v1494, %v1493
          %v1509 = vpack.c.bf16 %v1496, %v1495
          %v1510 = vpack.c.bf16 %v1498, %v1497
          %v1511 = vpack.c.bf16 %v1500, %v1499
          %v1512 = vpack.c.bf16 %v1502, %v1501
          %v1513 = vpack.c.bf16 %v1504, %v1503
          %v1514 = vpack.c.bf16 %v1506, %v1505
          %v1523 = vunpack.c.l.b16 %v1507
          %v1524 = vunpack.c.h.b16 %v1507
          %v1525 = vunpack.c.l.b16 %v1508
          %v1526 = vunpack.c.h.b16 %v1508
          %v1527 = vunpack.c.l.b16 %v1509
          %v1528 = vunpack.c.h.b16 %v1509
          %v1529 = vunpack.c.l.b16 %v1510
          %v1530 = vunpack.c.h.b16 %v1510
          %v1531 = vunpack.c.l.b16 %v1511
          %v1532 = vunpack.c.h.b16 %v1511
          %v1533 = vunpack.c.l.b16 %v1512
          %v1534 = vunpack.c.h.b16 %v1512
          %v1535 = vunpack.c.l.b16 %v1513
          %v1536 = vunpack.c.h.b16 %v1513
          %v1537 = vunpack.c.l.b16 %v1514
          %v1538 = vunpack.c.h.b16 %v1514
          %v1539 = vpack.c.b16 %v1523, %v1523
          %v1540 = vpack.c.b16 %v1524, %v1524
          %v1541 = vpack.c.b16 %v1525, %v1525
          %v1542 = vpack.c.b16 %v1526, %v1526
          %v1543 = vpack.c.b16 %v1527, %v1527
          %v1544 = vpack.c.b16 %v1528, %v1528
          %v1545 = vpack.c.b16 %v1529, %v1529
          %v1546 = vpack.c.b16 %v1530, %v1530
          %v1547 = vpack.c.b16 %v1531, %v1531
          %v1548 = vpack.c.b16 %v1532, %v1532
          %v1549 = vpack.c.b16 %v1533, %v1533
          %v1550 = vpack.c.b16 %v1534, %v1534
          %v1551 = vpack.c.b16 %v1535, %v1535
          %v1552 = vpack.c.b16 %v1536, %v1536
          %v1553 = vpack.c.b16 %v1537, %v1537
          %v1554 = vpack.c.b16 %v1538, %v1538
          %1571 = vst [vmem:[#allocation2 + $0x90] sm:$0xf] %v1539
          %1572 = vst [vmem:[#allocation2 + $0x94] sm:$0xf] %v1540
          %1573 = vst [vmem:[#allocation2 + $0x98] sm:$0xf] %v1541
          %1574 = vst [vmem:[#allocation2 + $0x9c] sm:$0xf] %v1542
          %1575 = vst [vmem:[#allocation2 + $0xa0] sm:$0xf] %v1543
          %1576 = vst [vmem:[#allocation2 + $0xa4] sm:$0xf] %v1544
          %1577 = vst [vmem:[#allocation2 + $0xa8] sm:$0xf] %v1545
          %1578 = vst [vmem:[#allocation2 + $0xac] sm:$0xf] %v1546
          %1579 = vst [vmem:[#allocation2 + $0xb0] sm:$0xf] %v1547
          %1580 = vst [vmem:[#allocation2 + $0xb4] sm:$0xf] %v1548
          %1581 = vst [vmem:[#allocation2 + $0xb8] sm:$0xf] %v1549
          %1582 = vst [vmem:[#allocation2 + $0xbc] sm:$0xf] %v1550
          %1583 = vst [vmem:[#allocation2 + $0xc0] sm:$0xf] %v1551
          %1584 = vst [vmem:[#allocation2 + $0xc4] sm:$0xf] %v1552
          %1585 = vst [vmem:[#allocation2 + $0xc8] sm:$0xf] %v1553
          %1586 = vst [vmem:[#allocation2 + $0xcc] sm:$0xf] %v1554
          %v1587 = vld [vmem:[#allocation2] sm:$0xc]
          %v1588 = vld [vmem:[#allocation2 + $0x4] sm:$0xf]
          %v1589 = vld [vmem:[#allocation2 + $0x8] sm:$0xf]
          %v1590 = vld [vmem:[#allocation2 + $0xc] sm:$0xf]
          %v1591 = vld [vmem:[#allocation2 + $0x10] sm:$0xf]
          %v1592 = vld [vmem:[#allocation2 + $0x14] sm:$0xf]
          %v1593 = vld [vmem:[#allocation2 + $0x18] sm:$0xf]
          %v1594 = vld [vmem:[#allocation2 + $0x1c] sm:$0xf]
          %v1595 = vld [vmem:[#allocation2 + $0x20] sm:$0xf]
          %v1596 = vld [vmem:[#allocation2 + $0x24] sm:$0xf]
          %v1597 = vld [vmem:[#allocation2 + $0x28] sm:$0xf]
          %v1598 = vld [vmem:[#allocation2 + $0x2c] sm:$0xf]
          %v1599 = vld [vmem:[#allocation2 + $0x30] sm:$0xf]
          %v1600 = vld [vmem:[#allocation2 + $0x34] sm:$0xf]
          %v1601 = vld [vmem:[#allocation2 + $0x38] sm:$0xf]
          %v1602 = vld [vmem:[#allocation2 + $0x3c] sm:$0xf]
          %v1603 = vld [vmem:[#allocation2 + $0x40] sm:$0x3]
          %v1604 = vld [vmem:[#allocation11] sm:$0xf]
          %v1605 = vld [vmem:[#allocation11 + $0x4] sm:$0xf]
          %v1606 = vld [vmem:[#allocation11 + $0x8] sm:$0xf]
          %v1607 = vld [vmem:[#allocation11 + $0xc] sm:$0xf]
          %v1608 = vld [vmem:[#allocation11 + $0x10] sm:$0xf]
          %v1609 = vld [vmem:[#allocation11 + $0x14] sm:$0xf]
          %v1610 = vld [vmem:[#allocation11 + $0x18] sm:$0xf]
          %v1611 = vld [vmem:[#allocation11 + $0x1c] sm:$0xf]
          %v1612 = vld [vmem:[#allocation11 + $0x20] sm:$0xf]
          %v1613 = vld [vmem:[#allocation11 + $0x24] sm:$0xf]
          %v1614 = vld [vmem:[#allocation11 + $0x28] sm:$0xf]
          %v1615 = vld [vmem:[#allocation11 + $0x2c] sm:$0xf]
          %v1616 = vld [vmem:[#allocation11 + $0x30] sm:$0xf]
          %v1617 = vld [vmem:[#allocation11 + $0x34] sm:$0xf]
          %v1618 = vld [vmem:[#allocation11 + $0x38] sm:$0xf]
          %v1619 = vld [vmem:[#allocation11 + $0x3c] sm:$0xf]
          %v1620 = vld [vmem:[#allocation2] sm:$0x8]
          %v1621 = vld [vmem:[#allocation2 + $0x40] sm:$0x7]
          %s1622 = scalar_lea.vmem [#allocation11], 64
          %v1623 = vld [vmem:[%s1622] sm:$0xf]
          %v1624 = vld [vmem:[%s1622 + $0x4] sm:$0xf]
          %v1625 = vld [vmem:[%s1622 + $0x8] sm:$0xf]
          %v1626 = vld [vmem:[%s1622 + $0xc] sm:$0xf]
          %v1627 = vld [vmem:[%s1622 + $0x10] sm:$0xf]
          %v1628 = vld [vmem:[%s1622 + $0x14] sm:$0xf]
          %v1629 = vld [vmem:[%s1622 + $0x18] sm:$0xf]
          %v1630 = vld [vmem:[%s1622 + $0x1c] sm:$0xf]
          %v1631 = vld [vmem:[%s1622 + $0x20] sm:$0xf]
          %v1632 = vld [vmem:[%s1622 + $0x24] sm:$0xf]
          %v1633 = vld [vmem:[%s1622 + $0x28] sm:$0xf]
          %v1634 = vld [vmem:[%s1622 + $0x2c] sm:$0xf]
          %v1635 = vld [vmem:[%s1622 + $0x30] sm:$0xf]
          %v1636 = vld [vmem:[%s1622 + $0x34] sm:$0xf]
          %v1637 = vld [vmem:[%s1622 + $0x38] sm:$0xf]
          %v1638 = vld [vmem:[%s1622 + $0x3c] sm:$0xf]
          %v1656 = vunpack.c.l.b16 %v1620
          %v1657 = vunpack.c.l.b16 %v1588
          %v1658 = vunpack.c.l.b16 %v1589
          %v1659 = vunpack.c.l.b16 %v1590
          %v1660 = vunpack.c.l.b16 %v1591
          %v1661 = vunpack.c.l.b16 %v1592
          %v1662 = vunpack.c.l.b16 %v1593
          %v1663 = vunpack.c.l.b16 %v1594
          %v1664 = vunpack.c.l.b16 %v1595
          %v1665 = vunpack.c.l.b16 %v1596
          %v1666 = vunpack.c.l.b16 %v1597
          %v1667 = vunpack.c.l.b16 %v1598
          %v1668 = vunpack.c.l.b16 %v1599
          %v1669 = vunpack.c.l.b16 %v1600
          %v1670 = vunpack.c.l.b16 %v1601
          %v1671 = vunpack.c.l.b16 %v1602
          %v1672 = vunpack.c.l.b16 %v1621
          %v1673 = vpack.c.b16 %v1657, %v1656
          %v1674 = vpack.c.b16 %v1659, %v1658
          %v1675 = vpack.c.b16 %v1661, %v1660
          %v1676 = vpack.c.b16 %v1663, %v1662
          %v1677 = vpack.c.b16 %v1665, %v1664
          %v1678 = vpack.c.b16 %v1667, %v1666
          %v1679 = vpack.c.b16 %v1669, %v1668
          %v1680 = vpack.c.b16 %v1671, %v1670
          %v1681 = vpack.c.b16 %v1672, %v1672
          %vm1682 = vcmask 1044480
          %v1683 = vrot.slane %v1673, 3
          %v1684 = vrot.slane %v1674, 3
          %v1685 = vsel %vm1682, %v1683, %v1684
          %v1686 = vrot.slane %v1675, 3
          %v1687 = vsel %vm1682, %v1684, %v1686
          %v1688 = vrot.slane %v1676, 3
          %v1689 = vsel %vm1682, %v1686, %v1688
          %v1690 = vrot.slane %v1677, 3
          %v1691 = vsel %vm1682, %v1688, %v1690
          %v1692 = vrot.slane %v1678, 3
          %v1693 = vsel %vm1682, %v1690, %v1692
          %v1694 = vrot.slane %v1679, 3
          %v1695 = vsel %vm1682, %v1692, %v1694
          %v1696 = vrot.slane %v1680, 3
          %v1697 = vsel %vm1682, %v1694, %v1696
          %v1698 = vrot.slane %v1681, 3
          %v1699 = vsel %vm1682, %v1696, %v1698
          %v1724 = vunpack.c.l.b16 %v1623
          %v1725 = vunpack.c.l.b16 %v1624
          %v1726 = vunpack.c.l.b16 %v1625
          %v1727 = vunpack.c.l.b16 %v1626
          %v1728 = vunpack.c.l.b16 %v1627
          %v1729 = vunpack.c.l.b16 %v1628
          %v1730 = vunpack.c.l.b16 %v1629
          %v1731 = vunpack.c.l.b16 %v1630
          %v1732 = vunpack.c.l.b16 %v1631
          %v1733 = vunpack.c.l.b16 %v1632
          %v1734 = vunpack.c.l.b16 %v1633
          %v1735 = vunpack.c.l.b16 %v1634
          %v1736 = vunpack.c.l.b16 %v1635
          %v1737 = vunpack.c.l.b16 %v1636
          %v1738 = vunpack.c.l.b16 %v1637
          %v1739 = vunpack.c.l.b16 %v1638
          %v1740 = vpack.c.b16 %v1725, %v1724
          %v1741 = vpack.c.b16 %v1727, %v1726
          %v1742 = vpack.c.b16 %v1729, %v1728
          %v1743 = vpack.c.b16 %v1731, %v1730
          %v1744 = vpack.c.b16 %v1733, %v1732
          %v1745 = vpack.c.b16 %v1735, %v1734
          %v1746 = vpack.c.b16 %v1737, %v1736
          %v1747 = vpack.c.b16 %v1739, %v1738
          %1756 = vmatprep.subr.bf16.mxu0 0
          %1757 = vmatpush1.bf16.msra.mxu0 %v1747
          %1758 = vmatprep.subr.bf16.mxu0 0
          %1759 = vmatpush1.bf16.msra.mxu0 %v1746
          %1760 = vmatprep.subr.bf16.mxu0 0
          %1761 = vmatpush1.bf16.msra.mxu0 %v1745
          %1762 = vmatprep.subr.bf16.mxu0 0
          %1763 = vmatpush1.bf16.msra.mxu0 %v1744
          %1764 = vmatprep.subr.bf16.mxu0 0
          %1765 = vmatpush1.bf16.msra.mxu0 %v1743
          %1766 = vmatprep.subr.bf16.mxu0 0
          %1767 = vmatpush1.bf16.msra.mxu0 %v1742
          %1768 = vmatprep.subr.bf16.mxu0 0
          %1769 = vmatpush1.bf16.msra.mxu0 %v1741
          %1770 = vmatprep.subr.bf16.mxu0 0
          %1771 = vmatpush1.bf16.msra.mxu0 %v1740
          %1772 = vmatprep.subr.bf16.mxu0 0
          %1773 = vmatpush2.bf16.msra.mxu0 0
          %1774 = vmatprep.subr.bf16.mxu0 0
          %1775 = vmatpush2.bf16.msra.mxu0 0
          %1776 = vmatprep.subr.bf16.mxu0 0
          %1777 = vmatpush2.bf16.msra.mxu0 0
          %1778 = vmatprep.subr.bf16.mxu0 0
          %1779 = vmatpush2.bf16.msra.mxu0 0
          %1780 = vmatprep.subr.bf16.mxu0 0
          %1781 = vmatpush2.bf16.msra.mxu0 0
          %1782 = vmatprep.subr.bf16.mxu0 0
          %1783 = vmatpush2.bf16.msra.mxu0 0
          %1784 = vmatprep.subr.bf16.mxu0 0
          %1785 = vmatpush2.bf16.msra.mxu0 0
          %1786 = vmatprep.subr.bf16.mxu0 0
          %1787 = vmatpush2.bf16.msra.mxu0 0
          %1788 = vmatprep.mubr.bf16.mxu0 0
          %1789 = vmatmul.mubr.bf16.gmra.mxu0 %v1685
          %v1790 = vpop.f32.mrf.mxu0
          %v1791 = vadd.f32 0.0, %v1790
          %v1792 = vpop.f32.mrf.mxu0
          %v1793 = vpop.f32.mrf.mxu0
          %v1794 = vadd.f32 0.0, %v1793
          %v1795 = vpop.f32.mrf.mxu0
          %1796 = vmatprep.mubr.bf16.mxu0 0
          %1797 = vmatmul.mubr.bf16.gmra.mxu0 %v1687
          %v1798 = vpop.f32.mrf.mxu0
          %v1799 = vadd.f32 0.0, %v1798
          %v1800 = vpop.f32.mrf.mxu0
          %v1801 = vpop.f32.mrf.mxu0
          %v1802 = vadd.f32 0.0, %v1801
          %v1803 = vpop.f32.mrf.mxu0
          %1804 = vmatprep.mubr.bf16.mxu0 0
          %1805 = vmatmul.mubr.bf16.gmra.mxu0 %v1689
          %v1806 = vpop.f32.mrf.mxu0
          %v1807 = vadd.f32 0.0, %v1806
          %v1808 = vpop.f32.mrf.mxu0
          %v1809 = vpop.f32.mrf.mxu0
          %v1810 = vadd.f32 0.0, %v1809
          %v1811 = vpop.f32.mrf.mxu0
          %1812 = vmatprep.mubr.bf16.mxu0 0
          %1813 = vmatmul.mubr.bf16.gmra.mxu0 %v1691
          %v1814 = vpop.f32.mrf.mxu0
          %v1815 = vadd.f32 0.0, %v1814
          %v1816 = vpop.f32.mrf.mxu0
          %v1817 = vpop.f32.mrf.mxu0
          %v1818 = vadd.f32 0.0, %v1817
          %v1819 = vpop.f32.mrf.mxu0
          %1820 = vmatprep.mubr.bf16.mxu0 0
          %1821 = vmatmul.mubr.bf16.gmra.mxu0 %v1693
          %v1822 = vpop.f32.mrf.mxu0
          %v1823 = vadd.f32 0.0, %v1822
          %v1824 = vpop.f32.mrf.mxu0
          %v1825 = vpop.f32.mrf.mxu0
          %v1826 = vadd.f32 0.0, %v1825
          %v1827 = vpop.f32.mrf.mxu0
          %1828 = vmatprep.mubr.bf16.mxu0 0
          %1829 = vmatmul.mubr.bf16.gmra.mxu0 %v1695
          %v1830 = vpop.f32.mrf.mxu0
          %v1831 = vadd.f32 0.0, %v1830
          %v1832 = vpop.f32.mrf.mxu0
          %v1833 = vpop.f32.mrf.mxu0
          %v1834 = vadd.f32 0.0, %v1833
          %v1835 = vpop.f32.mrf.mxu0
          %1836 = vmatprep.mubr.bf16.mxu0 0
          %1837 = vmatmul.mubr.bf16.gmra.mxu0 %v1697
          %v1838 = vpop.f32.mrf.mxu0
          %v1839 = vadd.f32 0.0, %v1838
          %v1840 = vpop.f32.mrf.mxu0
          %v1841 = vpop.f32.mrf.mxu0
          %v1842 = vadd.f32 0.0, %v1841
          %v1843 = vpop.f32.mrf.mxu0
          %1844 = vmatprep.mubr.bf16.mxu0 0
          %1845 = vmatmul.mubr.bf16.gmra.mxu0 %v1699
          %v1846 = vpop.f32.mrf.mxu0
          %v1847 = vadd.f32 0.0, %v1846
          %v1848 = vpop.f32.mrf.mxu0
          %v1849 = vpop.f32.mrf.mxu0
          %v1850 = vadd.f32 0.0, %v1849
          %v1851 = vpop.f32.mrf.mxu0
          %1852 = vdwg.mxu0
          %v1855 = vunpack.c.l.b16 %v1587
          %v1856 = vunpack.c.l.b16 %v1603
          %v1857 = vpack.c.b16 %v1657, %v1855
          %v1858 = vpack.c.b16 %v1856, %v1856
          %vm1859 = vcmask 1045504
          %v1860 = vrot.slane %v1857, 2
          %v1861 = vrot.slane %v1674, 2
          %v1862 = vsel %vm1859, %v1860, %v1861
          %v1863 = vrot.slane %v1675, 2
          %v1864 = vsel %vm1859, %v1861, %v1863
          %v1865 = vrot.slane %v1676, 2
          %v1866 = vsel %vm1859, %v1863, %v1865
          %v1867 = vrot.slane %v1677, 2
          %v1868 = vsel %vm1859, %v1865, %v1867
          %v1869 = vrot.slane %v1678, 2
          %v1870 = vsel %vm1859, %v1867, %v1869
          %v1871 = vrot.slane %v1679, 2
          %v1872 = vsel %vm1859, %v1869, %v1871
          %v1873 = vrot.slane %v1680, 2
          %v1874 = vsel %vm1859, %v1871, %v1873
          %v1875 = vrot.slane %v1858, 2
          %v1876 = vsel %vm1859, %v1873, %v1875
          %v1901 = vunpack.c.l.b16 %v1604
          %v1902 = vunpack.c.l.b16 %v1605
          %v1903 = vunpack.c.l.b16 %v1606
          %v1904 = vunpack.c.l.b16 %v1607
          %v1905 = vunpack.c.l.b16 %v1608
          %v1906 = vunpack.c.l.b16 %v1609
          %v1907 = vunpack.c.l.b16 %v1610
          %v1908 = vunpack.c.l.b16 %v1611
          %v1909 = vunpack.c.l.b16 %v1612
          %v1910 = vunpack.c.l.b16 %v1613
          %v1911 = vunpack.c.l.b16 %v1614
          %v1912 = vunpack.c.l.b16 %v1615
          %v1913 = vunpack.c.l.b16 %v1616
          %v1914 = vunpack.c.l.b16 %v1617
          %v1915 = vunpack.c.l.b16 %v1618
          %v1916 = vunpack.c.l.b16 %v1619
          %v1917 = vpack.c.b16 %v1902, %v1901
          %v1918 = vpack.c.b16 %v1904, %v1903
          %v1919 = vpack.c.b16 %v1906, %v1905
          %v1920 = vpack.c.b16 %v1908, %v1907
          %v1921 = vpack.c.b16 %v1910, %v1909
          %v1922 = vpack.c.b16 %v1912, %v1911
          %v1923 = vpack.c.b16 %v1914, %v1913
          %v1924 = vpack.c.b16 %v1916, %v1915
          %1933 = vmatprep.subr.bf16.mxu0 0
          %1934 = vmatpush1.bf16.msra.mxu0 %v1924
          %1935 = vmatprep.subr.bf16.mxu0 0
          %1936 = vmatpush1.bf16.msra.mxu0 %v1923
          %1937 = vmatprep.subr.bf16.mxu0 0
          %1938 = vmatpush1.bf16.msra.mxu0 %v1922
          %1939 = vmatprep.subr.bf16.mxu0 0
          %1940 = vmatpush1.bf16.msra.mxu0 %v1921
          %1941 = vmatprep.subr.bf16.mxu0 0
          %1942 = vmatpush1.bf16.msra.mxu0 %v1920
          %1943 = vmatprep.subr.bf16.mxu0 0
          %1944 = vmatpush1.bf16.msra.mxu0 %v1919
          %1945 = vmatprep.subr.bf16.mxu0 0
          %1946 = vmatpush1.bf16.msra.mxu0 %v1918
          %1947 = vmatprep.subr.bf16.mxu0 0
          %1948 = vmatpush1.bf16.msra.mxu0 %v1917
          %1949 = vmatprep.subr.bf16.mxu0 0
          %1950 = vmatpush2.bf16.msra.mxu0 0
          %1951 = vmatprep.subr.bf16.mxu0 0
          %1952 = vmatpush2.bf16.msra.mxu0 0
          %1953 = vmatprep.subr.bf16.mxu0 0
          %1954 = vmatpush2.bf16.msra.mxu0 0
          %1955 = vmatprep.subr.bf16.mxu0 0
          %1956 = vmatpush2.bf16.msra.mxu0 0
          %1957 = vmatprep.subr.bf16.mxu0 0
          %1958 = vmatpush2.bf16.msra.mxu0 0
          %1959 = vmatprep.subr.bf16.mxu0 0
          %1960 = vmatpush2.bf16.msra.mxu0 0
          %1961 = vmatprep.subr.bf16.mxu0 0
          %1962 = vmatpush2.bf16.msra.mxu0 0
          %1963 = vmatprep.subr.bf16.mxu0 0
          %1964 = vmatpush2.bf16.msra.mxu0 0
          %1965 = vmatprep.mubr.bf16.mxu0 0
          %1966 = vmatmul.mubr.bf16.gmra.mxu0 %v1862
          %v1967 = vpop.f32.mrf.mxu0
          %v1968 = vadd.f32 %v1791, %v1967
          %v1969 = vpop.f32.mrf.mxu0
          %v1970 = vpop.f32.mrf.mxu0
          %v1971 = vadd.f32 %v1794, %v1970
          %v1972 = vpop.f32.mrf.mxu0
          %1973 = vmatprep.mubr.bf16.mxu0 0
          %1974 = vmatmul.mubr.bf16.gmra.mxu0 %v1864
          %v1975 = vpop.f32.mrf.mxu0
          %v1976 = vadd.f32 %v1799, %v1975
          %v1977 = vpop.f32.mrf.mxu0
          %v1978 = vpop.f32.mrf.mxu0
          %v1979 = vadd.f32 %v1802, %v1978
          %v1980 = vpop.f32.mrf.mxu0
          %1981 = vmatprep.mubr.bf16.mxu0 0
          %1982 = vmatmul.mubr.bf16.gmra.mxu0 %v1866
          %v1983 = vpop.f32.mrf.mxu0
          %v1984 = vadd.f32 %v1807, %v1983
          %v1985 = vpop.f32.mrf.mxu0
          %v1986 = vpop.f32.mrf.mxu0
          %v1987 = vadd.f32 %v1810, %v1986
          %v1988 = vpop.f32.mrf.mxu0
          %1989 = vmatprep.mubr.bf16.mxu0 0
          %1990 = vmatmul.mubr.bf16.gmra.mxu0 %v1868
          %v1991 = vpop.f32.mrf.mxu0
          %v1992 = vadd.f32 %v1815, %v1991
          %v1993 = vpop.f32.mrf.mxu0
          %v1994 = vpop.f32.mrf.mxu0
          %v1995 = vadd.f32 %v1818, %v1994
          %v1996 = vpop.f32.mrf.mxu0
          %1997 = vmatprep.mubr.bf16.mxu0 0
          %1998 = vmatmul.mubr.bf16.gmra.mxu0 %v1870
          %v1999 = vpop.f32.mrf.mxu0
          %v2000 = vadd.f32 %v1823, %v1999
          %v2001 = vpop.f32.mrf.mxu0
          %v2002 = vpop.f32.mrf.mxu0
          %v2003 = vadd.f32 %v1826, %v2002
          %v2004 = vpop.f32.mrf.mxu0
          %2005 = vmatprep.mubr.bf16.mxu0 0
          %2006 = vmatmul.mubr.bf16.gmra.mxu0 %v1872
          %v2007 = vpop.f32.mrf.mxu0
          %v2008 = vadd.f32 %v1831, %v2007
          %v2009 = vpop.f32.mrf.mxu0
          %v2010 = vpop.f32.mrf.mxu0
          %v2011 = vadd.f32 %v1834, %v2010
          %v2012 = vpop.f32.mrf.mxu0
          %2013 = vmatprep.mubr.bf16.mxu0 0
          %2014 = vmatmul.mubr.bf16.gmra.mxu0 %v1874
          %v2015 = vpop.f32.mrf.mxu0
          %v2016 = vadd.f32 %v1839, %v2015
          %v2017 = vpop.f32.mrf.mxu0
          %v2018 = vpop.f32.mrf.mxu0
          %v2019 = vadd.f32 %v1842, %v2018
          %v2020 = vpop.f32.mrf.mxu0
          %2021 = vmatprep.mubr.bf16.mxu0 0
          %2022 = vmatmul.mubr.bf16.gmra.mxu0 %v1876
          %v2023 = vpop.f32.mrf.mxu0
          %v2024 = vadd.f32 %v1847, %v2023
          %v2025 = vpop.f32.mrf.mxu0
          %v2026 = vpop.f32.mrf.mxu0
          %v2027 = vadd.f32 %v1850, %v2026
          %v2028 = vpop.f32.mrf.mxu0
          %2029 = vdwg.mxu0
          %v2030 = vld [vmem:[#allocation2 + $0x40] sm:$0xf]
          %s2031 = scalar_lea.vmem [#allocation11], 128
          %v2032 = vld [vmem:[%s2031] sm:$0xf]
          %v2033 = vld [vmem:[%s2031 + $0x4] sm:$0xf]
          %v2034 = vld [vmem:[%s2031 + $0x8] sm:$0xf]
          %v2035 = vld [vmem:[%s2031 + $0xc] sm:$0xf]
          %v2036 = vld [vmem:[%s2031 + $0x10] sm:$0xf]
          %v2037 = vld [vmem:[%s2031 + $0x14] sm:$0xf]
          %v2038 = vld [vmem:[%s2031 + $0x18] sm:$0xf]
          %v2039 = vld [vmem:[%s2031 + $0x1c] sm:$0xf]
          %v2040 = vld [vmem:[%s2031 + $0x20] sm:$0xf]
          %v2041 = vld [vmem:[%s2031 + $0x24] sm:$0xf]
          %v2042 = vld [vmem:[%s2031 + $0x28] sm:$0xf]
          %v2043 = vld [vmem:[%s2031 + $0x2c] sm:$0xf]
          %v2044 = vld [vmem:[%s2031 + $0x30] sm:$0xf]
          %v2045 = vld [vmem:[%s2031 + $0x34] sm:$0xf]
          %v2046 = vld [vmem:[%s2031 + $0x38] sm:$0xf]
          %v2047 = vld [vmem:[%s2031 + $0x3c] sm:$0xf]
          %v2049 = vunpack.c.l.b16 %v2030
          %v2050 = vpack.c.b16 %v1658, %v1657
          %v2051 = vpack.c.b16 %v1660, %v1659
          %v2052 = vpack.c.b16 %v1662, %v1661
          %v2053 = vpack.c.b16 %v1664, %v1663
          %v2054 = vpack.c.b16 %v1666, %v1665
          %v2055 = vpack.c.b16 %v1668, %v1667
          %v2056 = vpack.c.b16 %v1670, %v1669
          %v2057 = vpack.c.b16 %v2049, %v1671
          %v2082 = vunpack.c.l.b16 %v2032
          %v2083 = vunpack.c.l.b16 %v2033
          %v2084 = vunpack.c.l.b16 %v2034
          %v2085 = vunpack.c.l.b16 %v2035
          %v2086 = vunpack.c.l.b16 %v2036
          %v2087 = vunpack.c.l.b16 %v2037
          %v2088 = vunpack.c.l.b16 %v2038
          %v2089 = vunpack.c.l.b16 %v2039
          %v2090 = vunpack.c.l.b16 %v2040
          %v2091 = vunpack.c.l.b16 %v2041
          %v2092 = vunpack.c.l.b16 %v2042
          %v2093 = vunpack.c.l.b16 %v2043
          %v2094 = vunpack.c.l.b16 %v2044
          %v2095 = vunpack.c.l.b16 %v2045
          %v2096 = vunpack.c.l.b16 %v2046
          %v2097 = vunpack.c.l.b16 %v2047
          %v2098 = vpack.c.b16 %v2083, %v2082
          %v2099 = vpack.c.b16 %v2085, %v2084
          %v2100 = vpack.c.b16 %v2087, %v2086
          %v2101 = vpack.c.b16 %v2089, %v2088
          %v2102 = vpack.c.b16 %v2091, %v2090
          %v2103 = vpack.c.b16 %v2093, %v2092
          %v2104 = vpack.c.b16 %v2095, %v2094
          %v2105 = vpack.c.b16 %v2097, %v2096
          %2114 = vmatprep.subr.bf16.mxu0 0
          %2115 = vmatpush1.bf16.msra.mxu0 %v2105
          %2116 = vmatprep.subr.bf16.mxu0 0
          %2117 = vmatpush1.bf16.msra.mxu0 %v2104
          %2118 = vmatprep.subr.bf16.mxu0 0
          %2119 = vmatpush1.bf16.msra.mxu0 %v2103
          %2120 = vmatprep.subr.bf16.mxu0 0
          %2121 = vmatpush1.bf16.msra.mxu0 %v2102
          %2122 = vmatprep.subr.bf16.mxu0 0
          %2123 = vmatpush1.bf16.msra.mxu0 %v2101
          %2124 = vmatprep.subr.bf16.mxu0 0
          %2125 = vmatpush1.bf16.msra.mxu0 %v2100
          %2126 = vmatprep.subr.bf16.mxu0 0
          %2127 = vmatpush1.bf16.msra.mxu0 %v2099
          %2128 = vmatprep.subr.bf16.mxu0 0
          %2129 = vmatpush1.bf16.msra.mxu0 %v2098
          %2130 = vmatprep.subr.bf16.mxu0 0
          %2131 = vmatpush2.bf16.msra.mxu0 0
          %2132 = vmatprep.subr.bf16.mxu0 0
          %2133 = vmatpush2.bf16.msra.mxu0 0
          %2134 = vmatprep.subr.bf16.mxu0 0
          %2135 = vmatpush2.bf16.msra.mxu0 0
          %2136 = vmatprep.subr.bf16.mxu0 0
          %2137 = vmatpush2.bf16.msra.mxu0 0
          %2138 = vmatprep.subr.bf16.mxu0 0
          %2139 = vmatpush2.bf16.msra.mxu0 0
          %2140 = vmatprep.subr.bf16.mxu0 0
          %2141 = vmatpush2.bf16.msra.mxu0 0
          %2142 = vmatprep.subr.bf16.mxu0 0
          %2143 = vmatpush2.bf16.msra.mxu0 0
          %2144 = vmatprep.subr.bf16.mxu0 0
          %2145 = vmatpush2.bf16.msra.mxu0 0
          %2146 = vmatprep.mubr.bf16.mxu0 0
          %2147 = vmatmul.mubr.bf16.gmra.mxu0 %v2050
          %v2148 = vpop.f32.mrf.mxu0
          %v2149 = vadd.f32 0.0, %v2148
          %v2150 = vpop.f32.mrf.mxu0
          %v2151 = vpop.f32.mrf.mxu0
          %v2152 = vadd.f32 0.0, %v2151
          %v2153 = vpop.f32.mrf.mxu0
          %2154 = vmatprep.mubr.bf16.mxu0 0
          %2155 = vmatmul.mubr.bf16.gmra.mxu0 %v2051
          %v2156 = vpop.f32.mrf.mxu0
          %v2157 = vadd.f32 0.0, %v2156
          %v2158 = vpop.f32.mrf.mxu0
          %v2159 = vpop.f32.mrf.mxu0
          %v2160 = vadd.f32 0.0, %v2159
          %v2161 = vpop.f32.mrf.mxu0
          %2162 = vmatprep.mubr.bf16.mxu0 0
          %2163 = vmatmul.mubr.bf16.gmra.mxu0 %v2052
          %v2164 = vpop.f32.mrf.mxu0
          %v2165 = vadd.f32 0.0, %v2164
          %v2166 = vpop.f32.mrf.mxu0
          %v2167 = vpop.f32.mrf.mxu0
          %v2168 = vadd.f32 0.0, %v2167
          %v2169 = vpop.f32.mrf.mxu0
          %2170 = vmatprep.mubr.bf16.mxu0 0
          %2171 = vmatmul.mubr.bf16.gmra.mxu0 %v2053
          %v2172 = vpop.f32.mrf.mxu0
          %v2173 = vadd.f32 0.0, %v2172
          %v2174 = vpop.f32.mrf.mxu0
          %v2175 = vpop.f32.mrf.mxu0
          %v2176 = vadd.f32 0.0, %v2175
          %v2177 = vpop.f32.mrf.mxu0
          %2178 = vmatprep.mubr.bf16.mxu0 0
          %2179 = vmatmul.mubr.bf16.gmra.mxu0 %v2054
          %v2180 = vpop.f32.mrf.mxu0
          %v2181 = vadd.f32 0.0, %v2180
          %v2182 = vpop.f32.mrf.mxu0
          %v2183 = vpop.f32.mrf.mxu0
          %v2184 = vadd.f32 0.0, %v2183
          %v2185 = vpop.f32.mrf.mxu0
          %2186 = vmatprep.mubr.bf16.mxu0 0
          %2187 = vmatmul.mubr.bf16.gmra.mxu0 %v2055
          %v2188 = vpop.f32.mrf.mxu0
          %v2189 = vadd.f32 0.0, %v2188
          %v2190 = vpop.f32.mrf.mxu0
          %v2191 = vpop.f32.mrf.mxu0
          %v2192 = vadd.f32 0.0, %v2191
          %v2193 = vpop.f32.mrf.mxu0
          %2194 = vmatprep.mubr.bf16.mxu0 0
          %2195 = vmatmul.mubr.bf16.gmra.mxu0 %v2056
          %v2196 = vpop.f32.mrf.mxu0
          %v2197 = vadd.f32 0.0, %v2196
          %v2198 = vpop.f32.mrf.mxu0
          %v2199 = vpop.f32.mrf.mxu0
          %v2200 = vadd.f32 0.0, %v2199
          %v2201 = vpop.f32.mrf.mxu0
          %2202 = vmatprep.mubr.bf16.mxu0 0
          %2203 = vmatmul.mubr.bf16.gmra.mxu0 %v2057
          %v2204 = vpop.f32.mrf.mxu0
          %v2205 = vadd.f32 0.0, %v2204
          %v2206 = vpop.f32.mrf.mxu0
          %v2207 = vpop.f32.mrf.mxu0
          %v2208 = vadd.f32 0.0, %v2207
          %v2209 = vpop.f32.mrf.mxu0
          %2210 = vdwg.mxu0
          %v2211 = vadd.f32 %v1968, %v2149
          %v2212 = vadd.f32 %v1971, %v2152
          %v2213 = vadd.f32 %v1976, %v2157
          %v2214 = vadd.f32 %v1979, %v2160
          %v2215 = vadd.f32 %v1984, %v2165
          %v2216 = vadd.f32 %v1987, %v2168
          %v2217 = vadd.f32 %v1992, %v2173
          %v2218 = vadd.f32 %v1995, %v2176
          %v2219 = vadd.f32 %v2000, %v2181
          %v2220 = vadd.f32 %v2003, %v2184
          %v2221 = vadd.f32 %v2008, %v2189
          %v2222 = vadd.f32 %v2011, %v2192
          %v2223 = vadd.f32 %v2016, %v2197
          %v2224 = vadd.f32 %v2019, %v2200
          %v2225 = vadd.f32 %v2024, %v2205
          %v2226 = vadd.f32 %v2027, %v2208
          %v2227 = vld [vmem:[#allocation2 + $0xc] sm:$0x8]
          %v2228 = vld [vmem:[#allocation2 + $0x10] sm:$0xf]
          %v2229 = vld [vmem:[#allocation2 + $0x14] sm:$0xf]
          %v2230 = vld [vmem:[#allocation2 + $0x18] sm:$0xf]
          %v2231 = vld [vmem:[#allocation2 + $0x1c] sm:$0xf]
          %v2232 = vld [vmem:[#allocation2 + $0x20] sm:$0xf]
          %v2233 = vld [vmem:[#allocation2 + $0x24] sm:$0xf]
          %v2234 = vld [vmem:[#allocation2 + $0x28] sm:$0xf]
          %v2235 = vld [vmem:[#allocation2 + $0x2c] sm:$0xf]
          %v2236 = vld [vmem:[#allocation2 + $0x30] sm:$0xf]
          %v2237 = vld [vmem:[#allocation2 + $0x34] sm:$0xf]
          %v2238 = vld [vmem:[#allocation2 + $0x38] sm:$0xf]
          %v2239 = vld [vmem:[#allocation2 + $0x3c] sm:$0xf]
          %v2240 = vld [vmem:[#allocation2 + $0x40] sm:$0xf]
          %v2241 = vld [vmem:[#allocation2 + $0x44] sm:$0xf]
          %v2242 = vld [vmem:[#allocation2 + $0x48] sm:$0xf]
          %v2243 = vld [vmem:[#allocation2 + $0x4c] sm:$0x7]
          %s2244 = scalar_lea.vmem [#allocation11], 192
          %v2245 = vld [vmem:[%s2244] sm:$0xf]
          %v2246 = vld [vmem:[%s2244 + $0x4] sm:$0xf]
          %v2247 = vld [vmem:[%s2244 + $0x8] sm:$0xf]
          %v2248 = vld [vmem:[%s2244 + $0xc] sm:$0xf]
          %v2249 = vld [vmem:[%s2244 + $0x10] sm:$0xf]
          %v2250 = vld [vmem:[%s2244 + $0x14] sm:$0xf]
          %v2251 = vld [vmem:[%s2244 + $0x18] sm:$0xf]
          %v2252 = vld [vmem:[%s2244 + $0x1c] sm:$0xf]
          %v2253 = vld [vmem:[%s2244 + $0x20] sm:$0xf]
          %v2254 = vld [vmem:[%s2244 + $0x24] sm:$0xf]
          %v2255 = vld [vmem:[%s2244 + $0x28] sm:$0xf]
          %v2256 = vld [vmem:[%s2244 + $0x2c] sm:$0xf]
          %v2257 = vld [vmem:[%s2244 + $0x30] sm:$0xf]
          %v2258 = vld [vmem:[%s2244 + $0x34] sm:$0xf]
          %v2259 = vld [vmem:[%s2244 + $0x38] sm:$0xf]
          %v2260 = vld [vmem:[%s2244 + $0x3c] sm:$0xf]
          %v2278 = vunpack.c.l.b16 %v2227
          %v2279 = vunpack.c.l.b16 %v2228
          %v2280 = vunpack.c.l.b16 %v2229
          %v2281 = vunpack.c.l.b16 %v2230
          %v2282 = vunpack.c.l.b16 %v2231
          %v2283 = vunpack.c.l.b16 %v2232
          %v2284 = vunpack.c.l.b16 %v2233
          %v2285 = vunpack.c.l.b16 %v2234
          %v2286 = vunpack.c.l.b16 %v2235
          %v2287 = vunpack.c.l.b16 %v2236
          %v2288 = vunpack.c.l.b16 %v2237
          %v2289 = vunpack.c.l.b16 %v2238
          %v2290 = vunpack.c.l.b16 %v2239
          %v2291 = vunpack.c.l.b16 %v2240
          %v2292 = vunpack.c.l.b16 %v2241
          %v2293 = vunpack.c.l.b16 %v2242
          %v2294 = vunpack.c.l.b16 %v2243
          %v2295 = vpack.c.b16 %v2279, %v2278
          %v2296 = vpack.c.b16 %v2281, %v2280
          %v2297 = vpack.c.b16 %v2283, %v2282
          %v2298 = vpack.c.b16 %v2285, %v2284
          %v2299 = vpack.c.b16 %v2287, %v2286
          %v2300 = vpack.c.b16 %v2289, %v2288
          %v2301 = vpack.c.b16 %v2291, %v2290
          %v2302 = vpack.c.b16 %v2293, %v2292
          %v2303 = vpack.c.b16 %v2294, %v2294
          %v2304 = vrot.slane %v2295, 3
          %v2305 = vrot.slane %v2296, 3
          %v2306 = vsel %vm1682, %v2304, %v2305
          %v2307 = vrot.slane %v2297, 3
          %v2308 = vsel %vm1682, %v2305, %v2307
          %v2309 = vrot.slane %v2298, 3
          %v2310 = vsel %vm1682, %v2307, %v2309
          %v2311 = vrot.slane %v2299, 3
          %v2312 = vsel %vm1682, %v2309, %v2311
          %v2313 = vrot.slane %v2300, 3
          %v2314 = vsel %vm1682, %v2311, %v2313
          %v2315 = vrot.slane %v2301, 3
          %v2316 = vsel %vm1682, %v2313, %v2315
          %v2317 = vrot.slane %v2302, 3
          %v2318 = vsel %vm1682, %v2315, %v2317
          %v2319 = vrot.slane %v2303, 3
          %v2320 = vsel %vm1682, %v2317, %v2319
          %v2345 = vunpack.c.l.b16 %v2245
          %v2346 = vunpack.c.l.b16 %v2246
          %v2347 = vunpack.c.l.b16 %v2247
          %v2348 = vunpack.c.l.b16 %v2248
          %v2349 = vunpack.c.l.b16 %v2249
          %v2350 = vunpack.c.l.b16 %v2250
          %v2351 = vunpack.c.l.b16 %v2251
          %v2352 = vunpack.c.l.b16 %v2252
          %v2353 = vunpack.c.l.b16 %v2253
          %v2354 = vunpack.c.l.b16 %v2254
          %v2355 = vunpack.c.l.b16 %v2255
          %v2356 = vunpack.c.l.b16 %v2256
          %v2357 = vunpack.c.l.b16 %v2257
          %v2358 = vunpack.c.l.b16 %v2258
          %v2359 = vunpack.c.l.b16 %v2259
          %v2360 = vunpack.c.l.b16 %v2260
          %v2361 = vpack.c.b16 %v2346, %v2345
          %v2362 = vpack.c.b16 %v2348, %v2347
          %v2363 = vpack.c.b16 %v2350, %v2349
          %v2364 = vpack.c.b16 %v2352, %v2351
          %v2365 = vpack.c.b16 %v2354, %v2353
          %v2366 = vpack.c.b16 %v2356, %v2355
          %v2367 = vpack.c.b16 %v2358, %v2357
          %v2368 = vpack.c.b16 %v2360, %v2359
          %2377 = vmatprep.subr.bf16.mxu0 0
          %2378 = vmatpush1.bf16.msra.mxu0 %v2368
          %2379 = vmatprep.subr.bf16.mxu0 0
          %2380 = vmatpush1.bf16.msra.mxu0 %v2367
          %2381 = vmatprep.subr.bf16.mxu0 0
          %2382 = vmatpush1.bf16.msra.mxu0 %v2366
          %2383 = vmatprep.subr.bf16.mxu0 0
          %2384 = vmatpush1.bf16.msra.mxu0 %v2365
          %2385 = vmatprep.subr.bf16.mxu0 0
          %2386 = vmatpush1.bf16.msra.mxu0 %v2364
          %2387 = vmatprep.subr.bf16.mxu0 0
          %2388 = vmatpush1.bf16.msra.mxu0 %v2363
          %2389 = vmatprep.subr.bf16.mxu0 0
          %2390 = vmatpush1.bf16.msra.mxu0 %v2362
          %2391 = vmatprep.subr.bf16.mxu0 0
          %2392 = vmatpush1.bf16.msra.mxu0 %v2361
          %2393 = vmatprep.subr.bf16.mxu0 0
          %2394 = vmatpush2.bf16.msra.mxu0 0
          %2395 = vmatprep.subr.bf16.mxu0 0
          %2396 = vmatpush2.bf16.msra.mxu0 0
          %2397 = vmatprep.subr.bf16.mxu0 0
          %2398 = vmatpush2.bf16.msra.mxu0 0
          %2399 = vmatprep.subr.bf16.mxu0 0
          %2400 = vmatpush2.bf16.msra.mxu0 0
          %2401 = vmatprep.subr.bf16.mxu0 0
          %2402 = vmatpush2.bf16.msra.mxu0 0
          %2403 = vmatprep.subr.bf16.mxu0 0
          %2404 = vmatpush2.bf16.msra.mxu0 0
          %2405 = vmatprep.subr.bf16.mxu0 0
          %2406 = vmatpush2.bf16.msra.mxu0 0
          %2407 = vmatprep.subr.bf16.mxu0 0
          %2408 = vmatpush2.bf16.msra.mxu0 0
          %2409 = vmatprep.mubr.bf16.mxu0 0
          %2410 = vmatmul.mubr.bf16.gmra.mxu0 %v2306
          %v2411 = vpop.f32.mrf.mxu0
          %v2412 = vadd.f32 0.0, %v2411
          %v2413 = vpop.f32.mrf.mxu0
          %v2414 = vpop.f32.mrf.mxu0
          %v2415 = vadd.f32 0.0, %v2414
          %v2416 = vpop.f32.mrf.mxu0
          %2417 = vmatprep.mubr.bf16.mxu0 0
          %2418 = vmatmul.mubr.bf16.gmra.mxu0 %v2308
          %v2419 = vpop.f32.mrf.mxu0
          %v2420 = vadd.f32 0.0, %v2419
          %v2421 = vpop.f32.mrf.mxu0
          %v2422 = vpop.f32.mrf.mxu0
          %v2423 = vadd.f32 0.0, %v2422
          %v2424 = vpop.f32.mrf.mxu0
          %2425 = vmatprep.mubr.bf16.mxu0 0
          %2426 = vmatmul.mubr.bf16.gmra.mxu0 %v2310
          %v2427 = vpop.f32.mrf.mxu0
          %v2428 = vadd.f32 0.0, %v2427
          %v2429 = vpop.f32.mrf.mxu0
          %v2430 = vpop.f32.mrf.mxu0
          %v2431 = vadd.f32 0.0, %v2430
          %v2432 = vpop.f32.mrf.mxu0
          %2433 = vmatprep.mubr.bf16.mxu0 0
          %2434 = vmatmul.mubr.bf16.gmra.mxu0 %v2312
          %v2435 = vpop.f32.mrf.mxu0
          %v2436 = vadd.f32 0.0, %v2435
          %v2437 = vpop.f32.mrf.mxu0
          %v2438 = vpop.f32.mrf.mxu0
          %v2439 = vadd.f32 0.0, %v2438
          %v2440 = vpop.f32.mrf.mxu0
          %2441 = vmatprep.mubr.bf16.mxu0 0
          %2442 = vmatmul.mubr.bf16.gmra.mxu0 %v2314
          %v2443 = vpop.f32.mrf.mxu0
          %v2444 = vadd.f32 0.0, %v2443
          %v2445 = vpop.f32.mrf.mxu0
          %v2446 = vpop.f32.mrf.mxu0
          %v2447 = vadd.f32 0.0, %v2446
          %v2448 = vpop.f32.mrf.mxu0
          %2449 = vmatprep.mubr.bf16.mxu0 0
          %2450 = vmatmul.mubr.bf16.gmra.mxu0 %v2316
          %v2451 = vpop.f32.mrf.mxu0
          %v2452 = vadd.f32 0.0, %v2451
          %v2453 = vpop.f32.mrf.mxu0
          %v2454 = vpop.f32.mrf.mxu0
          %v2455 = vadd.f32 0.0, %v2454
          %v2456 = vpop.f32.mrf.mxu0
          %2457 = vmatprep.mubr.bf16.mxu0 0
          %2458 = vmatmul.mubr.bf16.gmra.mxu0 %v2318
          %v2459 = vpop.f32.mrf.mxu0
          %v2460 = vadd.f32 0.0, %v2459
          %v2461 = vpop.f32.mrf.mxu0
          %v2462 = vpop.f32.mrf.mxu0
          %v2463 = vadd.f32 0.0, %v2462
          %v2464 = vpop.f32.mrf.mxu0
          %2465 = vmatprep.mubr.bf16.mxu0 0
          %2466 = vmatmul.mubr.bf16.gmra.mxu0 %v2320
          %v2467 = vpop.f32.mrf.mxu0
          %v2468 = vadd.f32 0.0, %v2467
          %v2469 = vpop.f32.mrf.mxu0
          %v2470 = vpop.f32.mrf.mxu0
          %v2471 = vadd.f32 0.0, %v2470
          %v2472 = vpop.f32.mrf.mxu0
          %2473 = vdwg.mxu0
          %v2474 = vadd.f32 %v2211, %v2412
          %v2475 = vadd.f32 %v2212, %v2415
          %v2476 = vadd.f32 %v2213, %v2420
          %v2477 = vadd.f32 %v2214, %v2423
          %v2478 = vadd.f32 %v2215, %v2428
          %v2479 = vadd.f32 %v2216, %v2431
          %v2480 = vadd.f32 %v2217, %v2436
          %v2481 = vadd.f32 %v2218, %v2439
          %v2482 = vadd.f32 %v2219, %v2444
          %v2483 = vadd.f32 %v2220, %v2447
          %v2484 = vadd.f32 %v2221, %v2452
          %v2485 = vadd.f32 %v2222, %v2455
          %v2486 = vadd.f32 %v2223, %v2460
          %v2487 = vadd.f32 %v2224, %v2463
          %v2488 = vadd.f32 %v2225, %v2468
          %v2489 = vadd.f32 %v2226, %v2471
          %v2490 = vld [vmem:[#allocation2 + $0x4c] sm:$0xf]
          %s2491 = scalar_lea.vmem [#allocation11], 256
          %v2492 = vld [vmem:[%s2491] sm:$0xf]
          %v2493 = vld [vmem:[%s2491 + $0x4] sm:$0xf]
          %v2494 = vld [vmem:[%s2491 + $0x8] sm:$0xf]
          %v2495 = vld [vmem:[%s2491 + $0xc] sm:$0xf]
          %v2496 = vld [vmem:[%s2491 + $0x10] sm:$0xf]
          %v2497 = vld [vmem:[%s2491 + $0x14] sm:$0xf]
          %v2498 = vld [vmem:[%s2491 + $0x18] sm:$0xf]
          %v2499 = vld [vmem:[%s2491 + $0x1c] sm:$0xf]
          %v2500 = vld [vmem:[%s2491 + $0x20] sm:$0xf]
          %v2501 = vld [vmem:[%s2491 + $0x24] sm:$0xf]
          %v2502 = vld [vmem:[%s2491 + $0x28] sm:$0xf]
          %v2503 = vld [vmem:[%s2491 + $0x2c] sm:$0xf]
          %v2504 = vld [vmem:[%s2491 + $0x30] sm:$0xf]
          %v2505 = vld [vmem:[%s2491 + $0x34] sm:$0xf]
          %v2506 = vld [vmem:[%s2491 + $0x38] sm:$0xf]
          %v2507 = vld [vmem:[%s2491 + $0x3c] sm:$0xf]
          %v2509 = vunpack.c.l.b16 %v2490
          %v2510 = vpack.c.b16 %v2280, %v2279
          %v2511 = vpack.c.b16 %v2282, %v2281
          %v2512 = vpack.c.b16 %v2284, %v2283
          %v2513 = vpack.c.b16 %v2286, %v2285
          %v2514 = vpack.c.b16 %v2288, %v2287
          %v2515 = vpack.c.b16 %v2290, %v2289
          %v2516 = vpack.c.b16 %v2292, %v2291
          %v2517 = vpack.c.b16 %v2509, %v2293
          %v2542 = vunpack.c.l.b16 %v2492
          %v2543 = vunpack.c.l.b16 %v2493
          %v2544 = vunpack.c.l.b16 %v2494
          %v2545 = vunpack.c.l.b16 %v2495
          %v2546 = vunpack.c.l.b16 %v2496
          %v2547 = vunpack.c.l.b16 %v2497
          %v2548 = vunpack.c.l.b16 %v2498
          %v2549 = vunpack.c.l.b16 %v2499
          %v2550 = vunpack.c.l.b16 %v2500
          %v2551 = vunpack.c.l.b16 %v2501
          %v2552 = vunpack.c.l.b16 %v2502
          %v2553 = vunpack.c.l.b16 %v2503
          %v2554 = vunpack.c.l.b16 %v2504
          %v2555 = vunpack.c.l.b16 %v2505
          %v2556 = vunpack.c.l.b16 %v2506
          %v2557 = vunpack.c.l.b16 %v2507
          %v2558 = vpack.c.b16 %v2543, %v2542
          %v2559 = vpack.c.b16 %v2545, %v2544
          %v2560 = vpack.c.b16 %v2547, %v2546
          %v2561 = vpack.c.b16 %v2549, %v2548
          %v2562 = vpack.c.b16 %v2551, %v2550
          %v2563 = vpack.c.b16 %v2553, %v2552
          %v2564 = vpack.c.b16 %v2555, %v2554
          %v2565 = vpack.c.b16 %v2557, %v2556
          %2574 = vmatprep.subr.bf16.mxu0 0
          %2575 = vmatpush1.bf16.msra.mxu0 %v2565
          %2576 = vmatprep.subr.bf16.mxu0 0
          %2577 = vmatpush1.bf16.msra.mxu0 %v2564
          %2578 = vmatprep.subr.bf16.mxu0 0
          %2579 = vmatpush1.bf16.msra.mxu0 %v2563
          %2580 = vmatprep.subr.bf16.mxu0 0
          %2581 = vmatpush1.bf16.msra.mxu0 %v2562
          %2582 = vmatprep.subr.bf16.mxu0 0
          %2583 = vmatpush1.bf16.msra.mxu0 %v2561
          %2584 = vmatprep.subr.bf16.mxu0 0
          %2585 = vmatpush1.bf16.msra.mxu0 %v2560
          %2586 = vmatprep.subr.bf16.mxu0 0
          %2587 = vmatpush1.bf16.msra.mxu0 %v2559
          %2588 = vmatprep.subr.bf16.mxu0 0
          %2589 = vmatpush1.bf16.msra.mxu0 %v2558
          %2590 = vmatprep.subr.bf16.mxu0 0
          %2591 = vmatpush2.bf16.msra.mxu0 0
          %2592 = vmatprep.subr.bf16.mxu0 0
          %2593 = vmatpush2.bf16.msra.mxu0 0
          %2594 = vmatprep.subr.bf16.mxu0 0
          %2595 = vmatpush2.bf16.msra.mxu0 0
          %2596 = vmatprep.subr.bf16.mxu0 0
          %2597 = vmatpush2.bf16.msra.mxu0 0
          %2598 = vmatprep.subr.bf16.mxu0 0
          %2599 = vmatpush2.bf16.msra.mxu0 0
          %2600 = vmatprep.subr.bf16.mxu0 0
          %2601 = vmatpush2.bf16.msra.mxu0 0
          %2602 = vmatprep.subr.bf16.mxu0 0
          %2603 = vmatpush2.bf16.msra.mxu0 0
          %2604 = vmatprep.subr.bf16.mxu0 0
          %2605 = vmatpush2.bf16.msra.mxu0 0
          %2606 = vmatprep.mubr.bf16.mxu0 0
          %2607 = vmatmul.mubr.bf16.gmra.mxu0 %v2510
          %v2608 = vpop.f32.mrf.mxu0
          %v2609 = vadd.f32 0.0, %v2608
          %v2610 = vpop.f32.mrf.mxu0
          %v2611 = vpop.f32.mrf.mxu0
          %v2612 = vadd.f32 0.0, %v2611
          %v2613 = vpop.f32.mrf.mxu0
          %2614 = vmatprep.mubr.bf16.mxu0 0
          %2615 = vmatmul.mubr.bf16.gmra.mxu0 %v2511
          %v2616 = vpop.f32.mrf.mxu0
          %v2617 = vadd.f32 0.0, %v2616
          %v2618 = vpop.f32.mrf.mxu0
          %v2619 = vpop.f32.mrf.mxu0
          %v2620 = vadd.f32 0.0, %v2619
          %v2621 = vpop.f32.mrf.mxu0
          %2622 = vmatprep.mubr.bf16.mxu0 0
          %2623 = vmatmul.mubr.bf16.gmra.mxu0 %v2512
          %v2624 = vpop.f32.mrf.mxu0
          %v2625 = vadd.f32 0.0, %v2624
          %v2626 = vpop.f32.mrf.mxu0
          %v2627 = vpop.f32.mrf.mxu0
          %v2628 = vadd.f32 0.0, %v2627
          %v2629 = vpop.f32.mrf.mxu0
          %2630 = vmatprep.mubr.bf16.mxu0 0
          %2631 = vmatmul.mubr.bf16.gmra.mxu0 %v2513
          %v2632 = vpop.f32.mrf.mxu0
          %v2633 = vadd.f32 0.0, %v2632
          %v2634 = vpop.f32.mrf.mxu0
          %v2635 = vpop.f32.mrf.mxu0
          %v2636 = vadd.f32 0.0, %v2635
          %v2637 = vpop.f32.mrf.mxu0
          %2638 = vmatprep.mubr.bf16.mxu0 0
          %2639 = vmatmul.mubr.bf16.gmra.mxu0 %v2514
          %v2640 = vpop.f32.mrf.mxu0
          %v2641 = vadd.f32 0.0, %v2640
          %v2642 = vpop.f32.mrf.mxu0
          %v2643 = vpop.f32.mrf.mxu0
          %v2644 = vadd.f32 0.0, %v2643
          %v2645 = vpop.f32.mrf.mxu0
          %2646 = vmatprep.mubr.bf16.mxu0 0
          %2647 = vmatmul.mubr.bf16.gmra.mxu0 %v2515
          %v2648 = vpop.f32.mrf.mxu0
          %v2649 = vadd.f32 0.0, %v2648
          %v2650 = vpop.f32.mrf.mxu0
          %v2651 = vpop.f32.mrf.mxu0
          %v2652 = vadd.f32 0.0, %v2651
          %v2653 = vpop.f32.mrf.mxu0
          %2654 = vmatprep.mubr.bf16.mxu0 0
          %2655 = vmatmul.mubr.bf16.gmra.mxu0 %v2516
          %v2656 = vpop.f32.mrf.mxu0
          %v2657 = vadd.f32 0.0, %v2656
          %v2658 = vpop.f32.mrf.mxu0
          %v2659 = vpop.f32.mrf.mxu0
          %v2660 = vadd.f32 0.0, %v2659
          %v2661 = vpop.f32.mrf.mxu0
          %2662 = vmatprep.mubr.bf16.mxu0 0
          %2663 = vmatmul.mubr.bf16.gmra.mxu0 %v2517
          %v2664 = vpop.f32.mrf.mxu0
          %v2665 = vadd.f32 0.0, %v2664
          %v2666 = vpop.f32.mrf.mxu0
          %v2667 = vpop.f32.mrf.mxu0
          %v2668 = vadd.f32 0.0, %v2667
          %v2669 = vpop.f32.mrf.mxu0
          %2670 = vdwg.mxu0
          %v2671 = vadd.f32 %v2474, %v2609
          %v2672 = vadd.f32 %v2475, %v2612
          %v2673 = vadd.f32 %v2476, %v2617
          %v2674 = vadd.f32 %v2477, %v2620
          %v2675 = vadd.f32 %v2478, %v2625
          %v2676 = vadd.f32 %v2479, %v2628
          %v2677 = vadd.f32 %v2480, %v2633
          %v2678 = vadd.f32 %v2481, %v2636
          %v2679 = vadd.f32 %v2482, %v2641
          %v2680 = vadd.f32 %v2483, %v2644
          %v2681 = vadd.f32 %v2484, %v2649
          %v2682 = vadd.f32 %v2485, %v2652
          %v2683 = vadd.f32 %v2486, %v2657
          %v2684 = vadd.f32 %v2487, %v2660
          %v2685 = vadd.f32 %v2488, %v2665
          %v2686 = vadd.f32 %v2489, %v2668
          %v2687 = vld [vmem:[#allocation2 + $0x10] sm:$0xe]
          %v2688 = vld [vmem:[#allocation2 + $0x14] sm:$0xf]
          %v2689 = vld [vmem:[#allocation2 + $0x18] sm:$0xf]
          %v2690 = vld [vmem:[#allocation2 + $0x1c] sm:$0xf]
          %v2691 = vld [vmem:[#allocation2 + $0x20] sm:$0xf]
          %v2692 = vld [vmem:[#allocation2 + $0x24] sm:$0xf]
          %v2693 = vld [vmem:[#allocation2 + $0x28] sm:$0xf]
          %v2694 = vld [vmem:[#allocation2 + $0x2c] sm:$0xf]
          %v2695 = vld [vmem:[#allocation2 + $0x30] sm:$0xf]
          %v2696 = vld [vmem:[#allocation2 + $0x34] sm:$0xf]
          %v2697 = vld [vmem:[#allocation2 + $0x38] sm:$0xf]
          %v2698 = vld [vmem:[#allocation2 + $0x3c] sm:$0xf]
          %v2699 = vld [vmem:[#allocation2 + $0x40] sm:$0xf]
          %v2700 = vld [vmem:[#allocation2 + $0x44] sm:$0xf]
          %v2701 = vld [vmem:[#allocation2 + $0x48] sm:$0xf]
          %v2702 = vld [vmem:[#allocation2 + $0x4c] sm:$0xf]
          %v2703 = vld [vmem:[#allocation2 + $0x50] sm:$0x1]
          %s2704 = scalar_lea.vmem [#allocation11], 320
          %v2705 = vld [vmem:[%s2704] sm:$0xf]
          %v2706 = vld [vmem:[%s2704 + $0x4] sm:$0xf]
          %v2707 = vld [vmem:[%s2704 + $0x8] sm:$0xf]
          %v2708 = vld [vmem:[%s2704 + $0xc] sm:$0xf]
          %v2709 = vld [vmem:[%s2704 + $0x10] sm:$0xf]
          %v2710 = vld [vmem:[%s2704 + $0x14] sm:$0xf]
          %v2711 = vld [vmem:[%s2704 + $0x18] sm:$0xf]
          %v2712 = vld [vmem:[%s2704 + $0x1c] sm:$0xf]
          %v2713 = vld [vmem:[%s2704 + $0x20] sm:$0xf]
          %v2714 = vld [vmem:[%s2704 + $0x24] sm:$0xf]
          %v2715 = vld [vmem:[%s2704 + $0x28] sm:$0xf]
          %v2716 = vld [vmem:[%s2704 + $0x2c] sm:$0xf]
          %v2717 = vld [vmem:[%s2704 + $0x30] sm:$0xf]
          %v2718 = vld [vmem:[%s2704 + $0x34] sm:$0xf]
          %v2719 = vld [vmem:[%s2704 + $0x38] sm:$0xf]
          %v2720 = vld [vmem:[%s2704 + $0x3c] sm:$0xf]
          %v2738 = vunpack.c.l.b16 %v2687
          %v2739 = vunpack.c.l.b16 %v2688
          %v2740 = vunpack.c.l.b16 %v2689
          %v2741 = vunpack.c.l.b16 %v2690
          %v2742 = vunpack.c.l.b16 %v2691
          %v2743 = vunpack.c.l.b16 %v2692
          %v2744 = vunpack.c.l.b16 %v2693
          %v2745 = vunpack.c.l.b16 %v2694
          %v2746 = vunpack.c.l.b16 %v2695
          %v2747 = vunpack.c.l.b16 %v2696
          %v2748 = vunpack.c.l.b16 %v2697
          %v2749 = vunpack.c.l.b16 %v2698
          %v2750 = vunpack.c.l.b16 %v2699
          %v2751 = vunpack.c.l.b16 %v2700
          %v2752 = vunpack.c.l.b16 %v2701
          %v2753 = vunpack.c.l.b16 %v2702
          %v2754 = vunpack.c.l.b16 %v2703
          %v2755 = vpack.c.b16 %v2739, %v2738
          %v2756 = vpack.c.b16 %v2741, %v2740
          %v2757 = vpack.c.b16 %v2743, %v2742
          %v2758 = vpack.c.b16 %v2745, %v2744
          %v2759 = vpack.c.b16 %v2747, %v2746
          %v2760 = vpack.c.b16 %v2749, %v2748
          %v2761 = vpack.c.b16 %v2751, %v2750
          %v2762 = vpack.c.b16 %v2753, %v2752
          %v2763 = vpack.c.b16 %v2754, %v2754
          %vm2764 = vcmask 1046528
          %v2765 = vrot.slane %v2755, 1
          %v2766 = vrot.slane %v2756, 1
          %v2767 = vsel %vm2764, %v2765, %v2766
          %v2768 = vrot.slane %v2757, 1
          %v2769 = vsel %vm2764, %v2766, %v2768
          %v2770 = vrot.slane %v2758, 1
          %v2771 = vsel %vm2764, %v2768, %v2770
          %v2772 = vrot.slane %v2759, 1
          %v2773 = vsel %vm2764, %v2770, %v2772
          %v2774 = vrot.slane %v2760, 1
          %v2775 = vsel %vm2764, %v2772, %v2774
          %v2776 = vrot.slane %v2761, 1
          %v2777 = vsel %vm2764, %v2774, %v2776
          %v2778 = vrot.slane %v2762, 1
          %v2779 = vsel %vm2764, %v2776, %v2778
          %v2780 = vrot.slane %v2763, 1
          %v2781 = vsel %vm2764, %v2778, %v2780
          %v2806 = vunpack.c.l.b16 %v2705
          %v2807 = vunpack.c.l.b16 %v2706
          %v2808 = vunpack.c.l.b16 %v2707
          %v2809 = vunpack.c.l.b16 %v2708
          %v2810 = vunpack.c.l.b16 %v2709
          %v2811 = vunpack.c.l.b16 %v2710
          %v2812 = vunpack.c.l.b16 %v2711
          %v2813 = vunpack.c.l.b16 %v2712
          %v2814 = vunpack.c.l.b16 %v2713
          %v2815 = vunpack.c.l.b16 %v2714
          %v2816 = vunpack.c.l.b16 %v2715
          %v2817 = vunpack.c.l.b16 %v2716
          %v2818 = vunpack.c.l.b16 %v2717
          %v2819 = vunpack.c.l.b16 %v2718
          %v2820 = vunpack.c.l.b16 %v2719
          %v2821 = vunpack.c.l.b16 %v2720
          %v2822 = vpack.c.b16 %v2807, %v2806
          %v2823 = vpack.c.b16 %v2809, %v2808
          %v2824 = vpack.c.b16 %v2811, %v2810
          %v2825 = vpack.c.b16 %v2813, %v2812
          %v2826 = vpack.c.b16 %v2815, %v2814
          %v2827 = vpack.c.b16 %v2817, %v2816
          %v2828 = vpack.c.b16 %v2819, %v2818
          %v2829 = vpack.c.b16 %v2821, %v2820
          %2838 = vmatprep.subr.bf16.mxu0 0
          %2839 = vmatpush1.bf16.msra.mxu0 %v2829
          %2840 = vmatprep.subr.bf16.mxu0 0
          %2841 = vmatpush1.bf16.msra.mxu0 %v2828
          %2842 = vmatprep.subr.bf16.mxu0 0
          %2843 = vmatpush1.bf16.msra.mxu0 %v2827
          %2844 = vmatprep.subr.bf16.mxu0 0
          %2845 = vmatpush1.bf16.msra.mxu0 %v2826
          %2846 = vmatprep.subr.bf16.mxu0 0
          %2847 = vmatpush1.bf16.msra.mxu0 %v2825
          %2848 = vmatprep.subr.bf16.mxu0 0
          %2849 = vmatpush1.bf16.msra.mxu0 %v2824
          %2850 = vmatprep.subr.bf16.mxu0 0
          %2851 = vmatpush1.bf16.msra.mxu0 %v2823
          %2852 = vmatprep.subr.bf16.mxu0 0
          %2853 = vmatpush1.bf16.msra.mxu0 %v2822
          %2854 = vmatprep.subr.bf16.mxu0 0
          %2855 = vmatpush2.bf16.msra.mxu0 0
          %2856 = vmatprep.subr.bf16.mxu0 0
          %2857 = vmatpush2.bf16.msra.mxu0 0
          %2858 = vmatprep.subr.bf16.mxu0 0
          %2859 = vmatpush2.bf16.msra.mxu0 0
          %2860 = vmatprep.subr.bf16.mxu0 0
          %2861 = vmatpush2.bf16.msra.mxu0 0
          %2862 = vmatprep.subr.bf16.mxu0 0
          %2863 = vmatpush2.bf16.msra.mxu0 0
          %2864 = vmatprep.subr.bf16.mxu0 0
          %2865 = vmatpush2.bf16.msra.mxu0 0
          %2866 = vmatprep.subr.bf16.mxu0 0
          %2867 = vmatpush2.bf16.msra.mxu0 0
          %2868 = vmatprep.subr.bf16.mxu0 0
          %2869 = vmatpush2.bf16.msra.mxu0 0
          %2870 = vmatprep.mubr.bf16.mxu0 0
          %2871 = vmatmul.mubr.bf16.gmra.mxu0 %v2767
          %v2872 = vpop.f32.mrf.mxu0
          %v2873 = vadd.f32 0.0, %v2872
          %v2874 = vpop.f32.mrf.mxu0
          %v2875 = vpop.f32.mrf.mxu0
          %v2876 = vadd.f32 0.0, %v2875
          %v2877 = vpop.f32.mrf.mxu0
          %2878 = vmatprep.mubr.bf16.mxu0 0
          %2879 = vmatmul.mubr.bf16.gmra.mxu0 %v2769
          %v2880 = vpop.f32.mrf.mxu0
          %v2881 = vadd.f32 0.0, %v2880
          %v2882 = vpop.f32.mrf.mxu0
          %v2883 = vpop.f32.mrf.mxu0
          %v2884 = vadd.f32 0.0, %v2883
          %v2885 = vpop.f32.mrf.mxu0
          %2886 = vmatprep.mubr.bf16.mxu0 0
          %2887 = vmatmul.mubr.bf16.gmra.mxu0 %v2771
          %v2888 = vpop.f32.mrf.mxu0
          %v2889 = vadd.f32 0.0, %v2888
          %v2890 = vpop.f32.mrf.mxu0
          %v2891 = vpop.f32.mrf.mxu0
          %v2892 = vadd.f32 0.0, %v2891
          %v2893 = vpop.f32.mrf.mxu0
          %2894 = vmatprep.mubr.bf16.mxu0 0
          %2895 = vmatmul.mubr.bf16.gmra.mxu0 %v2773
          %v2896 = vpop.f32.mrf.mxu0
          %v2897 = vadd.f32 0.0, %v2896
          %v2898 = vpop.f32.mrf.mxu0
          %v2899 = vpop.f32.mrf.mxu0
          %v2900 = vadd.f32 0.0, %v2899
          %v2901 = vpop.f32.mrf.mxu0
          %2902 = vmatprep.mubr.bf16.mxu0 0
          %2903 = vmatmul.mubr.bf16.gmra.mxu0 %v2775
          %v2904 = vpop.f32.mrf.mxu0
          %v2905 = vadd.f32 0.0, %v2904
          %v2906 = vpop.f32.mrf.mxu0
          %v2907 = vpop.f32.mrf.mxu0
          %v2908 = vadd.f32 0.0, %v2907
          %v2909 = vpop.f32.mrf.mxu0
          %2910 = vmatprep.mubr.bf16.mxu0 0
          %2911 = vmatmul.mubr.bf16.gmra.mxu0 %v2777
          %v2912 = vpop.f32.mrf.mxu0
          %v2913 = vadd.f32 0.0, %v2912
          %v2914 = vpop.f32.mrf.mxu0
          %v2915 = vpop.f32.mrf.mxu0
          %v2916 = vadd.f32 0.0, %v2915
          %v2917 = vpop.f32.mrf.mxu0
          %2918 = vmatprep.mubr.bf16.mxu0 0
          %2919 = vmatmul.mubr.bf16.gmra.mxu0 %v2779
          %v2920 = vpop.f32.mrf.mxu0
          %v2921 = vadd.f32 0.0, %v2920
          %v2922 = vpop.f32.mrf.mxu0
          %v2923 = vpop.f32.mrf.mxu0
          %v2924 = vadd.f32 0.0, %v2923
          %v2925 = vpop.f32.mrf.mxu0
          %2926 = vmatprep.mubr.bf16.mxu0 0
          %2927 = vmatmul.mubr.bf16.gmra.mxu0 %v2781
          %v2928 = vpop.f32.mrf.mxu0
          %v2929 = vadd.f32 0.0, %v2928
          %v2930 = vpop.f32.mrf.mxu0
          %v2931 = vpop.f32.mrf.mxu0
          %v2932 = vadd.f32 0.0, %v2931
          %v2933 = vpop.f32.mrf.mxu0
          %2934 = vdwg.mxu0
          %v2935 = vadd.f32 %v2671, %v2873
          %v2936 = vadd.f32 %v2672, %v2876
          %v2937 = vadd.f32 %v2673, %v2881
          %v2938 = vadd.f32 %v2674, %v2884
          %v2939 = vadd.f32 %v2675, %v2889
          %v2940 = vadd.f32 %v2676, %v2892
          %v2941 = vadd.f32 %v2677, %v2897
          %v2942 = vadd.f32 %v2678, %v2900
          %v2943 = vadd.f32 %v2679, %v2905
          %v2944 = vadd.f32 %v2680, %v2908
          %v2945 = vadd.f32 %v2681, %v2913
          %v2946 = vadd.f32 %v2682, %v2916
          %v2947 = vadd.f32 %v2683, %v2921
          %v2948 = vadd.f32 %v2684, %v2924
          %v2949 = vadd.f32 %v2685, %v2929
          %v2950 = vadd.f32 %v2686, %v2932
          %v2951 = vld [vmem:[#allocation2 + $0x1c] sm:$0xf]
          %v2952 = vld [vmem:[#allocation2 + $0x20] sm:$0xf]
          %v2953 = vld [vmem:[#allocation2 + $0x24] sm:$0xf]
          %v2954 = vld [vmem:[#allocation2 + $0x28] sm:$0xf]
          %v2955 = vld [vmem:[#allocation2 + $0x2c] sm:$0xf]
          %v2956 = vld [vmem:[#allocation2 + $0x30] sm:$0xf]
          %v2957 = vld [vmem:[#allocation2 + $0x34] sm:$0xf]
          %v2958 = vld [vmem:[#allocation2 + $0x38] sm:$0xf]
          %v2959 = vld [vmem:[#allocation2 + $0x3c] sm:$0xf]
          %v2960 = vld [vmem:[#allocation2 + $0x40] sm:$0xf]
          %v2961 = vld [vmem:[#allocation2 + $0x44] sm:$0xf]
          %v2962 = vld [vmem:[#allocation2 + $0x48] sm:$0xf]
          %v2963 = vld [vmem:[#allocation2 + $0x4c] sm:$0xf]
          %v2964 = vld [vmem:[#allocation2 + $0x50] sm:$0xf]
          %v2965 = vld [vmem:[#allocation2 + $0x54] sm:$0xf]
          %v2966 = vld [vmem:[#allocation2 + $0x58] sm:$0xf]
          %s2967 = scalar_lea.vmem [#allocation11], 384
          %v2968 = vld [vmem:[%s2967] sm:$0xf]
          %v2969 = vld [vmem:[%s2967 + $0x4] sm:$0xf]
          %v2970 = vld [vmem:[%s2967 + $0x8] sm:$0xf]
          %v2971 = vld [vmem:[%s2967 + $0xc] sm:$0xf]
          %v2972 = vld [vmem:[%s2967 + $0x10] sm:$0xf]
          %v2973 = vld [vmem:[%s2967 + $0x14] sm:$0xf]
          %v2974 = vld [vmem:[%s2967 + $0x18] sm:$0xf]
          %v2975 = vld [vmem:[%s2967 + $0x1c] sm:$0xf]
          %v2976 = vld [vmem:[%s2967 + $0x20] sm:$0xf]
          %v2977 = vld [vmem:[%s2967 + $0x24] sm:$0xf]
          %v2978 = vld [vmem:[%s2967 + $0x28] sm:$0xf]
          %v2979 = vld [vmem:[%s2967 + $0x2c] sm:$0xf]
          %v2980 = vld [vmem:[%s2967 + $0x30] sm:$0xf]
          %v2981 = vld [vmem:[%s2967 + $0x34] sm:$0xf]
          %v2982 = vld [vmem:[%s2967 + $0x38] sm:$0xf]
          %v2983 = vld [vmem:[%s2967 + $0x3c] sm:$0xf]
          %v3000 = vunpack.c.l.b16 %v2951
          %v3001 = vunpack.c.l.b16 %v2952
          %v3002 = vunpack.c.l.b16 %v2953
          %v3003 = vunpack.c.l.b16 %v2954
          %v3004 = vunpack.c.l.b16 %v2955
          %v3005 = vunpack.c.l.b16 %v2956
          %v3006 = vunpack.c.l.b16 %v2957
          %v3007 = vunpack.c.l.b16 %v2958
          %v3008 = vunpack.c.l.b16 %v2959
          %v3009 = vunpack.c.l.b16 %v2960
          %v3010 = vunpack.c.l.b16 %v2961
          %v3011 = vunpack.c.l.b16 %v2962
          %v3012 = vunpack.c.l.b16 %v2963
          %v3013 = vunpack.c.l.b16 %v2964
          %v3014 = vunpack.c.l.b16 %v2965
          %v3015 = vunpack.c.l.b16 %v2966
          %v3016 = vpack.c.b16 %v3001, %v3000
          %v3017 = vpack.c.b16 %v3003, %v3002
          %v3018 = vpack.c.b16 %v3005, %v3004
          %v3019 = vpack.c.b16 %v3007, %v3006
          %v3020 = vpack.c.b16 %v3009, %v3008
          %v3021 = vpack.c.b16 %v3011, %v3010
          %v3022 = vpack.c.b16 %v3013, %v3012
          %v3023 = vpack.c.b16 %v3015, %v3014
          %v3048 = vunpack.c.l.b16 %v2968
          %v3049 = vunpack.c.l.b16 %v2969
          %v3050 = vunpack.c.l.b16 %v2970
          %v3051 = vunpack.c.l.b16 %v2971
          %v3052 = vunpack.c.l.b16 %v2972
          %v3053 = vunpack.c.l.b16 %v2973
          %v3054 = vunpack.c.l.b16 %v2974
          %v3055 = vunpack.c.l.b16 %v2975
          %v3056 = vunpack.c.l.b16 %v2976
          %v3057 = vunpack.c.l.b16 %v2977
          %v3058 = vunpack.c.l.b16 %v2978
          %v3059 = vunpack.c.l.b16 %v2979
          %v3060 = vunpack.c.l.b16 %v2980
          %v3061 = vunpack.c.l.b16 %v2981
          %v3062 = vunpack.c.l.b16 %v2982
          %v3063 = vunpack.c.l.b16 %v2983
          %v3064 = vpack.c.b16 %v3049, %v3048
          %v3065 = vpack.c.b16 %v3051, %v3050
          %v3066 = vpack.c.b16 %v3053, %v3052
          %v3067 = vpack.c.b16 %v3055, %v3054
          %v3068 = vpack.c.b16 %v3057, %v3056
          %v3069 = vpack.c.b16 %v3059, %v3058
          %v3070 = vpack.c.b16 %v3061, %v3060
          %v3071 = vpack.c.b16 %v3063, %v3062
          %3080 = vmatprep.subr.bf16.mxu0 0
          %3081 = vmatpush1.bf16.msra.mxu0 %v3071
          %3082 = vmatprep.subr.bf16.mxu0 0
          %3083 = vmatpush1.bf16.msra.mxu0 %v3070
          %3084 = vmatprep.subr.bf16.mxu0 0
          %3085 = vmatpush1.bf16.msra.mxu0 %v3069
          %3086 = vmatprep.subr.bf16.mxu0 0
          %3087 = vmatpush1.bf16.msra.mxu0 %v3068
          %3088 = vmatprep.subr.bf16.mxu0 0
          %3089 = vmatpush1.bf16.msra.mxu0 %v3067
          %3090 = vmatprep.subr.bf16.mxu0 0
          %3091 = vmatpush1.bf16.msra.mxu0 %v3066
          %3092 = vmatprep.subr.bf16.mxu0 0
          %3093 = vmatpush1.bf16.msra.mxu0 %v3065
          %3094 = vmatprep.subr.bf16.mxu0 0
          %3095 = vmatpush1.bf16.msra.mxu0 %v3064
          %3096 = vmatprep.subr.bf16.mxu0 0
          %3097 = vmatpush2.bf16.msra.mxu0 0
          %3098 = vmatprep.subr.bf16.mxu0 0
          %3099 = vmatpush2.bf16.msra.mxu0 0
          %3100 = vmatprep.subr.bf16.mxu0 0
          %3101 = vmatpush2.bf16.msra.mxu0 0
          %3102 = vmatprep.subr.bf16.mxu0 0
          %3103 = vmatpush2.bf16.msra.mxu0 0
          %3104 = vmatprep.subr.bf16.mxu0 0
          %3105 = vmatpush2.bf16.msra.mxu0 0
          %3106 = vmatprep.subr.bf16.mxu0 0
          %3107 = vmatpush2.bf16.msra.mxu0 0
          %3108 = vmatprep.subr.bf16.mxu0 0
          %3109 = vmatpush2.bf16.msra.mxu0 0
          %3110 = vmatprep.subr.bf16.mxu0 0
          %3111 = vmatpush2.bf16.msra.mxu0 0
          %3112 = vmatprep.mubr.bf16.mxu0 0
          %3113 = vmatmul.mubr.bf16.gmra.mxu0 %v3016
          %v3114 = vpop.f32.mrf.mxu0
          %v3115 = vadd.f32 0.0, %v3114
          %v3116 = vpop.f32.mrf.mxu0
          %v3117 = vpop.f32.mrf.mxu0
          %v3118 = vadd.f32 0.0, %v3117
          %v3119 = vpop.f32.mrf.mxu0
          %3120 = vmatprep.mubr.bf16.mxu0 0
          %3121 = vmatmul.mubr.bf16.gmra.mxu0 %v3017
          %v3122 = vpop.f32.mrf.mxu0
          %v3123 = vadd.f32 0.0, %v3122
          %v3124 = vpop.f32.mrf.mxu0
          %v3125 = vpop.f32.mrf.mxu0
          %v3126 = vadd.f32 0.0, %v3125
          %v3127 = vpop.f32.mrf.mxu0
          %3128 = vmatprep.mubr.bf16.mxu0 0
          %3129 = vmatmul.mubr.bf16.gmra.mxu0 %v3018
          %v3130 = vpop.f32.mrf.mxu0
          %v3131 = vadd.f32 0.0, %v3130
          %v3132 = vpop.f32.mrf.mxu0
          %v3133 = vpop.f32.mrf.mxu0
          %v3134 = vadd.f32 0.0, %v3133
          %v3135 = vpop.f32.mrf.mxu0
          %3136 = vmatprep.mubr.bf16.mxu0 0
          %3137 = vmatmul.mubr.bf16.gmra.mxu0 %v3019
          %v3138 = vpop.f32.mrf.mxu0
          %v3139 = vadd.f32 0.0, %v3138
          %v3140 = vpop.f32.mrf.mxu0
          %v3141 = vpop.f32.mrf.mxu0
          %v3142 = vadd.f32 0.0, %v3141
          %v3143 = vpop.f32.mrf.mxu0
          %3144 = vmatprep.mubr.bf16.mxu0 0
          %3145 = vmatmul.mubr.bf16.gmra.mxu0 %v3020
          %v3146 = vpop.f32.mrf.mxu0
          %v3147 = vadd.f32 0.0, %v3146
          %v3148 = vpop.f32.mrf.mxu0
          %v3149 = vpop.f32.mrf.mxu0
          %v3150 = vadd.f32 0.0, %v3149
          %v3151 = vpop.f32.mrf.mxu0
          %3152 = vmatprep.mubr.bf16.mxu0 0
          %3153 = vmatmul.mubr.bf16.gmra.mxu0 %v3021
          %v3154 = vpop.f32.mrf.mxu0
          %v3155 = vadd.f32 0.0, %v3154
          %v3156 = vpop.f32.mrf.mxu0
          %v3157 = vpop.f32.mrf.mxu0
          %v3158 = vadd.f32 0.0, %v3157
          %v3159 = vpop.f32.mrf.mxu0
          %3160 = vmatprep.mubr.bf16.mxu0 0
          %3161 = vmatmul.mubr.bf16.gmra.mxu0 %v3022
          %v3162 = vpop.f32.mrf.mxu0
          %v3163 = vadd.f32 0.0, %v3162
          %v3164 = vpop.f32.mrf.mxu0
          %v3165 = vpop.f32.mrf.mxu0
          %v3166 = vadd.f32 0.0, %v3165
          %v3167 = vpop.f32.mrf.mxu0
          %3168 = vmatprep.mubr.bf16.mxu0 0
          %3169 = vmatmul.mubr.bf16.gmra.mxu0 %v3023
          %v3170 = vpop.f32.mrf.mxu0
          %v3171 = vadd.f32 0.0, %v3170
          %v3172 = vpop.f32.mrf.mxu0
          %v3173 = vpop.f32.mrf.mxu0
          %v3174 = vadd.f32 0.0, %v3173
          %v3175 = vpop.f32.mrf.mxu0
          %3176 = vdwg.mxu0
          %v3177 = vadd.f32 %v2935, %v3115
          %v3178 = vadd.f32 %v2936, %v3118
          %v3179 = vadd.f32 %v2937, %v3123
          %v3180 = vadd.f32 %v2938, %v3126
          %v3181 = vadd.f32 %v2939, %v3131
          %v3182 = vadd.f32 %v2940, %v3134
          %v3183 = vadd.f32 %v2941, %v3139
          %v3184 = vadd.f32 %v2942, %v3142
          %v3185 = vadd.f32 %v2943, %v3147
          %v3186 = vadd.f32 %v2944, %v3150
          %v3187 = vadd.f32 %v2945, %v3155
          %v3188 = vadd.f32 %v2946, %v3158
          %v3189 = vadd.f32 %v2947, %v3163
          %v3190 = vadd.f32 %v2948, %v3166
          %v3191 = vadd.f32 %v2949, %v3171
          %v3192 = vadd.f32 %v2950, %v3174
          %v3193 = vld [vmem:[#allocation2 + $0x1c] sm:$0xe]
          %v3194 = vld [vmem:[#allocation2 + $0x20] sm:$0xf]
          %v3195 = vld [vmem:[#allocation2 + $0x24] sm:$0xf]
          %v3196 = vld [vmem:[#allocation2 + $0x28] sm:$0xf]
          %v3197 = vld [vmem:[#allocation2 + $0x2c] sm:$0xf]
          %v3198 = vld [vmem:[#allocation2 + $0x30] sm:$0xf]
          %v3199 = vld [vmem:[#allocation2 + $0x34] sm:$0xf]
          %v3200 = vld [vmem:[#allocation2 + $0x38] sm:$0xf]
          %v3201 = vld [vmem:[#allocation2 + $0x3c] sm:$0xf]
          %v3202 = vld [vmem:[#allocation2 + $0x40] sm:$0xf]
          %v3203 = vld [vmem:[#allocation2 + $0x44] sm:$0xf]
          %v3204 = vld [vmem:[#allocation2 + $0x48] sm:$0xf]
          %v3205 = vld [vmem:[#allocation2 + $0x4c] sm:$0xf]
          %v3206 = vld [vmem:[#allocation2 + $0x50] sm:$0xf]
          %v3207 = vld [vmem:[#allocation2 + $0x54] sm:$0xf]
          %v3208 = vld [vmem:[#allocation2 + $0x58] sm:$0xf]
          %v3209 = vld [vmem:[#allocation2 + $0x5c] sm:$0x1]
          %s3210 = scalar_lea.vmem [#allocation11], 448
          %v3211 = vld [vmem:[%s3210] sm:$0xf]
          %v3212 = vld [vmem:[%s3210 + $0x4] sm:$0xf]
          %v3213 = vld [vmem:[%s3210 + $0x8] sm:$0xf]
          %v3214 = vld [vmem:[%s3210 + $0xc] sm:$0xf]
          %v3215 = vld [vmem:[%s3210 + $0x10] sm:$0xf]
          %v3216 = vld [vmem:[%s3210 + $0x14] sm:$0xf]
          %v3217 = vld [vmem:[%s3210 + $0x18] sm:$0xf]
          %v3218 = vld [vmem:[%s3210 + $0x1c] sm:$0xf]
          %v3219 = vld [vmem:[%s3210 + $0x20] sm:$0xf]
          %v3220 = vld [vmem:[%s3210 + $0x24] sm:$0xf]
          %v3221 = vld [vmem:[%s3210 + $0x28] sm:$0xf]
          %v3222 = vld [vmem:[%s3210 + $0x2c] sm:$0xf]
          %v3223 = vld [vmem:[%s3210 + $0x30] sm:$0xf]
          %v3224 = vld [vmem:[%s3210 + $0x34] sm:$0xf]
          %v3225 = vld [vmem:[%s3210 + $0x38] sm:$0xf]
          %v3226 = vld [vmem:[%s3210 + $0x3c] sm:$0xf]
          %v3244 = vunpack.c.l.b16 %v3193
          %v3245 = vunpack.c.l.b16 %v3194
          %v3246 = vunpack.c.l.b16 %v3195
          %v3247 = vunpack.c.l.b16 %v3196
          %v3248 = vunpack.c.l.b16 %v3197
          %v3249 = vunpack.c.l.b16 %v3198
          %v3250 = vunpack.c.l.b16 %v3199
          %v3251 = vunpack.c.l.b16 %v3200
          %v3252 = vunpack.c.l.b16 %v3201
          %v3253 = vunpack.c.l.b16 %v3202
          %v3254 = vunpack.c.l.b16 %v3203
          %v3255 = vunpack.c.l.b16 %v3204
          %v3256 = vunpack.c.l.b16 %v3205
          %v3257 = vunpack.c.l.b16 %v3206
          %v3258 = vunpack.c.l.b16 %v3207
          %v3259 = vunpack.c.l.b16 %v3208
          %v3260 = vunpack.c.l.b16 %v3209
          %v3261 = vpack.c.b16 %v3245, %v3244
          %v3262 = vpack.c.b16 %v3247, %v3246
          %v3263 = vpack.c.b16 %v3249, %v3248
          %v3264 = vpack.c.b16 %v3251, %v3250
          %v3265 = vpack.c.b16 %v3253, %v3252
          %v3266 = vpack.c.b16 %v3255, %v3254
          %v3267 = vpack.c.b16 %v3257, %v3256
          %v3268 = vpack.c.b16 %v3259, %v3258
          %v3269 = vpack.c.b16 %v3260, %v3260
          %v3270 = vrot.slane %v3261, 1
          %v3271 = vrot.slane %v3262, 1
          %v3272 = vsel %vm2764, %v3270, %v3271
          %v3273 = vrot.slane %v3263, 1
          %v3274 = vsel %vm2764, %v3271, %v3273
          %v3275 = vrot.slane %v3264, 1
          %v3276 = vsel %vm2764, %v3273, %v3275
          %v3277 = vrot.slane %v3265, 1
          %v3278 = vsel %vm2764, %v3275, %v3277
          %v3279 = vrot.slane %v3266, 1
          %v3280 = vsel %vm2764, %v3277, %v3279
          %v3281 = vrot.slane %v3267, 1
          %v3282 = vsel %vm2764, %v3279, %v3281
          %v3283 = vrot.slane %v3268, 1
          %v3284 = vsel %vm2764, %v3281, %v3283
          %v3285 = vrot.slane %v3269, 1
          %v3286 = vsel %vm2764, %v3283, %v3285
          %v3311 = vunpack.c.l.b16 %v3211
          %v3312 = vunpack.c.l.b16 %v3212
          %v3313 = vunpack.c.l.b16 %v3213
          %v3314 = vunpack.c.l.b16 %v3214
          %v3315 = vunpack.c.l.b16 %v3215
          %v3316 = vunpack.c.l.b16 %v3216
          %v3317 = vunpack.c.l.b16 %v3217
          %v3318 = vunpack.c.l.b16 %v3218
          %v3319 = vunpack.c.l.b16 %v3219
          %v3320 = vunpack.c.l.b16 %v3220
          %v3321 = vunpack.c.l.b16 %v3221
          %v3322 = vunpack.c.l.b16 %v3222
          %v3323 = vunpack.c.l.b16 %v3223
          %v3324 = vunpack.c.l.b16 %v3224
          %v3325 = vunpack.c.l.b16 %v3225
          %v3326 = vunpack.c.l.b16 %v3226
          %v3327 = vpack.c.b16 %v3312, %v3311
          %v3328 = vpack.c.b16 %v3314, %v3313
          %v3329 = vpack.c.b16 %v3316, %v3315
          %v3330 = vpack.c.b16 %v3318, %v3317
          %v3331 = vpack.c.b16 %v3320, %v3319
          %v3332 = vpack.c.b16 %v3322, %v3321
          %v3333 = vpack.c.b16 %v3324, %v3323
          %v3334 = vpack.c.b16 %v3326, %v3325
          %3343 = vmatprep.subr.bf16.mxu0 0
          %3344 = vmatpush1.bf16.msra.mxu0 %v3334
          %3345 = vmatprep.subr.bf16.mxu0 0
          %3346 = vmatpush1.bf16.msra.mxu0 %v3333
          %3347 = vmatprep.subr.bf16.mxu0 0
          %3348 = vmatpush1.bf16.msra.mxu0 %v3332
          %3349 = vmatprep.subr.bf16.mxu0 0
          %3350 = vmatpush1.bf16.msra.mxu0 %v3331
          %3351 = vmatprep.subr.bf16.mxu0 0
          %3352 = vmatpush1.bf16.msra.mxu0 %v3330
          %3353 = vmatprep.subr.bf16.mxu0 0
          %3354 = vmatpush1.bf16.msra.mxu0 %v3329
          %3355 = vmatprep.subr.bf16.mxu0 0
          %3356 = vmatpush1.bf16.msra.mxu0 %v3328
          %3357 = vmatprep.subr.bf16.mxu0 0
          %3358 = vmatpush1.bf16.msra.mxu0 %v3327
          %3359 = vmatprep.subr.bf16.mxu0 0
          %3360 = vmatpush2.bf16.msra.mxu0 0
          %3361 = vmatprep.subr.bf16.mxu0 0
          %3362 = vmatpush2.bf16.msra.mxu0 0
          %3363 = vmatprep.subr.bf16.mxu0 0
          %3364 = vmatpush2.bf16.msra.mxu0 0
          %3365 = vmatprep.subr.bf16.mxu0 0
          %3366 = vmatpush2.bf16.msra.mxu0 0
          %3367 = vmatprep.subr.bf16.mxu0 0
          %3368 = vmatpush2.bf16.msra.mxu0 0
          %3369 = vmatprep.subr.bf16.mxu0 0
          %3370 = vmatpush2.bf16.msra.mxu0 0
          %3371 = vmatprep.subr.bf16.mxu0 0
          %3372 = vmatpush2.bf16.msra.mxu0 0
          %3373 = vmatprep.subr.bf16.mxu0 0
          %3374 = vmatpush2.bf16.msra.mxu0 0
          %3375 = vmatprep.mubr.bf16.mxu0 0
          %3376 = vmatmul.mubr.bf16.gmra.mxu0 %v3272
          %v3377 = vpop.f32.mrf.mxu0
          %v3378 = vadd.f32 0.0, %v3377
          %v3379 = vpop.f32.mrf.mxu0
          %v3380 = vpop.f32.mrf.mxu0
          %v3381 = vadd.f32 0.0, %v3380
          %v3382 = vpop.f32.mrf.mxu0
          %3383 = vmatprep.mubr.bf16.mxu0 0
          %3384 = vmatmul.mubr.bf16.gmra.mxu0 %v3274
          %v3385 = vpop.f32.mrf.mxu0
          %v3386 = vadd.f32 0.0, %v3385
          %v3387 = vpop.f32.mrf.mxu0
          %v3388 = vpop.f32.mrf.mxu0
          %v3389 = vadd.f32 0.0, %v3388
          %v3390 = vpop.f32.mrf.mxu0
          %3391 = vmatprep.mubr.bf16.mxu0 0
          %3392 = vmatmul.mubr.bf16.gmra.mxu0 %v3276
          %v3393 = vpop.f32.mrf.mxu0
          %v3394 = vadd.f32 0.0, %v3393
          %v3395 = vpop.f32.mrf.mxu0
          %v3396 = vpop.f32.mrf.mxu0
          %v3397 = vadd.f32 0.0, %v3396
          %v3398 = vpop.f32.mrf.mxu0
          %3399 = vmatprep.mubr.bf16.mxu0 0
          %3400 = vmatmul.mubr.bf16.gmra.mxu0 %v3278
          %v3401 = vpop.f32.mrf.mxu0
          %v3402 = vadd.f32 0.0, %v3401
          %v3403 = vpop.f32.mrf.mxu0
          %v3404 = vpop.f32.mrf.mxu0
          %v3405 = vadd.f32 0.0, %v3404
          %v3406 = vpop.f32.mrf.mxu0
          %3407 = vmatprep.mubr.bf16.mxu0 0
          %3408 = vmatmul.mubr.bf16.gmra.mxu0 %v3280
          %v3409 = vpop.f32.mrf.mxu0
          %v3410 = vadd.f32 0.0, %v3409
          %v3411 = vpop.f32.mrf.mxu0
          %v3412 = vpop.f32.mrf.mxu0
          %v3413 = vadd.f32 0.0, %v3412
          %v3414 = vpop.f32.mrf.mxu0
          %3415 = vmatprep.mubr.bf16.mxu0 0
          %3416 = vmatmul.mubr.bf16.gmra.mxu0 %v3282
          %v3417 = vpop.f32.mrf.mxu0
          %v3418 = vadd.f32 0.0, %v3417
          %v3419 = vpop.f32.mrf.mxu0
          %v3420 = vpop.f32.mrf.mxu0
          %v3421 = vadd.f32 0.0, %v3420
          %v3422 = vpop.f32.mrf.mxu0
          %3423 = vmatprep.mubr.bf16.mxu0 0
          %3424 = vmatmul.mubr.bf16.gmra.mxu0 %v3284
          %v3425 = vpop.f32.mrf.mxu0
          %v3426 = vadd.f32 0.0, %v3425
          %v3427 = vpop.f32.mrf.mxu0
          %v3428 = vpop.f32.mrf.mxu0
          %v3429 = vadd.f32 0.0, %v3428
          %v3430 = vpop.f32.mrf.mxu0
          %3431 = vmatprep.mubr.bf16.mxu0 0
          %3432 = vmatmul.mubr.bf16.gmra.mxu0 %v3286
          %v3433 = vpop.f32.mrf.mxu0
          %v3434 = vadd.f32 0.0, %v3433
          %v3435 = vpop.f32.mrf.mxu0
          %v3436 = vpop.f32.mrf.mxu0
          %v3437 = vadd.f32 0.0, %v3436
          %v3438 = vpop.f32.mrf.mxu0
          %3439 = vdwg.mxu0
          %v3440 = vadd.f32 %v3177, %v3378
          %v3441 = vadd.f32 %v3178, %v3381
          %v3442 = vadd.f32 %v3179, %v3386
          %v3443 = vadd.f32 %v3180, %v3389
          %v3444 = vadd.f32 %v3181, %v3394
          %v3445 = vadd.f32 %v3182, %v3397
          %v3446 = vadd.f32 %v3183, %v3402
          %v3447 = vadd.f32 %v3184, %v3405
          %v3448 = vadd.f32 %v3185, %v3410
          %v3449 = vadd.f32 %v3186, %v3413
          %v3450 = vadd.f32 %v3187, %v3418
          %v3451 = vadd.f32 %v3188, %v3421
          %v3452 = vadd.f32 %v3189, %v3426
          %v3453 = vadd.f32 %v3190, %v3429
          %v3454 = vadd.f32 %v3191, %v3434
          %v3455 = vadd.f32 %v3192, %v3437
          %v3456 = vld [vmem:[#allocation2 + $0x1c] sm:$0xc]
          %v3457 = vld [vmem:[#allocation2 + $0x5c] sm:$0x3]
          %s3458 = scalar_lea.vmem [#allocation11], 512
          %v3459 = vld [vmem:[%s3458] sm:$0xf]
          %v3460 = vld [vmem:[%s3458 + $0x4] sm:$0xf]
          %v3461 = vld [vmem:[%s3458 + $0x8] sm:$0xf]
          %v3462 = vld [vmem:[%s3458 + $0xc] sm:$0xf]
          %v3463 = vld [vmem:[%s3458 + $0x10] sm:$0xf]
          %v3464 = vld [vmem:[%s3458 + $0x14] sm:$0xf]
          %v3465 = vld [vmem:[%s3458 + $0x18] sm:$0xf]
          %v3466 = vld [vmem:[%s3458 + $0x1c] sm:$0xf]
          %v3467 = vld [vmem:[%s3458 + $0x20] sm:$0xf]
          %v3468 = vld [vmem:[%s3458 + $0x24] sm:$0xf]
          %v3469 = vld [vmem:[%s3458 + $0x28] sm:$0xf]
          %v3470 = vld [vmem:[%s3458 + $0x2c] sm:$0xf]
          %v3471 = vld [vmem:[%s3458 + $0x30] sm:$0xf]
          %v3472 = vld [vmem:[%s3458 + $0x34] sm:$0xf]
          %v3473 = vld [vmem:[%s3458 + $0x38] sm:$0xf]
          %v3474 = vld [vmem:[%s3458 + $0x3c] sm:$0xf]
          %v3477 = vunpack.c.l.b16 %v3456
          %v3478 = vunpack.c.l.b16 %v3457
          %v3479 = vpack.c.b16 %v3245, %v3477
          %v3480 = vpack.c.b16 %v3478, %v3478
          %v3481 = vrot.slane %v3479, 2
          %v3482 = vrot.slane %v3262, 2
          %v3483 = vsel %vm1859, %v3481, %v3482
          %v3484 = vrot.slane %v3263, 2
          %v3485 = vsel %vm1859, %v3482, %v3484
          %v3486 = vrot.slane %v3264, 2
          %v3487 = vsel %vm1859, %v3484, %v3486
          %v3488 = vrot.slane %v3265, 2
          %v3489 = vsel %vm1859, %v3486, %v3488
          %v3490 = vrot.slane %v3266, 2
          %v3491 = vsel %vm1859, %v3488, %v3490
          %v3492 = vrot.slane %v3267, 2
          %v3493 = vsel %vm1859, %v3490, %v3492
          %v3494 = vrot.slane %v3268, 2
          %v3495 = vsel %vm1859, %v3492, %v3494
          %v3496 = vrot.slane %v3480, 2
          %v3497 = vsel %vm1859, %v3494, %v3496
          %v3522 = vunpack.c.l.b16 %v3459
          %v3523 = vunpack.c.l.b16 %v3460
          %v3524 = vunpack.c.l.b16 %v3461
          %v3525 = vunpack.c.l.b16 %v3462
          %v3526 = vunpack.c.l.b16 %v3463
          %v3527 = vunpack.c.l.b16 %v3464
          %v3528 = vunpack.c.l.b16 %v3465
          %v3529 = vunpack.c.l.b16 %v3466
          %v3530 = vunpack.c.l.b16 %v3467
          %v3531 = vunpack.c.l.b16 %v3468
          %v3532 = vunpack.c.l.b16 %v3469
          %v3533 = vunpack.c.l.b16 %v3470
          %v3534 = vunpack.c.l.b16 %v3471
          %v3535 = vunpack.c.l.b16 %v3472
          %v3536 = vunpack.c.l.b16 %v3473
          %v3537 = vunpack.c.l.b16 %v3474
          %v3538 = vpack.c.b16 %v3523, %v3522
          %v3539 = vpack.c.b16 %v3525, %v3524
          %v3540 = vpack.c.b16 %v3527, %v3526
          %v3541 = vpack.c.b16 %v3529, %v3528
          %v3542 = vpack.c.b16 %v3531, %v3530
          %v3543 = vpack.c.b16 %v3533, %v3532
          %v3544 = vpack.c.b16 %v3535, %v3534
          %v3545 = vpack.c.b16 %v3537, %v3536
          %3554 = vmatprep.subr.bf16.mxu0 0
          %3555 = vmatpush1.bf16.msra.mxu0 %v3545
          %3556 = vmatprep.subr.bf16.mxu0 0
          %3557 = vmatpush1.bf16.msra.mxu0 %v3544
          %3558 = vmatprep.subr.bf16.mxu0 0
          %3559 = vmatpush1.bf16.msra.mxu0 %v3543
          %3560 = vmatprep.subr.bf16.mxu0 0
          %3561 = vmatpush1.bf16.msra.mxu0 %v3542
          %3562 = vmatprep.subr.bf16.mxu0 0
          %3563 = vmatpush1.bf16.msra.mxu0 %v3541
          %3564 = vmatprep.subr.bf16.mxu0 0
          %3565 = vmatpush1.bf16.msra.mxu0 %v3540
          %3566 = vmatprep.subr.bf16.mxu0 0
          %3567 = vmatpush1.bf16.msra.mxu0 %v3539
          %3568 = vmatprep.subr.bf16.mxu0 0
          %3569 = vmatpush1.bf16.msra.mxu0 %v3538
          %3570 = vmatprep.subr.bf16.mxu0 0
          %3571 = vmatpush2.bf16.msra.mxu0 0
          %3572 = vmatprep.subr.bf16.mxu0 0
          %3573 = vmatpush2.bf16.msra.mxu0 0
          %3574 = vmatprep.subr.bf16.mxu0 0
          %3575 = vmatpush2.bf16.msra.mxu0 0
          %3576 = vmatprep.subr.bf16.mxu0 0
          %3577 = vmatpush2.bf16.msra.mxu0 0
          %3578 = vmatprep.subr.bf16.mxu0 0
          %3579 = vmatpush2.bf16.msra.mxu0 0
          %3580 = vmatprep.subr.bf16.mxu0 0
          %3581 = vmatpush2.bf16.msra.mxu0 0
          %3582 = vmatprep.subr.bf16.mxu0 0
          %3583 = vmatpush2.bf16.msra.mxu0 0
          %3584 = vmatprep.subr.bf16.mxu0 0
          %3585 = vmatpush2.bf16.msra.mxu0 0
          %3586 = vmatprep.mubr.bf16.mxu0 0
          %3587 = vmatmul.mubr.bf16.gmra.mxu0 %v3483
          %v3588 = vpop.f32.mrf.mxu0
          %v3589 = vadd.f32 0.0, %v3588
          %v3590 = vpop.f32.mrf.mxu0
          %v3591 = vpop.f32.mrf.mxu0
          %v3592 = vadd.f32 0.0, %v3591
          %v3593 = vpop.f32.mrf.mxu0
          %3594 = vmatprep.mubr.bf16.mxu0 0
          %3595 = vmatmul.mubr.bf16.gmra.mxu0 %v3485
          %v3596 = vpop.f32.mrf.mxu0
          %v3597 = vadd.f32 0.0, %v3596
          %v3598 = vpop.f32.mrf.mxu0
          %v3599 = vpop.f32.mrf.mxu0
          %v3600 = vadd.f32 0.0, %v3599
          %v3601 = vpop.f32.mrf.mxu0
          %3602 = vmatprep.mubr.bf16.mxu0 0
          %3603 = vmatmul.mubr.bf16.gmra.mxu0 %v3487
          %v3604 = vpop.f32.mrf.mxu0
          %v3605 = vadd.f32 0.0, %v3604
          %v3606 = vpop.f32.mrf.mxu0
          %v3607 = vpop.f32.mrf.mxu0
          %v3608 = vadd.f32 0.0, %v3607
          %v3609 = vpop.f32.mrf.mxu0
          %3610 = vmatprep.mubr.bf16.mxu0 0
          %3611 = vmatmul.mubr.bf16.gmra.mxu0 %v3489
          %v3612 = vpop.f32.mrf.mxu0
          %v3613 = vadd.f32 0.0, %v3612
          %v3614 = vpop.f32.mrf.mxu0
          %v3615 = vpop.f32.mrf.mxu0
          %v3616 = vadd.f32 0.0, %v3615
          %v3617 = vpop.f32.mrf.mxu0
          %3618 = vmatprep.mubr.bf16.mxu0 0
          %3619 = vmatmul.mubr.bf16.gmra.mxu0 %v3491
          %v3620 = vpop.f32.mrf.mxu0
          %v3621 = vadd.f32 0.0, %v3620
          %v3622 = vpop.f32.mrf.mxu0
          %v3623 = vpop.f32.mrf.mxu0
          %v3624 = vadd.f32 0.0, %v3623
          %v3625 = vpop.f32.mrf.mxu0
          %3626 = vmatprep.mubr.bf16.mxu0 0
          %3627 = vmatmul.mubr.bf16.gmra.mxu0 %v3493
          %v3628 = vpop.f32.mrf.mxu0
          %v3629 = vadd.f32 0.0, %v3628
          %v3630 = vpop.f32.mrf.mxu0
          %v3631 = vpop.f32.mrf.mxu0
          %v3632 = vadd.f32 0.0, %v3631
          %v3633 = vpop.f32.mrf.mxu0
          %3634 = vmatprep.mubr.bf16.mxu0 0
          %3635 = vmatmul.mubr.bf16.gmra.mxu0 %v3495
          %v3636 = vpop.f32.mrf.mxu0
          %v3637 = vadd.f32 0.0, %v3636
          %v3638 = vpop.f32.mrf.mxu0
          %v3639 = vpop.f32.mrf.mxu0
          %v3640 = vadd.f32 0.0, %v3639
          %v3641 = vpop.f32.mrf.mxu0
          %3642 = vmatprep.mubr.bf16.mxu0 0
          %3643 = vmatmul.mubr.bf16.gmra.mxu0 %v3497
          %v3644 = vpop.f32.mrf.mxu0
          %v3645 = vadd.f32 0.0, %v3644
          %v3646 = vpop.f32.mrf.mxu0
          %v3647 = vpop.f32.mrf.mxu0
          %v3648 = vadd.f32 0.0, %v3647
          %v3649 = vpop.f32.mrf.mxu0
          %3650 = vdwg.mxu0
          %v3651 = vadd.f32 %v3440, %v3589
          %v3652 = vadd.f32 %v3441, %v3592
          %v3653 = vadd.f32 %v3442, %v3597
          %v3654 = vadd.f32 %v3443, %v3600
          %v3655 = vadd.f32 %v3444, %v3605
          %v3656 = vadd.f32 %v3445, %v3608
          %v3657 = vadd.f32 %v3446, %v3613
          %v3658 = vadd.f32 %v3447, %v3616
          %v3659 = vadd.f32 %v3448, %v3621
          %v3660 = vadd.f32 %v3449, %v3624
          %v3661 = vadd.f32 %v3450, %v3629
          %v3662 = vadd.f32 %v3451, %v3632
          %v3663 = vadd.f32 %v3452, %v3637
          %v3664 = vadd.f32 %v3453, %v3640
          %v3665 = vadd.f32 %v3454, %v3645
          %v3666 = vadd.f32 %v3455, %v3648
          %v3668 = vlaneseq
          %v3669 = vshrl.u32 %v3668, 7
          %v3670 = vsub.s32 0, %v3669
          %v3671 = vrot.slane %v425, %v3670
          %v3673 = vadd.f32 %v3651, %v3671
          %v3674 = vadd.f32 %v3652, %v3671
          %v3675 = vadd.f32 %v3653, %v3671
          %v3676 = vadd.f32 %v3654, %v3671
          %v3677 = vadd.f32 %v3655, %v3671
          %v3678 = vadd.f32 %v3656, %v3671
          %v3679 = vadd.f32 %v3657, %v3671
          %v3680 = vadd.f32 %v3658, %v3671
          %v3681 = vadd.f32 %v3659, %v3671
          %v3682 = vadd.f32 %v3660, %v3671
          %v3683 = vadd.f32 %v3661, %v3671
          %v3684 = vadd.f32 %v3662, %v3671
          %v3685 = vadd.f32 %v3663, %v3671
          %v3686 = vadd.f32 %v3664, %v3671
          %v3687 = vadd.f32 %v3665, %v3671
          %v3688 = vadd.f32 %v3666, %v3671
          %v3689 = vmax.f32 %v3673, 0.0
          %v3690 = vmax.f32 %v3674, 0.0
          %v3691 = vmax.f32 %v3675, 0.0
          %v3692 = vmax.f32 %v3676, 0.0
          %v3693 = vmax.f32 %v3677, 0.0
          %v3694 = vmax.f32 %v3678, 0.0
          %v3695 = vmax.f32 %v3679, 0.0
          %v3696 = vmax.f32 %v3680, 0.0
          %v3697 = vmax.f32 %v3681, 0.0
          %v3698 = vmax.f32 %v3682, 0.0
          %v3699 = vmax.f32 %v3683, 0.0
          %v3700 = vmax.f32 %v3684, 0.0
          %v3701 = vmax.f32 %v3685, 0.0
          %v3702 = vmax.f32 %v3686, 0.0
          %v3703 = vmax.f32 %v3687, 0.0
          %v3704 = vmax.f32 %v3688, 0.0
          %3705 = vst [vmem:[#allocation3] sm:$0xff] %v3689
          %3706 = vst [vmem:[#allocation3 + $0x8] sm:$0xff] %v3690
          %3707 = vst [vmem:[#allocation3 + $0x10] sm:$0xff] %v3691
          %3708 = vst [vmem:[#allocation3 + $0x18] sm:$0xff] %v3692
          %3709 = vst [vmem:[#allocation3 + $0x20] sm:$0xff] %v3693
          %3710 = vst [vmem:[#allocation3 + $0x28] sm:$0xff] %v3694
          %3711 = vst [vmem:[#allocation3 + $0x30] sm:$0xff] %v3695
          %3712 = vst [vmem:[#allocation3 + $0x38] sm:$0xff] %v3696
          %3713 = vst [vmem:[#allocation3 + $0x40] sm:$0xff] %v3697
          %3714 = vst [vmem:[#allocation3 + $0x48] sm:$0xff] %v3698
          %3715 = vst [vmem:[#allocation3 + $0x50] sm:$0xff] %v3699
          %3716 = vst [vmem:[#allocation3 + $0x58] sm:$0xff] %v3700
          %3717 = vst [vmem:[#allocation3 + $0x60] sm:$0xff] %v3701
          %3718 = vst [vmem:[#allocation3 + $0x68] sm:$0xff] %v3702
          %3719 = vst [vmem:[#allocation3 + $0x70] sm:$0xff] %v3703
          %3720 = vst [vmem:[#allocation3 + $0x78] sm:$0xff] %v3704
          %v3721 = vld [vmem:[#allocation2 + $0x40] sm:$0xc]
          %v3722 = vld [vmem:[#allocation2 + $0x44] sm:$0xf]
          %v3723 = vld [vmem:[#allocation2 + $0x48] sm:$0xf]
          %v3724 = vld [vmem:[#allocation2 + $0x4c] sm:$0xf]
          %v3725 = vld [vmem:[#allocation2 + $0x50] sm:$0xf]
          %v3726 = vld [vmem:[#allocation2 + $0x54] sm:$0xf]
          %v3727 = vld [vmem:[#allocation2 + $0x58] sm:$0xf]
          %v3728 = vld [vmem:[#allocation2 + $0x5c] sm:$0xf]
          %v3729 = vld [vmem:[#allocation2 + $0x60] sm:$0xf]
          %v3730 = vld [vmem:[#allocation2 + $0x64] sm:$0xf]
          %v3731 = vld [vmem:[#allocation2 + $0x68] sm:$0xf]
          %v3732 = vld [vmem:[#allocation2 + $0x6c] sm:$0xf]
          %v3733 = vld [vmem:[#allocation2 + $0x70] sm:$0xf]
          %v3734 = vld [vmem:[#allocation2 + $0x74] sm:$0xf]
          %v3735 = vld [vmem:[#allocation2 + $0x78] sm:$0xf]
          %v3736 = vld [vmem:[#allocation2 + $0x7c] sm:$0xf]
          %v3737 = vld [vmem:[#allocation2 + $0x80] sm:$0x3]
          %v3738 = vld [vmem:[#allocation11] sm:$0xf]
          %v3739 = vld [vmem:[#allocation11 + $0x4] sm:$0xf]
          %v3740 = vld [vmem:[#allocation11 + $0x8] sm:$0xf]
          %v3741 = vld [vmem:[#allocation11 + $0xc] sm:$0xf]
          %v3742 = vld [vmem:[#allocation11 + $0x10] sm:$0xf]
          %v3743 = vld [vmem:[#allocation11 + $0x14] sm:$0xf]
          %v3744 = vld [vmem:[#allocation11 + $0x18] sm:$0xf]
          %v3745 = vld [vmem:[#allocation11 + $0x1c] sm:$0xf]
          %v3746 = vld [vmem:[#allocation11 + $0x20] sm:$0xf]
          %v3747 = vld [vmem:[#allocation11 + $0x24] sm:$0xf]
          %v3748 = vld [vmem:[#allocation11 + $0x28] sm:$0xf]
          %v3749 = vld [vmem:[#allocation11 + $0x2c] sm:$0xf]
          %v3750 = vld [vmem:[#allocation11 + $0x30] sm:$0xf]
          %v3751 = vld [vmem:[#allocation11 + $0x34] sm:$0xf]
          %v3752 = vld [vmem:[#allocation11 + $0x38] sm:$0xf]
          %v3753 = vld [vmem:[#allocation11 + $0x3c] sm:$0xf]
          %v3754 = vld [vmem:[#allocation2 + $0x40] sm:$0x8]
          %v3755 = vld [vmem:[#allocation2 + $0x80] sm:$0x7]
          %v3756 = vld [vmem:[%s1622] sm:$0xf]
          %v3757 = vld [vmem:[%s1622 + $0x4] sm:$0xf]
          %v3758 = vld [vmem:[%s1622 + $0x8] sm:$0xf]
          %v3759 = vld [vmem:[%s1622 + $0xc] sm:$0xf]
          %v3760 = vld [vmem:[%s1622 + $0x10] sm:$0xf]
          %v3761 = vld [vmem:[%s1622 + $0x14] sm:$0xf]
          %v3762 = vld [vmem:[%s1622 + $0x18] sm:$0xf]
          %v3763 = vld [vmem:[%s1622 + $0x1c] sm:$0xf]
          %v3764 = vld [vmem:[%s1622 + $0x20] sm:$0xf]
          %v3765 = vld [vmem:[%s1622 + $0x24] sm:$0xf]
          %v3766 = vld [vmem:[%s1622 + $0x28] sm:$0xf]
          %v3767 = vld [vmem:[%s1622 + $0x2c] sm:$0xf]
          %v3768 = vld [vmem:[%s1622 + $0x30] sm:$0xf]
          %v3769 = vld [vmem:[%s1622 + $0x34] sm:$0xf]
          %v3770 = vld [vmem:[%s1622 + $0x38] sm:$0xf]
          %v3771 = vld [vmem:[%s1622 + $0x3c] sm:$0xf]
          %v3789 = vunpack.c.l.b16 %v3754
          %v3790 = vunpack.c.l.b16 %v3722
          %v3791 = vunpack.c.l.b16 %v3723
          %v3792 = vunpack.c.l.b16 %v3724
          %v3793 = vunpack.c.l.b16 %v3725
          %v3794 = vunpack.c.l.b16 %v3726
          %v3795 = vunpack.c.l.b16 %v3727
          %v3796 = vunpack.c.l.b16 %v3728
          %v3797 = vunpack.c.l.b16 %v3729
          %v3798 = vunpack.c.l.b16 %v3730
          %v3799 = vunpack.c.l.b16 %v3731
          %v3800 = vunpack.c.l.b16 %v3732
          %v3801 = vunpack.c.l.b16 %v3733
          %v3802 = vunpack.c.l.b16 %v3734
          %v3803 = vunpack.c.l.b16 %v3735
          %v3804 = vunpack.c.l.b16 %v3736
          %v3805 = vunpack.c.l.b16 %v3755
          %v3806 = vpack.c.b16 %v3790, %v3789
          %v3807 = vpack.c.b16 %v3792, %v3791
          %v3808 = vpack.c.b16 %v3794, %v3793
          %v3809 = vpack.c.b16 %v3796, %v3795
          %v3810 = vpack.c.b16 %v3798, %v3797
          %v3811 = vpack.c.b16 %v3800, %v3799
          %v3812 = vpack.c.b16 %v3802, %v3801
          %v3813 = vpack.c.b16 %v3804, %v3803
          %v3814 = vpack.c.b16 %v3805, %v3805
          %v3815 = vrot.slane %v3806, 3
          %v3816 = vrot.slane %v3807, 3
          %v3817 = vsel %vm1682, %v3815, %v3816
          %v3818 = vrot.slane %v3808, 3
          %v3819 = vsel %vm1682, %v3816, %v3818
          %v3820 = vrot.slane %v3809, 3
          %v3821 = vsel %vm1682, %v3818, %v3820
          %v3822 = vrot.slane %v3810, 3
          %v3823 = vsel %vm1682, %v3820, %v3822
          %v3824 = vrot.slane %v3811, 3
          %v3825 = vsel %vm1682, %v3822, %v3824
          %v3826 = vrot.slane %v3812, 3
          %v3827 = vsel %vm1682, %v3824, %v3826
          %v3828 = vrot.slane %v3813, 3
          %v3829 = vsel %vm1682, %v3826, %v3828
          %v3830 = vrot.slane %v3814, 3
          %v3831 = vsel %vm1682, %v3828, %v3830
          %v3856 = vunpack.c.l.b16 %v3756
          %v3857 = vunpack.c.l.b16 %v3757
          %v3858 = vunpack.c.l.b16 %v3758
          %v3859 = vunpack.c.l.b16 %v3759
          %v3860 = vunpack.c.l.b16 %v3760
          %v3861 = vunpack.c.l.b16 %v3761
          %v3862 = vunpack.c.l.b16 %v3762
          %v3863 = vunpack.c.l.b16 %v3763
          %v3864 = vunpack.c.l.b16 %v3764
          %v3865 = vunpack.c.l.b16 %v3765
          %v3866 = vunpack.c.l.b16 %v3766
          %v3867 = vunpack.c.l.b16 %v3767
          %v3868 = vunpack.c.l.b16 %v3768
          %v3869 = vunpack.c.l.b16 %v3769
          %v3870 = vunpack.c.l.b16 %v3770
          %v3871 = vunpack.c.l.b16 %v3771
          %v3872 = vpack.c.b16 %v3857, %v3856
          %v3873 = vpack.c.b16 %v3859, %v3858
          %v3874 = vpack.c.b16 %v3861, %v3860
          %v3875 = vpack.c.b16 %v3863, %v3862
          %v3876 = vpack.c.b16 %v3865, %v3864
          %v3877 = vpack.c.b16 %v3867, %v3866
          %v3878 = vpack.c.b16 %v3869, %v3868
          %v3879 = vpack.c.b16 %v3871, %v3870
          %3888 = vmatprep.subr.bf16.mxu0 0
          %3889 = vmatpush1.bf16.msra.mxu0 %v3879
          %3890 = vmatprep.subr.bf16.mxu0 0
          %3891 = vmatpush1.bf16.msra.mxu0 %v3878
          %3892 = vmatprep.subr.bf16.mxu0 0
          %3893 = vmatpush1.bf16.msra.mxu0 %v3877
          %3894 = vmatprep.subr.bf16.mxu0 0
          %3895 = vmatpush1.bf16.msra.mxu0 %v3876
          %3896 = vmatprep.subr.bf16.mxu0 0
          %3897 = vmatpush1.bf16.msra.mxu0 %v3875
          %3898 = vmatprep.subr.bf16.mxu0 0
          %3899 = vmatpush1.bf16.msra.mxu0 %v3874
          %3900 = vmatprep.subr.bf16.mxu0 0
          %3901 = vmatpush1.bf16.msra.mxu0 %v3873
          %3902 = vmatprep.subr.bf16.mxu0 0
          %3903 = vmatpush1.bf16.msra.mxu0 %v3872
          %3904 = vmatprep.subr.bf16.mxu0 0
          %3905 = vmatpush2.bf16.msra.mxu0 0
          %3906 = vmatprep.subr.bf16.mxu0 0
          %3907 = vmatpush2.bf16.msra.mxu0 0
          %3908 = vmatprep.subr.bf16.mxu0 0
          %3909 = vmatpush2.bf16.msra.mxu0 0
          %3910 = vmatprep.subr.bf16.mxu0 0
          %3911 = vmatpush2.bf16.msra.mxu0 0
          %3912 = vmatprep.subr.bf16.mxu0 0
          %3913 = vmatpush2.bf16.msra.mxu0 0
          %3914 = vmatprep.subr.bf16.mxu0 0
          %3915 = vmatpush2.bf16.msra.mxu0 0
          %3916 = vmatprep.subr.bf16.mxu0 0
          %3917 = vmatpush2.bf16.msra.mxu0 0
          %3918 = vmatprep.subr.bf16.mxu0 0
          %3919 = vmatpush2.bf16.msra.mxu0 0
          %3920 = vmatprep.mubr.bf16.mxu0 0
          %3921 = vmatmul.mubr.bf16.gmra.mxu0 %v3817
          %v3922 = vpop.f32.mrf.mxu0
          %v3923 = vadd.f32 0.0, %v3922
          %v3924 = vpop.f32.mrf.mxu0
          %v3925 = vpop.f32.mrf.mxu0
          %v3926 = vadd.f32 0.0, %v3925
          %v3927 = vpop.f32.mrf.mxu0
          %3928 = vmatprep.mubr.bf16.mxu0 0
          %3929 = vmatmul.mubr.bf16.gmra.mxu0 %v3819
          %v3930 = vpop.f32.mrf.mxu0
          %v3931 = vadd.f32 0.0, %v3930
          %v3932 = vpop.f32.mrf.mxu0
          %v3933 = vpop.f32.mrf.mxu0
          %v3934 = vadd.f32 0.0, %v3933
          %v3935 = vpop.f32.mrf.mxu0
          %3936 = vmatprep.mubr.bf16.mxu0 0
          %3937 = vmatmul.mubr.bf16.gmra.mxu0 %v3821
          %v3938 = vpop.f32.mrf.mxu0
          %v3939 = vadd.f32 0.0, %v3938
          %v3940 = vpop.f32.mrf.mxu0
          %v3941 = vpop.f32.mrf.mxu0
          %v3942 = vadd.f32 0.0, %v3941
          %v3943 = vpop.f32.mrf.mxu0
          %3944 = vmatprep.mubr.bf16.mxu0 0
          %3945 = vmatmul.mubr.bf16.gmra.mxu0 %v3823
          %v3946 = vpop.f32.mrf.mxu0
          %v3947 = vadd.f32 0.0, %v3946
          %v3948 = vpop.f32.mrf.mxu0
          %v3949 = vpop.f32.mrf.mxu0
          %v3950 = vadd.f32 0.0, %v3949
          %v3951 = vpop.f32.mrf.mxu0
          %3952 = vmatprep.mubr.bf16.mxu0 0
          %3953 = vmatmul.mubr.bf16.gmra.mxu0 %v3825
          %v3954 = vpop.f32.mrf.mxu0
          %v3955 = vadd.f32 0.0, %v3954
          %v3956 = vpop.f32.mrf.mxu0
          %v3957 = vpop.f32.mrf.mxu0
          %v3958 = vadd.f32 0.0, %v3957
          %v3959 = vpop.f32.mrf.mxu0
          %3960 = vmatprep.mubr.bf16.mxu0 0
          %3961 = vmatmul.mubr.bf16.gmra.mxu0 %v3827
          %v3962 = vpop.f32.mrf.mxu0
          %v3963 = vadd.f32 0.0, %v3962
          %v3964 = vpop.f32.mrf.mxu0
          %v3965 = vpop.f32.mrf.mxu0
          %v3966 = vadd.f32 0.0, %v3965
          %v3967 = vpop.f32.mrf.mxu0
          %3968 = vmatprep.mubr.bf16.mxu0 0
          %3969 = vmatmul.mubr.bf16.gmra.mxu0 %v3829
          %v3970 = vpop.f32.mrf.mxu0
          %v3971 = vadd.f32 0.0, %v3970
          %v3972 = vpop.f32.mrf.mxu0
          %v3973 = vpop.f32.mrf.mxu0
          %v3974 = vadd.f32 0.0, %v3973
          %v3975 = vpop.f32.mrf.mxu0
          %3976 = vmatprep.mubr.bf16.mxu0 0
          %3977 = vmatmul.mubr.bf16.gmra.mxu0 %v3831
          %v3978 = vpop.f32.mrf.mxu0
          %v3979 = vadd.f32 0.0, %v3978
          %v3980 = vpop.f32.mrf.mxu0
          %v3981 = vpop.f32.mrf.mxu0
          %v3982 = vadd.f32 0.0, %v3981
          %v3983 = vpop.f32.mrf.mxu0
          %3984 = vdwg.mxu0
          %v3987 = vunpack.c.l.b16 %v3721
          %v3988 = vunpack.c.l.b16 %v3737
          %v3989 = vpack.c.b16 %v3790, %v3987
          %v3990 = vpack.c.b16 %v3988, %v3988
          %v3991 = vrot.slane %v3989, 2
          %v3992 = vrot.slane %v3807, 2
          %v3993 = vsel %vm1859, %v3991, %v3992
          %v3994 = vrot.slane %v3808, 2
          %v3995 = vsel %vm1859, %v3992, %v3994
          %v3996 = vrot.slane %v3809, 2
          %v3997 = vsel %vm1859, %v3994, %v3996
          %v3998 = vrot.slane %v3810, 2
          %v3999 = vsel %vm1859, %v3996, %v3998
          %v4000 = vrot.slane %v3811, 2
          %v4001 = vsel %vm1859, %v3998, %v4000
          %v4002 = vrot.slane %v3812, 2
          %v4003 = vsel %vm1859, %v4000, %v4002
          %v4004 = vrot.slane %v3813, 2
          %v4005 = vsel %vm1859, %v4002, %v4004
          %v4006 = vrot.slane %v3990, 2
          %v4007 = vsel %vm1859, %v4004, %v4006
          %v4032 = vunpack.c.l.b16 %v3738
          %v4033 = vunpack.c.l.b16 %v3739
          %v4034 = vunpack.c.l.b16 %v3740
          %v4035 = vunpack.c.l.b16 %v3741
          %v4036 = vunpack.c.l.b16 %v3742
          %v4037 = vunpack.c.l.b16 %v3743
          %v4038 = vunpack.c.l.b16 %v3744
          %v4039 = vunpack.c.l.b16 %v3745
          %v4040 = vunpack.c.l.b16 %v3746
          %v4041 = vunpack.c.l.b16 %v3747
          %v4042 = vunpack.c.l.b16 %v3748
          %v4043 = vunpack.c.l.b16 %v3749
          %v4044 = vunpack.c.l.b16 %v3750
          %v4045 = vunpack.c.l.b16 %v3751
          %v4046 = vunpack.c.l.b16 %v3752
          %v4047 = vunpack.c.l.b16 %v3753
          %v4048 = vpack.c.b16 %v4033, %v4032
          %v4049 = vpack.c.b16 %v4035, %v4034
          %v4050 = vpack.c.b16 %v4037, %v4036
          %v4051 = vpack.c.b16 %v4039, %v4038
          %v4052 = vpack.c.b16 %v4041, %v4040
          %v4053 = vpack.c.b16 %v4043, %v4042
          %v4054 = vpack.c.b16 %v4045, %v4044
          %v4055 = vpack.c.b16 %v4047, %v4046
          %4064 = vmatprep.subr.bf16.mxu0 0
          %4065 = vmatpush1.bf16.msra.mxu0 %v4055
          %4066 = vmatprep.subr.bf16.mxu0 0
          %4067 = vmatpush1.bf16.msra.mxu0 %v4054
          %4068 = vmatprep.subr.bf16.mxu0 0
          %4069 = vmatpush1.bf16.msra.mxu0 %v4053
          %4070 = vmatprep.subr.bf16.mxu0 0
          %4071 = vmatpush1.bf16.msra.mxu0 %v4052
          %4072 = vmatprep.subr.bf16.mxu0 0
          %4073 = vmatpush1.bf16.msra.mxu0 %v4051
          %4074 = vmatprep.subr.bf16.mxu0 0
          %4075 = vmatpush1.bf16.msra.mxu0 %v4050
          %4076 = vmatprep.subr.bf16.mxu0 0
          %4077 = vmatpush1.bf16.msra.mxu0 %v4049
          %4078 = vmatprep.subr.bf16.mxu0 0
          %4079 = vmatpush1.bf16.msra.mxu0 %v4048
          %4080 = vmatprep.subr.bf16.mxu0 0
          %4081 = vmatpush2.bf16.msra.mxu0 0
          %4082 = vmatprep.subr.bf16.mxu0 0
          %4083 = vmatpush2.bf16.msra.mxu0 0
          %4084 = vmatprep.subr.bf16.mxu0 0
          %4085 = vmatpush2.bf16.msra.mxu0 0
          %4086 = vmatprep.subr.bf16.mxu0 0
          %4087 = vmatpush2.bf16.msra.mxu0 0
          %4088 = vmatprep.subr.bf16.mxu0 0
          %4089 = vmatpush2.bf16.msra.mxu0 0
          %4090 = vmatprep.subr.bf16.mxu0 0
          %4091 = vmatpush2.bf16.msra.mxu0 0
          %4092 = vmatprep.subr.bf16.mxu0 0
          %4093 = vmatpush2.bf16.msra.mxu0 0
          %4094 = vmatprep.subr.bf16.mxu0 0
          %4095 = vmatpush2.bf16.msra.mxu0 0
          %4096 = vmatprep.mubr.bf16.mxu0 0
          %4097 = vmatmul.mubr.bf16.gmra.mxu0 %v3993
          %v4098 = vpop.f32.mrf.mxu0
          %v4099 = vadd.f32 %v3923, %v4098
          %v4100 = vpop.f32.mrf.mxu0
          %v4101 = vpop.f32.mrf.mxu0
          %v4102 = vadd.f32 %v3926, %v4101
          %v4103 = vpop.f32.mrf.mxu0
          %4104 = vmatprep.mubr.bf16.mxu0 0
          %4105 = vmatmul.mubr.bf16.gmra.mxu0 %v3995
          %v4106 = vpop.f32.mrf.mxu0
          %v4107 = vadd.f32 %v3931, %v4106
          %v4108 = vpop.f32.mrf.mxu0
          %v4109 = vpop.f32.mrf.mxu0
          %v4110 = vadd.f32 %v3934, %v4109
          %v4111 = vpop.f32.mrf.mxu0
          %4112 = vmatprep.mubr.bf16.mxu0 0
          %4113 = vmatmul.mubr.bf16.gmra.mxu0 %v3997
          %v4114 = vpop.f32.mrf.mxu0
          %v4115 = vadd.f32 %v3939, %v4114
          %v4116 = vpop.f32.mrf.mxu0
          %v4117 = vpop.f32.mrf.mxu0
          %v4118 = vadd.f32 %v3942, %v4117
          %v4119 = vpop.f32.mrf.mxu0
          %4120 = vmatprep.mubr.bf16.mxu0 0
          %4121 = vmatmul.mubr.bf16.gmra.mxu0 %v3999
          %v4122 = vpop.f32.mrf.mxu0
          %v4123 = vadd.f32 %v3947, %v4122
          %v4124 = vpop.f32.mrf.mxu0
          %v4125 = vpop.f32.mrf.mxu0
          %v4126 = vadd.f32 %v3950, %v4125
          %v4127 = vpop.f32.mrf.mxu0
          %4128 = vmatprep.mubr.bf16.mxu0 0
          %4129 = vmatmul.mubr.bf16.gmra.mxu0 %v4001
          %v4130 = vpop.f32.mrf.mxu0
          %v4131 = vadd.f32 %v3955, %v4130
          %v4132 = vpop.f32.mrf.mxu0
          %v4133 = vpop.f32.mrf.mxu0
          %v4134 = vadd.f32 %v3958, %v4133
          %v4135 = vpop.f32.mrf.mxu0
          %4136 = vmatprep.mubr.bf16.mxu0 0
          %4137 = vmatmul.mubr.bf16.gmra.mxu0 %v4003
          %v4138 = vpop.f32.mrf.mxu0
          %v4139 = vadd.f32 %v3963, %v4138
          %v4140 = vpop.f32.mrf.mxu0
          %v4141 = vpop.f32.mrf.mxu0
          %v4142 = vadd.f32 %v3966, %v4141
          %v4143 = vpop.f32.mrf.mxu0
          %4144 = vmatprep.mubr.bf16.mxu0 0
          %4145 = vmatmul.mubr.bf16.gmra.mxu0 %v4005
          %v4146 = vpop.f32.mrf.mxu0
          %v4147 = vadd.f32 %v3971, %v4146
          %v4148 = vpop.f32.mrf.mxu0
          %v4149 = vpop.f32.mrf.mxu0
          %v4150 = vadd.f32 %v3974, %v4149
          %v4151 = vpop.f32.mrf.mxu0
          %4152 = vmatprep.mubr.bf16.mxu0 0
          %4153 = vmatmul.mubr.bf16.gmra.mxu0 %v4007
          %v4154 = vpop.f32.mrf.mxu0
          %v4155 = vadd.f32 %v3979, %v4154
          %v4156 = vpop.f32.mrf.mxu0
          %v4157 = vpop.f32.mrf.mxu0
          %v4158 = vadd.f32 %v3982, %v4157
          %v4159 = vpop.f32.mrf.mxu0
          %4160 = vdwg.mxu0
          %v4161 = vld [vmem:[#allocation2 + $0x80] sm:$0xf]
          %v4162 = vld [vmem:[%s2031] sm:$0xf]
          %v4163 = vld [vmem:[%s2031 + $0x4] sm:$0xf]
          %v4164 = vld [vmem:[%s2031 + $0x8] sm:$0xf]
          %v4165 = vld [vmem:[%s2031 + $0xc] sm:$0xf]
          %v4166 = vld [vmem:[%s2031 + $0x10] sm:$0xf]
          %v4167 = vld [vmem:[%s2031 + $0x14] sm:$0xf]
          %v4168 = vld [vmem:[%s2031 + $0x18] sm:$0xf]
          %v4169 = vld [vmem:[%s2031 + $0x1c] sm:$0xf]
          %v4170 = vld [vmem:[%s2031 + $0x20] sm:$0xf]
          %v4171 = vld [vmem:[%s2031 + $0x24] sm:$0xf]
          %v4172 = vld [vmem:[%s2031 + $0x28] sm:$0xf]
          %v4173 = vld [vmem:[%s2031 + $0x2c] sm:$0xf]
          %v4174 = vld [vmem:[%s2031 + $0x30] sm:$0xf]
          %v4175 = vld [vmem:[%s2031 + $0x34] sm:$0xf]
          %v4176 = vld [vmem:[%s2031 + $0x38] sm:$0xf]
          %v4177 = vld [vmem:[%s2031 + $0x3c] sm:$0xf]
          %v4179 = vunpack.c.l.b16 %v4161
          %v4180 = vpack.c.b16 %v3791, %v3790
          %v4181 = vpack.c.b16 %v3793, %v3792
          %v4182 = vpack.c.b16 %v3795, %v3794
          %v4183 = vpack.c.b16 %v3797, %v3796
          %v4184 = vpack.c.b16 %v3799, %v3798
          %v4185 = vpack.c.b16 %v3801, %v3800
          %v4186 = vpack.c.b16 %v3803, %v3802
          %v4187 = vpack.c.b16 %v4179, %v3804
          %v4212 = vunpack.c.l.b16 %v4162
          %v4213 = vunpack.c.l.b16 %v4163
          %v4214 = vunpack.c.l.b16 %v4164
          %v4215 = vunpack.c.l.b16 %v4165
          %v4216 = vunpack.c.l.b16 %v4166
          %v4217 = vunpack.c.l.b16 %v4167
          %v4218 = vunpack.c.l.b16 %v4168
          %v4219 = vunpack.c.l.b16 %v4169
          %v4220 = vunpack.c.l.b16 %v4170
          %v4221 = vunpack.c.l.b16 %v4171
          %v4222 = vunpack.c.l.b16 %v4172
          %v4223 = vunpack.c.l.b16 %v4173
          %v4224 = vunpack.c.l.b16 %v4174
          %v4225 = vunpack.c.l.b16 %v4175
          %v4226 = vunpack.c.l.b16 %v4176
          %v4227 = vunpack.c.l.b16 %v4177
          %v4228 = vpack.c.b16 %v4213, %v4212
          %v4229 = vpack.c.b16 %v4215, %v4214
          %v4230 = vpack.c.b16 %v4217, %v4216
          %v4231 = vpack.c.b16 %v4219, %v4218
          %v4232 = vpack.c.b16 %v4221, %v4220
          %v4233 = vpack.c.b16 %v4223, %v4222
          %v4234 = vpack.c.b16 %v4225, %v4224
          %v4235 = vpack.c.b16 %v4227, %v4226
          %4244 = vmatprep.subr.bf16.mxu0 0
          %4245 = vmatpush1.bf16.msra.mxu0 %v4235
          %4246 = vmatprep.subr.bf16.mxu0 0
          %4247 = vmatpush1.bf16.msra.mxu0 %v4234
          %4248 = vmatprep.subr.bf16.mxu0 0
          %4249 = vmatpush1.bf16.msra.mxu0 %v4233
          %4250 = vmatprep.subr.bf16.mxu0 0
          %4251 = vmatpush1.bf16.msra.mxu0 %v4232
          %4252 = vmatprep.subr.bf16.mxu0 0
          %4253 = vmatpush1.bf16.msra.mxu0 %v4231
          %4254 = vmatprep.subr.bf16.mxu0 0
          %4255 = vmatpush1.bf16.msra.mxu0 %v4230
          %4256 = vmatprep.subr.bf16.mxu0 0
          %4257 = vmatpush1.bf16.msra.mxu0 %v4229
          %4258 = vmatprep.subr.bf16.mxu0 0
          %4259 = vmatpush1.bf16.msra.mxu0 %v4228
          %4260 = vmatprep.subr.bf16.mxu0 0
          %4261 = vmatpush2.bf16.msra.mxu0 0
          %4262 = vmatprep.subr.bf16.mxu0 0
          %4263 = vmatpush2.bf16.msra.mxu0 0
          %4264 = vmatprep.subr.bf16.mxu0 0
          %4265 = vmatpush2.bf16.msra.mxu0 0
          %4266 = vmatprep.subr.bf16.mxu0 0
          %4267 = vmatpush2.bf16.msra.mxu0 0
          %4268 = vmatprep.subr.bf16.mxu0 0
          %4269 = vmatpush2.bf16.msra.mxu0 0
          %4270 = vmatprep.subr.bf16.mxu0 0
          %4271 = vmatpush2.bf16.msra.mxu0 0
          %4272 = vmatprep.subr.bf16.mxu0 0
          %4273 = vmatpush2.bf16.msra.mxu0 0
          %4274 = vmatprep.subr.bf16.mxu0 0
          %4275 = vmatpush2.bf16.msra.mxu0 0
          %4276 = vmatprep.mubr.bf16.mxu0 0
          %4277 = vmatmul.mubr.bf16.gmra.mxu0 %v4180
          %v4278 = vpop.f32.mrf.mxu0
          %v4279 = vadd.f32 0.0, %v4278
          %v4280 = vpop.f32.mrf.mxu0
          %v4281 = vpop.f32.mrf.mxu0
          %v4282 = vadd.f32 0.0, %v4281
          %v4283 = vpop.f32.mrf.mxu0
          %4284 = vmatprep.mubr.bf16.mxu0 0
          %4285 = vmatmul.mubr.bf16.gmra.mxu0 %v4181
          %v4286 = vpop.f32.mrf.mxu0
          %v4287 = vadd.f32 0.0, %v4286
          %v4288 = vpop.f32.mrf.mxu0
          %v4289 = vpop.f32.mrf.mxu0
          %v4290 = vadd.f32 0.0, %v4289
          %v4291 = vpop.f32.mrf.mxu0
          %4292 = vmatprep.mubr.bf16.mxu0 0
          %4293 = vmatmul.mubr.bf16.gmra.mxu0 %v4182
          %v4294 = vpop.f32.mrf.mxu0
          %v4295 = vadd.f32 0.0, %v4294
          %v4296 = vpop.f32.mrf.mxu0
          %v4297 = vpop.f32.mrf.mxu0
          %v4298 = vadd.f32 0.0, %v4297
          %v4299 = vpop.f32.mrf.mxu0
          %4300 = vmatprep.mubr.bf16.mxu0 0
          %4301 = vmatmul.mubr.bf16.gmra.mxu0 %v4183
          %v4302 = vpop.f32.mrf.mxu0
          %v4303 = vadd.f32 0.0, %v4302
          %v4304 = vpop.f32.mrf.mxu0
          %v4305 = vpop.f32.mrf.mxu0
          %v4306 = vadd.f32 0.0, %v4305
          %v4307 = vpop.f32.mrf.mxu0
          %4308 = vmatprep.mubr.bf16.mxu0 0
          %4309 = vmatmul.mubr.bf16.gmra.mxu0 %v4184
          %v4310 = vpop.f32.mrf.mxu0
          %v4311 = vadd.f32 0.0, %v4310
          %v4312 = vpop.f32.mrf.mxu0
          %v4313 = vpop.f32.mrf.mxu0
          %v4314 = vadd.f32 0.0, %v4313
          %v4315 = vpop.f32.mrf.mxu0
          %4316 = vmatprep.mubr.bf16.mxu0 0
          %4317 = vmatmul.mubr.bf16.gmra.mxu0 %v4185
          %v4318 = vpop.f32.mrf.mxu0
          %v4319 = vadd.f32 0.0, %v4318
          %v4320 = vpop.f32.mrf.mxu0
          %v4321 = vpop.f32.mrf.mxu0
          %v4322 = vadd.f32 0.0, %v4321
          %v4323 = vpop.f32.mrf.mxu0
          %4324 = vmatprep.mubr.bf16.mxu0 0
          %4325 = vmatmul.mubr.bf16.gmra.mxu0 %v4186
          %v4326 = vpop.f32.mrf.mxu0
          %v4327 = vadd.f32 0.0, %v4326
          %v4328 = vpop.f32.mrf.mxu0
          %v4329 = vpop.f32.mrf.mxu0
          %v4330 = vadd.f32 0.0, %v4329
          %v4331 = vpop.f32.mrf.mxu0
          %4332 = vmatprep.mubr.bf16.mxu0 0
          %4333 = vmatmul.mubr.bf16.gmra.mxu0 %v4187
          %v4334 = vpop.f32.mrf.mxu0
          %v4335 = vadd.f32 0.0, %v4334
          %v4336 = vpop.f32.mrf.mxu0
          %v4337 = vpop.f32.mrf.mxu0
          %v4338 = vadd.f32 0.0, %v4337
          %v4339 = vpop.f32.mrf.mxu0
          %4340 = vdwg.mxu0
          %v4341 = vadd.f32 %v4099, %v4279
          %v4342 = vadd.f32 %v4102, %v4282
          %v4343 = vadd.f32 %v4107, %v4287
          %v4344 = vadd.f32 %v4110, %v4290
          %v4345 = vadd.f32 %v4115, %v4295
          %v4346 = vadd.f32 %v4118, %v4298
          %v4347 = vadd.f32 %v4123, %v4303
          %v4348 = vadd.f32 %v4126, %v4306
          %v4349 = vadd.f32 %v4131, %v4311
          %v4350 = vadd.f32 %v4134, %v4314
          %v4351 = vadd.f32 %v4139, %v4319
          %v4352 = vadd.f32 %v4142, %v4322
          %v4353 = vadd.f32 %v4147, %v4327
          %v4354 = vadd.f32 %v4150, %v4330
          %v4355 = vadd.f32 %v4155, %v4335
          %v4356 = vadd.f32 %v4158, %v4338
          %v4357 = vld [vmem:[#allocation2 + $0x4c] sm:$0x8]
          %v4358 = vld [vmem:[#allocation2 + $0x50] sm:$0xf]
          %v4359 = vld [vmem:[#allocation2 + $0x54] sm:$0xf]
          %v4360 = vld [vmem:[#allocation2 + $0x58] sm:$0xf]
          %v4361 = vld [vmem:[#allocation2 + $0x5c] sm:$0xf]
          %v4362 = vld [vmem:[#allocation2 + $0x60] sm:$0xf]
          %v4363 = vld [vmem:[#allocation2 + $0x64] sm:$0xf]
          %v4364 = vld [vmem:[#allocation2 + $0x68] sm:$0xf]
          %v4365 = vld [vmem:[#allocation2 + $0x6c] sm:$0xf]
          %v4366 = vld [vmem:[#allocation2 + $0x70] sm:$0xf]
          %v4367 = vld [vmem:[#allocation2 + $0x74] sm:$0xf]
          %v4368 = vld [vmem:[#allocation2 + $0x78] sm:$0xf]
          %v4369 = vld [vmem:[#allocation2 + $0x7c] sm:$0xf]
          %v4370 = vld [vmem:[#allocation2 + $0x80] sm:$0xf]
          %v4371 = vld [vmem:[#allocation2 + $0x84] sm:$0xf]
          %v4372 = vld [vmem:[#allocation2 + $0x88] sm:$0xf]
          %v4373 = vld [vmem:[#allocation2 + $0x8c] sm:$0x7]
          %v4374 = vld [vmem:[%s2244] sm:$0xf]
          %v4375 = vld [vmem:[%s2244 + $0x4] sm:$0xf]
          %v4376 = vld [vmem:[%s2244 + $0x8] sm:$0xf]
          %v4377 = vld [vmem:[%s2244 + $0xc] sm:$0xf]
          %v4378 = vld [vmem:[%s2244 + $0x10] sm:$0xf]
          %v4379 = vld [vmem:[%s2244 + $0x14] sm:$0xf]
          %v4380 = vld [vmem:[%s2244 + $0x18] sm:$0xf]
          %v4381 = vld [vmem:[%s2244 + $0x1c] sm:$0xf]
          %v4382 = vld [vmem:[%s2244 + $0x20] sm:$0xf]
          %v4383 = vld [vmem:[%s2244 + $0x24] sm:$0xf]
          %v4384 = vld [vmem:[%s2244 + $0x28] sm:$0xf]
          %v4385 = vld [vmem:[%s2244 + $0x2c] sm:$0xf]
          %v4386 = vld [vmem:[%s2244 + $0x30] sm:$0xf]
          %v4387 = vld [vmem:[%s2244 + $0x34] sm:$0xf]
          %v4388 = vld [vmem:[%s2244 + $0x38] sm:$0xf]
          %v4389 = vld [vmem:[%s2244 + $0x3c] sm:$0xf]
          %v4407 = vunpack.c.l.b16 %v4357
          %v4408 = vunpack.c.l.b16 %v4358
          %v4409 = vunpack.c.l.b16 %v4359
          %v4410 = vunpack.c.l.b16 %v4360
          %v4411 = vunpack.c.l.b16 %v4361
          %v4412 = vunpack.c.l.b16 %v4362
          %v4413 = vunpack.c.l.b16 %v4363
          %v4414 = vunpack.c.l.b16 %v4364
          %v4415 = vunpack.c.l.b16 %v4365
          %v4416 = vunpack.c.l.b16 %v4366
          %v4417 = vunpack.c.l.b16 %v4367
          %v4418 = vunpack.c.l.b16 %v4368
          %v4419 = vunpack.c.l.b16 %v4369
          %v4420 = vunpack.c.l.b16 %v4370
          %v4421 = vunpack.c.l.b16 %v4371
          %v4422 = vunpack.c.l.b16 %v4372
          %v4423 = vunpack.c.l.b16 %v4373
          %v4424 = vpack.c.b16 %v4408, %v4407
          %v4425 = vpack.c.b16 %v4410, %v4409
          %v4426 = vpack.c.b16 %v4412, %v4411
          %v4427 = vpack.c.b16 %v4414, %v4413
          %v4428 = vpack.c.b16 %v4416, %v4415
          %v4429 = vpack.c.b16 %v4418, %v4417
          %v4430 = vpack.c.b16 %v4420, %v4419
          %v4431 = vpack.c.b16 %v4422, %v4421
          %v4432 = vpack.c.b16 %v4423, %v4423
          %v4433 = vrot.slane %v4424, 3
          %v4434 = vrot.slane %v4425, 3
          %v4435 = vsel %vm1682, %v4433, %v4434
          %v4436 = vrot.slane %v4426, 3
          %v4437 = vsel %vm1682, %v4434, %v4436
          %v4438 = vrot.slane %v4427, 3
          %v4439 = vsel %vm1682, %v4436, %v4438
          %v4440 = vrot.slane %v4428, 3
          %v4441 = vsel %vm1682, %v4438, %v4440
          %v4442 = vrot.slane %v4429, 3
          %v4443 = vsel %vm1682, %v4440, %v4442
          %v4444 = vrot.slane %v4430, 3
          %v4445 = vsel %vm1682, %v4442, %v4444
          %v4446 = vrot.slane %v4431, 3
          %v4447 = vsel %vm1682, %v4444, %v4446
          %v4448 = vrot.slane %v4432, 3
          %v4449 = vsel %vm1682, %v4446, %v4448
          %v4474 = vunpack.c.l.b16 %v4374
          %v4475 = vunpack.c.l.b16 %v4375
          %v4476 = vunpack.c.l.b16 %v4376
          %v4477 = vunpack.c.l.b16 %v4377
          %v4478 = vunpack.c.l.b16 %v4378
          %v4479 = vunpack.c.l.b16 %v4379
          %v4480 = vunpack.c.l.b16 %v4380
          %v4481 = vunpack.c.l.b16 %v4381
          %v4482 = vunpack.c.l.b16 %v4382
          %v4483 = vunpack.c.l.b16 %v4383
          %v4484 = vunpack.c.l.b16 %v4384
          %v4485 = vunpack.c.l.b16 %v4385
          %v4486 = vunpack.c.l.b16 %v4386
          %v4487 = vunpack.c.l.b16 %v4387
          %v4488 = vunpack.c.l.b16 %v4388
          %v4489 = vunpack.c.l.b16 %v4389
          %v4490 = vpack.c.b16 %v4475, %v4474
          %v4491 = vpack.c.b16 %v4477, %v4476
          %v4492 = vpack.c.b16 %v4479, %v4478
          %v4493 = vpack.c.b16 %v4481, %v4480
          %v4494 = vpack.c.b16 %v4483, %v4482
          %v4495 = vpack.c.b16 %v4485, %v4484
          %v4496 = vpack.c.b16 %v4487, %v4486
          %v4497 = vpack.c.b16 %v4489, %v4488
          %4506 = vmatprep.subr.bf16.mxu0 0
          %4507 = vmatpush1.bf16.msra.mxu0 %v4497
          %4508 = vmatprep.subr.bf16.mxu0 0
          %4509 = vmatpush1.bf16.msra.mxu0 %v4496
          %4510 = vmatprep.subr.bf16.mxu0 0
          %4511 = vmatpush1.bf16.msra.mxu0 %v4495
          %4512 = vmatprep.subr.bf16.mxu0 0
          %4513 = vmatpush1.bf16.msra.mxu0 %v4494
          %4514 = vmatprep.subr.bf16.mxu0 0
          %4515 = vmatpush1.bf16.msra.mxu0 %v4493
          %4516 = vmatprep.subr.bf16.mxu0 0
          %4517 = vmatpush1.bf16.msra.mxu0 %v4492
          %4518 = vmatprep.subr.bf16.mxu0 0
          %4519 = vmatpush1.bf16.msra.mxu0 %v4491
          %4520 = vmatprep.subr.bf16.mxu0 0
          %4521 = vmatpush1.bf16.msra.mxu0 %v4490
          %4522 = vmatprep.subr.bf16.mxu0 0
          %4523 = vmatpush2.bf16.msra.mxu0 0
          %4524 = vmatprep.subr.bf16.mxu0 0
          %4525 = vmatpush2.bf16.msra.mxu0 0
          %4526 = vmatprep.subr.bf16.mxu0 0
          %4527 = vmatpush2.bf16.msra.mxu0 0
          %4528 = vmatprep.subr.bf16.mxu0 0
          %4529 = vmatpush2.bf16.msra.mxu0 0
          %4530 = vmatprep.subr.bf16.mxu0 0
          %4531 = vmatpush2.bf16.msra.mxu0 0
          %4532 = vmatprep.subr.bf16.mxu0 0
          %4533 = vmatpush2.bf16.msra.mxu0 0
          %4534 = vmatprep.subr.bf16.mxu0 0
          %4535 = vmatpush2.bf16.msra.mxu0 0
          %4536 = vmatprep.subr.bf16.mxu0 0
          %4537 = vmatpush2.bf16.msra.mxu0 0
          %4538 = vmatprep.mubr.bf16.mxu0 0
          %4539 = vmatmul.mubr.bf16.gmra.mxu0 %v4435
          %v4540 = vpop.f32.mrf.mxu0
          %v4541 = vadd.f32 0.0, %v4540
          %v4542 = vpop.f32.mrf.mxu0
          %v4543 = vpop.f32.mrf.mxu0
          %v4544 = vadd.f32 0.0, %v4543
          %v4545 = vpop.f32.mrf.mxu0
          %4546 = vmatprep.mubr.bf16.mxu0 0
          %4547 = vmatmul.mubr.bf16.gmra.mxu0 %v4437
          %v4548 = vpop.f32.mrf.mxu0
          %v4549 = vadd.f32 0.0, %v4548
          %v4550 = vpop.f32.mrf.mxu0
          %v4551 = vpop.f32.mrf.mxu0
          %v4552 = vadd.f32 0.0, %v4551
          %v4553 = vpop.f32.mrf.mxu0
          %4554 = vmatprep.mubr.bf16.mxu0 0
          %4555 = vmatmul.mubr.bf16.gmra.mxu0 %v4439
          %v4556 = vpop.f32.mrf.mxu0
          %v4557 = vadd.f32 0.0, %v4556
          %v4558 = vpop.f32.mrf.mxu0
          %v4559 = vpop.f32.mrf.mxu0
          %v4560 = vadd.f32 0.0, %v4559
          %v4561 = vpop.f32.mrf.mxu0
          %4562 = vmatprep.mubr.bf16.mxu0 0
          %4563 = vmatmul.mubr.bf16.gmra.mxu0 %v4441
          %v4564 = vpop.f32.mrf.mxu0
          %v4565 = vadd.f32 0.0, %v4564
          %v4566 = vpop.f32.mrf.mxu0
          %v4567 = vpop.f32.mrf.mxu0
          %v4568 = vadd.f32 0.0, %v4567
          %v4569 = vpop.f32.mrf.mxu0
          %4570 = vmatprep.mubr.bf16.mxu0 0
          %4571 = vmatmul.mubr.bf16.gmra.mxu0 %v4443
          %v4572 = vpop.f32.mrf.mxu0
          %v4573 = vadd.f32 0.0, %v4572
          %v4574 = vpop.f32.mrf.mxu0
          %v4575 = vpop.f32.mrf.mxu0
          %v4576 = vadd.f32 0.0, %v4575
          %v4577 = vpop.f32.mrf.mxu0
          %4578 = vmatprep.mubr.bf16.mxu0 0
          %4579 = vmatmul.mubr.bf16.gmra.mxu0 %v4445
          %v4580 = vpop.f32.mrf.mxu0
          %v4581 = vadd.f32 0.0, %v4580
          %v4582 = vpop.f32.mrf.mxu0
          %v4583 = vpop.f32.mrf.mxu0
          %v4584 = vadd.f32 0.0, %v4583
          %v4585 = vpop.f32.mrf.mxu0
          %4586 = vmatprep.mubr.bf16.mxu0 0
          %4587 = vmatmul.mubr.bf16.gmra.mxu0 %v4447
          %v4588 = vpop.f32.mrf.mxu0
          %v4589 = vadd.f32 0.0, %v4588
          %v4590 = vpop.f32.mrf.mxu0
          %v4591 = vpop.f32.mrf.mxu0
          %v4592 = vadd.f32 0.0, %v4591
          %v4593 = vpop.f32.mrf.mxu0
          %4594 = vmatprep.mubr.bf16.mxu0 0
          %4595 = vmatmul.mubr.bf16.gmra.mxu0 %v4449
          %v4596 = vpop.f32.mrf.mxu0
          %v4597 = vadd.f32 0.0, %v4596
          %v4598 = vpop.f32.mrf.mxu0
          %v4599 = vpop.f32.mrf.mxu0
          %v4600 = vadd.f32 0.0, %v4599
          %v4601 = vpop.f32.mrf.mxu0
          %4602 = vdwg.mxu0
          %v4603 = vadd.f32 %v4341, %v4541
          %v4604 = vadd.f32 %v4342, %v4544
          %v4605 = vadd.f32 %v4343, %v4549
          %v4606 = vadd.f32 %v4344, %v4552
          %v4607 = vadd.f32 %v4345, %v4557
          %v4608 = vadd.f32 %v4346, %v4560
          %v4609 = vadd.f32 %v4347, %v4565
          %v4610 = vadd.f32 %v4348, %v4568
          %v4611 = vadd.f32 %v4349, %v4573
          %v4612 = vadd.f32 %v4350, %v4576
          %v4613 = vadd.f32 %v4351, %v4581
          %v4614 = vadd.f32 %v4352, %v4584
          %v4615 = vadd.f32 %v4353, %v4589
          %v4616 = vadd.f32 %v4354, %v4592
          %v4617 = vadd.f32 %v4355, %v4597
          %v4618 = vadd.f32 %v4356, %v4600
          %v4619 = vld [vmem:[#allocation2 + $0x8c] sm:$0xf]
          %v4620 = vld [vmem:[%s2491] sm:$0xf]
          %v4621 = vld [vmem:[%s2491 + $0x4] sm:$0xf]
          %v4622 = vld [vmem:[%s2491 + $0x8] sm:$0xf]
          %v4623 = vld [vmem:[%s2491 + $0xc] sm:$0xf]
          %v4624 = vld [vmem:[%s2491 + $0x10] sm:$0xf]
          %v4625 = vld [vmem:[%s2491 + $0x14] sm:$0xf]
          %v4626 = vld [vmem:[%s2491 + $0x18] sm:$0xf]
          %v4627 = vld [vmem:[%s2491 + $0x1c] sm:$0xf]
          %v4628 = vld [vmem:[%s2491 + $0x20] sm:$0xf]
          %v4629 = vld [vmem:[%s2491 + $0x24] sm:$0xf]
          %v4630 = vld [vmem:[%s2491 + $0x28] sm:$0xf]
          %v4631 = vld [vmem:[%s2491 + $0x2c] sm:$0xf]
          %v4632 = vld [vmem:[%s2491 + $0x30] sm:$0xf]
          %v4633 = vld [vmem:[%s2491 + $0x34] sm:$0xf]
          %v4634 = vld [vmem:[%s2491 + $0x38] sm:$0xf]
          %v4635 = vld [vmem:[%s2491 + $0x3c] sm:$0xf]
          %v4637 = vunpack.c.l.b16 %v4619
          %v4638 = vpack.c.b16 %v4409, %v4408
          %v4639 = vpack.c.b16 %v4411, %v4410
          %v4640 = vpack.c.b16 %v4413, %v4412
          %v4641 = vpack.c.b16 %v4415, %v4414
          %v4642 = vpack.c.b16 %v4417, %v4416
          %v4643 = vpack.c.b16 %v4419, %v4418
          %v4644 = vpack.c.b16 %v4421, %v4420
          %v4645 = vpack.c.b16 %v4637, %v4422
          %v4670 = vunpack.c.l.b16 %v4620
          %v4671 = vunpack.c.l.b16 %v4621
          %v4672 = vunpack.c.l.b16 %v4622
          %v4673 = vunpack.c.l.b16 %v4623
          %v4674 = vunpack.c.l.b16 %v4624
          %v4675 = vunpack.c.l.b16 %v4625
          %v4676 = vunpack.c.l.b16 %v4626
          %v4677 = vunpack.c.l.b16 %v4627
          %v4678 = vunpack.c.l.b16 %v4628
          %v4679 = vunpack.c.l.b16 %v4629
          %v4680 = vunpack.c.l.b16 %v4630
          %v4681 = vunpack.c.l.b16 %v4631
          %v4682 = vunpack.c.l.b16 %v4632
          %v4683 = vunpack.c.l.b16 %v4633
          %v4684 = vunpack.c.l.b16 %v4634
          %v4685 = vunpack.c.l.b16 %v4635
          %v4686 = vpack.c.b16 %v4671, %v4670
          %v4687 = vpack.c.b16 %v4673, %v4672
          %v4688 = vpack.c.b16 %v4675, %v4674
          %v4689 = vpack.c.b16 %v4677, %v4676
          %v4690 = vpack.c.b16 %v4679, %v4678
          %v4691 = vpack.c.b16 %v4681, %v4680
          %v4692 = vpack.c.b16 %v4683, %v4682
          %v4693 = vpack.c.b16 %v4685, %v4684
          %4702 = vmatprep.subr.bf16.mxu0 0
          %4703 = vmatpush1.bf16.msra.mxu0 %v4693
          %4704 = vmatprep.subr.bf16.mxu0 0
          %4705 = vmatpush1.bf16.msra.mxu0 %v4692
          %4706 = vmatprep.subr.bf16.mxu0 0
          %4707 = vmatpush1.bf16.msra.mxu0 %v4691
          %4708 = vmatprep.subr.bf16.mxu0 0
          %4709 = vmatpush1.bf16.msra.mxu0 %v4690
          %4710 = vmatprep.subr.bf16.mxu0 0
          %4711 = vmatpush1.bf16.msra.mxu0 %v4689
          %4712 = vmatprep.subr.bf16.mxu0 0
          %4713 = vmatpush1.bf16.msra.mxu0 %v4688
          %4714 = vmatprep.subr.bf16.mxu0 0
          %4715 = vmatpush1.bf16.msra.mxu0 %v4687
          %4716 = vmatprep.subr.bf16.mxu0 0
          %4717 = vmatpush1.bf16.msra.mxu0 %v4686
          %4718 = vmatprep.subr.bf16.mxu0 0
          %4719 = vmatpush2.bf16.msra.mxu0 0
          %4720 = vmatprep.subr.bf16.mxu0 0
          %4721 = vmatpush2.bf16.msra.mxu0 0
          %4722 = vmatprep.subr.bf16.mxu0 0
          %4723 = vmatpush2.bf16.msra.mxu0 0
          %4724 = vmatprep.subr.bf16.mxu0 0
          %4725 = vmatpush2.bf16.msra.mxu0 0
          %4726 = vmatprep.subr.bf16.mxu0 0
          %4727 = vmatpush2.bf16.msra.mxu0 0
          %4728 = vmatprep.subr.bf16.mxu0 0
          %4729 = vmatpush2.bf16.msra.mxu0 0
          %4730 = vmatprep.subr.bf16.mxu0 0
          %4731 = vmatpush2.bf16.msra.mxu0 0
          %4732 = vmatprep.subr.bf16.mxu0 0
          %4733 = vmatpush2.bf16.msra.mxu0 0
          %4734 = vmatprep.mubr.bf16.mxu0 0
          %4735 = vmatmul.mubr.bf16.gmra.mxu0 %v4638
          %v4736 = vpop.f32.mrf.mxu0
          %v4737 = vadd.f32 0.0, %v4736
          %v4738 = vpop.f32.mrf.mxu0
          %v4739 = vpop.f32.mrf.mxu0
          %v4740 = vadd.f32 0.0, %v4739
          %v4741 = vpop.f32.mrf.mxu0
          %4742 = vmatprep.mubr.bf16.mxu0 0
          %4743 = vmatmul.mubr.bf16.gmra.mxu0 %v4639
          %v4744 = vpop.f32.mrf.mxu0
          %v4745 = vadd.f32 0.0, %v4744
          %v4746 = vpop.f32.mrf.mxu0
          %v4747 = vpop.f32.mrf.mxu0
          %v4748 = vadd.f32 0.0, %v4747
          %v4749 = vpop.f32.mrf.mxu0
          %4750 = vmatprep.mubr.bf16.mxu0 0
          %4751 = vmatmul.mubr.bf16.gmra.mxu0 %v4640
          %v4752 = vpop.f32.mrf.mxu0
          %v4753 = vadd.f32 0.0, %v4752
          %v4754 = vpop.f32.mrf.mxu0
          %v4755 = vpop.f32.mrf.mxu0
          %v4756 = vadd.f32 0.0, %v4755
          %v4757 = vpop.f32.mrf.mxu0
          %4758 = vmatprep.mubr.bf16.mxu0 0
          %4759 = vmatmul.mubr.bf16.gmra.mxu0 %v4641
          %v4760 = vpop.f32.mrf.mxu0
          %v4761 = vadd.f32 0.0, %v4760
          %v4762 = vpop.f32.mrf.mxu0
          %v4763 = vpop.f32.mrf.mxu0
          %v4764 = vadd.f32 0.0, %v4763
          %v4765 = vpop.f32.mrf.mxu0
          %4766 = vmatprep.mubr.bf16.mxu0 0
          %4767 = vmatmul.mubr.bf16.gmra.mxu0 %v4642
          %v4768 = vpop.f32.mrf.mxu0
          %v4769 = vadd.f32 0.0, %v4768
          %v4770 = vpop.f32.mrf.mxu0
          %v4771 = vpop.f32.mrf.mxu0
          %v4772 = vadd.f32 0.0, %v4771
          %v4773 = vpop.f32.mrf.mxu0
          %4774 = vmatprep.mubr.bf16.mxu0 0
          %4775 = vmatmul.mubr.bf16.gmra.mxu0 %v4643
          %v4776 = vpop.f32.mrf.mxu0
          %v4777 = vadd.f32 0.0, %v4776
          %v4778 = vpop.f32.mrf.mxu0
          %v4779 = vpop.f32.mrf.mxu0
          %v4780 = vadd.f32 0.0, %v4779
          %v4781 = vpop.f32.mrf.mxu0
          %4782 = vmatprep.mubr.bf16.mxu0 0
          %4783 = vmatmul.mubr.bf16.gmra.mxu0 %v4644
          %v4784 = vpop.f32.mrf.mxu0
          %v4785 = vadd.f32 0.0, %v4784
          %v4786 = vpop.f32.mrf.mxu0
          %v4787 = vpop.f32.mrf.mxu0
          %v4788 = vadd.f32 0.0, %v4787
          %v4789 = vpop.f32.mrf.mxu0
          %4790 = vmatprep.mubr.bf16.mxu0 0
          %4791 = vmatmul.mubr.bf16.gmra.mxu0 %v4645
          %v4792 = vpop.f32.mrf.mxu0
          %v4793 = vadd.f32 0.0, %v4792
          %v4794 = vpop.f32.mrf.mxu0
          %v4795 = vpop.f32.mrf.mxu0
          %v4796 = vadd.f32 0.0, %v4795
          %v4797 = vpop.f32.mrf.mxu0
          %4798 = vdwg.mxu0
          %v4799 = vadd.f32 %v4603, %v4737
          %v4800 = vadd.f32 %v4604, %v4740
          %v4801 = vadd.f32 %v4605, %v4745
          %v4802 = vadd.f32 %v4606, %v4748
          %v4803 = vadd.f32 %v4607, %v4753
          %v4804 = vadd.f32 %v4608, %v4756
          %v4805 = vadd.f32 %v4609, %v4761
          %v4806 = vadd.f32 %v4610, %v4764
          %v4807 = vadd.f32 %v4611, %v4769
          %v4808 = vadd.f32 %v4612, %v4772
          %v4809 = vadd.f32 %v4613, %v4777
          %v4810 = vadd.f32 %v4614, %v4780
          %v4811 = vadd.f32 %v4615, %v4785
          %v4812 = vadd.f32 %v4616, %v4788
          %v4813 = vadd.f32 %v4617, %v4793
          %v4814 = vadd.f32 %v4618, %v4796
          %v4815 = vld [vmem:[#allocation2 + $0x50] sm:$0xe]
          %v4816 = vld [vmem:[#allocation2 + $0x54] sm:$0xf]
          %v4817 = vld [vmem:[#allocation2 + $0x58] sm:$0xf]
          %v4818 = vld [vmem:[#allocation2 + $0x5c] sm:$0xf]
          %v4819 = vld [vmem:[#allocation2 + $0x60] sm:$0xf]
          %v4820 = vld [vmem:[#allocation2 + $0x64] sm:$0xf]
          %v4821 = vld [vmem:[#allocation2 + $0x68] sm:$0xf]
          %v4822 = vld [vmem:[#allocation2 + $0x6c] sm:$0xf]
          %v4823 = vld [vmem:[#allocation2 + $0x70] sm:$0xf]
          %v4824 = vld [vmem:[#allocation2 + $0x74] sm:$0xf]
          %v4825 = vld [vmem:[#allocation2 + $0x78] sm:$0xf]
          %v4826 = vld [vmem:[#allocation2 + $0x7c] sm:$0xf]
          %v4827 = vld [vmem:[#allocation2 + $0x80] sm:$0xf]
          %v4828 = vld [vmem:[#allocation2 + $0x84] sm:$0xf]
          %v4829 = vld [vmem:[#allocation2 + $0x88] sm:$0xf]
          %v4830 = vld [vmem:[#allocation2 + $0x8c] sm:$0xf]
          %v4831 = vld [vmem:[#allocation2 + $0x90] sm:$0x1]
          %v4832 = vld [vmem:[%s2704] sm:$0xf]
          %v4833 = vld [vmem:[%s2704 + $0x4] sm:$0xf]
          %v4834 = vld [vmem:[%s2704 + $0x8] sm:$0xf]
          %v4835 = vld [vmem:[%s2704 + $0xc] sm:$0xf]
          %v4836 = vld [vmem:[%s2704 + $0x10] sm:$0xf]
          %v4837 = vld [vmem:[%s2704 + $0x14] sm:$0xf]
          %v4838 = vld [vmem:[%s2704 + $0x18] sm:$0xf]
          %v4839 = vld [vmem:[%s2704 + $0x1c] sm:$0xf]
          %v4840 = vld [vmem:[%s2704 + $0x20] sm:$0xf]
          %v4841 = vld [vmem:[%s2704 + $0x24] sm:$0xf]
          %v4842 = vld [vmem:[%s2704 + $0x28] sm:$0xf]
          %v4843 = vld [vmem:[%s2704 + $0x2c] sm:$0xf]
          %v4844 = vld [vmem:[%s2704 + $0x30] sm:$0xf]
          %v4845 = vld [vmem:[%s2704 + $0x34] sm:$0xf]
          %v4846 = vld [vmem:[%s2704 + $0x38] sm:$0xf]
          %v4847 = vld [vmem:[%s2704 + $0x3c] sm:$0xf]
          %v4865 = vunpack.c.l.b16 %v4815
          %v4866 = vunpack.c.l.b16 %v4816
          %v4867 = vunpack.c.l.b16 %v4817
          %v4868 = vunpack.c.l.b16 %v4818
          %v4869 = vunpack.c.l.b16 %v4819
          %v4870 = vunpack.c.l.b16 %v4820
          %v4871 = vunpack.c.l.b16 %v4821
          %v4872 = vunpack.c.l.b16 %v4822
          %v4873 = vunpack.c.l.b16 %v4823
          %v4874 = vunpack.c.l.b16 %v4824
          %v4875 = vunpack.c.l.b16 %v4825
          %v4876 = vunpack.c.l.b16 %v4826
          %v4877 = vunpack.c.l.b16 %v4827
          %v4878 = vunpack.c.l.b16 %v4828
          %v4879 = vunpack.c.l.b16 %v4829
          %v4880 = vunpack.c.l.b16 %v4830
          %v4881 = vunpack.c.l.b16 %v4831
          %v4882 = vpack.c.b16 %v4866, %v4865
          %v4883 = vpack.c.b16 %v4868, %v4867
          %v4884 = vpack.c.b16 %v4870, %v4869
          %v4885 = vpack.c.b16 %v4872, %v4871
          %v4886 = vpack.c.b16 %v4874, %v4873
          %v4887 = vpack.c.b16 %v4876, %v4875
          %v4888 = vpack.c.b16 %v4878, %v4877
          %v4889 = vpack.c.b16 %v4880, %v4879
          %v4890 = vpack.c.b16 %v4881, %v4881
          %v4891 = vrot.slane %v4882, 1
          %v4892 = vrot.slane %v4883, 1
          %v4893 = vsel %vm2764, %v4891, %v4892
          %v4894 = vrot.slane %v4884, 1
          %v4895 = vsel %vm2764, %v4892, %v4894
          %v4896 = vrot.slane %v4885, 1
          %v4897 = vsel %vm2764, %v4894, %v4896
          %v4898 = vrot.slane %v4886, 1
          %v4899 = vsel %vm2764, %v4896, %v4898
          %v4900 = vrot.slane %v4887, 1
          %v4901 = vsel %vm2764, %v4898, %v4900
          %v4902 = vrot.slane %v4888, 1
          %v4903 = vsel %vm2764, %v4900, %v4902
          %v4904 = vrot.slane %v4889, 1
          %v4905 = vsel %vm2764, %v4902, %v4904
          %v4906 = vrot.slane %v4890, 1
          %v4907 = vsel %vm2764, %v4904, %v4906
          %v4932 = vunpack.c.l.b16 %v4832
          %v4933 = vunpack.c.l.b16 %v4833
          %v4934 = vunpack.c.l.b16 %v4834
          %v4935 = vunpack.c.l.b16 %v4835
          %v4936 = vunpack.c.l.b16 %v4836
          %v4937 = vunpack.c.l.b16 %v4837
          %v4938 = vunpack.c.l.b16 %v4838
          %v4939 = vunpack.c.l.b16 %v4839
          %v4940 = vunpack.c.l.b16 %v4840
          %v4941 = vunpack.c.l.b16 %v4841
          %v4942 = vunpack.c.l.b16 %v4842
          %v4943 = vunpack.c.l.b16 %v4843
          %v4944 = vunpack.c.l.b16 %v4844
          %v4945 = vunpack.c.l.b16 %v4845
          %v4946 = vunpack.c.l.b16 %v4846
          %v4947 = vunpack.c.l.b16 %v4847
          %v4948 = vpack.c.b16 %v4933, %v4932
          %v4949 = vpack.c.b16 %v4935, %v4934
          %v4950 = vpack.c.b16 %v4937, %v4936
          %v4951 = vpack.c.b16 %v4939, %v4938
          %v4952 = vpack.c.b16 %v4941, %v4940
          %v4953 = vpack.c.b16 %v4943, %v4942
          %v4954 = vpack.c.b16 %v4945, %v4944
          %v4955 = vpack.c.b16 %v4947, %v4946
          %4964 = vmatprep.subr.bf16.mxu0 0
          %4965 = vmatpush1.bf16.msra.mxu0 %v4955
          %4966 = vmatprep.subr.bf16.mxu0 0
          %4967 = vmatpush1.bf16.msra.mxu0 %v4954
          %4968 = vmatprep.subr.bf16.mxu0 0
          %4969 = vmatpush1.bf16.msra.mxu0 %v4953
          %4970 = vmatprep.subr.bf16.mxu0 0
          %4971 = vmatpush1.bf16.msra.mxu0 %v4952
          %4972 = vmatprep.subr.bf16.mxu0 0
          %4973 = vmatpush1.bf16.msra.mxu0 %v4951
          %4974 = vmatprep.subr.bf16.mxu0 0
          %4975 = vmatpush1.bf16.msra.mxu0 %v4950
          %4976 = vmatprep.subr.bf16.mxu0 0
          %4977 = vmatpush1.bf16.msra.mxu0 %v4949
          %4978 = vmatprep.subr.bf16.mxu0 0
          %4979 = vmatpush1.bf16.msra.mxu0 %v4948
          %4980 = vmatprep.subr.bf16.mxu0 0
          %4981 = vmatpush2.bf16.msra.mxu0 0
          %4982 = vmatprep.subr.bf16.mxu0 0
          %4983 = vmatpush2.bf16.msra.mxu0 0
          %4984 = vmatprep.subr.bf16.mxu0 0
          %4985 = vmatpush2.bf16.msra.mxu0 0
          %4986 = vmatprep.subr.bf16.mxu0 0
          %4987 = vmatpush2.bf16.msra.mxu0 0
          %4988 = vmatprep.subr.bf16.mxu0 0
          %4989 = vmatpush2.bf16.msra.mxu0 0
          %4990 = vmatprep.subr.bf16.mxu0 0
          %4991 = vmatpush2.bf16.msra.mxu0 0
          %4992 = vmatprep.subr.bf16.mxu0 0
          %4993 = vmatpush2.bf16.msra.mxu0 0
          %4994 = vmatprep.subr.bf16.mxu0 0
          %4995 = vmatpush2.bf16.msra.mxu0 0
          %4996 = vmatprep.mubr.bf16.mxu0 0
          %4997 = vmatmul.mubr.bf16.gmra.mxu0 %v4893
          %v4998 = vpop.f32.mrf.mxu0
          %v4999 = vadd.f32 0.0, %v4998
          %v5000 = vpop.f32.mrf.mxu0
          %v5001 = vpop.f32.mrf.mxu0
          %v5002 = vadd.f32 0.0, %v5001
          %v5003 = vpop.f32.mrf.mxu0
          %5004 = vmatprep.mubr.bf16.mxu0 0
          %5005 = vmatmul.mubr.bf16.gmra.mxu0 %v4895
          %v5006 = vpop.f32.mrf.mxu0
          %v5007 = vadd.f32 0.0, %v5006
          %v5008 = vpop.f32.mrf.mxu0
          %v5009 = vpop.f32.mrf.mxu0
          %v5010 = vadd.f32 0.0, %v5009
          %v5011 = vpop.f32.mrf.mxu0
          %5012 = vmatprep.mubr.bf16.mxu0 0
          %5013 = vmatmul.mubr.bf16.gmra.mxu0 %v4897
          %v5014 = vpop.f32.mrf.mxu0
          %v5015 = vadd.f32 0.0, %v5014
          %v5016 = vpop.f32.mrf.mxu0
          %v5017 = vpop.f32.mrf.mxu0
          %v5018 = vadd.f32 0.0, %v5017
          %v5019 = vpop.f32.mrf.mxu0
          %5020 = vmatprep.mubr.bf16.mxu0 0
          %5021 = vmatmul.mubr.bf16.gmra.mxu0 %v4899
          %v5022 = vpop.f32.mrf.mxu0
          %v5023 = vadd.f32 0.0, %v5022
          %v5024 = vpop.f32.mrf.mxu0
          %v5025 = vpop.f32.mrf.mxu0
          %v5026 = vadd.f32 0.0, %v5025
          %v5027 = vpop.f32.mrf.mxu0
          %5028 = vmatprep.mubr.bf16.mxu0 0
          %5029 = vmatmul.mubr.bf16.gmra.mxu0 %v4901
          %v5030 = vpop.f32.mrf.mxu0
          %v5031 = vadd.f32 0.0, %v5030
          %v5032 = vpop.f32.mrf.mxu0
          %v5033 = vpop.f32.mrf.mxu0
          %v5034 = vadd.f32 0.0, %v5033
          %v5035 = vpop.f32.mrf.mxu0
          %5036 = vmatprep.mubr.bf16.mxu0 0
          %5037 = vmatmul.mubr.bf16.gmra.mxu0 %v4903
          %v5038 = vpop.f32.mrf.mxu0
          %v5039 = vadd.f32 0.0, %v5038
          %v5040 = vpop.f32.mrf.mxu0
          %v5041 = vpop.f32.mrf.mxu0
          %v5042 = vadd.f32 0.0, %v5041
          %v5043 = vpop.f32.mrf.mxu0
          %5044 = vmatprep.mubr.bf16.mxu0 0
          %5045 = vmatmul.mubr.bf16.gmra.mxu0 %v4905
          %v5046 = vpop.f32.mrf.mxu0
          %v5047 = vadd.f32 0.0, %v5046
          %v5048 = vpop.f32.mrf.mxu0
          %v5049 = vpop.f32.mrf.mxu0
          %v5050 = vadd.f32 0.0, %v5049
          %v5051 = vpop.f32.mrf.mxu0
          %5052 = vmatprep.mubr.bf16.mxu0 0
          %5053 = vmatmul.mubr.bf16.gmra.mxu0 %v4907
          %v5054 = vpop.f32.mrf.mxu0
          %v5055 = vadd.f32 0.0, %v5054
          %v5056 = vpop.f32.mrf.mxu0
          %v5057 = vpop.f32.mrf.mxu0
          %v5058 = vadd.f32 0.0, %v5057
          %v5059 = vpop.f32.mrf.mxu0
          %5060 = vdwg.mxu0
          %v5061 = vadd.f32 %v4799, %v4999
          %v5062 = vadd.f32 %v4800, %v5002
          %v5063 = vadd.f32 %v4801, %v5007
          %v5064 = vadd.f32 %v4802, %v5010
          %v5065 = vadd.f32 %v4803, %v5015
          %v5066 = vadd.f32 %v4804, %v5018
          %v5067 = vadd.f32 %v4805, %v5023
          %v5068 = vadd.f32 %v4806, %v5026
          %v5069 = vadd.f32 %v4807, %v5031
          %v5070 = vadd.f32 %v4808, %v5034
          %v5071 = vadd.f32 %v4809, %v5039
          %v5072 = vadd.f32 %v4810, %v5042
          %v5073 = vadd.f32 %v4811, %v5047
          %v5074 = vadd.f32 %v4812, %v5050
          %v5075 = vadd.f32 %v4813, %v5055
          %v5076 = vadd.f32 %v4814, %v5058
          %v5077 = vld [vmem:[#allocation2 + $0x5c] sm:$0xf]
          %v5078 = vld [vmem:[#allocation2 + $0x60] sm:$0xf]
          %v5079 = vld [vmem:[#allocation2 + $0x64] sm:$0xf]
          %v5080 = vld [vmem:[#allocation2 + $0x68] sm:$0xf]
          %v5081 = vld [vmem:[#allocation2 + $0x6c] sm:$0xf]
          %v5082 = vld [vmem:[#allocation2 + $0x70] sm:$0xf]
          %v5083 = vld [vmem:[#allocation2 + $0x74] sm:$0xf]
          %v5084 = vld [vmem:[#allocation2 + $0x78] sm:$0xf]
          %v5085 = vld [vmem:[#allocation2 + $0x7c] sm:$0xf]
          %v5086 = vld [vmem:[#allocation2 + $0x80] sm:$0xf]
          %v5087 = vld [vmem:[#allocation2 + $0x84] sm:$0xf]
          %v5088 = vld [vmem:[#allocation2 + $0x88] sm:$0xf]
          %v5089 = vld [vmem:[#allocation2 + $0x8c] sm:$0xf]
          %v5090 = vld [vmem:[#allocation2 + $0x90] sm:$0xf]
          %v5091 = vld [vmem:[#allocation2 + $0x94] sm:$0xf]
          %v5092 = vld [vmem:[#allocation2 + $0x98] sm:$0xf]
          %v5093 = vld [vmem:[%s2967] sm:$0xf]
          %v5094 = vld [vmem:[%s2967 + $0x4] sm:$0xf]
          %v5095 = vld [vmem:[%s2967 + $0x8] sm:$0xf]
          %v5096 = vld [vmem:[%s2967 + $0xc] sm:$0xf]
          %v5097 = vld [vmem:[%s2967 + $0x10] sm:$0xf]
          %v5098 = vld [vmem:[%s2967 + $0x14] sm:$0xf]
          %v5099 = vld [vmem:[%s2967 + $0x18] sm:$0xf]
          %v5100 = vld [vmem:[%s2967 + $0x1c] sm:$0xf]
          %v5101 = vld [vmem:[%s2967 + $0x20] sm:$0xf]
          %v5102 = vld [vmem:[%s2967 + $0x24] sm:$0xf]
          %v5103 = vld [vmem:[%s2967 + $0x28] sm:$0xf]
          %v5104 = vld [vmem:[%s2967 + $0x2c] sm:$0xf]
          %v5105 = vld [vmem:[%s2967 + $0x30] sm:$0xf]
          %v5106 = vld [vmem:[%s2967 + $0x34] sm:$0xf]
          %v5107 = vld [vmem:[%s2967 + $0x38] sm:$0xf]
          %v5108 = vld [vmem:[%s2967 + $0x3c] sm:$0xf]
          %v5125 = vunpack.c.l.b16 %v5077
          %v5126 = vunpack.c.l.b16 %v5078
          %v5127 = vunpack.c.l.b16 %v5079
          %v5128 = vunpack.c.l.b16 %v5080
          %v5129 = vunpack.c.l.b16 %v5081
          %v5130 = vunpack.c.l.b16 %v5082
          %v5131 = vunpack.c.l.b16 %v5083
          %v5132 = vunpack.c.l.b16 %v5084
          %v5133 = vunpack.c.l.b16 %v5085
          %v5134 = vunpack.c.l.b16 %v5086
          %v5135 = vunpack.c.l.b16 %v5087
          %v5136 = vunpack.c.l.b16 %v5088
          %v5137 = vunpack.c.l.b16 %v5089
          %v5138 = vunpack.c.l.b16 %v5090
          %v5139 = vunpack.c.l.b16 %v5091
          %v5140 = vunpack.c.l.b16 %v5092
          %v5141 = vpack.c.b16 %v5126, %v5125
          %v5142 = vpack.c.b16 %v5128, %v5127
          %v5143 = vpack.c.b16 %v5130, %v5129
          %v5144 = vpack.c.b16 %v5132, %v5131
          %v5145 = vpack.c.b16 %v5134, %v5133
          %v5146 = vpack.c.b16 %v5136, %v5135
          %v5147 = vpack.c.b16 %v5138, %v5137
          %v5148 = vpack.c.b16 %v5140, %v5139
          %v5173 = vunpack.c.l.b16 %v5093
          %v5174 = vunpack.c.l.b16 %v5094
          %v5175 = vunpack.c.l.b16 %v5095
          %v5176 = vunpack.c.l.b16 %v5096
          %v5177 = vunpack.c.l.b16 %v5097
          %v5178 = vunpack.c.l.b16 %v5098
          %v5179 = vunpack.c.l.b16 %v5099
          %v5180 = vunpack.c.l.b16 %v5100
          %v5181 = vunpack.c.l.b16 %v5101
          %v5182 = vunpack.c.l.b16 %v5102
          %v5183 = vunpack.c.l.b16 %v5103
          %v5184 = vunpack.c.l.b16 %v5104
          %v5185 = vunpack.c.l.b16 %v5105
          %v5186 = vunpack.c.l.b16 %v5106
          %v5187 = vunpack.c.l.b16 %v5107
          %v5188 = vunpack.c.l.b16 %v5108
          %v5189 = vpack.c.b16 %v5174, %v5173
          %v5190 = vpack.c.b16 %v5176, %v5175
          %v5191 = vpack.c.b16 %v5178, %v5177
          %v5192 = vpack.c.b16 %v5180, %v5179
          %v5193 = vpack.c.b16 %v5182, %v5181
          %v5194 = vpack.c.b16 %v5184, %v5183
          %v5195 = vpack.c.b16 %v5186, %v5185
          %v5196 = vpack.c.b16 %v5188, %v5187
          %5205 = vmatprep.subr.bf16.mxu0 0
          %5206 = vmatpush1.bf16.msra.mxu0 %v5196
          %5207 = vmatprep.subr.bf16.mxu0 0
          %5208 = vmatpush1.bf16.msra.mxu0 %v5195
          %5209 = vmatprep.subr.bf16.mxu0 0
          %5210 = vmatpush1.bf16.msra.mxu0 %v5194
          %5211 = vmatprep.subr.bf16.mxu0 0
          %5212 = vmatpush1.bf16.msra.mxu0 %v5193
          %5213 = vmatprep.subr.bf16.mxu0 0
          %5214 = vmatpush1.bf16.msra.mxu0 %v5192
          %5215 = vmatprep.subr.bf16.mxu0 0
          %5216 = vmatpush1.bf16.msra.mxu0 %v5191
          %5217 = vmatprep.subr.bf16.mxu0 0
          %5218 = vmatpush1.bf16.msra.mxu0 %v5190
          %5219 = vmatprep.subr.bf16.mxu0 0
          %5220 = vmatpush1.bf16.msra.mxu0 %v5189
          %5221 = vmatprep.subr.bf16.mxu0 0
          %5222 = vmatpush2.bf16.msra.mxu0 0
          %5223 = vmatprep.subr.bf16.mxu0 0
          %5224 = vmatpush2.bf16.msra.mxu0 0
          %5225 = vmatprep.subr.bf16.mxu0 0
          %5226 = vmatpush2.bf16.msra.mxu0 0
          %5227 = vmatprep.subr.bf16.mxu0 0
          %5228 = vmatpush2.bf16.msra.mxu0 0
          %5229 = vmatprep.subr.bf16.mxu0 0
          %5230 = vmatpush2.bf16.msra.mxu0 0
          %5231 = vmatprep.subr.bf16.mxu0 0
          %5232 = vmatpush2.bf16.msra.mxu0 0
          %5233 = vmatprep.subr.bf16.mxu0 0
          %5234 = vmatpush2.bf16.msra.mxu0 0
          %5235 = vmatprep.subr.bf16.mxu0 0
          %5236 = vmatpush2.bf16.msra.mxu0 0
          %5237 = vmatprep.mubr.bf16.mxu0 0
          %5238 = vmatmul.mubr.bf16.gmra.mxu0 %v5141
          %v5239 = vpop.f32.mrf.mxu0
          %v5240 = vadd.f32 0.0, %v5239
          %v5241 = vpop.f32.mrf.mxu0
          %v5242 = vpop.f32.mrf.mxu0
          %v5243 = vadd.f32 0.0, %v5242
          %v5244 = vpop.f32.mrf.mxu0
          %5245 = vmatprep.mubr.bf16.mxu0 0
          %5246 = vmatmul.mubr.bf16.gmra.mxu0 %v5142
          %v5247 = vpop.f32.mrf.mxu0
          %v5248 = vadd.f32 0.0, %v5247
          %v5249 = vpop.f32.mrf.mxu0
          %v5250 = vpop.f32.mrf.mxu0
          %v5251 = vadd.f32 0.0, %v5250
          %v5252 = vpop.f32.mrf.mxu0
          %5253 = vmatprep.mubr.bf16.mxu0 0
          %5254 = vmatmul.mubr.bf16.gmra.mxu0 %v5143
          %v5255 = vpop.f32.mrf.mxu0
          %v5256 = vadd.f32 0.0, %v5255
          %v5257 = vpop.f32.mrf.mxu0
          %v5258 = vpop.f32.mrf.mxu0
          %v5259 = vadd.f32 0.0, %v5258
          %v5260 = vpop.f32.mrf.mxu0
          %5261 = vmatprep.mubr.bf16.mxu0 0
          %5262 = vmatmul.mubr.bf16.gmra.mxu0 %v5144
          %v5263 = vpop.f32.mrf.mxu0
          %v5264 = vadd.f32 0.0, %v5263
          %v5265 = vpop.f32.mrf.mxu0
          %v5266 = vpop.f32.mrf.mxu0
          %v5267 = vadd.f32 0.0, %v5266
          %v5268 = vpop.f32.mrf.mxu0
          %5269 = vmatprep.mubr.bf16.mxu0 0
          %5270 = vmatmul.mubr.bf16.gmra.mxu0 %v5145
          %v5271 = vpop.f32.mrf.mxu0
          %v5272 = vadd.f32 0.0, %v5271
          %v5273 = vpop.f32.mrf.mxu0
          %v5274 = vpop.f32.mrf.mxu0
          %v5275 = vadd.f32 0.0, %v5274
          %v5276 = vpop.f32.mrf.mxu0
          %5277 = vmatprep.mubr.bf16.mxu0 0
          %5278 = vmatmul.mubr.bf16.gmra.mxu0 %v5146
          %v5279 = vpop.f32.mrf.mxu0
          %v5280 = vadd.f32 0.0, %v5279
          %v5281 = vpop.f32.mrf.mxu0
          %v5282 = vpop.f32.mrf.mxu0
          %v5283 = vadd.f32 0.0, %v5282
          %v5284 = vpop.f32.mrf.mxu0
          %5285 = vmatprep.mubr.bf16.mxu0 0
          %5286 = vmatmul.mubr.bf16.gmra.mxu0 %v5147
          %v5287 = vpop.f32.mrf.mxu0
          %v5288 = vadd.f32 0.0, %v5287
          %v5289 = vpop.f32.mrf.mxu0
          %v5290 = vpop.f32.mrf.mxu0
          %v5291 = vadd.f32 0.0, %v5290
          %v5292 = vpop.f32.mrf.mxu0
          %5293 = vmatprep.mubr.bf16.mxu0 0
          %5294 = vmatmul.mubr.bf16.gmra.mxu0 %v5148
          %v5295 = vpop.f32.mrf.mxu0
          %v5296 = vadd.f32 0.0, %v5295
          %v5297 = vpop.f32.mrf.mxu0
          %v5298 = vpop.f32.mrf.mxu0
          %v5299 = vadd.f32 0.0, %v5298
          %v5300 = vpop.f32.mrf.mxu0
          %5301 = vdwg.mxu0
          %v5302 = vadd.f32 %v5061, %v5240
          %v5303 = vadd.f32 %v5062, %v5243
          %v5304 = vadd.f32 %v5063, %v5248
          %v5305 = vadd.f32 %v5064, %v5251
          %v5306 = vadd.f32 %v5065, %v5256
          %v5307 = vadd.f32 %v5066, %v5259
          %v5308 = vadd.f32 %v5067, %v5264
          %v5309 = vadd.f32 %v5068, %v5267
          %v5310 = vadd.f32 %v5069, %v5272
          %v5311 = vadd.f32 %v5070, %v5275
          %v5312 = vadd.f32 %v5071, %v5280
          %v5313 = vadd.f32 %v5072, %v5283
          %v5314 = vadd.f32 %v5073, %v5288
          %v5315 = vadd.f32 %v5074, %v5291
          %v5316 = vadd.f32 %v5075, %v5296
          %v5317 = vadd.f32 %v5076, %v5299
          %v5318 = vld [vmem:[#allocation2 + $0x5c] sm:$0xe]
          %v5319 = vld [vmem:[#allocation2 + $0x60] sm:$0xf]
          %v5320 = vld [vmem:[#allocation2 + $0x64] sm:$0xf]
          %v5321 = vld [vmem:[#allocation2 + $0x68] sm:$0xf]
          %v5322 = vld [vmem:[#allocation2 + $0x6c] sm:$0xf]
          %v5323 = vld [vmem:[#allocation2 + $0x70] sm:$0xf]
          %v5324 = vld [vmem:[#allocation2 + $0x74] sm:$0xf]
          %v5325 = vld [vmem:[#allocation2 + $0x78] sm:$0xf]
          %v5326 = vld [vmem:[#allocation2 + $0x7c] sm:$0xf]
          %v5327 = vld [vmem:[#allocation2 + $0x80] sm:$0xf]
          %v5328 = vld [vmem:[#allocation2 + $0x84] sm:$0xf]
          %v5329 = vld [vmem:[#allocation2 + $0x88] sm:$0xf]
          %v5330 = vld [vmem:[#allocation2 + $0x8c] sm:$0xf]
          %v5331 = vld [vmem:[#allocation2 + $0x90] sm:$0xf]
          %v5332 = vld [vmem:[#allocation2 + $0x94] sm:$0xf]
          %v5333 = vld [vmem:[#allocation2 + $0x98] sm:$0xf]
          %v5334 = vld [vmem:[#allocation2 + $0x9c] sm:$0x1]
          %v5335 = vld [vmem:[%s3210] sm:$0xf]
          %v5336 = vld [vmem:[%s3210 + $0x4] sm:$0xf]
          %v5337 = vld [vmem:[%s3210 + $0x8] sm:$0xf]
          %v5338 = vld [vmem:[%s3210 + $0xc] sm:$0xf]
          %v5339 = vld [vmem:[%s3210 + $0x10] sm:$0xf]
          %v5340 = vld [vmem:[%s3210 + $0x14] sm:$0xf]
          %v5341 = vld [vmem:[%s3210 + $0x18] sm:$0xf]
          %v5342 = vld [vmem:[%s3210 + $0x1c] sm:$0xf]
          %v5343 = vld [vmem:[%s3210 + $0x20] sm:$0xf]
          %v5344 = vld [vmem:[%s3210 + $0x24] sm:$0xf]
          %v5345 = vld [vmem:[%s3210 + $0x28] sm:$0xf]
          %v5346 = vld [vmem:[%s3210 + $0x2c] sm:$0xf]
          %v5347 = vld [vmem:[%s3210 + $0x30] sm:$0xf]
          %v5348 = vld [vmem:[%s3210 + $0x34] sm:$0xf]
          %v5349 = vld [vmem:[%s3210 + $0x38] sm:$0xf]
          %v5350 = vld [vmem:[%s3210 + $0x3c] sm:$0xf]
          %v5368 = vunpack.c.l.b16 %v5318
          %v5369 = vunpack.c.l.b16 %v5319
          %v5370 = vunpack.c.l.b16 %v5320
          %v5371 = vunpack.c.l.b16 %v5321
          %v5372 = vunpack.c.l.b16 %v5322
          %v5373 = vunpack.c.l.b16 %v5323
          %v5374 = vunpack.c.l.b16 %v5324
          %v5375 = vunpack.c.l.b16 %v5325
          %v5376 = vunpack.c.l.b16 %v5326
          %v5377 = vunpack.c.l.b16 %v5327
          %v5378 = vunpack.c.l.b16 %v5328
          %v5379 = vunpack.c.l.b16 %v5329
          %v5380 = vunpack.c.l.b16 %v5330
          %v5381 = vunpack.c.l.b16 %v5331
          %v5382 = vunpack.c.l.b16 %v5332
          %v5383 = vunpack.c.l.b16 %v5333
          %v5384 = vunpack.c.l.b16 %v5334
          %v5385 = vpack.c.b16 %v5369, %v5368
          %v5386 = vpack.c.b16 %v5371, %v5370
          %v5387 = vpack.c.b16 %v5373, %v5372
          %v5388 = vpack.c.b16 %v5375, %v5374
          %v5389 = vpack.c.b16 %v5377, %v5376
          %v5390 = vpack.c.b16 %v5379, %v5378
          %v5391 = vpack.c.b16 %v5381, %v5380
          %v5392 = vpack.c.b16 %v5383, %v5382
          %v5393 = vpack.c.b16 %v5384, %v5384
          %v5394 = vrot.slane %v5385, 1
          %v5395 = vrot.slane %v5386, 1
          %v5396 = vsel %vm2764, %v5394, %v5395
          %v5397 = vrot.slane %v5387, 1
          %v5398 = vsel %vm2764, %v5395, %v5397
          %v5399 = vrot.slane %v5388, 1
          %v5400 = vsel %vm2764, %v5397, %v5399
          %v5401 = vrot.slane %v5389, 1
          %v5402 = vsel %vm2764, %v5399, %v5401
          %v5403 = vrot.slane %v5390, 1
          %v5404 = vsel %vm2764, %v5401, %v5403
          %v5405 = vrot.slane %v5391, 1
          %v5406 = vsel %vm2764, %v5403, %v5405
          %v5407 = vrot.slane %v5392, 1
          %v5408 = vsel %vm2764, %v5405, %v5407
          %v5409 = vrot.slane %v5393, 1
          %v5410 = vsel %vm2764, %v5407, %v5409
          %v5435 = vunpack.c.l.b16 %v5335
          %v5436 = vunpack.c.l.b16 %v5336
          %v5437 = vunpack.c.l.b16 %v5337
          %v5438 = vunpack.c.l.b16 %v5338
          %v5439 = vunpack.c.l.b16 %v5339
          %v5440 = vunpack.c.l.b16 %v5340
          %v5441 = vunpack.c.l.b16 %v5341
          %v5442 = vunpack.c.l.b16 %v5342
          %v5443 = vunpack.c.l.b16 %v5343
          %v5444 = vunpack.c.l.b16 %v5344
          %v5445 = vunpack.c.l.b16 %v5345
          %v5446 = vunpack.c.l.b16 %v5346
          %v5447 = vunpack.c.l.b16 %v5347
          %v5448 = vunpack.c.l.b16 %v5348
          %v5449 = vunpack.c.l.b16 %v5349
          %v5450 = vunpack.c.l.b16 %v5350
          %v5451 = vpack.c.b16 %v5436, %v5435
          %v5452 = vpack.c.b16 %v5438, %v5437
          %v5453 = vpack.c.b16 %v5440, %v5439
          %v5454 = vpack.c.b16 %v5442, %v5441
          %v5455 = vpack.c.b16 %v5444, %v5443
          %v5456 = vpack.c.b16 %v5446, %v5445
          %v5457 = vpack.c.b16 %v5448, %v5447
          %v5458 = vpack.c.b16 %v5450, %v5449
          %5467 = vmatprep.subr.bf16.mxu0 0
          %5468 = vmatpush1.bf16.msra.mxu0 %v5458
          %5469 = vmatprep.subr.bf16.mxu0 0
          %5470 = vmatpush1.bf16.msra.mxu0 %v5457
          %5471 = vmatprep.subr.bf16.mxu0 0
          %5472 = vmatpush1.bf16.msra.mxu0 %v5456
          %5473 = vmatprep.subr.bf16.mxu0 0
          %5474 = vmatpush1.bf16.msra.mxu0 %v5455
          %5475 = vmatprep.subr.bf16.mxu0 0
          %5476 = vmatpush1.bf16.msra.mxu0 %v5454
          %5477 = vmatprep.subr.bf16.mxu0 0
          %5478 = vmatpush1.bf16.msra.mxu0 %v5453
          %5479 = vmatprep.subr.bf16.mxu0 0
          %5480 = vmatpush1.bf16.msra.mxu0 %v5452
          %5481 = vmatprep.subr.bf16.mxu0 0
          %5482 = vmatpush1.bf16.msra.mxu0 %v5451
          %5483 = vmatprep.subr.bf16.mxu0 0
          %5484 = vmatpush2.bf16.msra.mxu0 0
          %5485 = vmatprep.subr.bf16.mxu0 0
          %5486 = vmatpush2.bf16.msra.mxu0 0
          %5487 = vmatprep.subr.bf16.mxu0 0
          %5488 = vmatpush2.bf16.msra.mxu0 0
          %5489 = vmatprep.subr.bf16.mxu0 0
          %5490 = vmatpush2.bf16.msra.mxu0 0
          %5491 = vmatprep.subr.bf16.mxu0 0
          %5492 = vmatpush2.bf16.msra.mxu0 0
          %5493 = vmatprep.subr.bf16.mxu0 0
          %5494 = vmatpush2.bf16.msra.mxu0 0
          %5495 = vmatprep.subr.bf16.mxu0 0
          %5496 = vmatpush2.bf16.msra.mxu0 0
          %5497 = vmatprep.subr.bf16.mxu0 0
          %5498 = vmatpush2.bf16.msra.mxu0 0
          %5499 = vmatprep.mubr.bf16.mxu0 0
          %5500 = vmatmul.mubr.bf16.gmra.mxu0 %v5396
          %v5501 = vpop.f32.mrf.mxu0
          %v5502 = vadd.f32 0.0, %v5501
          %v5503 = vpop.f32.mrf.mxu0
          %v5504 = vpop.f32.mrf.mxu0
          %v5505 = vadd.f32 0.0, %v5504
          %v5506 = vpop.f32.mrf.mxu0
          %5507 = vmatprep.mubr.bf16.mxu0 0
          %5508 = vmatmul.mubr.bf16.gmra.mxu0 %v5398
          %v5509 = vpop.f32.mrf.mxu0
          %v5510 = vadd.f32 0.0, %v5509
          %v5511 = vpop.f32.mrf.mxu0
          %v5512 = vpop.f32.mrf.mxu0
          %v5513 = vadd.f32 0.0, %v5512
          %v5514 = vpop.f32.mrf.mxu0
          %5515 = vmatprep.mubr.bf16.mxu0 0
          %5516 = vmatmul.mubr.bf16.gmra.mxu0 %v5400
          %v5517 = vpop.f32.mrf.mxu0
          %v5518 = vadd.f32 0.0, %v5517
          %v5519 = vpop.f32.mrf.mxu0
          %v5520 = vpop.f32.mrf.mxu0
          %v5521 = vadd.f32 0.0, %v5520
          %v5522 = vpop.f32.mrf.mxu0
          %5523 = vmatprep.mubr.bf16.mxu0 0
          %5524 = vmatmul.mubr.bf16.gmra.mxu0 %v5402
          %v5525 = vpop.f32.mrf.mxu0
          %v5526 = vadd.f32 0.0, %v5525
          %v5527 = vpop.f32.mrf.mxu0
          %v5528 = vpop.f32.mrf.mxu0
          %v5529 = vadd.f32 0.0, %v5528
          %v5530 = vpop.f32.mrf.mxu0
          %5531 = vmatprep.mubr.bf16.mxu0 0
          %5532 = vmatmul.mubr.bf16.gmra.mxu0 %v5404
          %v5533 = vpop.f32.mrf.mxu0
          %v5534 = vadd.f32 0.0, %v5533
          %v5535 = vpop.f32.mrf.mxu0
          %v5536 = vpop.f32.mrf.mxu0
          %v5537 = vadd.f32 0.0, %v5536
          %v5538 = vpop.f32.mrf.mxu0
          %5539 = vmatprep.mubr.bf16.mxu0 0
          %5540 = vmatmul.mubr.bf16.gmra.mxu0 %v5406
          %v5541 = vpop.f32.mrf.mxu0
          %v5542 = vadd.f32 0.0, %v5541
          %v5543 = vpop.f32.mrf.mxu0
          %v5544 = vpop.f32.mrf.mxu0
          %v5545 = vadd.f32 0.0, %v5544
          %v5546 = vpop.f32.mrf.mxu0
          %5547 = vmatprep.mubr.bf16.mxu0 0
          %5548 = vmatmul.mubr.bf16.gmra.mxu0 %v5408
          %v5549 = vpop.f32.mrf.mxu0
          %v5550 = vadd.f32 0.0, %v5549
          %v5551 = vpop.f32.mrf.mxu0
          %v5552 = vpop.f32.mrf.mxu0
          %v5553 = vadd.f32 0.0, %v5552
          %v5554 = vpop.f32.mrf.mxu0
          %5555 = vmatprep.mubr.bf16.mxu0 0
          %5556 = vmatmul.mubr.bf16.gmra.mxu0 %v5410
          %v5557 = vpop.f32.mrf.mxu0
          %v5558 = vadd.f32 0.0, %v5557
          %v5559 = vpop.f32.mrf.mxu0
          %v5560 = vpop.f32.mrf.mxu0
          %v5561 = vadd.f32 0.0, %v5560
          %v5562 = vpop.f32.mrf.mxu0
          %5563 = vdwg.mxu0
          %v5564 = vadd.f32 %v5302, %v5502
          %v5565 = vadd.f32 %v5303, %v5505
          %v5566 = vadd.f32 %v5304, %v5510
          %v5567 = vadd.f32 %v5305, %v5513
          %v5568 = vadd.f32 %v5306, %v5518
          %v5569 = vadd.f32 %v5307, %v5521
          %v5570 = vadd.f32 %v5308, %v5526
          %v5571 = vadd.f32 %v5309, %v5529
          %v5572 = vadd.f32 %v5310, %v5534
          %v5573 = vadd.f32 %v5311, %v5537
          %v5574 = vadd.f32 %v5312, %v5542
          %v5575 = vadd.f32 %v5313, %v5545
          %v5576 = vadd.f32 %v5314, %v5550
          %v5577 = vadd.f32 %v5315, %v5553
          %v5578 = vadd.f32 %v5316, %v5558
          %v5579 = vadd.f32 %v5317, %v5561
          %v5580 = vld [vmem:[#allocation2 + $0x5c] sm:$0xc]
          %v5581 = vld [vmem:[#allocation2 + $0x9c] sm:$0x3]
          %v5582 = vld [vmem:[%s3458] sm:$0xf]
          %v5583 = vld [vmem:[%s3458 + $0x4] sm:$0xf]
          %v5584 = vld [vmem:[%s3458 + $0x8] sm:$0xf]
          %v5585 = vld [vmem:[%s3458 + $0xc] sm:$0xf]
          %v5586 = vld [vmem:[%s3458 + $0x10] sm:$0xf]
          %v5587 = vld [vmem:[%s3458 + $0x14] sm:$0xf]
          %v5588 = vld [vmem:[%s3458 + $0x18] sm:$0xf]
          %v5589 = vld [vmem:[%s3458 + $0x1c] sm:$0xf]
          %v5590 = vld [vmem:[%s3458 + $0x20] sm:$0xf]
          %v5591 = vld [vmem:[%s3458 + $0x24] sm:$0xf]
          %v5592 = vld [vmem:[%s3458 + $0x28] sm:$0xf]
          %v5593 = vld [vmem:[%s3458 + $0x2c] sm:$0xf]
          %v5594 = vld [vmem:[%s3458 + $0x30] sm:$0xf]
          %v5595 = vld [vmem:[%s3458 + $0x34] sm:$0xf]
          %v5596 = vld [vmem:[%s3458 + $0x38] sm:$0xf]
          %v5597 = vld [vmem:[%s3458 + $0x3c] sm:$0xf]
          %v5600 = vunpack.c.l.b16 %v5580
          %v5601 = vunpack.c.l.b16 %v5581
          %v5602 = vpack.c.b16 %v5369, %v5600
          %v5603 = vpack.c.b16 %v5601, %v5601
          %v5604 = vrot.slane %v5602, 2
          %v5605 = vrot.slane %v5386, 2
          %v5606 = vsel %vm1859, %v5604, %v5605
          %v5607 = vrot.slane %v5387, 2
          %v5608 = vsel %vm1859, %v5605, %v5607
          %v5609 = vrot.slane %v5388, 2
          %v5610 = vsel %vm1859, %v5607, %v5609
          %v5611 = vrot.slane %v5389, 2
          %v5612 = vsel %vm1859, %v5609, %v5611
          %v5613 = vrot.slane %v5390, 2
          %v5614 = vsel %vm1859, %v5611, %v5613
          %v5615 = vrot.slane %v5391, 2
          %v5616 = vsel %vm1859, %v5613, %v5615
          %v5617 = vrot.slane %v5392, 2
          %v5618 = vsel %vm1859, %v5615, %v5617
          %v5619 = vrot.slane %v5603, 2
          %v5620 = vsel %vm1859, %v5617, %v5619
          %v5645 = vunpack.c.l.b16 %v5582
          %v5646 = vunpack.c.l.b16 %v5583
          %v5647 = vunpack.c.l.b16 %v5584
          %v5648 = vunpack.c.l.b16 %v5585
          %v5649 = vunpack.c.l.b16 %v5586
          %v5650 = vunpack.c.l.b16 %v5587
          %v5651 = vunpack.c.l.b16 %v5588
          %v5652 = vunpack.c.l.b16 %v5589
          %v5653 = vunpack.c.l.b16 %v5590
          %v5654 = vunpack.c.l.b16 %v5591
          %v5655 = vunpack.c.l.b16 %v5592
          %v5656 = vunpack.c.l.b16 %v5593
          %v5657 = vunpack.c.l.b16 %v5594
          %v5658 = vunpack.c.l.b16 %v5595
          %v5659 = vunpack.c.l.b16 %v5596
          %v5660 = vunpack.c.l.b16 %v5597
          %v5661 = vpack.c.b16 %v5646, %v5645
          %v5662 = vpack.c.b16 %v5648, %v5647
          %v5663 = vpack.c.b16 %v5650, %v5649
          %v5664 = vpack.c.b16 %v5652, %v5651
          %v5665 = vpack.c.b16 %v5654, %v5653
          %v5666 = vpack.c.b16 %v5656, %v5655
          %v5667 = vpack.c.b16 %v5658, %v5657
          %v5668 = vpack.c.b16 %v5660, %v5659
          %5677 = vmatprep.subr.bf16.mxu0 0
          %5678 = vmatpush1.bf16.msra.mxu0 %v5668
          %5679 = vmatprep.subr.bf16.mxu0 0
          %5680 = vmatpush1.bf16.msra.mxu0 %v5667
          %5681 = vmatprep.subr.bf16.mxu0 0
          %5682 = vmatpush1.bf16.msra.mxu0 %v5666
          %5683 = vmatprep.subr.bf16.mxu0 0
          %5684 = vmatpush1.bf16.msra.mxu0 %v5665
          %5685 = vmatprep.subr.bf16.mxu0 0
          %5686 = vmatpush1.bf16.msra.mxu0 %v5664
          %5687 = vmatprep.subr.bf16.mxu0 0
          %5688 = vmatpush1.bf16.msra.mxu0 %v5663
          %5689 = vmatprep.subr.bf16.mxu0 0
          %5690 = vmatpush1.bf16.msra.mxu0 %v5662
          %5691 = vmatprep.subr.bf16.mxu0 0
          %5692 = vmatpush1.bf16.msra.mxu0 %v5661
          %5693 = vmatprep.subr.bf16.mxu0 0
          %5694 = vmatpush2.bf16.msra.mxu0 0
          %5695 = vmatprep.subr.bf16.mxu0 0
          %5696 = vmatpush2.bf16.msra.mxu0 0
          %5697 = vmatprep.subr.bf16.mxu0 0
          %5698 = vmatpush2.bf16.msra.mxu0 0
          %5699 = vmatprep.subr.bf16.mxu0 0
          %5700 = vmatpush2.bf16.msra.mxu0 0
          %5701 = vmatprep.subr.bf16.mxu0 0
          %5702 = vmatpush2.bf16.msra.mxu0 0
          %5703 = vmatprep.subr.bf16.mxu0 0
          %5704 = vmatpush2.bf16.msra.mxu0 0
          %5705 = vmatprep.subr.bf16.mxu0 0
          %5706 = vmatpush2.bf16.msra.mxu0 0
          %5707 = vmatprep.subr.bf16.mxu0 0
          %5708 = vmatpush2.bf16.msra.mxu0 0
          %5709 = vmatprep.mubr.bf16.mxu0 0
          %5710 = vmatmul.mubr.bf16.gmra.mxu0 %v5606
          %v5711 = vpop.f32.mrf.mxu0
          %v5712 = vadd.f32 0.0, %v5711
          %v5713 = vpop.f32.mrf.mxu0
          %v5714 = vpop.f32.mrf.mxu0
          %v5715 = vadd.f32 0.0, %v5714
          %v5716 = vpop.f32.mrf.mxu0
          %5717 = vmatprep.mubr.bf16.mxu0 0
          %5718 = vmatmul.mubr.bf16.gmra.mxu0 %v5608
          %v5719 = vpop.f32.mrf.mxu0
          %v5720 = vadd.f32 0.0, %v5719
          %v5721 = vpop.f32.mrf.mxu0
          %v5722 = vpop.f32.mrf.mxu0
          %v5723 = vadd.f32 0.0, %v5722
          %v5724 = vpop.f32.mrf.mxu0
          %5725 = vmatprep.mubr.bf16.mxu0 0
          %5726 = vmatmul.mubr.bf16.gmra.mxu0 %v5610
          %v5727 = vpop.f32.mrf.mxu0
          %v5728 = vadd.f32 0.0, %v5727
          %v5729 = vpop.f32.mrf.mxu0
          %v5730 = vpop.f32.mrf.mxu0
          %v5731 = vadd.f32 0.0, %v5730
          %v5732 = vpop.f32.mrf.mxu0
          %5733 = vmatprep.mubr.bf16.mxu0 0
          %5734 = vmatmul.mubr.bf16.gmra.mxu0 %v5612
          %v5735 = vpop.f32.mrf.mxu0
          %v5736 = vadd.f32 0.0, %v5735
          %v5737 = vpop.f32.mrf.mxu0
          %v5738 = vpop.f32.mrf.mxu0
          %v5739 = vadd.f32 0.0, %v5738
          %v5740 = vpop.f32.mrf.mxu0
          %5741 = vmatprep.mubr.bf16.mxu0 0
          %5742 = vmatmul.mubr.bf16.gmra.mxu0 %v5614
          %v5743 = vpop.f32.mrf.mxu0
          %v5744 = vadd.f32 0.0, %v5743
          %v5745 = vpop.f32.mrf.mxu0
          %v5746 = vpop.f32.mrf.mxu0
          %v5747 = vadd.f32 0.0, %v5746
          %v5748 = vpop.f32.mrf.mxu0
          %5749 = vmatprep.mubr.bf16.mxu0 0
          %5750 = vmatmul.mubr.bf16.gmra.mxu0 %v5616
          %v5751 = vpop.f32.mrf.mxu0
          %v5752 = vadd.f32 0.0, %v5751
          %v5753 = vpop.f32.mrf.mxu0
          %v5754 = vpop.f32.mrf.mxu0
          %v5755 = vadd.f32 0.0, %v5754
          %v5756 = vpop.f32.mrf.mxu0
          %5757 = vmatprep.mubr.bf16.mxu0 0
          %5758 = vmatmul.mubr.bf16.gmra.mxu0 %v5618
          %v5759 = vpop.f32.mrf.mxu0
          %v5760 = vadd.f32 0.0, %v5759
          %v5761 = vpop.f32.mrf.mxu0
          %v5762 = vpop.f32.mrf.mxu0
          %v5763 = vadd.f32 0.0, %v5762
          %v5764 = vpop.f32.mrf.mxu0
          %5765 = vmatprep.mubr.bf16.mxu0 0
          %5766 = vmatmul.mubr.bf16.gmra.mxu0 %v5620
          %v5767 = vpop.f32.mrf.mxu0
          %v5768 = vadd.f32 0.0, %v5767
          %v5769 = vpop.f32.mrf.mxu0
          %v5770 = vpop.f32.mrf.mxu0
          %v5771 = vadd.f32 0.0, %v5770
          %v5772 = vpop.f32.mrf.mxu0
          %5773 = vdwg.mxu0
          %v5774 = vadd.f32 %v5564, %v5712
          %v5775 = vadd.f32 %v5565, %v5715
          %v5776 = vadd.f32 %v5566, %v5720
          %v5777 = vadd.f32 %v5567, %v5723
          %v5778 = vadd.f32 %v5568, %v5728
          %v5779 = vadd.f32 %v5569, %v5731
          %v5780 = vadd.f32 %v5570, %v5736
          %v5781 = vadd.f32 %v5571, %v5739
          %v5782 = vadd.f32 %v5572, %v5744
          %v5783 = vadd.f32 %v5573, %v5747
          %v5784 = vadd.f32 %v5574, %v5752
          %v5785 = vadd.f32 %v5575, %v5755
          %v5786 = vadd.f32 %v5576, %v5760
          %v5787 = vadd.f32 %v5577, %v5763
          %v5788 = vadd.f32 %v5578, %v5768
          %v5789 = vadd.f32 %v5579, %v5771
          %v5790 = vadd.f32 %v5774, %v3671
          %v5791 = vadd.f32 %v5775, %v3671
          %v5792 = vadd.f32 %v5776, %v3671
          %v5793 = vadd.f32 %v5777, %v3671
          %v5794 = vadd.f32 %v5778, %v3671
          %v5795 = vadd.f32 %v5779, %v3671
          %v5796 = vadd.f32 %v5780, %v3671
          %v5797 = vadd.f32 %v5781, %v3671
          %v5798 = vadd.f32 %v5782, %v3671
          %v5799 = vadd.f32 %v5783, %v3671
          %v5800 = vadd.f32 %v5784, %v3671
          %v5801 = vadd.f32 %v5785, %v3671
          %v5802 = vadd.f32 %v5786, %v3671
          %v5803 = vadd.f32 %v5787, %v3671
          %v5804 = vadd.f32 %v5788, %v3671
          %v5805 = vadd.f32 %v5789, %v3671
          %v5806 = vmax.f32 %v5790, 0.0
          %v5807 = vmax.f32 %v5791, 0.0
          %v5808 = vmax.f32 %v5792, 0.0
          %v5809 = vmax.f32 %v5793, 0.0
          %v5810 = vmax.f32 %v5794, 0.0
          %v5811 = vmax.f32 %v5795, 0.0
          %v5812 = vmax.f32 %v5796, 0.0
          %v5813 = vmax.f32 %v5797, 0.0
          %v5814 = vmax.f32 %v5798, 0.0
          %v5815 = vmax.f32 %v5799, 0.0
          %v5816 = vmax.f32 %v5800, 0.0
          %v5817 = vmax.f32 %v5801, 0.0
          %v5818 = vmax.f32 %v5802, 0.0
          %v5819 = vmax.f32 %v5803, 0.0
          %v5820 = vmax.f32 %v5804, 0.0
          %v5821 = vmax.f32 %v5805, 0.0
          %5822 = vst [vmem:[#allocation3 + $0x80] sm:$0xff] %v5806
          %5823 = vst [vmem:[#allocation3 + $0x88] sm:$0xff] %v5807
          %5824 = vst [vmem:[#allocation3 + $0x90] sm:$0xff] %v5808
          %5825 = vst [vmem:[#allocation3 + $0x98] sm:$0xff] %v5809
          %5826 = vst [vmem:[#allocation3 + $0xa0] sm:$0xff] %v5810
          %5827 = vst [vmem:[#allocation3 + $0xa8] sm:$0xff] %v5811
          %5828 = vst [vmem:[#allocation3 + $0xb0] sm:$0xff] %v5812
          %5829 = vst [vmem:[#allocation3 + $0xb8] sm:$0xff] %v5813
          %5830 = vst [vmem:[#allocation3 + $0xc0] sm:$0xff] %v5814
          %5831 = vst [vmem:[#allocation3 + $0xc8] sm:$0xff] %v5815
          %5832 = vst [vmem:[#allocation3 + $0xd0] sm:$0xff] %v5816
          %5833 = vst [vmem:[#allocation3 + $0xd8] sm:$0xff] %v5817
          %5834 = vst [vmem:[#allocation3 + $0xe0] sm:$0xff] %v5818
          %5835 = vst [vmem:[#allocation3 + $0xe8] sm:$0xff] %v5819
          %5836 = vst [vmem:[#allocation3 + $0xf0] sm:$0xff] %v5820
          %5837 = vst [vmem:[#allocation3 + $0xf8] sm:$0xff] %v5821
          %v5838 = vld [vmem:[#allocation2 + $0x80] sm:$0xc]
          %v5839 = vld [vmem:[#allocation2 + $0x84] sm:$0xf]
          %v5840 = vld [vmem:[#allocation2 + $0x88] sm:$0xf]
          %v5841 = vld [vmem:[#allocation2 + $0x8c] sm:$0xf]
          %v5842 = vld [vmem:[#allocation2 + $0x90] sm:$0xf]
          %v5843 = vld [vmem:[#allocation2 + $0x94] sm:$0xf]
          %v5844 = vld [vmem:[#allocation2 + $0x98] sm:$0xf]
          %v5845 = vld [vmem:[#allocation2 + $0x9c] sm:$0xf]
          %v5846 = vld [vmem:[#allocation2 + $0xa0] sm:$0xf]
          %v5847 = vld [vmem:[#allocation2 + $0xa4] sm:$0xf]
          %v5848 = vld [vmem:[#allocation2 + $0xa8] sm:$0xf]
          %v5849 = vld [vmem:[#allocation2 + $0xac] sm:$0xf]
          %v5850 = vld [vmem:[#allocation2 + $0xb0] sm:$0xf]
          %v5851 = vld [vmem:[#allocation2 + $0xb4] sm:$0xf]
          %v5852 = vld [vmem:[#allocation2 + $0xb8] sm:$0xf]
          %v5853 = vld [vmem:[#allocation2 + $0xbc] sm:$0xf]
          %v5854 = vld [vmem:[#allocation2 + $0xc0] sm:$0x3]
          %v5855 = vld [vmem:[#allocation11] sm:$0xf]
          %v5856 = vld [vmem:[#allocation11 + $0x4] sm:$0xf]
          %v5857 = vld [vmem:[#allocation11 + $0x8] sm:$0xf]
          %v5858 = vld [vmem:[#allocation11 + $0xc] sm:$0xf]
          %v5859 = vld [vmem:[#allocation11 + $0x10] sm:$0xf]
          %v5860 = vld [vmem:[#allocation11 + $0x14] sm:$0xf]
          %v5861 = vld [vmem:[#allocation11 + $0x18] sm:$0xf]
          %v5862 = vld [vmem:[#allocation11 + $0x1c] sm:$0xf]
          %v5863 = vld [vmem:[#allocation11 + $0x20] sm:$0xf]
          %v5864 = vld [vmem:[#allocation11 + $0x24] sm:$0xf]
          %v5865 = vld [vmem:[#allocation11 + $0x28] sm:$0xf]
          %v5866 = vld [vmem:[#allocation11 + $0x2c] sm:$0xf]
          %v5867 = vld [vmem:[#allocation11 + $0x30] sm:$0xf]
          %v5868 = vld [vmem:[#allocation11 + $0x34] sm:$0xf]
          %v5869 = vld [vmem:[#allocation11 + $0x38] sm:$0xf]
          %v5870 = vld [vmem:[#allocation11 + $0x3c] sm:$0xf]
          %v5871 = vld [vmem:[#allocation2 + $0x80] sm:$0x8]
          %v5872 = vld [vmem:[#allocation2 + $0xc0] sm:$0x7]
          %v5873 = vld [vmem:[%s1622] sm:$0xf]
          %v5874 = vld [vmem:[%s1622 + $0x4] sm:$0xf]
          %v5875 = vld [vmem:[%s1622 + $0x8] sm:$0xf]
          %v5876 = vld [vmem:[%s1622 + $0xc] sm:$0xf]
          %v5877 = vld [vmem:[%s1622 + $0x10] sm:$0xf]
          %v5878 = vld [vmem:[%s1622 + $0x14] sm:$0xf]
          %v5879 = vld [vmem:[%s1622 + $0x18] sm:$0xf]
          %v5880 = vld [vmem:[%s1622 + $0x1c] sm:$0xf]
          %v5881 = vld [vmem:[%s1622 + $0x20] sm:$0xf]
          %v5882 = vld [vmem:[%s1622 + $0x24] sm:$0xf]
          %v5883 = vld [vmem:[%s1622 + $0x28] sm:$0xf]
          %v5884 = vld [vmem:[%s1622 + $0x2c] sm:$0xf]
          %v5885 = vld [vmem:[%s1622 + $0x30] sm:$0xf]
          %v5886 = vld [vmem:[%s1622 + $0x34] sm:$0xf]
          %v5887 = vld [vmem:[%s1622 + $0x38] sm:$0xf]
          %v5888 = vld [vmem:[%s1622 + $0x3c] sm:$0xf]
          %v5906 = vunpack.c.l.b16 %v5871
          %v5907 = vunpack.c.l.b16 %v5839
          %v5908 = vunpack.c.l.b16 %v5840
          %v5909 = vunpack.c.l.b16 %v5841
          %v5910 = vunpack.c.l.b16 %v5842
          %v5911 = vunpack.c.l.b16 %v5843
          %v5912 = vunpack.c.l.b16 %v5844
          %v5913 = vunpack.c.l.b16 %v5845
          %v5914 = vunpack.c.l.b16 %v5846
          %v5915 = vunpack.c.l.b16 %v5847
          %v5916 = vunpack.c.l.b16 %v5848
          %v5917 = vunpack.c.l.b16 %v5849
          %v5918 = vunpack.c.l.b16 %v5850
          %v5919 = vunpack.c.l.b16 %v5851
          %v5920 = vunpack.c.l.b16 %v5852
          %v5921 = vunpack.c.l.b16 %v5853
          %v5922 = vunpack.c.l.b16 %v5872
          %v5923 = vpack.c.b16 %v5907, %v5906
          %v5924 = vpack.c.b16 %v5909, %v5908
          %v5925 = vpack.c.b16 %v5911, %v5910
          %v5926 = vpack.c.b16 %v5913, %v5912
          %v5927 = vpack.c.b16 %v5915, %v5914
          %v5928 = vpack.c.b16 %v5917, %v5916
          %v5929 = vpack.c.b16 %v5919, %v5918
          %v5930 = vpack.c.b16 %v5921, %v5920
          %v5931 = vpack.c.b16 %v5922, %v5922
          %v5932 = vrot.slane %v5923, 3
          %v5933 = vrot.slane %v5924, 3
          %v5934 = vsel %vm1682, %v5932, %v5933
          %v5935 = vrot.slane %v5925, 3
          %v5936 = vsel %vm1682, %v5933, %v5935
          %v5937 = vrot.slane %v5926, 3
          %v5938 = vsel %vm1682, %v5935, %v5937
          %v5939 = vrot.slane %v5927, 3
          %v5940 = vsel %vm1682, %v5937, %v5939
          %v5941 = vrot.slane %v5928, 3
          %v5942 = vsel %vm1682, %v5939, %v5941
          %v5943 = vrot.slane %v5929, 3
          %v5944 = vsel %vm1682, %v5941, %v5943
          %v5945 = vrot.slane %v5930, 3
          %v5946 = vsel %vm1682, %v5943, %v5945
          %v5947 = vrot.slane %v5931, 3
          %v5948 = vsel %vm1682, %v5945, %v5947
          %v5973 = vunpack.c.l.b16 %v5873
          %v5974 = vunpack.c.l.b16 %v5874
          %v5975 = vunpack.c.l.b16 %v5875
          %v5976 = vunpack.c.l.b16 %v5876
          %v5977 = vunpack.c.l.b16 %v5877
          %v5978 = vunpack.c.l.b16 %v5878
          %v5979 = vunpack.c.l.b16 %v5879
          %v5980 = vunpack.c.l.b16 %v5880
          %v5981 = vunpack.c.l.b16 %v5881
          %v5982 = vunpack.c.l.b16 %v5882
          %v5983 = vunpack.c.l.b16 %v5883
          %v5984 = vunpack.c.l.b16 %v5884
          %v5985 = vunpack.c.l.b16 %v5885
          %v5986 = vunpack.c.l.b16 %v5886
          %v5987 = vunpack.c.l.b16 %v5887
          %v5988 = vunpack.c.l.b16 %v5888
          %v5989 = vpack.c.b16 %v5974, %v5973
          %v5990 = vpack.c.b16 %v5976, %v5975
          %v5991 = vpack.c.b16 %v5978, %v5977
          %v5992 = vpack.c.b16 %v5980, %v5979
          %v5993 = vpack.c.b16 %v5982, %v5981
          %v5994 = vpack.c.b16 %v5984, %v5983
          %v5995 = vpack.c.b16 %v5986, %v5985
          %v5996 = vpack.c.b16 %v5988, %v5987
          %6005 = vmatprep.subr.bf16.mxu0 0
          %6006 = vmatpush1.bf16.msra.mxu0 %v5996
          %6007 = vmatprep.subr.bf16.mxu0 0
          %6008 = vmatpush1.bf16.msra.mxu0 %v5995
          %6009 = vmatprep.subr.bf16.mxu0 0
          %6010 = vmatpush1.bf16.msra.mxu0 %v5994
          %6011 = vmatprep.subr.bf16.mxu0 0
          %6012 = vmatpush1.bf16.msra.mxu0 %v5993
          %6013 = vmatprep.subr.bf16.mxu0 0
          %6014 = vmatpush1.bf16.msra.mxu0 %v5992
          %6015 = vmatprep.subr.bf16.mxu0 0
          %6016 = vmatpush1.bf16.msra.mxu0 %v5991
          %6017 = vmatprep.subr.bf16.mxu0 0
          %6018 = vmatpush1.bf16.msra.mxu0 %v5990
          %6019 = vmatprep.subr.bf16.mxu0 0
          %6020 = vmatpush1.bf16.msra.mxu0 %v5989
          %6021 = vmatprep.subr.bf16.mxu0 0
          %6022 = vmatpush2.bf16.msra.mxu0 0
          %6023 = vmatprep.subr.bf16.mxu0 0
          %6024 = vmatpush2.bf16.msra.mxu0 0
          %6025 = vmatprep.subr.bf16.mxu0 0
          %6026 = vmatpush2.bf16.msra.mxu0 0
          %6027 = vmatprep.subr.bf16.mxu0 0
          %6028 = vmatpush2.bf16.msra.mxu0 0
          %6029 = vmatprep.subr.bf16.mxu0 0
          %6030 = vmatpush2.bf16.msra.mxu0 0
          %6031 = vmatprep.subr.bf16.mxu0 0
          %6032 = vmatpush2.bf16.msra.mxu0 0
          %6033 = vmatprep.subr.bf16.mxu0 0
          %6034 = vmatpush2.bf16.msra.mxu0 0
          %6035 = vmatprep.subr.bf16.mxu0 0
          %6036 = vmatpush2.bf16.msra.mxu0 0
          %6037 = vmatprep.mubr.bf16.mxu0 0
          %6038 = vmatmul.mubr.bf16.gmra.mxu0 %v5934
          %v6039 = vpop.f32.mrf.mxu0
          %v6040 = vadd.f32 0.0, %v6039
          %v6041 = vpop.f32.mrf.mxu0
          %v6042 = vpop.f32.mrf.mxu0
          %v6043 = vadd.f32 0.0, %v6042
          %v6044 = vpop.f32.mrf.mxu0
          %6045 = vmatprep.mubr.bf16.mxu0 0
          %6046 = vmatmul.mubr.bf16.gmra.mxu0 %v5936
          %v6047 = vpop.f32.mrf.mxu0
          %v6048 = vadd.f32 0.0, %v6047
          %v6049 = vpop.f32.mrf.mxu0
          %v6050 = vpop.f32.mrf.mxu0
          %v6051 = vadd.f32 0.0, %v6050
          %v6052 = vpop.f32.mrf.mxu0
          %6053 = vmatprep.mubr.bf16.mxu0 0
          %6054 = vmatmul.mubr.bf16.gmra.mxu0 %v5938
          %v6055 = vpop.f32.mrf.mxu0
          %v6056 = vadd.f32 0.0, %v6055
          %v6057 = vpop.f32.mrf.mxu0
          %v6058 = vpop.f32.mrf.mxu0
          %v6059 = vadd.f32 0.0, %v6058
          %v6060 = vpop.f32.mrf.mxu0
          %6061 = vmatprep.mubr.bf16.mxu0 0
          %6062 = vmatmul.mubr.bf16.gmra.mxu0 %v5940
          %v6063 = vpop.f32.mrf.mxu0
          %v6064 = vadd.f32 0.0, %v6063
          %v6065 = vpop.f32.mrf.mxu0
          %v6066 = vpop.f32.mrf.mxu0
          %v6067 = vadd.f32 0.0, %v6066
          %v6068 = vpop.f32.mrf.mxu0
          %6069 = vmatprep.mubr.bf16.mxu0 0
          %6070 = vmatmul.mubr.bf16.gmra.mxu0 %v5942
          %v6071 = vpop.f32.mrf.mxu0
          %v6072 = vadd.f32 0.0, %v6071
          %v6073 = vpop.f32.mrf.mxu0
          %v6074 = vpop.f32.mrf.mxu0
          %v6075 = vadd.f32 0.0, %v6074
          %v6076 = vpop.f32.mrf.mxu0
          %6077 = vmatprep.mubr.bf16.mxu0 0
          %6078 = vmatmul.mubr.bf16.gmra.mxu0 %v5944
          %v6079 = vpop.f32.mrf.mxu0
          %v6080 = vadd.f32 0.0, %v6079
          %v6081 = vpop.f32.mrf.mxu0
          %v6082 = vpop.f32.mrf.mxu0
          %v6083 = vadd.f32 0.0, %v6082
          %v6084 = vpop.f32.mrf.mxu0
          %6085 = vmatprep.mubr.bf16.mxu0 0
          %6086 = vmatmul.mubr.bf16.gmra.mxu0 %v5946
          %v6087 = vpop.f32.mrf.mxu0
          %v6088 = vadd.f32 0.0, %v6087
          %v6089 = vpop.f32.mrf.mxu0
          %v6090 = vpop.f32.mrf.mxu0
          %v6091 = vadd.f32 0.0, %v6090
          %v6092 = vpop.f32.mrf.mxu0
          %6093 = vmatprep.mubr.bf16.mxu0 0
          %6094 = vmatmul.mubr.bf16.gmra.mxu0 %v5948
          %v6095 = vpop.f32.mrf.mxu0
          %v6096 = vadd.f32 0.0, %v6095
          %v6097 = vpop.f32.mrf.mxu0
          %v6098 = vpop.f32.mrf.mxu0
          %v6099 = vadd.f32 0.0, %v6098
          %v6100 = vpop.f32.mrf.mxu0
          %6101 = vdwg.mxu0
          %v6104 = vunpack.c.l.b16 %v5838
          %v6105 = vunpack.c.l.b16 %v5854
          %v6106 = vpack.c.b16 %v5907, %v6104
          %v6107 = vpack.c.b16 %v6105, %v6105
          %v6108 = vrot.slane %v6106, 2
          %v6109 = vrot.slane %v5924, 2
          %v6110 = vsel %vm1859, %v6108, %v6109
          %v6111 = vrot.slane %v5925, 2
          %v6112 = vsel %vm1859, %v6109, %v6111
          %v6113 = vrot.slane %v5926, 2
          %v6114 = vsel %vm1859, %v6111, %v6113
          %v6115 = vrot.slane %v5927, 2
          %v6116 = vsel %vm1859, %v6113, %v6115
          %v6117 = vrot.slane %v5928, 2
          %v6118 = vsel %vm1859, %v6115, %v6117
          %v6119 = vrot.slane %v5929, 2
          %v6120 = vsel %vm1859, %v6117, %v6119
          %v6121 = vrot.slane %v5930, 2
          %v6122 = vsel %vm1859, %v6119, %v6121
          %v6123 = vrot.slane %v6107, 2
          %v6124 = vsel %vm1859, %v6121, %v6123
          %v6149 = vunpack.c.l.b16 %v5855
          %v6150 = vunpack.c.l.b16 %v5856
          %v6151 = vunpack.c.l.b16 %v5857
          %v6152 = vunpack.c.l.b16 %v5858
          %v6153 = vunpack.c.l.b16 %v5859
          %v6154 = vunpack.c.l.b16 %v5860
          %v6155 = vunpack.c.l.b16 %v5861
          %v6156 = vunpack.c.l.b16 %v5862
          %v6157 = vunpack.c.l.b16 %v5863
          %v6158 = vunpack.c.l.b16 %v5864
          %v6159 = vunpack.c.l.b16 %v5865
          %v6160 = vunpack.c.l.b16 %v5866
          %v6161 = vunpack.c.l.b16 %v5867
          %v6162 = vunpack.c.l.b16 %v5868
          %v6163 = vunpack.c.l.b16 %v5869
          %v6164 = vunpack.c.l.b16 %v5870
          %v6165 = vpack.c.b16 %v6150, %v6149
          %v6166 = vpack.c.b16 %v6152, %v6151
          %v6167 = vpack.c.b16 %v6154, %v6153
          %v6168 = vpack.c.b16 %v6156, %v6155
          %v6169 = vpack.c.b16 %v6158, %v6157
          %v6170 = vpack.c.b16 %v6160, %v6159
          %v6171 = vpack.c.b16 %v6162, %v6161
          %v6172 = vpack.c.b16 %v6164, %v6163
          %6181 = vmatprep.subr.bf16.mxu0 0
          %6182 = vmatpush1.bf16.msra.mxu0 %v6172
          %6183 = vmatprep.subr.bf16.mxu0 0
          %6184 = vmatpush1.bf16.msra.mxu0 %v6171
          %6185 = vmatprep.subr.bf16.mxu0 0
          %6186 = vmatpush1.bf16.msra.mxu0 %v6170
          %6187 = vmatprep.subr.bf16.mxu0 0
          %6188 = vmatpush1.bf16.msra.mxu0 %v6169
          %6189 = vmatprep.subr.bf16.mxu0 0
          %6190 = vmatpush1.bf16.msra.mxu0 %v6168
          %6191 = vmatprep.subr.bf16.mxu0 0
          %6192 = vmatpush1.bf16.msra.mxu0 %v6167
          %6193 = vmatprep.subr.bf16.mxu0 0
          %6194 = vmatpush1.bf16.msra.mxu0 %v6166
          %6195 = vmatprep.subr.bf16.mxu0 0
          %6196 = vmatpush1.bf16.msra.mxu0 %v6165
          %6197 = vmatprep.subr.bf16.mxu0 0
          %6198 = vmatpush2.bf16.msra.mxu0 0
          %6199 = vmatprep.subr.bf16.mxu0 0
          %6200 = vmatpush2.bf16.msra.mxu0 0
          %6201 = vmatprep.subr.bf16.mxu0 0
          %6202 = vmatpush2.bf16.msra.mxu0 0
          %6203 = vmatprep.subr.bf16.mxu0 0
          %6204 = vmatpush2.bf16.msra.mxu0 0
          %6205 = vmatprep.subr.bf16.mxu0 0
          %6206 = vmatpush2.bf16.msra.mxu0 0
          %6207 = vmatprep.subr.bf16.mxu0 0
          %6208 = vmatpush2.bf16.msra.mxu0 0
          %6209 = vmatprep.subr.bf16.mxu0 0
          %6210 = vmatpush2.bf16.msra.mxu0 0
          %6211 = vmatprep.subr.bf16.mxu0 0
          %6212 = vmatpush2.bf16.msra.mxu0 0
          %6213 = vmatprep.mubr.bf16.mxu0 0
          %6214 = vmatmul.mubr.bf16.gmra.mxu0 %v6110
          %v6215 = vpop.f32.mrf.mxu0
          %v6216 = vadd.f32 %v6040, %v6215
          %v6217 = vpop.f32.mrf.mxu0
          %v6218 = vpop.f32.mrf.mxu0
          %v6219 = vadd.f32 %v6043, %v6218
          %v6220 = vpop.f32.mrf.mxu0
          %6221 = vmatprep.mubr.bf16.mxu0 0
          %6222 = vmatmul.mubr.bf16.gmra.mxu0 %v6112
          %v6223 = vpop.f32.mrf.mxu0
          %v6224 = vadd.f32 %v6048, %v6223
          %v6225 = vpop.f32.mrf.mxu0
          %v6226 = vpop.f32.mrf.mxu0
          %v6227 = vadd.f32 %v6051, %v6226
          %v6228 = vpop.f32.mrf.mxu0
          %6229 = vmatprep.mubr.bf16.mxu0 0
          %6230 = vmatmul.mubr.bf16.gmra.mxu0 %v6114
          %v6231 = vpop.f32.mrf.mxu0
          %v6232 = vadd.f32 %v6056, %v6231
          %v6233 = vpop.f32.mrf.mxu0
          %v6234 = vpop.f32.mrf.mxu0
          %v6235 = vadd.f32 %v6059, %v6234
          %v6236 = vpop.f32.mrf.mxu0
          %6237 = vmatprep.mubr.bf16.mxu0 0
          %6238 = vmatmul.mubr.bf16.gmra.mxu0 %v6116
          %v6239 = vpop.f32.mrf.mxu0
          %v6240 = vadd.f32 %v6064, %v6239
          %v6241 = vpop.f32.mrf.mxu0
          %v6242 = vpop.f32.mrf.mxu0
          %v6243 = vadd.f32 %v6067, %v6242
          %v6244 = vpop.f32.mrf.mxu0
          %6245 = vmatprep.mubr.bf16.mxu0 0
          %6246 = vmatmul.mubr.bf16.gmra.mxu0 %v6118
          %v6247 = vpop.f32.mrf.mxu0
          %v6248 = vadd.f32 %v6072, %v6247
          %v6249 = vpop.f32.mrf.mxu0
          %v6250 = vpop.f32.mrf.mxu0
          %v6251 = vadd.f32 %v6075, %v6250
          %v6252 = vpop.f32.mrf.mxu0
          %6253 = vmatprep.mubr.bf16.mxu0 0
          %6254 = vmatmul.mubr.bf16.gmra.mxu0 %v6120
          %v6255 = vpop.f32.mrf.mxu0
          %v6256 = vadd.f32 %v6080, %v6255
          %v6257 = vpop.f32.mrf.mxu0
          %v6258 = vpop.f32.mrf.mxu0
          %v6259 = vadd.f32 %v6083, %v6258
          %v6260 = vpop.f32.mrf.mxu0
          %6261 = vmatprep.mubr.bf16.mxu0 0
          %6262 = vmatmul.mubr.bf16.gmra.mxu0 %v6122
          %v6263 = vpop.f32.mrf.mxu0
          %v6264 = vadd.f32 %v6088, %v6263
          %v6265 = vpop.f32.mrf.mxu0
          %v6266 = vpop.f32.mrf.mxu0
          %v6267 = vadd.f32 %v6091, %v6266
          %v6268 = vpop.f32.mrf.mxu0
          %6269 = vmatprep.mubr.bf16.mxu0 0
          %6270 = vmatmul.mubr.bf16.gmra.mxu0 %v6124
          %v6271 = vpop.f32.mrf.mxu0
          %v6272 = vadd.f32 %v6096, %v6271
          %v6273 = vpop.f32.mrf.mxu0
          %v6274 = vpop.f32.mrf.mxu0
          %v6275 = vadd.f32 %v6099, %v6274
          %v6276 = vpop.f32.mrf.mxu0
          %6277 = vdwg.mxu0
          %v6278 = vld [vmem:[#allocation2 + $0xc0] sm:$0xf]
          %v6279 = vld [vmem:[%s2031] sm:$0xf]
          %v6280 = vld [vmem:[%s2031 + $0x4] sm:$0xf]
          %v6281 = vld [vmem:[%s2031 + $0x8] sm:$0xf]
          %v6282 = vld [vmem:[%s2031 + $0xc] sm:$0xf]
          %v6283 = vld [vmem:[%s2031 + $0x10] sm:$0xf]
          %v6284 = vld [vmem:[%s2031 + $0x14] sm:$0xf]
          %v6285 = vld [vmem:[%s2031 + $0x18] sm:$0xf]
          %v6286 = vld [vmem:[%s2031 + $0x1c] sm:$0xf]
          %v6287 = vld [vmem:[%s2031 + $0x20] sm:$0xf]
          %v6288 = vld [vmem:[%s2031 + $0x24] sm:$0xf]
          %v6289 = vld [vmem:[%s2031 + $0x28] sm:$0xf]
          %v6290 = vld [vmem:[%s2031 + $0x2c] sm:$0xf]
          %v6291 = vld [vmem:[%s2031 + $0x30] sm:$0xf]
          %v6292 = vld [vmem:[%s2031 + $0x34] sm:$0xf]
          %v6293 = vld [vmem:[%s2031 + $0x38] sm:$0xf]
          %v6294 = vld [vmem:[%s2031 + $0x3c] sm:$0xf]
          %v6296 = vunpack.c.l.b16 %v6278
          %v6297 = vpack.c.b16 %v5908, %v5907
          %v6298 = vpack.c.b16 %v5910, %v5909
          %v6299 = vpack.c.b16 %v5912, %v5911
          %v6300 = vpack.c.b16 %v5914, %v5913
          %v6301 = vpack.c.b16 %v5916, %v5915
          %v6302 = vpack.c.b16 %v5918, %v5917
          %v6303 = vpack.c.b16 %v5920, %v5919
          %v6304 = vpack.c.b16 %v6296, %v5921
          %v6329 = vunpack.c.l.b16 %v6279
          %v6330 = vunpack.c.l.b16 %v6280
          %v6331 = vunpack.c.l.b16 %v6281
          %v6332 = vunpack.c.l.b16 %v6282
          %v6333 = vunpack.c.l.b16 %v6283
          %v6334 = vunpack.c.l.b16 %v6284
          %v6335 = vunpack.c.l.b16 %v6285
          %v6336 = vunpack.c.l.b16 %v6286
          %v6337 = vunpack.c.l.b16 %v6287
          %v6338 = vunpack.c.l.b16 %v6288
          %v6339 = vunpack.c.l.b16 %v6289
          %v6340 = vunpack.c.l.b16 %v6290
          %v6341 = vunpack.c.l.b16 %v6291
          %v6342 = vunpack.c.l.b16 %v6292
          %v6343 = vunpack.c.l.b16 %v6293
          %v6344 = vunpack.c.l.b16 %v6294
          %v6345 = vpack.c.b16 %v6330, %v6329
          %v6346 = vpack.c.b16 %v6332, %v6331
          %v6347 = vpack.c.b16 %v6334, %v6333
          %v6348 = vpack.c.b16 %v6336, %v6335
          %v6349 = vpack.c.b16 %v6338, %v6337
          %v6350 = vpack.c.b16 %v6340, %v6339
          %v6351 = vpack.c.b16 %v6342, %v6341
          %v6352 = vpack.c.b16 %v6344, %v6343
          %6361 = vmatprep.subr.bf16.mxu0 0
          %6362 = vmatpush1.bf16.msra.mxu0 %v6352
          %6363 = vmatprep.subr.bf16.mxu0 0
          %6364 = vmatpush1.bf16.msra.mxu0 %v6351
          %6365 = vmatprep.subr.bf16.mxu0 0
          %6366 = vmatpush1.bf16.msra.mxu0 %v6350
          %6367 = vmatprep.subr.bf16.mxu0 0
          %6368 = vmatpush1.bf16.msra.mxu0 %v6349
          %6369 = vmatprep.subr.bf16.mxu0 0
          %6370 = vmatpush1.bf16.msra.mxu0 %v6348
          %6371 = vmatprep.subr.bf16.mxu0 0
          %6372 = vmatpush1.bf16.msra.mxu0 %v6347
          %6373 = vmatprep.subr.bf16.mxu0 0
          %6374 = vmatpush1.bf16.msra.mxu0 %v6346
          %6375 = vmatprep.subr.bf16.mxu0 0
          %6376 = vmatpush1.bf16.msra.mxu0 %v6345
          %6377 = vmatprep.subr.bf16.mxu0 0
          %6378 = vmatpush2.bf16.msra.mxu0 0
          %6379 = vmatprep.subr.bf16.mxu0 0
          %6380 = vmatpush2.bf16.msra.mxu0 0
          %6381 = vmatprep.subr.bf16.mxu0 0
          %6382 = vmatpush2.bf16.msra.mxu0 0
          %6383 = vmatprep.subr.bf16.mxu0 0
          %6384 = vmatpush2.bf16.msra.mxu0 0
          %6385 = vmatprep.subr.bf16.mxu0 0
          %6386 = vmatpush2.bf16.msra.mxu0 0
          %6387 = vmatprep.subr.bf16.mxu0 0
          %6388 = vmatpush2.bf16.msra.mxu0 0
          %6389 = vmatprep.subr.bf16.mxu0 0
          %6390 = vmatpush2.bf16.msra.mxu0 0
          %6391 = vmatprep.subr.bf16.mxu0 0
          %6392 = vmatpush2.bf16.msra.mxu0 0
          %6393 = vmatprep.mubr.bf16.mxu0 0
          %6394 = vmatmul.mubr.bf16.gmra.mxu0 %v6297
          %v6395 = vpop.f32.mrf.mxu0
          %v6396 = vadd.f32 0.0, %v6395
          %v6397 = vpop.f32.mrf.mxu0
          %v6398 = vpop.f32.mrf.mxu0
          %v6399 = vadd.f32 0.0, %v6398
          %v6400 = vpop.f32.mrf.mxu0
          %6401 = vmatprep.mubr.bf16.mxu0 0
          %6402 = vmatmul.mubr.bf16.gmra.mxu0 %v6298
          %v6403 = vpop.f32.mrf.mxu0
          %v6404 = vadd.f32 0.0, %v6403
          %v6405 = vpop.f32.mrf.mxu0
          %v6406 = vpop.f32.mrf.mxu0
          %v6407 = vadd.f32 0.0, %v6406
          %v6408 = vpop.f32.mrf.mxu0
          %6409 = vmatprep.mubr.bf16.mxu0 0
          %6410 = vmatmul.mubr.bf16.gmra.mxu0 %v6299
          %v6411 = vpop.f32.mrf.mxu0
          %v6412 = vadd.f32 0.0, %v6411
          %v6413 = vpop.f32.mrf.mxu0
          %v6414 = vpop.f32.mrf.mxu0
          %v6415 = vadd.f32 0.0, %v6414
          %v6416 = vpop.f32.mrf.mxu0
          %6417 = vmatprep.mubr.bf16.mxu0 0
          %6418 = vmatmul.mubr.bf16.gmra.mxu0 %v6300
          %v6419 = vpop.f32.mrf.mxu0
          %v6420 = vadd.f32 0.0, %v6419
          %v6421 = vpop.f32.mrf.mxu0
          %v6422 = vpop.f32.mrf.mxu0
          %v6423 = vadd.f32 0.0, %v6422
          %v6424 = vpop.f32.mrf.mxu0
          %6425 = vmatprep.mubr.bf16.mxu0 0
          %6426 = vmatmul.mubr.bf16.gmra.mxu0 %v6301
          %v6427 = vpop.f32.mrf.mxu0
          %v6428 = vadd.f32 0.0, %v6427
          %v6429 = vpop.f32.mrf.mxu0
          %v6430 = vpop.f32.mrf.mxu0
          %v6431 = vadd.f32 0.0, %v6430
          %v6432 = vpop.f32.mrf.mxu0
          %6433 = vmatprep.mubr.bf16.mxu0 0
          %6434 = vmatmul.mubr.bf16.gmra.mxu0 %v6302
          %v6435 = vpop.f32.mrf.mxu0
          %v6436 = vadd.f32 0.0, %v6435
          %v6437 = vpop.f32.mrf.mxu0
          %v6438 = vpop.f32.mrf.mxu0
          %v6439 = vadd.f32 0.0, %v6438
          %v6440 = vpop.f32.mrf.mxu0
          %6441 = vmatprep.mubr.bf16.mxu0 0
          %6442 = vmatmul.mubr.bf16.gmra.mxu0 %v6303
          %v6443 = vpop.f32.mrf.mxu0
          %v6444 = vadd.f32 0.0, %v6443
          %v6445 = vpop.f32.mrf.mxu0
          %v6446 = vpop.f32.mrf.mxu0
          %v6447 = vadd.f32 0.0, %v6446
          %v6448 = vpop.f32.mrf.mxu0
          %6449 = vmatprep.mubr.bf16.mxu0 0
          %6450 = vmatmul.mubr.bf16.gmra.mxu0 %v6304
          %v6451 = vpop.f32.mrf.mxu0
          %v6452 = vadd.f32 0.0, %v6451
          %v6453 = vpop.f32.mrf.mxu0
          %v6454 = vpop.f32.mrf.mxu0
          %v6455 = vadd.f32 0.0, %v6454
          %v6456 = vpop.f32.mrf.mxu0
          %6457 = vdwg.mxu0
          %v6458 = vadd.f32 %v6216, %v6396
          %v6459 = vadd.f32 %v6219, %v6399
          %v6460 = vadd.f32 %v6224, %v6404
          %v6461 = vadd.f32 %v6227, %v6407
          %v6462 = vadd.f32 %v6232, %v6412
          %v6463 = vadd.f32 %v6235, %v6415
          %v6464 = vadd.f32 %v6240, %v6420
          %v6465 = vadd.f32 %v6243, %v6423
          %v6466 = vadd.f32 %v6248, %v6428
          %v6467 = vadd.f32 %v6251, %v6431
          %v6468 = vadd.f32 %v6256, %v6436
          %v6469 = vadd.f32 %v6259, %v6439
          %v6470 = vadd.f32 %v6264, %v6444
          %v6471 = vadd.f32 %v6267, %v6447
          %v6472 = vadd.f32 %v6272, %v6452
          %v6473 = vadd.f32 %v6275, %v6455
          %v6474 = vld [vmem:[#allocation2 + $0x8c] sm:$0x8]
          %v6475 = vld [vmem:[#allocation2 + $0x90] sm:$0xf]
          %v6476 = vld [vmem:[#allocation2 + $0x94] sm:$0xf]
          %v6477 = vld [vmem:[#allocation2 + $0x98] sm:$0xf]
          %v6478 = vld [vmem:[#allocation2 + $0x9c] sm:$0xf]
          %v6479 = vld [vmem:[#allocation2 + $0xa0] sm:$0xf]
          %v6480 = vld [vmem:[#allocation2 + $0xa4] sm:$0xf]
          %v6481 = vld [vmem:[#allocation2 + $0xa8] sm:$0xf]
          %v6482 = vld [vmem:[#allocation2 + $0xac] sm:$0xf]
          %v6483 = vld [vmem:[#allocation2 + $0xb0] sm:$0xf]
          %v6484 = vld [vmem:[#allocation2 + $0xb4] sm:$0xf]
          %v6485 = vld [vmem:[#allocation2 + $0xb8] sm:$0xf]
          %v6486 = vld [vmem:[#allocation2 + $0xbc] sm:$0xf]
          %v6487 = vld [vmem:[#allocation2 + $0xc0] sm:$0xf]
          %v6488 = vld [vmem:[#allocation2 + $0xc4] sm:$0xf]
          %v6489 = vld [vmem:[#allocation2 + $0xc8] sm:$0xf]
          %v6490 = vld [vmem:[#allocation2 + $0xcc] sm:$0x7]
          %v6491 = vld [vmem:[%s2244] sm:$0xf]
          %v6492 = vld [vmem:[%s2244 + $0x4] sm:$0xf]
          %v6493 = vld [vmem:[%s2244 + $0x8] sm:$0xf]
          %v6494 = vld [vmem:[%s2244 + $0xc] sm:$0xf]
          %v6495 = vld [vmem:[%s2244 + $0x10] sm:$0xf]
          %v6496 = vld [vmem:[%s2244 + $0x14] sm:$0xf]
          %v6497 = vld [vmem:[%s2244 + $0x18] sm:$0xf]
          %v6498 = vld [vmem:[%s2244 + $0x1c] sm:$0xf]
          %v6499 = vld [vmem:[%s2244 + $0x20] sm:$0xf]
          %v6500 = vld [vmem:[%s2244 + $0x24] sm:$0xf]
          %v6501 = vld [vmem:[%s2244 + $0x28] sm:$0xf]
          %v6502 = vld [vmem:[%s2244 + $0x2c] sm:$0xf]
          %v6503 = vld [vmem:[%s2244 + $0x30] sm:$0xf]
          %v6504 = vld [vmem:[%s2244 + $0x34] sm:$0xf]
          %v6505 = vld [vmem:[%s2244 + $0x38] sm:$0xf]
          %v6506 = vld [vmem:[%s2244 + $0x3c] sm:$0xf]
          %v6524 = vunpack.c.l.b16 %v6474
          %v6525 = vunpack.c.l.b16 %v6475
          %v6526 = vunpack.c.l.b16 %v6476
          %v6527 = vunpack.c.l.b16 %v6477
          %v6528 = vunpack.c.l.b16 %v6478
          %v6529 = vunpack.c.l.b16 %v6479
          %v6530 = vunpack.c.l.b16 %v6480
          %v6531 = vunpack.c.l.b16 %v6481
          %v6532 = vunpack.c.l.b16 %v6482
          %v6533 = vunpack.c.l.b16 %v6483
          %v6534 = vunpack.c.l.b16 %v6484
          %v6535 = vunpack.c.l.b16 %v6485
          %v6536 = vunpack.c.l.b16 %v6486
          %v6537 = vunpack.c.l.b16 %v6487
          %v6538 = vunpack.c.l.b16 %v6488
          %v6539 = vunpack.c.l.b16 %v6489
          %v6540 = vunpack.c.l.b16 %v6490
          %v6541 = vpack.c.b16 %v6525, %v6524
          %v6542 = vpack.c.b16 %v6527, %v6526
          %v6543 = vpack.c.b16 %v6529, %v6528
          %v6544 = vpack.c.b16 %v6531, %v6530
          %v6545 = vpack.c.b16 %v6533, %v6532
          %v6546 = vpack.c.b16 %v6535, %v6534
          %v6547 = vpack.c.b16 %v6537, %v6536
          %v6548 = vpack.c.b16 %v6539, %v6538
          %v6549 = vpack.c.b16 %v6540, %v6540
          %v6550 = vrot.slane %v6541, 3
          %v6551 = vrot.slane %v6542, 3
          %v6552 = vsel %vm1682, %v6550, %v6551
          %v6553 = vrot.slane %v6543, 3
          %v6554 = vsel %vm1682, %v6551, %v6553
          %v6555 = vrot.slane %v6544, 3
          %v6556 = vsel %vm1682, %v6553, %v6555
          %v6557 = vrot.slane %v6545, 3
          %v6558 = vsel %vm1682, %v6555, %v6557
          %v6559 = vrot.slane %v6546, 3
          %v6560 = vsel %vm1682, %v6557, %v6559
          %v6561 = vrot.slane %v6547, 3
          %v6562 = vsel %vm1682, %v6559, %v6561
          %v6563 = vrot.slane %v6548, 3
          %v6564 = vsel %vm1682, %v6561, %v6563
          %v6565 = vrot.slane %v6549, 3
          %v6566 = vsel %vm1682, %v6563, %v6565
          %v6591 = vunpack.c.l.b16 %v6491
          %v6592 = vunpack.c.l.b16 %v6492
          %v6593 = vunpack.c.l.b16 %v6493
          %v6594 = vunpack.c.l.b16 %v6494
          %v6595 = vunpack.c.l.b16 %v6495
          %v6596 = vunpack.c.l.b16 %v6496
          %v6597 = vunpack.c.l.b16 %v6497
          %v6598 = vunpack.c.l.b16 %v6498
          %v6599 = vunpack.c.l.b16 %v6499
          %v6600 = vunpack.c.l.b16 %v6500
          %v6601 = vunpack.c.l.b16 %v6501
          %v6602 = vunpack.c.l.b16 %v6502
          %v6603 = vunpack.c.l.b16 %v6503
          %v6604 = vunpack.c.l.b16 %v6504
          %v6605 = vunpack.c.l.b16 %v6505
          %v6606 = vunpack.c.l.b16 %v6506
          %v6607 = vpack.c.b16 %v6592, %v6591
          %v6608 = vpack.c.b16 %v6594, %v6593
          %v6609 = vpack.c.b16 %v6596, %v6595
          %v6610 = vpack.c.b16 %v6598, %v6597
          %v6611 = vpack.c.b16 %v6600, %v6599
          %v6612 = vpack.c.b16 %v6602, %v6601
          %v6613 = vpack.c.b16 %v6604, %v6603
          %v6614 = vpack.c.b16 %v6606, %v6605
          %6623 = vmatprep.subr.bf16.mxu0 0
          %6624 = vmatpush1.bf16.msra.mxu0 %v6614
          %6625 = vmatprep.subr.bf16.mxu0 0
          %6626 = vmatpush1.bf16.msra.mxu0 %v6613
          %6627 = vmatprep.subr.bf16.mxu0 0
          %6628 = vmatpush1.bf16.msra.mxu0 %v6612
          %6629 = vmatprep.subr.bf16.mxu0 0
          %6630 = vmatpush1.bf16.msra.mxu0 %v6611
          %6631 = vmatprep.subr.bf16.mxu0 0
          %6632 = vmatpush1.bf16.msra.mxu0 %v6610
          %6633 = vmatprep.subr.bf16.mxu0 0
          %6634 = vmatpush1.bf16.msra.mxu0 %v6609
          %6635 = vmatprep.subr.bf16.mxu0 0
          %6636 = vmatpush1.bf16.msra.mxu0 %v6608
          %6637 = vmatprep.subr.bf16.mxu0 0
          %6638 = vmatpush1.bf16.msra.mxu0 %v6607
          %6639 = vmatprep.subr.bf16.mxu0 0
          %6640 = vmatpush2.bf16.msra.mxu0 0
          %6641 = vmatprep.subr.bf16.mxu0 0
          %6642 = vmatpush2.bf16.msra.mxu0 0
          %6643 = vmatprep.subr.bf16.mxu0 0
          %6644 = vmatpush2.bf16.msra.mxu0 0
          %6645 = vmatprep.subr.bf16.mxu0 0
          %6646 = vmatpush2.bf16.msra.mxu0 0
          %6647 = vmatprep.subr.bf16.mxu0 0
          %6648 = vmatpush2.bf16.msra.mxu0 0
          %6649 = vmatprep.subr.bf16.mxu0 0
          %6650 = vmatpush2.bf16.msra.mxu0 0
          %6651 = vmatprep.subr.bf16.mxu0 0
          %6652 = vmatpush2.bf16.msra.mxu0 0
          %6653 = vmatprep.subr.bf16.mxu0 0
          %6654 = vmatpush2.bf16.msra.mxu0 0
          %6655 = vmatprep.mubr.bf16.mxu0 0
          %6656 = vmatmul.mubr.bf16.gmra.mxu0 %v6552
          %v6657 = vpop.f32.mrf.mxu0
          %v6658 = vadd.f32 0.0, %v6657
          %v6659 = vpop.f32.mrf.mxu0
          %v6660 = vpop.f32.mrf.mxu0
          %v6661 = vadd.f32 0.0, %v6660
          %v6662 = vpop.f32.mrf.mxu0
          %6663 = vmatprep.mubr.bf16.mxu0 0
          %6664 = vmatmul.mubr.bf16.gmra.mxu0 %v6554
          %v6665 = vpop.f32.mrf.mxu0
          %v6666 = vadd.f32 0.0, %v6665
          %v6667 = vpop.f32.mrf.mxu0
          %v6668 = vpop.f32.mrf.mxu0
          %v6669 = vadd.f32 0.0, %v6668
          %v6670 = vpop.f32.mrf.mxu0
          %6671 = vmatprep.mubr.bf16.mxu0 0
          %6672 = vmatmul.mubr.bf16.gmra.mxu0 %v6556
          %v6673 = vpop.f32.mrf.mxu0
          %v6674 = vadd.f32 0.0, %v6673
          %v6675 = vpop.f32.mrf.mxu0
          %v6676 = vpop.f32.mrf.mxu0
          %v6677 = vadd.f32 0.0, %v6676
          %v6678 = vpop.f32.mrf.mxu0
          %6679 = vmatprep.mubr.bf16.mxu0 0
          %6680 = vmatmul.mubr.bf16.gmra.mxu0 %v6558
          %v6681 = vpop.f32.mrf.mxu0
          %v6682 = vadd.f32 0.0, %v6681
          %v6683 = vpop.f32.mrf.mxu0
          %v6684 = vpop.f32.mrf.mxu0
          %v6685 = vadd.f32 0.0, %v6684
          %v6686 = vpop.f32.mrf.mxu0
          %6687 = vmatprep.mubr.bf16.mxu0 0
          %6688 = vmatmul.mubr.bf16.gmra.mxu0 %v6560
          %v6689 = vpop.f32.mrf.mxu0
          %v6690 = vadd.f32 0.0, %v6689
          %v6691 = vpop.f32.mrf.mxu0
          %v6692 = vpop.f32.mrf.mxu0
          %v6693 = vadd.f32 0.0, %v6692
          %v6694 = vpop.f32.mrf.mxu0
          %6695 = vmatprep.mubr.bf16.mxu0 0
          %6696 = vmatmul.mubr.bf16.gmra.mxu0 %v6562
          %v6697 = vpop.f32.mrf.mxu0
          %v6698 = vadd.f32 0.0, %v6697
          %v6699 = vpop.f32.mrf.mxu0
          %v6700 = vpop.f32.mrf.mxu0
          %v6701 = vadd.f32 0.0, %v6700
          %v6702 = vpop.f32.mrf.mxu0
          %6703 = vmatprep.mubr.bf16.mxu0 0
          %6704 = vmatmul.mubr.bf16.gmra.mxu0 %v6564
          %v6705 = vpop.f32.mrf.mxu0
          %v6706 = vadd.f32 0.0, %v6705
          %v6707 = vpop.f32.mrf.mxu0
          %v6708 = vpop.f32.mrf.mxu0
          %v6709 = vadd.f32 0.0, %v6708
          %v6710 = vpop.f32.mrf.mxu0
          %6711 = vmatprep.mubr.bf16.mxu0 0
          %6712 = vmatmul.mubr.bf16.gmra.mxu0 %v6566
          %v6713 = vpop.f32.mrf.mxu0
          %v6714 = vadd.f32 0.0, %v6713
          %v6715 = vpop.f32.mrf.mxu0
          %v6716 = vpop.f32.mrf.mxu0
          %v6717 = vadd.f32 0.0, %v6716
          %v6718 = vpop.f32.mrf.mxu0
          %6719 = vdwg.mxu0
          %v6720 = vadd.f32 %v6458, %v6658
          %v6721 = vadd.f32 %v6459, %v6661
          %v6722 = vadd.f32 %v6460, %v6666
          %v6723 = vadd.f32 %v6461, %v6669
          %v6724 = vadd.f32 %v6462, %v6674
          %v6725 = vadd.f32 %v6463, %v6677
          %v6726 = vadd.f32 %v6464, %v6682
          %v6727 = vadd.f32 %v6465, %v6685
          %v6728 = vadd.f32 %v6466, %v6690
          %v6729 = vadd.f32 %v6467, %v6693
          %v6730 = vadd.f32 %v6468, %v6698
          %v6731 = vadd.f32 %v6469, %v6701
          %v6732 = vadd.f32 %v6470, %v6706
          %v6733 = vadd.f32 %v6471, %v6709
          %v6734 = vadd.f32 %v6472, %v6714
          %v6735 = vadd.f32 %v6473, %v6717
          %v6736 = vld [vmem:[#allocation2 + $0xcc] sm:$0xf]
          %v6737 = vld [vmem:[%s2491] sm:$0xf]
          %v6738 = vld [vmem:[%s2491 + $0x4] sm:$0xf]
          %v6739 = vld [vmem:[%s2491 + $0x8] sm:$0xf]
          %v6740 = vld [vmem:[%s2491 + $0xc] sm:$0xf]
          %v6741 = vld [vmem:[%s2491 + $0x10] sm:$0xf]
          %v6742 = vld [vmem:[%s2491 + $0x14] sm:$0xf]
          %v6743 = vld [vmem:[%s2491 + $0x18] sm:$0xf]
          %v6744 = vld [vmem:[%s2491 + $0x1c] sm:$0xf]
          %v6745 = vld [vmem:[%s2491 + $0x20] sm:$0xf]
          %v6746 = vld [vmem:[%s2491 + $0x24] sm:$0xf]
          %v6747 = vld [vmem:[%s2491 + $0x28] sm:$0xf]
          %v6748 = vld [vmem:[%s2491 + $0x2c] sm:$0xf]
          %v6749 = vld [vmem:[%s2491 + $0x30] sm:$0xf]
          %v6750 = vld [vmem:[%s2491 + $0x34] sm:$0xf]
          %v6751 = vld [vmem:[%s2491 + $0x38] sm:$0xf]
          %v6752 = vld [vmem:[%s2491 + $0x3c] sm:$0xf]
          %v6754 = vunpack.c.l.b16 %v6736
          %v6755 = vpack.c.b16 %v6526, %v6525
          %v6756 = vpack.c.b16 %v6528, %v6527
          %v6757 = vpack.c.b16 %v6530, %v6529
          %v6758 = vpack.c.b16 %v6532, %v6531
          %v6759 = vpack.c.b16 %v6534, %v6533
          %v6760 = vpack.c.b16 %v6536, %v6535
          %v6761 = vpack.c.b16 %v6538, %v6537
          %v6762 = vpack.c.b16 %v6754, %v6539
          %v6787 = vunpack.c.l.b16 %v6737
          %v6788 = vunpack.c.l.b16 %v6738
          %v6789 = vunpack.c.l.b16 %v6739
          %v6790 = vunpack.c.l.b16 %v6740
          %v6791 = vunpack.c.l.b16 %v6741
          %v6792 = vunpack.c.l.b16 %v6742
          %v6793 = vunpack.c.l.b16 %v6743
          %v6794 = vunpack.c.l.b16 %v6744
          %v6795 = vunpack.c.l.b16 %v6745
          %v6796 = vunpack.c.l.b16 %v6746
          %v6797 = vunpack.c.l.b16 %v6747
          %v6798 = vunpack.c.l.b16 %v6748
          %v6799 = vunpack.c.l.b16 %v6749
          %v6800 = vunpack.c.l.b16 %v6750
          %v6801 = vunpack.c.l.b16 %v6751
          %v6802 = vunpack.c.l.b16 %v6752
          %v6803 = vpack.c.b16 %v6788, %v6787
          %v6804 = vpack.c.b16 %v6790, %v6789
          %v6805 = vpack.c.b16 %v6792, %v6791
          %v6806 = vpack.c.b16 %v6794, %v6793
          %v6807 = vpack.c.b16 %v6796, %v6795
          %v6808 = vpack.c.b16 %v6798, %v6797
          %v6809 = vpack.c.b16 %v6800, %v6799
          %v6810 = vpack.c.b16 %v6802, %v6801
          %6819 = vmatprep.subr.bf16.mxu0 0
          %6820 = vmatpush1.bf16.msra.mxu0 %v6810
          %6821 = vmatprep.subr.bf16.mxu0 0
          %6822 = vmatpush1.bf16.msra.mxu0 %v6809
          %6823 = vmatprep.subr.bf16.mxu0 0
          %6824 = vmatpush1.bf16.msra.mxu0 %v6808
          %6825 = vmatprep.subr.bf16.mxu0 0
          %6826 = vmatpush1.bf16.msra.mxu0 %v6807
          %6827 = vmatprep.subr.bf16.mxu0 0
          %6828 = vmatpush1.bf16.msra.mxu0 %v6806
          %6829 = vmatprep.subr.bf16.mxu0 0
          %6830 = vmatpush1.bf16.msra.mxu0 %v6805
          %6831 = vmatprep.subr.bf16.mxu0 0
          %6832 = vmatpush1.bf16.msra.mxu0 %v6804
          %6833 = vmatprep.subr.bf16.mxu0 0
          %6834 = vmatpush1.bf16.msra.mxu0 %v6803
          %6835 = vmatprep.subr.bf16.mxu0 0
          %6836 = vmatpush2.bf16.msra.mxu0 0
          %6837 = vmatprep.subr.bf16.mxu0 0
          %6838 = vmatpush2.bf16.msra.mxu0 0
          %6839 = vmatprep.subr.bf16.mxu0 0
          %6840 = vmatpush2.bf16.msra.mxu0 0
          %6841 = vmatprep.subr.bf16.mxu0 0
          %6842 = vmatpush2.bf16.msra.mxu0 0
          %6843 = vmatprep.subr.bf16.mxu0 0
          %6844 = vmatpush2.bf16.msra.mxu0 0
          %6845 = vmatprep.subr.bf16.mxu0 0
          %6846 = vmatpush2.bf16.msra.mxu0 0
          %6847 = vmatprep.subr.bf16.mxu0 0
          %6848 = vmatpush2.bf16.msra.mxu0 0
          %6849 = vmatprep.subr.bf16.mxu0 0
          %6850 = vmatpush2.bf16.msra.mxu0 0
          %6851 = vmatprep.mubr.bf16.mxu0 0
          %6852 = vmatmul.mubr.bf16.gmra.mxu0 %v6755
          %v6853 = vpop.f32.mrf.mxu0
          %v6854 = vadd.f32 0.0, %v6853
          %v6855 = vpop.f32.mrf.mxu0
          %v6856 = vpop.f32.mrf.mxu0
          %v6857 = vadd.f32 0.0, %v6856
          %v6858 = vpop.f32.mrf.mxu0
          %6859 = vmatprep.mubr.bf16.mxu0 0
          %6860 = vmatmul.mubr.bf16.gmra.mxu0 %v6756
          %v6861 = vpop.f32.mrf.mxu0
          %v6862 = vadd.f32 0.0, %v6861
          %v6863 = vpop.f32.mrf.mxu0
          %v6864 = vpop.f32.mrf.mxu0
          %v6865 = vadd.f32 0.0, %v6864
          %v6866 = vpop.f32.mrf.mxu0
          %6867 = vmatprep.mubr.bf16.mxu0 0
          %6868 = vmatmul.mubr.bf16.gmra.mxu0 %v6757
          %v6869 = vpop.f32.mrf.mxu0
          %v6870 = vadd.f32 0.0, %v6869
          %v6871 = vpop.f32.mrf.mxu0
          %v6872 = vpop.f32.mrf.mxu0
          %v6873 = vadd.f32 0.0, %v6872
          %v6874 = vpop.f32.mrf.mxu0
          %6875 = vmatprep.mubr.bf16.mxu0 0
          %6876 = vmatmul.mubr.bf16.gmra.mxu0 %v6758
          %v6877 = vpop.f32.mrf.mxu0
          %v6878 = vadd.f32 0.0, %v6877
          %v6879 = vpop.f32.mrf.mxu0
          %v6880 = vpop.f32.mrf.mxu0
          %v6881 = vadd.f32 0.0, %v6880
          %v6882 = vpop.f32.mrf.mxu0
          %6883 = vmatprep.mubr.bf16.mxu0 0
          %6884 = vmatmul.mubr.bf16.gmra.mxu0 %v6759
          %v6885 = vpop.f32.mrf.mxu0
          %v6886 = vadd.f32 0.0, %v6885
          %v6887 = vpop.f32.mrf.mxu0
          %v6888 = vpop.f32.mrf.mxu0
          %v6889 = vadd.f32 0.0, %v6888
          %v6890 = vpop.f32.mrf.mxu0
          %6891 = vmatprep.mubr.bf16.mxu0 0
          %6892 = vmatmul.mubr.bf16.gmra.mxu0 %v6760
          %v6893 = vpop.f32.mrf.mxu0
          %v6894 = vadd.f32 0.0, %v6893
          %v6895 = vpop.f32.mrf.mxu0
          %v6896 = vpop.f32.mrf.mxu0
          %v6897 = vadd.f32 0.0, %v6896
          %v6898 = vpop.f32.mrf.mxu0
          %6899 = vmatprep.mubr.bf16.mxu0 0
          %6900 = vmatmul.mubr.bf16.gmra.mxu0 %v6761
          %v6901 = vpop.f32.mrf.mxu0
          %v6902 = vadd.f32 0.0, %v6901
          %v6903 = vpop.f32.mrf.mxu0
          %v6904 = vpop.f32.mrf.mxu0
          %v6905 = vadd.f32 0.0, %v6904
          %v6906 = vpop.f32.mrf.mxu0
          %6907 = vmatprep.mubr.bf16.mxu0 0
          %6908 = vmatmul.mubr.bf16.gmra.mxu0 %v6762
          %v6909 = vpop.f32.mrf.mxu0
          %v6910 = vadd.f32 0.0, %v6909
          %v6911 = vpop.f32.mrf.mxu0
          %v6912 = vpop.f32.mrf.mxu0
          %v6913 = vadd.f32 0.0, %v6912
          %v6914 = vpop.f32.mrf.mxu0
          %6915 = vdwg.mxu0
          %v6916 = vadd.f32 %v6720, %v6854
          %v6917 = vadd.f32 %v6721, %v6857
          %v6918 = vadd.f32 %v6722, %v6862
          %v6919 = vadd.f32 %v6723, %v6865
          %v6920 = vadd.f32 %v6724, %v6870
          %v6921 = vadd.f32 %v6725, %v6873
          %v6922 = vadd.f32 %v6726, %v6878
          %v6923 = vadd.f32 %v6727, %v6881
          %v6924 = vadd.f32 %v6728, %v6886
          %v6925 = vadd.f32 %v6729, %v6889
          %v6926 = vadd.f32 %v6730, %v6894
          %v6927 = vadd.f32 %v6731, %v6897
          %v6928 = vadd.f32 %v6732, %v6902
          %v6929 = vadd.f32 %v6733, %v6905
          %v6930 = vadd.f32 %v6734, %v6910
          %v6931 = vadd.f32 %v6735, %v6913
          %v6932 = vld [vmem:[#allocation2 + $0x90] sm:$0xe]
          %v6933 = vld [vmem:[#allocation2 + $0x94] sm:$0xf]
          %v6934 = vld [vmem:[#allocation2 + $0x98] sm:$0xf]
          %v6935 = vld [vmem:[#allocation2 + $0x9c] sm:$0xf]
          %v6936 = vld [vmem:[#allocation2 + $0xa0] sm:$0xf]
          %v6937 = vld [vmem:[#allocation2 + $0xa4] sm:$0xf]
          %v6938 = vld [vmem:[#allocation2 + $0xa8] sm:$0xf]
          %v6939 = vld [vmem:[#allocation2 + $0xac] sm:$0xf]
          %v6940 = vld [vmem:[#allocation2 + $0xb0] sm:$0xf]
          %v6941 = vld [vmem:[#allocation2 + $0xb4] sm:$0xf]
          %v6942 = vld [vmem:[#allocation2 + $0xb8] sm:$0xf]
          %v6943 = vld [vmem:[#allocation2 + $0xbc] sm:$0xf]
          %v6944 = vld [vmem:[#allocation2 + $0xc0] sm:$0xf]
          %v6945 = vld [vmem:[#allocation2 + $0xc4] sm:$0xf]
          %v6946 = vld [vmem:[#allocation2 + $0xc8] sm:$0xf]
          %v6947 = vld [vmem:[#allocation2 + $0xcc] sm:$0xf]
          %v6948 = vld [vmem:[#allocation2 + $0xd0] sm:$0x1]
          %v6949 = vld [vmem:[%s2704] sm:$0xf]
          %v6950 = vld [vmem:[%s2704 + $0x4] sm:$0xf]
          %v6951 = vld [vmem:[%s2704 + $0x8] sm:$0xf]
          %v6952 = vld [vmem:[%s2704 + $0xc] sm:$0xf]
          %v6953 = vld [vmem:[%s2704 + $0x10] sm:$0xf]
          %v6954 = vld [vmem:[%s2704 + $0x14] sm:$0xf]
          %v6955 = vld [vmem:[%s2704 + $0x18] sm:$0xf]
          %v6956 = vld [vmem:[%s2704 + $0x1c] sm:$0xf]
          %v6957 = vld [vmem:[%s2704 + $0x20] sm:$0xf]
          %v6958 = vld [vmem:[%s2704 + $0x24] sm:$0xf]
          %v6959 = vld [vmem:[%s2704 + $0x28] sm:$0xf]
          %v6960 = vld [vmem:[%s2704 + $0x2c] sm:$0xf]
          %v6961 = vld [vmem:[%s2704 + $0x30] sm:$0xf]
          %v6962 = vld [vmem:[%s2704 + $0x34] sm:$0xf]
          %v6963 = vld [vmem:[%s2704 + $0x38] sm:$0xf]
          %v6964 = vld [vmem:[%s2704 + $0x3c] sm:$0xf]
          %v6982 = vunpack.c.l.b16 %v6932
          %v6983 = vunpack.c.l.b16 %v6933
          %v6984 = vunpack.c.l.b16 %v6934
          %v6985 = vunpack.c.l.b16 %v6935
          %v6986 = vunpack.c.l.b16 %v6936
          %v6987 = vunpack.c.l.b16 %v6937
          %v6988 = vunpack.c.l.b16 %v6938
          %v6989 = vunpack.c.l.b16 %v6939
          %v6990 = vunpack.c.l.b16 %v6940
          %v6991 = vunpack.c.l.b16 %v6941
          %v6992 = vunpack.c.l.b16 %v6942
          %v6993 = vunpack.c.l.b16 %v6943
          %v6994 = vunpack.c.l.b16 %v6944
          %v6995 = vunpack.c.l.b16 %v6945
          %v6996 = vunpack.c.l.b16 %v6946
          %v6997 = vunpack.c.l.b16 %v6947
          %v6998 = vunpack.c.l.b16 %v6948
          %v6999 = vpack.c.b16 %v6983, %v6982
          %v7000 = vpack.c.b16 %v6985, %v6984
          %v7001 = vpack.c.b16 %v6987, %v6986
          %v7002 = vpack.c.b16 %v6989, %v6988
          %v7003 = vpack.c.b16 %v6991, %v6990
          %v7004 = vpack.c.b16 %v6993, %v6992
          %v7005 = vpack.c.b16 %v6995, %v6994
          %v7006 = vpack.c.b16 %v6997, %v6996
          %v7007 = vpack.c.b16 %v6998, %v6998
          %v7008 = vrot.slane %v6999, 1
          %v7009 = vrot.slane %v7000, 1
          %v7010 = vsel %vm2764, %v7008, %v7009
          %v7011 = vrot.slane %v7001, 1
          %v7012 = vsel %vm2764, %v7009, %v7011
          %v7013 = vrot.slane %v7002, 1
          %v7014 = vsel %vm2764, %v7011, %v7013
          %v7015 = vrot.slane %v7003, 1
          %v7016 = vsel %vm2764, %v7013, %v7015
          %v7017 = vrot.slane %v7004, 1
          %v7018 = vsel %vm2764, %v7015, %v7017
          %v7019 = vrot.slane %v7005, 1
          %v7020 = vsel %vm2764, %v7017, %v7019
          %v7021 = vrot.slane %v7006, 1
          %v7022 = vsel %vm2764, %v7019, %v7021
          %v7023 = vrot.slane %v7007, 1
          %v7024 = vsel %vm2764, %v7021, %v7023
          %v7049 = vunpack.c.l.b16 %v6949
          %v7050 = vunpack.c.l.b16 %v6950
          %v7051 = vunpack.c.l.b16 %v6951
          %v7052 = vunpack.c.l.b16 %v6952
          %v7053 = vunpack.c.l.b16 %v6953
          %v7054 = vunpack.c.l.b16 %v6954
          %v7055 = vunpack.c.l.b16 %v6955
          %v7056 = vunpack.c.l.b16 %v6956
          %v7057 = vunpack.c.l.b16 %v6957
          %v7058 = vunpack.c.l.b16 %v6958
          %v7059 = vunpack.c.l.b16 %v6959
          %v7060 = vunpack.c.l.b16 %v6960
          %v7061 = vunpack.c.l.b16 %v6961
          %v7062 = vunpack.c.l.b16 %v6962
          %v7063 = vunpack.c.l.b16 %v6963
          %v7064 = vunpack.c.l.b16 %v6964
          %v7065 = vpack.c.b16 %v7050, %v7049
          %v7066 = vpack.c.b16 %v7052, %v7051
          %v7067 = vpack.c.b16 %v7054, %v7053
          %v7068 = vpack.c.b16 %v7056, %v7055
          %v7069 = vpack.c.b16 %v7058, %v7057
          %v7070 = vpack.c.b16 %v7060, %v7059
          %v7071 = vpack.c.b16 %v7062, %v7061
          %v7072 = vpack.c.b16 %v7064, %v7063
          %7081 = vmatprep.subr.bf16.mxu0 0
          %7082 = vmatpush1.bf16.msra.mxu0 %v7072
          %7083 = vmatprep.subr.bf16.mxu0 0
          %7084 = vmatpush1.bf16.msra.mxu0 %v7071
          %7085 = vmatprep.subr.bf16.mxu0 0
          %7086 = vmatpush1.bf16.msra.mxu0 %v7070
          %7087 = vmatprep.subr.bf16.mxu0 0
          %7088 = vmatpush1.bf16.msra.mxu0 %v7069
          %7089 = vmatprep.subr.bf16.mxu0 0
          %7090 = vmatpush1.bf16.msra.mxu0 %v7068
          %7091 = vmatprep.subr.bf16.mxu0 0
          %7092 = vmatpush1.bf16.msra.mxu0 %v7067
          %7093 = vmatprep.subr.bf16.mxu0 0
          %7094 = vmatpush1.bf16.msra.mxu0 %v7066
          %7095 = vmatprep.subr.bf16.mxu0 0
          %7096 = vmatpush1.bf16.msra.mxu0 %v7065
          %7097 = vmatprep.subr.bf16.mxu0 0
          %7098 = vmatpush2.bf16.msra.mxu0 0
          %7099 = vmatprep.subr.bf16.mxu0 0
          %7100 = vmatpush2.bf16.msra.mxu0 0
          %7101 = vmatprep.subr.bf16.mxu0 0
          %7102 = vmatpush2.bf16.msra.mxu0 0
          %7103 = vmatprep.subr.bf16.mxu0 0
          %7104 = vmatpush2.bf16.msra.mxu0 0
          %7105 = vmatprep.subr.bf16.mxu0 0
          %7106 = vmatpush2.bf16.msra.mxu0 0
          %7107 = vmatprep.subr.bf16.mxu0 0
          %7108 = vmatpush2.bf16.msra.mxu0 0
          %7109 = vmatprep.subr.bf16.mxu0 0
          %7110 = vmatpush2.bf16.msra.mxu0 0
          %7111 = vmatprep.subr.bf16.mxu0 0
          %7112 = vmatpush2.bf16.msra.mxu0 0
          %7113 = vmatprep.mubr.bf16.mxu0 0
          %7114 = vmatmul.mubr.bf16.gmra.mxu0 %v7010
          %v7115 = vpop.f32.mrf.mxu0
          %v7116 = vadd.f32 0.0, %v7115
          %v7117 = vpop.f32.mrf.mxu0
          %v7118 = vpop.f32.mrf.mxu0
          %v7119 = vadd.f32 0.0, %v7118
          %v7120 = vpop.f32.mrf.mxu0
          %7121 = vmatprep.mubr.bf16.mxu0 0
          %7122 = vmatmul.mubr.bf16.gmra.mxu0 %v7012
          %v7123 = vpop.f32.mrf.mxu0
          %v7124 = vadd.f32 0.0, %v7123
          %v7125 = vpop.f32.mrf.mxu0
          %v7126 = vpop.f32.mrf.mxu0
          %v7127 = vadd.f32 0.0, %v7126
          %v7128 = vpop.f32.mrf.mxu0
          %7129 = vmatprep.mubr.bf16.mxu0 0
          %7130 = vmatmul.mubr.bf16.gmra.mxu0 %v7014
          %v7131 = vpop.f32.mrf.mxu0
          %v7132 = vadd.f32 0.0, %v7131
          %v7133 = vpop.f32.mrf.mxu0
          %v7134 = vpop.f32.mrf.mxu0
          %v7135 = vadd.f32 0.0, %v7134
          %v7136 = vpop.f32.mrf.mxu0
          %7137 = vmatprep.mubr.bf16.mxu0 0
          %7138 = vmatmul.mubr.bf16.gmra.mxu0 %v7016
          %v7139 = vpop.f32.mrf.mxu0
          %v7140 = vadd.f32 0.0, %v7139
          %v7141 = vpop.f32.mrf.mxu0
          %v7142 = vpop.f32.mrf.mxu0
          %v7143 = vadd.f32 0.0, %v7142
          %v7144 = vpop.f32.mrf.mxu0
          %7145 = vmatprep.mubr.bf16.mxu0 0
          %7146 = vmatmul.mubr.bf16.gmra.mxu0 %v7018
          %v7147 = vpop.f32.mrf.mxu0
          %v7148 = vadd.f32 0.0, %v7147
          %v7149 = vpop.f32.mrf.mxu0
          %v7150 = vpop.f32.mrf.mxu0
          %v7151 = vadd.f32 0.0, %v7150
          %v7152 = vpop.f32.mrf.mxu0
          %7153 = vmatprep.mubr.bf16.mxu0 0
          %7154 = vmatmul.mubr.bf16.gmra.mxu0 %v7020
          %v7155 = vpop.f32.mrf.mxu0
          %v7156 = vadd.f32 0.0, %v7155
          %v7157 = vpop.f32.mrf.mxu0
          %v7158 = vpop.f32.mrf.mxu0
          %v7159 = vadd.f32 0.0, %v7158
          %v7160 = vpop.f32.mrf.mxu0
          %7161 = vmatprep.mubr.bf16.mxu0 0
          %7162 = vmatmul.mubr.bf16.gmra.mxu0 %v7022
          %v7163 = vpop.f32.mrf.mxu0
          %v7164 = vadd.f32 0.0, %v7163
          %v7165 = vpop.f32.mrf.mxu0
          %v7166 = vpop.f32.mrf.mxu0
          %v7167 = vadd.f32 0.0, %v7166
          %v7168 = vpop.f32.mrf.mxu0
          %7169 = vmatprep.mubr.bf16.mxu0 0
          %7170 = vmatmul.mubr.bf16.gmra.mxu0 %v7024
          %v7171 = vpop.f32.mrf.mxu0
          %v7172 = vadd.f32 0.0, %v7171
          %v7173 = vpop.f32.mrf.mxu0
          %v7174 = vpop.f32.mrf.mxu0
          %v7175 = vadd.f32 0.0, %v7174
          %v7176 = vpop.f32.mrf.mxu0
          %7177 = vdwg.mxu0
          %v7178 = vadd.f32 %v6916, %v7116
          %v7179 = vadd.f32 %v6917, %v7119
          %v7180 = vadd.f32 %v6918, %v7124
          %v7181 = vadd.f32 %v6919, %v7127
          %v7182 = vadd.f32 %v6920, %v7132
          %v7183 = vadd.f32 %v6921, %v7135
          %v7184 = vadd.f32 %v6922, %v7140
          %v7185 = vadd.f32 %v6923, %v7143
          %v7186 = vadd.f32 %v6924, %v7148
          %v7187 = vadd.f32 %v6925, %v7151
          %v7188 = vadd.f32 %v6926, %v7156
          %v7189 = vadd.f32 %v6927, %v7159
          %v7190 = vadd.f32 %v6928, %v7164
          %v7191 = vadd.f32 %v6929, %v7167
          %v7192 = vadd.f32 %v6930, %v7172
          %v7193 = vadd.f32 %v6931, %v7175
          %v7194 = vld [vmem:[#allocation2 + $0x9c] sm:$0xf]
          %v7195 = vld [vmem:[#allocation2 + $0xa0] sm:$0xf]
          %v7196 = vld [vmem:[#allocation2 + $0xa4] sm:$0xf]
          %v7197 = vld [vmem:[#allocation2 + $0xa8] sm:$0xf]
          %v7198 = vld [vmem:[#allocation2 + $0xac] sm:$0xf]
          %v7199 = vld [vmem:[#allocation2 + $0xb0] sm:$0xf]
          %v7200 = vld [vmem:[#allocation2 + $0xb4] sm:$0xf]
          %v7201 = vld [vmem:[#allocation2 + $0xb8] sm:$0xf]
          %v7202 = vld [vmem:[#allocation2 + $0xbc] sm:$0xf]
          %v7203 = vld [vmem:[#allocation2 + $0xc0] sm:$0xf]
          %v7204 = vld [vmem:[#allocation2 + $0xc4] sm:$0xf]
          %v7205 = vld [vmem:[#allocation2 + $0xc8] sm:$0xf]
          %v7206 = vld [vmem:[#allocation2 + $0xcc] sm:$0xf]
          %v7207 = vld [vmem:[#allocation2 + $0xd0] sm:$0xf]
          %v7208 = vld [vmem:[#allocation2 + $0xd4] sm:$0xf]
          %v7209 = vld [vmem:[#allocation2 + $0xd8] sm:$0xf]
          %v7210 = vld [vmem:[%s2967] sm:$0xf]
          %v7211 = vld [vmem:[%s2967 + $0x4] sm:$0xf]
          %v7212 = vld [vmem:[%s2967 + $0x8] sm:$0xf]
          %v7213 = vld [vmem:[%s2967 + $0xc] sm:$0xf]
          %v7214 = vld [vmem:[%s2967 + $0x10] sm:$0xf]
          %v7215 = vld [vmem:[%s2967 + $0x14] sm:$0xf]
          %v7216 = vld [vmem:[%s2967 + $0x18] sm:$0xf]
          %v7217 = vld [vmem:[%s2967 + $0x1c] sm:$0xf]
          %v7218 = vld [vmem:[%s2967 + $0x20] sm:$0xf]
          %v7219 = vld [vmem:[%s2967 + $0x24] sm:$0xf]
          %v7220 = vld [vmem:[%s2967 + $0x28] sm:$0xf]
          %v7221 = vld [vmem:[%s2967 + $0x2c] sm:$0xf]
          %v7222 = vld [vmem:[%s2967 + $0x30] sm:$0xf]
          %v7223 = vld [vmem:[%s2967 + $0x34] sm:$0xf]
          %v7224 = vld [vmem:[%s2967 + $0x38] sm:$0xf]
          %v7225 = vld [vmem:[%s2967 + $0x3c] sm:$0xf]
          %v7242 = vunpack.c.l.b16 %v7194
          %v7243 = vunpack.c.l.b16 %v7195
          %v7244 = vunpack.c.l.b16 %v7196
          %v7245 = vunpack.c.l.b16 %v7197
          %v7246 = vunpack.c.l.b16 %v7198
          %v7247 = vunpack.c.l.b16 %v7199
          %v7248 = vunpack.c.l.b16 %v7200
          %v7249 = vunpack.c.l.b16 %v7201
          %v7250 = vunpack.c.l.b16 %v7202
          %v7251 = vunpack.c.l.b16 %v7203
          %v7252 = vunpack.c.l.b16 %v7204
          %v7253 = vunpack.c.l.b16 %v7205
          %v7254 = vunpack.c.l.b16 %v7206
          %v7255 = vunpack.c.l.b16 %v7207
          %v7256 = vunpack.c.l.b16 %v7208
          %v7257 = vunpack.c.l.b16 %v7209
          %v7258 = vpack.c.b16 %v7243, %v7242
          %v7259 = vpack.c.b16 %v7245, %v7244
          %v7260 = vpack.c.b16 %v7247, %v7246
          %v7261 = vpack.c.b16 %v7249, %v7248
          %v7262 = vpack.c.b16 %v7251, %v7250
          %v7263 = vpack.c.b16 %v7253, %v7252
          %v7264 = vpack.c.b16 %v7255, %v7254
          %v7265 = vpack.c.b16 %v7257, %v7256
          %v7290 = vunpack.c.l.b16 %v7210
          %v7291 = vunpack.c.l.b16 %v7211
          %v7292 = vunpack.c.l.b16 %v7212
          %v7293 = vunpack.c.l.b16 %v7213
          %v7294 = vunpack.c.l.b16 %v7214
          %v7295 = vunpack.c.l.b16 %v7215
          %v7296 = vunpack.c.l.b16 %v7216
          %v7297 = vunpack.c.l.b16 %v7217
          %v7298 = vunpack.c.l.b16 %v7218
          %v7299 = vunpack.c.l.b16 %v7219
          %v7300 = vunpack.c.l.b16 %v7220
          %v7301 = vunpack.c.l.b16 %v7221
          %v7302 = vunpack.c.l.b16 %v7222
          %v7303 = vunpack.c.l.b16 %v7223
          %v7304 = vunpack.c.l.b16 %v7224
          %v7305 = vunpack.c.l.b16 %v7225
          %v7306 = vpack.c.b16 %v7291, %v7290
          %v7307 = vpack.c.b16 %v7293, %v7292
          %v7308 = vpack.c.b16 %v7295, %v7294
          %v7309 = vpack.c.b16 %v7297, %v7296
          %v7310 = vpack.c.b16 %v7299, %v7298
          %v7311 = vpack.c.b16 %v7301, %v7300
          %v7312 = vpack.c.b16 %v7303, %v7302
          %v7313 = vpack.c.b16 %v7305, %v7304
          %7322 = vmatprep.subr.bf16.mxu0 0
          %7323 = vmatpush1.bf16.msra.mxu0 %v7313
          %7324 = vmatprep.subr.bf16.mxu0 0
          %7325 = vmatpush1.bf16.msra.mxu0 %v7312
          %7326 = vmatprep.subr.bf16.mxu0 0
          %7327 = vmatpush1.bf16.msra.mxu0 %v7311
          %7328 = vmatprep.subr.bf16.mxu0 0
          %7329 = vmatpush1.bf16.msra.mxu0 %v7310
          %7330 = vmatprep.subr.bf16.mxu0 0
          %7331 = vmatpush1.bf16.msra.mxu0 %v7309
          %7332 = vmatprep.subr.bf16.mxu0 0
          %7333 = vmatpush1.bf16.msra.mxu0 %v7308
          %7334 = vmatprep.subr.bf16.mxu0 0
          %7335 = vmatpush1.bf16.msra.mxu0 %v7307
          %7336 = vmatprep.subr.bf16.mxu0 0
          %7337 = vmatpush1.bf16.msra.mxu0 %v7306
          %7338 = vmatprep.subr.bf16.mxu0 0
          %7339 = vmatpush2.bf16.msra.mxu0 0
          %7340 = vmatprep.subr.bf16.mxu0 0
          %7341 = vmatpush2.bf16.msra.mxu0 0
          %7342 = vmatprep.subr.bf16.mxu0 0
          %7343 = vmatpush2.bf16.msra.mxu0 0
          %7344 = vmatprep.subr.bf16.mxu0 0
          %7345 = vmatpush2.bf16.msra.mxu0 0
          %7346 = vmatprep.subr.bf16.mxu0 0
          %7347 = vmatpush2.bf16.msra.mxu0 0
          %7348 = vmatprep.subr.bf16.mxu0 0
          %7349 = vmatpush2.bf16.msra.mxu0 0
          %7350 = vmatprep.subr.bf16.mxu0 0
          %7351 = vmatpush2.bf16.msra.mxu0 0
          %7352 = vmatprep.subr.bf16.mxu0 0
          %7353 = vmatpush2.bf16.msra.mxu0 0
          %7354 = vmatprep.mubr.bf16.mxu0 0
          %7355 = vmatmul.mubr.bf16.gmra.mxu0 %v7258
          %v7356 = vpop.f32.mrf.mxu0
          %v7357 = vadd.f32 0.0, %v7356
          %v7358 = vpop.f32.mrf.mxu0
          %v7359 = vpop.f32.mrf.mxu0
          %v7360 = vadd.f32 0.0, %v7359
          %v7361 = vpop.f32.mrf.mxu0
          %7362 = vmatprep.mubr.bf16.mxu0 0
          %7363 = vmatmul.mubr.bf16.gmra.mxu0 %v7259
          %v7364 = vpop.f32.mrf.mxu0
          %v7365 = vadd.f32 0.0, %v7364
          %v7366 = vpop.f32.mrf.mxu0
          %v7367 = vpop.f32.mrf.mxu0
          %v7368 = vadd.f32 0.0, %v7367
          %v7369 = vpop.f32.mrf.mxu0
          %7370 = vmatprep.mubr.bf16.mxu0 0
          %7371 = vmatmul.mubr.bf16.gmra.mxu0 %v7260
          %v7372 = vpop.f32.mrf.mxu0
          %v7373 = vadd.f32 0.0, %v7372
          %v7374 = vpop.f32.mrf.mxu0
          %v7375 = vpop.f32.mrf.mxu0
          %v7376 = vadd.f32 0.0, %v7375
          %v7377 = vpop.f32.mrf.mxu0
          %7378 = vmatprep.mubr.bf16.mxu0 0
          %7379 = vmatmul.mubr.bf16.gmra.mxu0 %v7261
          %v7380 = vpop.f32.mrf.mxu0
          %v7381 = vadd.f32 0.0, %v7380
          %v7382 = vpop.f32.mrf.mxu0
          %v7383 = vpop.f32.mrf.mxu0
          %v7384 = vadd.f32 0.0, %v7383
          %v7385 = vpop.f32.mrf.mxu0
          %7386 = vmatprep.mubr.bf16.mxu0 0
          %7387 = vmatmul.mubr.bf16.gmra.mxu0 %v7262
          %v7388 = vpop.f32.mrf.mxu0
          %v7389 = vadd.f32 0.0, %v7388
          %v7390 = vpop.f32.mrf.mxu0
          %v7391 = vpop.f32.mrf.mxu0
          %v7392 = vadd.f32 0.0, %v7391
          %v7393 = vpop.f32.mrf.mxu0
          %7394 = vmatprep.mubr.bf16.mxu0 0
          %7395 = vmatmul.mubr.bf16.gmra.mxu0 %v7263
          %v7396 = vpop.f32.mrf.mxu0
          %v7397 = vadd.f32 0.0, %v7396
          %v7398 = vpop.f32.mrf.mxu0
          %v7399 = vpop.f32.mrf.mxu0
          %v7400 = vadd.f32 0.0, %v7399
          %v7401 = vpop.f32.mrf.mxu0
          %7402 = vmatprep.mubr.bf16.mxu0 0
          %7403 = vmatmul.mubr.bf16.gmra.mxu0 %v7264
          %v7404 = vpop.f32.mrf.mxu0
          %v7405 = vadd.f32 0.0, %v7404
          %v7406 = vpop.f32.mrf.mxu0
          %v7407 = vpop.f32.mrf.mxu0
          %v7408 = vadd.f32 0.0, %v7407
          %v7409 = vpop.f32.mrf.mxu0
          %7410 = vmatprep.mubr.bf16.mxu0 0
          %7411 = vmatmul.mubr.bf16.gmra.mxu0 %v7265
          %v7412 = vpop.f32.mrf.mxu0
          %v7413 = vadd.f32 0.0, %v7412
          %v7414 = vpop.f32.mrf.mxu0
          %v7415 = vpop.f32.mrf.mxu0
          %v7416 = vadd.f32 0.0, %v7415
          %v7417 = vpop.f32.mrf.mxu0
          %7418 = vdwg.mxu0
          %v7419 = vadd.f32 %v7178, %v7357
          %v7420 = vadd.f32 %v7179, %v7360
          %v7421 = vadd.f32 %v7180, %v7365
          %v7422 = vadd.f32 %v7181, %v7368
          %v7423 = vadd.f32 %v7182, %v7373
          %v7424 = vadd.f32 %v7183, %v7376
          %v7425 = vadd.f32 %v7184, %v7381
          %v7426 = vadd.f32 %v7185, %v7384
          %v7427 = vadd.f32 %v7186, %v7389
          %v7428 = vadd.f32 %v7187, %v7392
          %v7429 = vadd.f32 %v7188, %v7397
          %v7430 = vadd.f32 %v7189, %v7400
          %v7431 = vadd.f32 %v7190, %v7405
          %v7432 = vadd.f32 %v7191, %v7408
          %v7433 = vadd.f32 %v7192, %v7413
          %v7434 = vadd.f32 %v7193, %v7416
          %v7435 = vld [vmem:[#allocation2 + $0x9c] sm:$0xe]
          %v7436 = vld [vmem:[#allocation2 + $0xa0] sm:$0xf]
          %v7437 = vld [vmem:[#allocation2 + $0xa4] sm:$0xf]
          %v7438 = vld [vmem:[#allocation2 + $0xa8] sm:$0xf]
          %v7439 = vld [vmem:[#allocation2 + $0xac] sm:$0xf]
          %v7440 = vld [vmem:[#allocation2 + $0xb0] sm:$0xf]
          %v7441 = vld [vmem:[#allocation2 + $0xb4] sm:$0xf]
          %v7442 = vld [vmem:[#allocation2 + $0xb8] sm:$0xf]
          %v7443 = vld [vmem:[#allocation2 + $0xbc] sm:$0xf]
          %v7444 = vld [vmem:[#allocation2 + $0xc0] sm:$0xf]
          %v7445 = vld [vmem:[#allocation2 + $0xc4] sm:$0xf]
          %v7446 = vld [vmem:[#allocation2 + $0xc8] sm:$0xf]
          %v7447 = vld [vmem:[#allocation2 + $0xcc] sm:$0xf]
          %v7448 = vld [vmem:[#allocation2 + $0xd0] sm:$0xf]
          %v7449 = vld [vmem:[#allocation2 + $0xd4] sm:$0xf]
          %v7450 = vld [vmem:[#allocation2 + $0xd8] sm:$0xf]
          %v7451 = vld [vmem:[#allocation2 + $0xdc] sm:$0x1]
          %v7452 = vld [vmem:[%s3210] sm:$0xf]
          %v7453 = vld [vmem:[%s3210 + $0x4] sm:$0xf]
          %v7454 = vld [vmem:[%s3210 + $0x8] sm:$0xf]
          %v7455 = vld [vmem:[%s3210 + $0xc] sm:$0xf]
          %v7456 = vld [vmem:[%s3210 + $0x10] sm:$0xf]
          %v7457 = vld [vmem:[%s3210 + $0x14] sm:$0xf]
          %v7458 = vld [vmem:[%s3210 + $0x18] sm:$0xf]
          %v7459 = vld [vmem:[%s3210 + $0x1c] sm:$0xf]
          %v7460 = vld [vmem:[%s3210 + $0x20] sm:$0xf]
          %v7461 = vld [vmem:[%s3210 + $0x24] sm:$0xf]
          %v7462 = vld [vmem:[%s3210 + $0x28] sm:$0xf]
          %v7463 = vld [vmem:[%s3210 + $0x2c] sm:$0xf]
          %v7464 = vld [vmem:[%s3210 + $0x30] sm:$0xf]
          %v7465 = vld [vmem:[%s3210 + $0x34] sm:$0xf]
          %v7466 = vld [vmem:[%s3210 + $0x38] sm:$0xf]
          %v7467 = vld [vmem:[%s3210 + $0x3c] sm:$0xf]
          %v7485 = vunpack.c.l.b16 %v7435
          %v7486 = vunpack.c.l.b16 %v7436
          %v7487 = vunpack.c.l.b16 %v7437
          %v7488 = vunpack.c.l.b16 %v7438
          %v7489 = vunpack.c.l.b16 %v7439
          %v7490 = vunpack.c.l.b16 %v7440
          %v7491 = vunpack.c.l.b16 %v7441
          %v7492 = vunpack.c.l.b16 %v7442
          %v7493 = vunpack.c.l.b16 %v7443
          %v7494 = vunpack.c.l.b16 %v7444
          %v7495 = vunpack.c.l.b16 %v7445
          %v7496 = vunpack.c.l.b16 %v7446
          %v7497 = vunpack.c.l.b16 %v7447
          %v7498 = vunpack.c.l.b16 %v7448
          %v7499 = vunpack.c.l.b16 %v7449
          %v7500 = vunpack.c.l.b16 %v7450
          %v7501 = vunpack.c.l.b16 %v7451
          %v7502 = vpack.c.b16 %v7486, %v7485
          %v7503 = vpack.c.b16 %v7488, %v7487
          %v7504 = vpack.c.b16 %v7490, %v7489
          %v7505 = vpack.c.b16 %v7492, %v7491
          %v7506 = vpack.c.b16 %v7494, %v7493
          %v7507 = vpack.c.b16 %v7496, %v7495
          %v7508 = vpack.c.b16 %v7498, %v7497
          %v7509 = vpack.c.b16 %v7500, %v7499
          %v7510 = vpack.c.b16 %v7501, %v7501
          %v7511 = vrot.slane %v7502, 1
          %v7512 = vrot.slane %v7503, 1
          %v7513 = vsel %vm2764, %v7511, %v7512
          %v7514 = vrot.slane %v7504, 1
          %v7515 = vsel %vm2764, %v7512, %v7514
          %v7516 = vrot.slane %v7505, 1
          %v7517 = vsel %vm2764, %v7514, %v7516
          %v7518 = vrot.slane %v7506, 1
          %v7519 = vsel %vm2764, %v7516, %v7518
          %v7520 = vrot.slane %v7507, 1
          %v7521 = vsel %vm2764, %v7518, %v7520
          %v7522 = vrot.slane %v7508, 1
          %v7523 = vsel %vm2764, %v7520, %v7522
          %v7524 = vrot.slane %v7509, 1
          %v7525 = vsel %vm2764, %v7522, %v7524
          %v7526 = vrot.slane %v7510, 1
          %v7527 = vsel %vm2764, %v7524, %v7526
          %v7552 = vunpack.c.l.b16 %v7452
          %v7553 = vunpack.c.l.b16 %v7453
          %v7554 = vunpack.c.l.b16 %v7454
          %v7555 = vunpack.c.l.b16 %v7455
          %v7556 = vunpack.c.l.b16 %v7456
          %v7557 = vunpack.c.l.b16 %v7457
          %v7558 = vunpack.c.l.b16 %v7458
          %v7559 = vunpack.c.l.b16 %v7459
          %v7560 = vunpack.c.l.b16 %v7460
          %v7561 = vunpack.c.l.b16 %v7461
          %v7562 = vunpack.c.l.b16 %v7462
          %v7563 = vunpack.c.l.b16 %v7463
          %v7564 = vunpack.c.l.b16 %v7464
          %v7565 = vunpack.c.l.b16 %v7465
          %v7566 = vunpack.c.l.b16 %v7466
          %v7567 = vunpack.c.l.b16 %v7467
          %v7568 = vpack.c.b16 %v7553, %v7552
          %v7569 = vpack.c.b16 %v7555, %v7554
          %v7570 = vpack.c.b16 %v7557, %v7556
          %v7571 = vpack.c.b16 %v7559, %v7558
          %v7572 = vpack.c.b16 %v7561, %v7560
          %v7573 = vpack.c.b16 %v7563, %v7562
          %v7574 = vpack.c.b16 %v7565, %v7564
          %v7575 = vpack.c.b16 %v7567, %v7566
          %7584 = vmatprep.subr.bf16.mxu0 0
          %7585 = vmatpush1.bf16.msra.mxu0 %v7575
          %7586 = vmatprep.subr.bf16.mxu0 0
          %7587 = vmatpush1.bf16.msra.mxu0 %v7574
          %7588 = vmatprep.subr.bf16.mxu0 0
          %7589 = vmatpush1.bf16.msra.mxu0 %v7573
          %7590 = vmatprep.subr.bf16.mxu0 0
          %7591 = vmatpush1.bf16.msra.mxu0 %v7572
          %7592 = vmatprep.subr.bf16.mxu0 0
          %7593 = vmatpush1.bf16.msra.mxu0 %v7571
          %7594 = vmatprep.subr.bf16.mxu0 0
          %7595 = vmatpush1.bf16.msra.mxu0 %v7570
          %7596 = vmatprep.subr.bf16.mxu0 0
          %7597 = vmatpush1.bf16.msra.mxu0 %v7569
          %7598 = vmatprep.subr.bf16.mxu0 0
          %7599 = vmatpush1.bf16.msra.mxu0 %v7568
          %7600 = vmatprep.subr.bf16.mxu0 0
          %7601 = vmatpush2.bf16.msra.mxu0 0
          %7602 = vmatprep.subr.bf16.mxu0 0
          %7603 = vmatpush2.bf16.msra.mxu0 0
          %7604 = vmatprep.subr.bf16.mxu0 0
          %7605 = vmatpush2.bf16.msra.mxu0 0
          %7606 = vmatprep.subr.bf16.mxu0 0
          %7607 = vmatpush2.bf16.msra.mxu0 0
          %7608 = vmatprep.subr.bf16.mxu0 0
          %7609 = vmatpush2.bf16.msra.mxu0 0
          %7610 = vmatprep.subr.bf16.mxu0 0
          %7611 = vmatpush2.bf16.msra.mxu0 0
          %7612 = vmatprep.subr.bf16.mxu0 0
          %7613 = vmatpush2.bf16.msra.mxu0 0
          %7614 = vmatprep.subr.bf16.mxu0 0
          %7615 = vmatpush2.bf16.msra.mxu0 0
          %7616 = vmatprep.mubr.bf16.mxu0 0
          %7617 = vmatmul.mubr.bf16.gmra.mxu0 %v7513
          %v7618 = vpop.f32.mrf.mxu0
          %v7619 = vadd.f32 0.0, %v7618
          %v7620 = vpop.f32.mrf.mxu0
          %v7621 = vpop.f32.mrf.mxu0
          %v7622 = vadd.f32 0.0, %v7621
          %v7623 = vpop.f32.mrf.mxu0
          %7624 = vmatprep.mubr.bf16.mxu0 0
          %7625 = vmatmul.mubr.bf16.gmra.mxu0 %v7515
          %v7626 = vpop.f32.mrf.mxu0
          %v7627 = vadd.f32 0.0, %v7626
          %v7628 = vpop.f32.mrf.mxu0
          %v7629 = vpop.f32.mrf.mxu0
          %v7630 = vadd.f32 0.0, %v7629
          %v7631 = vpop.f32.mrf.mxu0
          %7632 = vmatprep.mubr.bf16.mxu0 0
          %7633 = vmatmul.mubr.bf16.gmra.mxu0 %v7517
          %v7634 = vpop.f32.mrf.mxu0
          %v7635 = vadd.f32 0.0, %v7634
          %v7636 = vpop.f32.mrf.mxu0
          %v7637 = vpop.f32.mrf.mxu0
          %v7638 = vadd.f32 0.0, %v7637
          %v7639 = vpop.f32.mrf.mxu0
          %7640 = vmatprep.mubr.bf16.mxu0 0
          %7641 = vmatmul.mubr.bf16.gmra.mxu0 %v7519
          %v7642 = vpop.f32.mrf.mxu0
          %v7643 = vadd.f32 0.0, %v7642
          %v7644 = vpop.f32.mrf.mxu0
          %v7645 = vpop.f32.mrf.mxu0
          %v7646 = vadd.f32 0.0, %v7645
          %v7647 = vpop.f32.mrf.mxu0
          %7648 = vmatprep.mubr.bf16.mxu0 0
          %7649 = vmatmul.mubr.bf16.gmra.mxu0 %v7521
          %v7650 = vpop.f32.mrf.mxu0
          %v7651 = vadd.f32 0.0, %v7650
          %v7652 = vpop.f32.mrf.mxu0
          %v7653 = vpop.f32.mrf.mxu0
          %v7654 = vadd.f32 0.0, %v7653
          %v7655 = vpop.f32.mrf.mxu0
          %7656 = vmatprep.mubr.bf16.mxu0 0
          %7657 = vmatmul.mubr.bf16.gmra.mxu0 %v7523
          %v7658 = vpop.f32.mrf.mxu0
          %v7659 = vadd.f32 0.0, %v7658
          %v7660 = vpop.f32.mrf.mxu0
          %v7661 = vpop.f32.mrf.mxu0
          %v7662 = vadd.f32 0.0, %v7661
          %v7663 = vpop.f32.mrf.mxu0
          %7664 = vmatprep.mubr.bf16.mxu0 0
          %7665 = vmatmul.mubr.bf16.gmra.mxu0 %v7525
          %v7666 = vpop.f32.mrf.mxu0
          %v7667 = vadd.f32 0.0, %v7666
          %v7668 = vpop.f32.mrf.mxu0
          %v7669 = vpop.f32.mrf.mxu0
          %v7670 = vadd.f32 0.0, %v7669
          %v7671 = vpop.f32.mrf.mxu0
          %7672 = vmatprep.mubr.bf16.mxu0 0
          %7673 = vmatmul.mubr.bf16.gmra.mxu0 %v7527
          %v7674 = vpop.f32.mrf.mxu0
          %v7675 = vadd.f32 0.0, %v7674
          %v7676 = vpop.f32.mrf.mxu0
          %v7677 = vpop.f32.mrf.mxu0
          %v7678 = vadd.f32 0.0, %v7677
          %v7679 = vpop.f32.mrf.mxu0
          %7680 = vdwg.mxu0
          %v7681 = vadd.f32 %v7419, %v7619
          %v7682 = vadd.f32 %v7420, %v7622
          %v7683 = vadd.f32 %v7421, %v7627
          %v7684 = vadd.f32 %v7422, %v7630
          %v7685 = vadd.f32 %v7423, %v7635
          %v7686 = vadd.f32 %v7424, %v7638
          %v7687 = vadd.f32 %v7425, %v7643
          %v7688 = vadd.f32 %v7426, %v7646
          %v7689 = vadd.f32 %v7427, %v7651
          %v7690 = vadd.f32 %v7428, %v7654
          %v7691 = vadd.f32 %v7429, %v7659
          %v7692 = vadd.f32 %v7430, %v7662
          %v7693 = vadd.f32 %v7431, %v7667
          %v7694 = vadd.f32 %v7432, %v7670
          %v7695 = vadd.f32 %v7433, %v7675
          %v7696 = vadd.f32 %v7434, %v7678
          %v7697 = vld [vmem:[#allocation2 + $0x9c] sm:$0xc]
          %v7698 = vld [vmem:[#allocation2 + $0xdc] sm:$0x3]
          %v7699 = vld [vmem:[%s3458] sm:$0xf]
          %v7700 = vld [vmem:[%s3458 + $0x4] sm:$0xf]
          %v7701 = vld [vmem:[%s3458 + $0x8] sm:$0xf]
          %v7702 = vld [vmem:[%s3458 + $0xc] sm:$0xf]
          %v7703 = vld [vmem:[%s3458 + $0x10] sm:$0xf]
          %v7704 = vld [vmem:[%s3458 + $0x14] sm:$0xf]
          %v7705 = vld [vmem:[%s3458 + $0x18] sm:$0xf]
          %v7706 = vld [vmem:[%s3458 + $0x1c] sm:$0xf]
          %v7707 = vld [vmem:[%s3458 + $0x20] sm:$0xf]
          %v7708 = vld [vmem:[%s3458 + $0x24] sm:$0xf]
          %v7709 = vld [vmem:[%s3458 + $0x28] sm:$0xf]
          %v7710 = vld [vmem:[%s3458 + $0x2c] sm:$0xf]
          %v7711 = vld [vmem:[%s3458 + $0x30] sm:$0xf]
          %v7712 = vld [vmem:[%s3458 + $0x34] sm:$0xf]
          %v7713 = vld [vmem:[%s3458 + $0x38] sm:$0xf]
          %v7714 = vld [vmem:[%s3458 + $0x3c] sm:$0xf]
          %v7717 = vunpack.c.l.b16 %v7697
          %v7718 = vunpack.c.l.b16 %v7698
          %v7719 = vpack.c.b16 %v7486, %v7717
          %v7720 = vpack.c.b16 %v7718, %v7718
          %v7721 = vrot.slane %v7719, 2
          %v7722 = vrot.slane %v7503, 2
          %v7723 = vsel %vm1859, %v7721, %v7722
          %v7724 = vrot.slane %v7504, 2
          %v7725 = vsel %vm1859, %v7722, %v7724
          %v7726 = vrot.slane %v7505, 2
          %v7727 = vsel %vm1859, %v7724, %v7726
          %v7728 = vrot.slane %v7506, 2
          %v7729 = vsel %vm1859, %v7726, %v7728
          %v7730 = vrot.slane %v7507, 2
          %v7731 = vsel %vm1859, %v7728, %v7730
          %v7732 = vrot.slane %v7508, 2
          %v7733 = vsel %vm1859, %v7730, %v7732
          %v7734 = vrot.slane %v7509, 2
          %v7735 = vsel %vm1859, %v7732, %v7734
          %v7736 = vrot.slane %v7720, 2
          %v7737 = vsel %vm1859, %v7734, %v7736
          %v7762 = vunpack.c.l.b16 %v7699
          %v7763 = vunpack.c.l.b16 %v7700
          %v7764 = vunpack.c.l.b16 %v7701
          %v7765 = vunpack.c.l.b16 %v7702
          %v7766 = vunpack.c.l.b16 %v7703
          %v7767 = vunpack.c.l.b16 %v7704
          %v7768 = vunpack.c.l.b16 %v7705
          %v7769 = vunpack.c.l.b16 %v7706
          %v7770 = vunpack.c.l.b16 %v7707
          %v7771 = vunpack.c.l.b16 %v7708
          %v7772 = vunpack.c.l.b16 %v7709
          %v7773 = vunpack.c.l.b16 %v7710
          %v7774 = vunpack.c.l.b16 %v7711
          %v7775 = vunpack.c.l.b16 %v7712
          %v7776 = vunpack.c.l.b16 %v7713
          %v7777 = vunpack.c.l.b16 %v7714
          %v7778 = vpack.c.b16 %v7763, %v7762
          %v7779 = vpack.c.b16 %v7765, %v7764
          %v7780 = vpack.c.b16 %v7767, %v7766
          %v7781 = vpack.c.b16 %v7769, %v7768
          %v7782 = vpack.c.b16 %v7771, %v7770
          %v7783 = vpack.c.b16 %v7773, %v7772
          %v7784 = vpack.c.b16 %v7775, %v7774
          %v7785 = vpack.c.b16 %v7777, %v7776
          %7794 = vmatprep.subr.bf16.mxu0 0
          %7795 = vmatpush1.bf16.msra.mxu0 %v7785
          %7796 = vmatprep.subr.bf16.mxu0 0
          %7797 = vmatpush1.bf16.msra.mxu0 %v7784
          %7798 = vmatprep.subr.bf16.mxu0 0
          %7799 = vmatpush1.bf16.msra.mxu0 %v7783
          %7800 = vmatprep.subr.bf16.mxu0 0
          %7801 = vmatpush1.bf16.msra.mxu0 %v7782
          %7802 = vmatprep.subr.bf16.mxu0 0
          %7803 = vmatpush1.bf16.msra.mxu0 %v7781
          %7804 = vmatprep.subr.bf16.mxu0 0
          %7805 = vmatpush1.bf16.msra.mxu0 %v7780
          %7806 = vmatprep.subr.bf16.mxu0 0
          %7807 = vmatpush1.bf16.msra.mxu0 %v7779
          %7808 = vmatprep.subr.bf16.mxu0 0
          %7809 = vmatpush1.bf16.msra.mxu0 %v7778
          %7810 = vmatprep.subr.bf16.mxu0 0
          %7811 = vmatpush2.bf16.msra.mxu0 0
          %7812 = vmatprep.subr.bf16.mxu0 0
          %7813 = vmatpush2.bf16.msra.mxu0 0
          %7814 = vmatprep.subr.bf16.mxu0 0
          %7815 = vmatpush2.bf16.msra.mxu0 0
          %7816 = vmatprep.subr.bf16.mxu0 0
          %7817 = vmatpush2.bf16.msra.mxu0 0
          %7818 = vmatprep.subr.bf16.mxu0 0
          %7819 = vmatpush2.bf16.msra.mxu0 0
          %7820 = vmatprep.subr.bf16.mxu0 0
          %7821 = vmatpush2.bf16.msra.mxu0 0
          %7822 = vmatprep.subr.bf16.mxu0 0
          %7823 = vmatpush2.bf16.msra.mxu0 0
          %7824 = vmatprep.subr.bf16.mxu0 0
          %7825 = vmatpush2.bf16.msra.mxu0 0
          %7826 = vmatprep.mubr.bf16.mxu0 0
          %7827 = vmatmul.mubr.bf16.gmra.mxu0 %v7723
          %v7828 = vpop.f32.mrf.mxu0
          %v7829 = vadd.f32 0.0, %v7828
          %v7830 = vpop.f32.mrf.mxu0
          %v7831 = vpop.f32.mrf.mxu0
          %v7832 = vadd.f32 0.0, %v7831
          %v7833 = vpop.f32.mrf.mxu0
          %7834 = vmatprep.mubr.bf16.mxu0 0
          %7835 = vmatmul.mubr.bf16.gmra.mxu0 %v7725
          %v7836 = vpop.f32.mrf.mxu0
          %v7837 = vadd.f32 0.0, %v7836
          %v7838 = vpop.f32.mrf.mxu0
          %v7839 = vpop.f32.mrf.mxu0
          %v7840 = vadd.f32 0.0, %v7839
          %v7841 = vpop.f32.mrf.mxu0
          %7842 = vmatprep.mubr.bf16.mxu0 0
          %7843 = vmatmul.mubr.bf16.gmra.mxu0 %v7727
          %v7844 = vpop.f32.mrf.mxu0
          %v7845 = vadd.f32 0.0, %v7844
          %v7846 = vpop.f32.mrf.mxu0
          %v7847 = vpop.f32.mrf.mxu0
          %v7848 = vadd.f32 0.0, %v7847
          %v7849 = vpop.f32.mrf.mxu0
          %7850 = vmatprep.mubr.bf16.mxu0 0
          %7851 = vmatmul.mubr.bf16.gmra.mxu0 %v7729
          %v7852 = vpop.f32.mrf.mxu0
          %v7853 = vadd.f32 0.0, %v7852
          %v7854 = vpop.f32.mrf.mxu0
          %v7855 = vpop.f32.mrf.mxu0
          %v7856 = vadd.f32 0.0, %v7855
          %v7857 = vpop.f32.mrf.mxu0
          %7858 = vmatprep.mubr.bf16.mxu0 0
          %7859 = vmatmul.mubr.bf16.gmra.mxu0 %v7731
          %v7860 = vpop.f32.mrf.mxu0
          %v7861 = vadd.f32 0.0, %v7860
          %v7862 = vpop.f32.mrf.mxu0
          %v7863 = vpop.f32.mrf.mxu0
          %v7864 = vadd.f32 0.0, %v7863
          %v7865 = vpop.f32.mrf.mxu0
          %7866 = vmatprep.mubr.bf16.mxu0 0
          %7867 = vmatmul.mubr.bf16.gmra.mxu0 %v7733
          %v7868 = vpop.f32.mrf.mxu0
          %v7869 = vadd.f32 0.0, %v7868
          %v7870 = vpop.f32.mrf.mxu0
          %v7871 = vpop.f32.mrf.mxu0
          %v7872 = vadd.f32 0.0, %v7871
          %v7873 = vpop.f32.mrf.mxu0
          %7874 = vmatprep.mubr.bf16.mxu0 0
          %7875 = vmatmul.mubr.bf16.gmra.mxu0 %v7735
          %v7876 = vpop.f32.mrf.mxu0
          %v7877 = vadd.f32 0.0, %v7876
          %v7878 = vpop.f32.mrf.mxu0
          %v7879 = vpop.f32.mrf.mxu0
          %v7880 = vadd.f32 0.0, %v7879
          %v7881 = vpop.f32.mrf.mxu0
          %7882 = vmatprep.mubr.bf16.mxu0 0
          %7883 = vmatmul.mubr.bf16.gmra.mxu0 %v7737
          %v7884 = vpop.f32.mrf.mxu0
          %v7885 = vadd.f32 0.0, %v7884
          %v7886 = vpop.f32.mrf.mxu0
          %v7887 = vpop.f32.mrf.mxu0
          %v7888 = vadd.f32 0.0, %v7887
          %v7889 = vpop.f32.mrf.mxu0
          %7890 = vdwg.mxu0
          %v7891 = vadd.f32 %v7681, %v7829
          %v7892 = vadd.f32 %v7682, %v7832
          %v7893 = vadd.f32 %v7683, %v7837
          %v7894 = vadd.f32 %v7684, %v7840
          %v7895 = vadd.f32 %v7685, %v7845
          %v7896 = vadd.f32 %v7686, %v7848
          %v7897 = vadd.f32 %v7687, %v7853
          %v7898 = vadd.f32 %v7688, %v7856
          %v7899 = vadd.f32 %v7689, %v7861
          %v7900 = vadd.f32 %v7690, %v7864
          %v7901 = vadd.f32 %v7691, %v7869
          %v7902 = vadd.f32 %v7692, %v7872
          %v7903 = vadd.f32 %v7693, %v7877
          %v7904 = vadd.f32 %v7694, %v7880
          %v7905 = vadd.f32 %v7695, %v7885
          %v7906 = vadd.f32 %v7696, %v7888
          %v7907 = vadd.f32 %v7891, %v3671
          %v7908 = vadd.f32 %v7892, %v3671
          %v7909 = vadd.f32 %v7893, %v3671
          %v7910 = vadd.f32 %v7894, %v3671
          %v7911 = vadd.f32 %v7895, %v3671
          %v7912 = vadd.f32 %v7896, %v3671
          %v7913 = vadd.f32 %v7897, %v3671
          %v7914 = vadd.f32 %v7898, %v3671
          %v7915 = vadd.f32 %v7899, %v3671
          %v7916 = vadd.f32 %v7900, %v3671
          %v7917 = vadd.f32 %v7901, %v3671
          %v7918 = vadd.f32 %v7902, %v3671
          %v7919 = vadd.f32 %v7903, %v3671
          %v7920 = vadd.f32 %v7904, %v3671
          %v7921 = vadd.f32 %v7905, %v3671
          %v7922 = vadd.f32 %v7906, %v3671
          %v7923 = vmax.f32 %v7907, 0.0
          %v7924 = vmax.f32 %v7908, 0.0
          %v7925 = vmax.f32 %v7909, 0.0
          %v7926 = vmax.f32 %v7910, 0.0
          %v7927 = vmax.f32 %v7911, 0.0
          %v7928 = vmax.f32 %v7912, 0.0
          %v7929 = vmax.f32 %v7913, 0.0
          %v7930 = vmax.f32 %v7914, 0.0
          %v7931 = vmax.f32 %v7915, 0.0
          %v7932 = vmax.f32 %v7916, 0.0
          %v7933 = vmax.f32 %v7917, 0.0
          %v7934 = vmax.f32 %v7918, 0.0
          %v7935 = vmax.f32 %v7919, 0.0
          %v7936 = vmax.f32 %v7920, 0.0
          %v7937 = vmax.f32 %v7921, 0.0
          %v7938 = vmax.f32 %v7922, 0.0
          %7939 = vst [vmem:[#allocation3 + $0x100] sm:$0xff] %v7923
          %7940 = vst [vmem:[#allocation3 + $0x108] sm:$0xff] %v7924
          %7941 = vst [vmem:[#allocation3 + $0x110] sm:$0xff] %v7925
          %7942 = vst [vmem:[#allocation3 + $0x118] sm:$0xff] %v7926
          %7943 = vst [vmem:[#allocation3 + $0x120] sm:$0xff] %v7927
          %7944 = vst [vmem:[#allocation3 + $0x128] sm:$0xff] %v7928
          %7945 = vst [vmem:[#allocation3 + $0x130] sm:$0xff] %v7929
          %7946 = vst [vmem:[#allocation3 + $0x138] sm:$0xff] %v7930
          %7947 = vst [vmem:[#allocation3 + $0x140] sm:$0xff] %v7931
          %7948 = vst [vmem:[#allocation3 + $0x148] sm:$0xff] %v7932
          %7949 = vst [vmem:[#allocation3 + $0x150] sm:$0xff] %v7933
          %7950 = vst [vmem:[#allocation3 + $0x158] sm:$0xff] %v7934
          %7951 = vst [vmem:[#allocation3 + $0x160] sm:$0xff] %v7935
          %7952 = vst [vmem:[#allocation3 + $0x168] sm:$0xff] %v7936
          %7953 = vst [vmem:[#allocation3 + $0x170] sm:$0xff] %v7937
          %7954 = vst [vmem:[#allocation3 + $0x178] sm:$0xff] %v7938
          %v7955 = vld [vmem:[#allocation16] sm:$0x1]
          %v7957 = vlaneseq
          %v7958 = vshrl.u32 %v7957, 7
          %v7959 = vsub.s32 0, %v7958
          %v7960 = vrot.slane %v7955, %v7959
          %7962 = vst [vmem:[#allocation4] sm:$0x3] %v7960
        $region84: #{dqn_forward.1} parent=51 // pred_fallthru
          _
        %s7963 = smul.u32 %s26, 78
        %s7964 = sadd.s32 %s7963, 56
        %s7965 = scalar_lea.vmem [#allocation3], %s7964
        %v7966 = vld [vmem:[%s7965] sm:$0x3]
        %v7967 = vpack.c.bf16 %v7966, %v7966
        %v7968 = vld [vmem:[%s362] sm:$0xf]
        %v7969 = vld [vmem:[%s362 + $0x4] sm:$0xf]
        %v7970 = vld [vmem:[%s362 + $0x8] sm:$0xf]
        %v7971 = vld [vmem:[%s362 + $0xc] sm:$0xf]
        %v7972 = vld [vmem:[%s362 + $0x10] sm:$0xf]
        %v7973 = vld [vmem:[%s362 + $0x14] sm:$0xf]
        %v7974 = vld [vmem:[%s362 + $0x18] sm:$0xf]
        %v7975 = vld [vmem:[%s362 + $0x1c] sm:$0xf]
        %v7976 = vld [vmem:[%s362 + $0x20] sm:$0xf]
        %v7977 = vld [vmem:[%s362 + $0x24] sm:$0xf]
        %v7978 = vld [vmem:[%s362 + $0x28] sm:$0xf]
        %v7979 = vld [vmem:[%s362 + $0x2c] sm:$0xf]
        %v7980 = vld [vmem:[%s362 + $0x30] sm:$0xf]
        %v7981 = vld [vmem:[%s362 + $0x34] sm:$0xf]
        %v7982 = vld [vmem:[%s362 + $0x38] sm:$0xf]
        %v7983 = vld [vmem:[%s362 + $0x3c] sm:$0xf]
        %s7984 = sadd.s32 %s7963, 58
        %s7985 = scalar_lea.vmem [#allocation3], %s7984
        %v7986 = vld [vmem:[%s7985] sm:$0x3]
        %v7987 = vpack.c.bf16 %v7986, %v7986
        %s7988 = scalar_lea.vmem %s362, 64 [#allocation14]
        %v7989 = vld [vmem:[%s7988] sm:$0xf]
        %v7990 = vld [vmem:[%s7988 + $0x4] sm:$0xf]
        %v7991 = vld [vmem:[%s7988 + $0x8] sm:$0xf]
        %v7992 = vld [vmem:[%s7988 + $0xc] sm:$0xf]
        %v7993 = vld [vmem:[%s7988 + $0x10] sm:$0xf]
        %v7994 = vld [vmem:[%s7988 + $0x14] sm:$0xf]
        %v7995 = vld [vmem:[%s7988 + $0x18] sm:$0xf]
        %v7996 = vld [vmem:[%s7988 + $0x1c] sm:$0xf]
        %v7997 = vld [vmem:[%s7988 + $0x20] sm:$0xf]
        %v7998 = vld [vmem:[%s7988 + $0x24] sm:$0xf]
        %v7999 = vld [vmem:[%s7988 + $0x28] sm:$0xf]
        %v8000 = vld [vmem:[%s7988 + $0x2c] sm:$0xf]
        %v8001 = vld [vmem:[%s7988 + $0x30] sm:$0xf]
        %v8002 = vld [vmem:[%s7988 + $0x34] sm:$0xf]
        %v8003 = vld [vmem:[%s7988 + $0x38] sm:$0xf]
        %v8004 = vld [vmem:[%s7988 + $0x3c] sm:$0xf]
        %v8021 = vunpack.c.l.b16 %v7989
        %v8022 = vunpack.c.l.b16 %v7990
        %v8023 = vunpack.c.l.b16 %v7991
        %v8024 = vunpack.c.l.b16 %v7992
        %v8025 = vunpack.c.l.b16 %v7993
        %v8026 = vunpack.c.l.b16 %v7994
        %v8027 = vunpack.c.l.b16 %v7995
        %v8028 = vunpack.c.l.b16 %v7996
        %v8029 = vunpack.c.l.b16 %v7997
        %v8030 = vunpack.c.l.b16 %v7998
        %v8031 = vunpack.c.l.b16 %v7999
        %v8032 = vunpack.c.l.b16 %v8000
        %v8033 = vunpack.c.l.b16 %v8001
        %v8034 = vunpack.c.l.b16 %v8002
        %v8035 = vunpack.c.l.b16 %v8003
        %v8036 = vunpack.c.l.b16 %v8004
        %v8037 = vpack.c.b16 %v8022, %v8021
        %v8038 = vpack.c.b16 %v8024, %v8023
        %v8039 = vpack.c.b16 %v8026, %v8025
        %v8040 = vpack.c.b16 %v8028, %v8027
        %v8041 = vpack.c.b16 %v8030, %v8029
        %v8042 = vpack.c.b16 %v8032, %v8031
        %v8043 = vpack.c.b16 %v8034, %v8033
        %v8044 = vpack.c.b16 %v8036, %v8035
        %8053 = vmatprep.subr.bf16.mxu0 0
        %8054 = vmatpush1.bf16.msra.mxu0 %v8044
        %8055 = vmatprep.subr.bf16.mxu0 0
        %8056 = vmatpush1.bf16.msra.mxu0 %v8043
        %8057 = vmatprep.subr.bf16.mxu0 0
        %8058 = vmatpush1.bf16.msra.mxu0 %v8042
        %8059 = vmatprep.subr.bf16.mxu0 0
        %8060 = vmatpush1.bf16.msra.mxu0 %v8041
        %8061 = vmatprep.subr.bf16.mxu0 0
        %8062 = vmatpush1.bf16.msra.mxu0 %v8040
        %8063 = vmatprep.subr.bf16.mxu0 0
        %8064 = vmatpush1.bf16.msra.mxu0 %v8039
        %8065 = vmatprep.subr.bf16.mxu0 0
        %8066 = vmatpush1.bf16.msra.mxu0 %v8038
        %8067 = vmatprep.subr.bf16.mxu0 0
        %8068 = vmatpush1.bf16.msra.mxu0 %v8037
        %8069 = vmatprep.subr.bf16.mxu0 0
        %8070 = vmatpush2.bf16.msra.mxu0 0
        %8071 = vmatprep.subr.bf16.mxu0 0
        %8072 = vmatpush2.bf16.msra.mxu0 0
        %8073 = vmatprep.subr.bf16.mxu0 0
        %8074 = vmatpush2.bf16.msra.mxu0 0
        %8075 = vmatprep.subr.bf16.mxu0 0
        %8076 = vmatpush2.bf16.msra.mxu0 0
        %8077 = vmatprep.subr.bf16.mxu0 0
        %8078 = vmatpush2.bf16.msra.mxu0 0
        %8079 = vmatprep.subr.bf16.mxu0 0
        %8080 = vmatpush2.bf16.msra.mxu0 0
        %8081 = vmatprep.subr.bf16.mxu0 0
        %8082 = vmatpush2.bf16.msra.mxu0 0
        %8083 = vmatprep.subr.bf16.mxu0 0
        %8084 = vmatpush2.bf16.msra.mxu0 0
        %8085 = vmatprep.mubr.bf16.mxu0 0
        %8086 = vmatmul.mubr.bf16.gmra.mxu0 %v7987
        %v8087 = vpop.f32.mrf.mxu0
        %v8088 = vadd.f32 0.0, %v8087
        %v8089 = vpop.f32.mrf.mxu0
        %v8090 = vpop.f32.mrf.mxu0
        %v8091 = vpop.f32.mrf.mxu0
        %8092 = vdwg.mxu0
        %v8109 = vunpack.c.l.b16 %v7968
        %v8110 = vunpack.c.l.b16 %v7969
        %v8111 = vunpack.c.l.b16 %v7970
        %v8112 = vunpack.c.l.b16 %v7971
        %v8113 = vunpack.c.l.b16 %v7972
        %v8114 = vunpack.c.l.b16 %v7973
        %v8115 = vunpack.c.l.b16 %v7974
        %v8116 = vunpack.c.l.b16 %v7975
        %v8117 = vunpack.c.l.b16 %v7976
        %v8118 = vunpack.c.l.b16 %v7977
        %v8119 = vunpack.c.l.b16 %v7978
        %v8120 = vunpack.c.l.b16 %v7979
        %v8121 = vunpack.c.l.b16 %v7980
        %v8122 = vunpack.c.l.b16 %v7981
        %v8123 = vunpack.c.l.b16 %v7982
        %v8124 = vunpack.c.l.b16 %v7983
        %v8125 = vpack.c.b16 %v8110, %v8109
        %v8126 = vpack.c.b16 %v8112, %v8111
        %v8127 = vpack.c.b16 %v8114, %v8113
        %v8128 = vpack.c.b16 %v8116, %v8115
        %v8129 = vpack.c.b16 %v8118, %v8117
        %v8130 = vpack.c.b16 %v8120, %v8119
        %v8131 = vpack.c.b16 %v8122, %v8121
        %v8132 = vpack.c.b16 %v8124, %v8123
        %8141 = vmatprep.subr.bf16.mxu0 0
        %8142 = vmatpush1.bf16.msra.mxu0 %v8132
        %8143 = vmatprep.subr.bf16.mxu0 0
        %8144 = vmatpush1.bf16.msra.mxu0 %v8131
        %8145 = vmatprep.subr.bf16.mxu0 0
        %8146 = vmatpush1.bf16.msra.mxu0 %v8130
        %8147 = vmatprep.subr.bf16.mxu0 0
        %8148 = vmatpush1.bf16.msra.mxu0 %v8129
        %8149 = vmatprep.subr.bf16.mxu0 0
        %8150 = vmatpush1.bf16.msra.mxu0 %v8128
        %8151 = vmatprep.subr.bf16.mxu0 0
        %8152 = vmatpush1.bf16.msra.mxu0 %v8127
        %8153 = vmatprep.subr.bf16.mxu0 0
        %8154 = vmatpush1.bf16.msra.mxu0 %v8126
        %8155 = vmatprep.subr.bf16.mxu0 0
        %8156 = vmatpush1.bf16.msra.mxu0 %v8125
        %8157 = vmatprep.subr.bf16.mxu0 0
        %8158 = vmatpush2.bf16.msra.mxu0 0
        %8159 = vmatprep.subr.bf16.mxu0 0
        %8160 = vmatpush2.bf16.msra.mxu0 0
        %8161 = vmatprep.subr.bf16.mxu0 0
        %8162 = vmatpush2.bf16.msra.mxu0 0
        %8163 = vmatprep.subr.bf16.mxu0 0
        %8164 = vmatpush2.bf16.msra.mxu0 0
        %8165 = vmatprep.subr.bf16.mxu0 0
        %8166 = vmatpush2.bf16.msra.mxu0 0
        %8167 = vmatprep.subr.bf16.mxu0 0
        %8168 = vmatpush2.bf16.msra.mxu0 0
        %8169 = vmatprep.subr.bf16.mxu0 0
        %8170 = vmatpush2.bf16.msra.mxu0 0
        %8171 = vmatprep.subr.bf16.mxu0 0
        %8172 = vmatpush2.bf16.msra.mxu0 0
        %8173 = vmatprep.mubr.bf16.mxu0 0
        %8174 = vmatmul.mubr.bf16.gmra.mxu0 %v7967
        %v8175 = vpop.f32.mrf.mxu0
        %v8176 = vadd.f32 %v8088, %v8175
        %v8177 = vpop.f32.mrf.mxu0
        %v8178 = vpop.f32.mrf.mxu0
        %v8179 = vpop.f32.mrf.mxu0
        %8180 = vdwg.mxu0
        %s8181 = sadd.s32 %s7963, 60
        %s8182 = scalar_lea.vmem [#allocation3], %s8181
        %v8183 = vld [vmem:[%s8182] sm:$0x3]
        %v8184 = vpack.c.bf16 %v8183, %v8183
        %s8185 = scalar_lea.vmem %s362, 128 [#allocation14]
        %v8186 = vld [vmem:[%s8185] sm:$0xf]
        %v8187 = vld [vmem:[%s8185 + $0x4] sm:$0xf]
        %v8188 = vld [vmem:[%s8185 + $0x8] sm:$0xf]
        %v8189 = vld [vmem:[%s8185 + $0xc] sm:$0xf]
        %v8190 = vld [vmem:[%s8185 + $0x10] sm:$0xf]
        %v8191 = vld [vmem:[%s8185 + $0x14] sm:$0xf]
        %v8192 = vld [vmem:[%s8185 + $0x18] sm:$0xf]
        %v8193 = vld [vmem:[%s8185 + $0x1c] sm:$0xf]
        %v8194 = vld [vmem:[%s8185 + $0x20] sm:$0xf]
        %v8195 = vld [vmem:[%s8185 + $0x24] sm:$0xf]
        %v8196 = vld [vmem:[%s8185 + $0x28] sm:$0xf]
        %v8197 = vld [vmem:[%s8185 + $0x2c] sm:$0xf]
        %v8198 = vld [vmem:[%s8185 + $0x30] sm:$0xf]
        %v8199 = vld [vmem:[%s8185 + $0x34] sm:$0xf]
        %v8200 = vld [vmem:[%s8185 + $0x38] sm:$0xf]
        %v8201 = vld [vmem:[%s8185 + $0x3c] sm:$0xf]
        %v8218 = vunpack.c.l.b16 %v8186
        %v8219 = vunpack.c.l.b16 %v8187
        %v8220 = vunpack.c.l.b16 %v8188
        %v8221 = vunpack.c.l.b16 %v8189
        %v8222 = vunpack.c.l.b16 %v8190
        %v8223 = vunpack.c.l.b16 %v8191
        %v8224 = vunpack.c.l.b16 %v8192
        %v8225 = vunpack.c.l.b16 %v8193
        %v8226 = vunpack.c.l.b16 %v8194
        %v8227 = vunpack.c.l.b16 %v8195
        %v8228 = vunpack.c.l.b16 %v8196
        %v8229 = vunpack.c.l.b16 %v8197
        %v8230 = vunpack.c.l.b16 %v8198
        %v8231 = vunpack.c.l.b16 %v8199
        %v8232 = vunpack.c.l.b16 %v8200
        %v8233 = vunpack.c.l.b16 %v8201
        %v8234 = vpack.c.b16 %v8219, %v8218
        %v8235 = vpack.c.b16 %v8221, %v8220
        %v8236 = vpack.c.b16 %v8223, %v8222
        %v8237 = vpack.c.b16 %v8225, %v8224
        %v8238 = vpack.c.b16 %v8227, %v8226
        %v8239 = vpack.c.b16 %v8229, %v8228
        %v8240 = vpack.c.b16 %v8231, %v8230
        %v8241 = vpack.c.b16 %v8233, %v8232
        %8250 = vmatprep.subr.bf16.mxu0 0
        %8251 = vmatpush1.bf16.msra.mxu0 %v8241
        %8252 = vmatprep.subr.bf16.mxu0 0
        %8253 = vmatpush1.bf16.msra.mxu0 %v8240
        %8254 = vmatprep.subr.bf16.mxu0 0
        %8255 = vmatpush1.bf16.msra.mxu0 %v8239
        %8256 = vmatprep.subr.bf16.mxu0 0
        %8257 = vmatpush1.bf16.msra.mxu0 %v8238
        %8258 = vmatprep.subr.bf16.mxu0 0
        %8259 = vmatpush1.bf16.msra.mxu0 %v8237
        %8260 = vmatprep.subr.bf16.mxu0 0
        %8261 = vmatpush1.bf16.msra.mxu0 %v8236
        %8262 = vmatprep.subr.bf16.mxu0 0
        %8263 = vmatpush1.bf16.msra.mxu0 %v8235
        %8264 = vmatprep.subr.bf16.mxu0 0
        %8265 = vmatpush1.bf16.msra.mxu0 %v8234
        %8266 = vmatprep.subr.bf16.mxu0 0
        %8267 = vmatpush2.bf16.msra.mxu0 0
        %8268 = vmatprep.subr.bf16.mxu0 0
        %8269 = vmatpush2.bf16.msra.mxu0 0
        %8270 = vmatprep.subr.bf16.mxu0 0
        %8271 = vmatpush2.bf16.msra.mxu0 0
        %8272 = vmatprep.subr.bf16.mxu0 0
        %8273 = vmatpush2.bf16.msra.mxu0 0
        %8274 = vmatprep.subr.bf16.mxu0 0
        %8275 = vmatpush2.bf16.msra.mxu0 0
        %8276 = vmatprep.subr.bf16.mxu0 0
        %8277 = vmatpush2.bf16.msra.mxu0 0
        %8278 = vmatprep.subr.bf16.mxu0 0
        %8279 = vmatpush2.bf16.msra.mxu0 0
        %8280 = vmatprep.subr.bf16.mxu0 0
        %8281 = vmatpush2.bf16.msra.mxu0 0
        %8282 = vmatprep.mubr.bf16.mxu0 0
        %8283 = vmatmul.mubr.bf16.gmra.mxu0 %v8184
        %v8284 = vpop.f32.mrf.mxu0
        %v8285 = vadd.f32 0.0, %v8284
        %v8286 = vpop.f32.mrf.mxu0
        %v8287 = vpop.f32.mrf.mxu0
        %v8288 = vpop.f32.mrf.mxu0
        %8289 = vdwg.mxu0
        %v8290 = vadd.f32 %v8176, %v8285
        %s8291 = sadd.s32 %s7963, 62
        %s8292 = scalar_lea.vmem [#allocation3], %s8291
        %v8293 = vld [vmem:[%s8292] sm:$0x3]
        %v8294 = vpack.c.bf16 %v8293, %v8293
        %s8295 = scalar_lea.vmem %s362, 192 [#allocation14]
        %v8296 = vld [vmem:[%s8295] sm:$0xf]
        %v8297 = vld [vmem:[%s8295 + $0x4] sm:$0xf]
        %v8298 = vld [vmem:[%s8295 + $0x8] sm:$0xf]
        %v8299 = vld [vmem:[%s8295 + $0xc] sm:$0xf]
        %v8300 = vld [vmem:[%s8295 + $0x10] sm:$0xf]
        %v8301 = vld [vmem:[%s8295 + $0x14] sm:$0xf]
        %v8302 = vld [vmem:[%s8295 + $0x18] sm:$0xf]
        %v8303 = vld [vmem:[%s8295 + $0x1c] sm:$0xf]
        %v8304 = vld [vmem:[%s8295 + $0x20] sm:$0xf]
        %v8305 = vld [vmem:[%s8295 + $0x24] sm:$0xf]
        %v8306 = vld [vmem:[%s8295 + $0x28] sm:$0xf]
        %v8307 = vld [vmem:[%s8295 + $0x2c] sm:$0xf]
        %v8308 = vld [vmem:[%s8295 + $0x30] sm:$0xf]
        %v8309 = vld [vmem:[%s8295 + $0x34] sm:$0xf]
        %v8310 = vld [vmem:[%s8295 + $0x38] sm:$0xf]
        %v8311 = vld [vmem:[%s8295 + $0x3c] sm:$0xf]
        %v8328 = vunpack.c.l.b16 %v8296
        %v8329 = vunpack.c.l.b16 %v8297
        %v8330 = vunpack.c.l.b16 %v8298
        %v8331 = vunpack.c.l.b16 %v8299
        %v8332 = vunpack.c.l.b16 %v8300
        %v8333 = vunpack.c.l.b16 %v8301
        %v8334 = vunpack.c.l.b16 %v8302
        %v8335 = vunpack.c.l.b16 %v8303
        %v8336 = vunpack.c.l.b16 %v8304
        %v8337 = vunpack.c.l.b16 %v8305
        %v8338 = vunpack.c.l.b16 %v8306
        %v8339 = vunpack.c.l.b16 %v8307
        %v8340 = vunpack.c.l.b16 %v8308
        %v8341 = vunpack.c.l.b16 %v8309
        %v8342 = vunpack.c.l.b16 %v8310
        %v8343 = vunpack.c.l.b16 %v8311
        %v8344 = vpack.c.b16 %v8329, %v8328
        %v8345 = vpack.c.b16 %v8331, %v8330
        %v8346 = vpack.c.b16 %v8333, %v8332
        %v8347 = vpack.c.b16 %v8335, %v8334
        %v8348 = vpack.c.b16 %v8337, %v8336
        %v8349 = vpack.c.b16 %v8339, %v8338
        %v8350 = vpack.c.b16 %v8341, %v8340
        %v8351 = vpack.c.b16 %v8343, %v8342
        %8360 = vmatprep.subr.bf16.mxu0 0
        %8361 = vmatpush1.bf16.msra.mxu0 %v8351
        %8362 = vmatprep.subr.bf16.mxu0 0
        %8363 = vmatpush1.bf16.msra.mxu0 %v8350
        %8364 = vmatprep.subr.bf16.mxu0 0
        %8365 = vmatpush1.bf16.msra.mxu0 %v8349
        %8366 = vmatprep.subr.bf16.mxu0 0
        %8367 = vmatpush1.bf16.msra.mxu0 %v8348
        %8368 = vmatprep.subr.bf16.mxu0 0
        %8369 = vmatpush1.bf16.msra.mxu0 %v8347
        %8370 = vmatprep.subr.bf16.mxu0 0
        %8371 = vmatpush1.bf16.msra.mxu0 %v8346
        %8372 = vmatprep.subr.bf16.mxu0 0
        %8373 = vmatpush1.bf16.msra.mxu0 %v8345
        %8374 = vmatprep.subr.bf16.mxu0 0
        %8375 = vmatpush1.bf16.msra.mxu0 %v8344
        %8376 = vmatprep.subr.bf16.mxu0 0
        %8377 = vmatpush2.bf16.msra.mxu0 0
        %8378 = vmatprep.subr.bf16.mxu0 0
        %8379 = vmatpush2.bf16.msra.mxu0 0
        %8380 = vmatprep.subr.bf16.mxu0 0
        %8381 = vmatpush2.bf16.msra.mxu0 0
        %8382 = vmatprep.subr.bf16.mxu0 0
        %8383 = vmatpush2.bf16.msra.mxu0 0
        %8384 = vmatprep.subr.bf16.mxu0 0
        %8385 = vmatpush2.bf16.msra.mxu0 0
        %8386 = vmatprep.subr.bf16.mxu0 0
        %8387 = vmatpush2.bf16.msra.mxu0 0
        %8388 = vmatprep.subr.bf16.mxu0 0
        %8389 = vmatpush2.bf16.msra.mxu0 0
        %8390 = vmatprep.subr.bf16.mxu0 0
        %8391 = vmatpush2.bf16.msra.mxu0 0
        %8392 = vmatprep.mubr.bf16.mxu0 0
        %8393 = vmatmul.mubr.bf16.gmra.mxu0 %v8294
        %v8394 = vpop.f32.mrf.mxu0
        %v8395 = vadd.f32 0.0, %v8394
        %v8396 = vpop.f32.mrf.mxu0
        %v8397 = vpop.f32.mrf.mxu0
        %v8398 = vpop.f32.mrf.mxu0
        %8399 = vdwg.mxu0
        %v8400 = vadd.f32 %v8290, %v8395
        %s8401 = sadd.s32 %s7963, 64
        %s8402 = scalar_lea.vmem [#allocation3], %s8401
        %v8403 = vld [vmem:[%s8402] sm:$0x3]
        %v8404 = vpack.c.bf16 %v8403, %v8403
        %s8405 = scalar_lea.vmem %s362, 256 [#allocation14]
        %v8406 = vld [vmem:[%s8405] sm:$0xf]
        %v8407 = vld [vmem:[%s8405 + $0x4] sm:$0xf]
        %v8408 = vld [vmem:[%s8405 + $0x8] sm:$0xf]
        %v8409 = vld [vmem:[%s8405 + $0xc] sm:$0xf]
        %v8410 = vld [vmem:[%s8405 + $0x10] sm:$0xf]
        %v8411 = vld [vmem:[%s8405 + $0x14] sm:$0xf]
        %v8412 = vld [vmem:[%s8405 + $0x18] sm:$0xf]
        %v8413 = vld [vmem:[%s8405 + $0x1c] sm:$0xf]
        %v8414 = vld [vmem:[%s8405 + $0x20] sm:$0xf]
        %v8415 = vld [vmem:[%s8405 + $0x24] sm:$0xf]
        %v8416 = vld [vmem:[%s8405 + $0x28] sm:$0xf]
        %v8417 = vld [vmem:[%s8405 + $0x2c] sm:$0xf]
        %v8418 = vld [vmem:[%s8405 + $0x30] sm:$0xf]
        %v8419 = vld [vmem:[%s8405 + $0x34] sm:$0xf]
        %v8420 = vld [vmem:[%s8405 + $0x38] sm:$0xf]
        %v8421 = vld [vmem:[%s8405 + $0x3c] sm:$0xf]
        %v8438 = vunpack.c.l.b16 %v8406
        %v8439 = vunpack.c.l.b16 %v8407
        %v8440 = vunpack.c.l.b16 %v8408
        %v8441 = vunpack.c.l.b16 %v8409
        %v8442 = vunpack.c.l.b16 %v8410
        %v8443 = vunpack.c.l.b16 %v8411
        %v8444 = vunpack.c.l.b16 %v8412
        %v8445 = vunpack.c.l.b16 %v8413
        %v8446 = vunpack.c.l.b16 %v8414
        %v8447 = vunpack.c.l.b16 %v8415
        %v8448 = vunpack.c.l.b16 %v8416
        %v8449 = vunpack.c.l.b16 %v8417
        %v8450 = vunpack.c.l.b16 %v8418
        %v8451 = vunpack.c.l.b16 %v8419
        %v8452 = vunpack.c.l.b16 %v8420
        %v8453 = vunpack.c.l.b16 %v8421
        %v8454 = vpack.c.b16 %v8439, %v8438
        %v8455 = vpack.c.b16 %v8441, %v8440
        %v8456 = vpack.c.b16 %v8443, %v8442
        %v8457 = vpack.c.b16 %v8445, %v8444
        %v8458 = vpack.c.b16 %v8447, %v8446
        %v8459 = vpack.c.b16 %v8449, %v8448
        %v8460 = vpack.c.b16 %v8451, %v8450
        %v8461 = vpack.c.b16 %v8453, %v8452
        %8470 = vmatprep.subr.bf16.mxu0 0
        %8471 = vmatpush1.bf16.msra.mxu0 %v8461
        %8472 = vmatprep.subr.bf16.mxu0 0
        %8473 = vmatpush1.bf16.msra.mxu0 %v8460
        %8474 = vmatprep.subr.bf16.mxu0 0
        %8475 = vmatpush1.bf16.msra.mxu0 %v8459
        %8476 = vmatprep.subr.bf16.mxu0 0
        %8477 = vmatpush1.bf16.msra.mxu0 %v8458
        %8478 = vmatprep.subr.bf16.mxu0 0
        %8479 = vmatpush1.bf16.msra.mxu0 %v8457
        %8480 = vmatprep.subr.bf16.mxu0 0
        %8481 = vmatpush1.bf16.msra.mxu0 %v8456
        %8482 = vmatprep.subr.bf16.mxu0 0
        %8483 = vmatpush1.bf16.msra.mxu0 %v8455
        %8484 = vmatprep.subr.bf16.mxu0 0
        %8485 = vmatpush1.bf16.msra.mxu0 %v8454
        %8486 = vmatprep.subr.bf16.mxu0 0
        %8487 = vmatpush2.bf16.msra.mxu0 0
        %8488 = vmatprep.subr.bf16.mxu0 0
        %8489 = vmatpush2.bf16.msra.mxu0 0
        %8490 = vmatprep.subr.bf16.mxu0 0
        %8491 = vmatpush2.bf16.msra.mxu0 0
        %8492 = vmatprep.subr.bf16.mxu0 0
        %8493 = vmatpush2.bf16.msra.mxu0 0
        %8494 = vmatprep.subr.bf16.mxu0 0
        %8495 = vmatpush2.bf16.msra.mxu0 0
        %8496 = vmatprep.subr.bf16.mxu0 0
        %8497 = vmatpush2.bf16.msra.mxu0 0
        %8498 = vmatprep.subr.bf16.mxu0 0
        %8499 = vmatpush2.bf16.msra.mxu0 0
        %8500 = vmatprep.subr.bf16.mxu0 0
        %8501 = vmatpush2.bf16.msra.mxu0 0
        %8502 = vmatprep.mubr.bf16.mxu0 0
        %8503 = vmatmul.mubr.bf16.gmra.mxu0 %v8404
        %v8504 = vpop.f32.mrf.mxu0
        %v8505 = vadd.f32 0.0, %v8504
        %v8506 = vpop.f32.mrf.mxu0
        %v8507 = vpop.f32.mrf.mxu0
        %v8508 = vpop.f32.mrf.mxu0
        %8509 = vdwg.mxu0
        %v8510 = vadd.f32 %v8400, %v8505
        %s8511 = sadd.s32 %s7963, 66
        %s8512 = scalar_lea.vmem [#allocation3], %s8511
        %v8513 = vld [vmem:[%s8512] sm:$0x3]
        %v8514 = vpack.c.bf16 %v8513, %v8513
        %s8515 = scalar_lea.vmem %s362, 320 [#allocation14]
        %v8516 = vld [vmem:[%s8515] sm:$0xf]
        %v8517 = vld [vmem:[%s8515 + $0x4] sm:$0xf]
        %v8518 = vld [vmem:[%s8515 + $0x8] sm:$0xf]
        %v8519 = vld [vmem:[%s8515 + $0xc] sm:$0xf]
        %v8520 = vld [vmem:[%s8515 + $0x10] sm:$0xf]
        %v8521 = vld [vmem:[%s8515 + $0x14] sm:$0xf]
        %v8522 = vld [vmem:[%s8515 + $0x18] sm:$0xf]
        %v8523 = vld [vmem:[%s8515 + $0x1c] sm:$0xf]
        %v8524 = vld [vmem:[%s8515 + $0x20] sm:$0xf]
        %v8525 = vld [vmem:[%s8515 + $0x24] sm:$0xf]
        %v8526 = vld [vmem:[%s8515 + $0x28] sm:$0xf]
        %v8527 = vld [vmem:[%s8515 + $0x2c] sm:$0xf]
        %v8528 = vld [vmem:[%s8515 + $0x30] sm:$0xf]
        %v8529 = vld [vmem:[%s8515 + $0x34] sm:$0xf]
        %v8530 = vld [vmem:[%s8515 + $0x38] sm:$0xf]
        %v8531 = vld [vmem:[%s8515 + $0x3c] sm:$0xf]
        %v8548 = vunpack.c.l.b16 %v8516
        %v8549 = vunpack.c.l.b16 %v8517
        %v8550 = vunpack.c.l.b16 %v8518
        %v8551 = vunpack.c.l.b16 %v8519
        %v8552 = vunpack.c.l.b16 %v8520
        %v8553 = vunpack.c.l.b16 %v8521
        %v8554 = vunpack.c.l.b16 %v8522
        %v8555 = vunpack.c.l.b16 %v8523
        %v8556 = vunpack.c.l.b16 %v8524
        %v8557 = vunpack.c.l.b16 %v8525
        %v8558 = vunpack.c.l.b16 %v8526
        %v8559 = vunpack.c.l.b16 %v8527
        %v8560 = vunpack.c.l.b16 %v8528
        %v8561 = vunpack.c.l.b16 %v8529
        %v8562 = vunpack.c.l.b16 %v8530
        %v8563 = vunpack.c.l.b16 %v8531
        %v8564 = vpack.c.b16 %v8549, %v8548
        %v8565 = vpack.c.b16 %v8551, %v8550
        %v8566 = vpack.c.b16 %v8553, %v8552
        %v8567 = vpack.c.b16 %v8555, %v8554
        %v8568 = vpack.c.b16 %v8557, %v8556
        %v8569 = vpack.c.b16 %v8559, %v8558
        %v8570 = vpack.c.b16 %v8561, %v8560
        %v8571 = vpack.c.b16 %v8563, %v8562
        %8580 = vmatprep.subr.bf16.mxu0 0
        %8581 = vmatpush1.bf16.msra.mxu0 %v8571
        %8582 = vmatprep.subr.bf16.mxu0 0
        %8583 = vmatpush1.bf16.msra.mxu0 %v8570
        %8584 = vmatprep.subr.bf16.mxu0 0
        %8585 = vmatpush1.bf16.msra.mxu0 %v8569
        %8586 = vmatprep.subr.bf16.mxu0 0
        %8587 = vmatpush1.bf16.msra.mxu0 %v8568
        %8588 = vmatprep.subr.bf16.mxu0 0
        %8589 = vmatpush1.bf16.msra.mxu0 %v8567
        %8590 = vmatprep.subr.bf16.mxu0 0
        %8591 = vmatpush1.bf16.msra.mxu0 %v8566
        %8592 = vmatprep.subr.bf16.mxu0 0
        %8593 = vmatpush1.bf16.msra.mxu0 %v8565
        %8594 = vmatprep.subr.bf16.mxu0 0
        %8595 = vmatpush1.bf16.msra.mxu0 %v8564
        %8596 = vmatprep.subr.bf16.mxu0 0
        %8597 = vmatpush2.bf16.msra.mxu0 0
        %8598 = vmatprep.subr.bf16.mxu0 0
        %8599 = vmatpush2.bf16.msra.mxu0 0
        %8600 = vmatprep.subr.bf16.mxu0 0
        %8601 = vmatpush2.bf16.msra.mxu0 0
        %8602 = vmatprep.subr.bf16.mxu0 0
        %8603 = vmatpush2.bf16.msra.mxu0 0
        %8604 = vmatprep.subr.bf16.mxu0 0
        %8605 = vmatpush2.bf16.msra.mxu0 0
        %8606 = vmatprep.subr.bf16.mxu0 0
        %8607 = vmatpush2.bf16.msra.mxu0 0
        %8608 = vmatprep.subr.bf16.mxu0 0
        %8609 = vmatpush2.bf16.msra.mxu0 0
        %8610 = vmatprep.subr.bf16.mxu0 0
        %8611 = vmatpush2.bf16.msra.mxu0 0
        %8612 = vmatprep.mubr.bf16.mxu0 0
        %8613 = vmatmul.mubr.bf16.gmra.mxu0 %v8514
        %v8614 = vpop.f32.mrf.mxu0
        %v8615 = vadd.f32 0.0, %v8614
        %v8616 = vpop.f32.mrf.mxu0
        %v8617 = vpop.f32.mrf.mxu0
        %v8618 = vpop.f32.mrf.mxu0
        %8619 = vdwg.mxu0
        %v8620 = vadd.f32 %v8510, %v8615
        %s8621 = sadd.s32 %s7963, 68
        %s8622 = scalar_lea.vmem [#allocation3], %s8621
        %v8623 = vld [vmem:[%s8622] sm:$0x3]
        %v8624 = vpack.c.bf16 %v8623, %v8623
        %s8625 = scalar_lea.vmem %s362, 384 [#allocation14]
        %v8626 = vld [vmem:[%s8625] sm:$0xf]
        %v8627 = vld [vmem:[%s8625 + $0x4] sm:$0xf]
        %v8628 = vld [vmem:[%s8625 + $0x8] sm:$0xf]
        %v8629 = vld [vmem:[%s8625 + $0xc] sm:$0xf]
        %v8630 = vld [vmem:[%s8625 + $0x10] sm:$0xf]
        %v8631 = vld [vmem:[%s8625 + $0x14] sm:$0xf]
        %v8632 = vld [vmem:[%s8625 + $0x18] sm:$0xf]
        %v8633 = vld [vmem:[%s8625 + $0x1c] sm:$0xf]
        %v8634 = vld [vmem:[%s8625 + $0x20] sm:$0xf]
        %v8635 = vld [vmem:[%s8625 + $0x24] sm:$0xf]
        %v8636 = vld [vmem:[%s8625 + $0x28] sm:$0xf]
        %v8637 = vld [vmem:[%s8625 + $0x2c] sm:$0xf]
        %v8638 = vld [vmem:[%s8625 + $0x30] sm:$0xf]
        %v8639 = vld [vmem:[%s8625 + $0x34] sm:$0xf]
        %v8640 = vld [vmem:[%s8625 + $0x38] sm:$0xf]
        %v8641 = vld [vmem:[%s8625 + $0x3c] sm:$0xf]
        %v8658 = vunpack.c.l.b16 %v8626
        %v8659 = vunpack.c.l.b16 %v8627
        %v8660 = vunpack.c.l.b16 %v8628
        %v8661 = vunpack.c.l.b16 %v8629
        %v8662 = vunpack.c.l.b16 %v8630
        %v8663 = vunpack.c.l.b16 %v8631
        %v8664 = vunpack.c.l.b16 %v8632
        %v8665 = vunpack.c.l.b16 %v8633
        %v8666 = vunpack.c.l.b16 %v8634
        %v8667 = vunpack.c.l.b16 %v8635
        %v8668 = vunpack.c.l.b16 %v8636
        %v8669 = vunpack.c.l.b16 %v8637
        %v8670 = vunpack.c.l.b16 %v8638
        %v8671 = vunpack.c.l.b16 %v8639
        %v8672 = vunpack.c.l.b16 %v8640
        %v8673 = vunpack.c.l.b16 %v8641
        %v8674 = vpack.c.b16 %v8659, %v8658
        %v8675 = vpack.c.b16 %v8661, %v8660
        %v8676 = vpack.c.b16 %v8663, %v8662
        %v8677 = vpack.c.b16 %v8665, %v8664
        %v8678 = vpack.c.b16 %v8667, %v8666
        %v8679 = vpack.c.b16 %v8669, %v8668
        %v8680 = vpack.c.b16 %v8671, %v8670
        %v8681 = vpack.c.b16 %v8673, %v8672
        %8690 = vmatprep.subr.bf16.mxu0 0
        %8691 = vmatpush1.bf16.msra.mxu0 %v8681
        %8692 = vmatprep.subr.bf16.mxu0 0
        %8693 = vmatpush1.bf16.msra.mxu0 %v8680
        %8694 = vmatprep.subr.bf16.mxu0 0
        %8695 = vmatpush1.bf16.msra.mxu0 %v8679
        %8696 = vmatprep.subr.bf16.mxu0 0
        %8697 = vmatpush1.bf16.msra.mxu0 %v8678
        %8698 = vmatprep.subr.bf16.mxu0 0
        %8699 = vmatpush1.bf16.msra.mxu0 %v8677
        %8700 = vmatprep.subr.bf16.mxu0 0
        %8701 = vmatpush1.bf16.msra.mxu0 %v8676
        %8702 = vmatprep.subr.bf16.mxu0 0
        %8703 = vmatpush1.bf16.msra.mxu0 %v8675
        %8704 = vmatprep.subr.bf16.mxu0 0
        %8705 = vmatpush1.bf16.msra.mxu0 %v8674
        %8706 = vmatprep.subr.bf16.mxu0 0
        %8707 = vmatpush2.bf16.msra.mxu0 0
        %8708 = vmatprep.subr.bf16.mxu0 0
        %8709 = vmatpush2.bf16.msra.mxu0 0
        %8710 = vmatprep.subr.bf16.mxu0 0
        %8711 = vmatpush2.bf16.msra.mxu0 0
        %8712 = vmatprep.subr.bf16.mxu0 0
        %8713 = vmatpush2.bf16.msra.mxu0 0
        %8714 = vmatprep.subr.bf16.mxu0 0
        %8715 = vmatpush2.bf16.msra.mxu0 0
        %8716 = vmatprep.subr.bf16.mxu0 0
        %8717 = vmatpush2.bf16.msra.mxu0 0
        %8718 = vmatprep.subr.bf16.mxu0 0
        %8719 = vmatpush2.bf16.msra.mxu0 0
        %8720 = vmatprep.subr.bf16.mxu0 0
        %8721 = vmatpush2.bf16.msra.mxu0 0
        %8722 = vmatprep.mubr.bf16.mxu0 0
        %8723 = vmatmul.mubr.bf16.gmra.mxu0 %v8624
        %v8724 = vpop.f32.mrf.mxu0
        %v8725 = vadd.f32 0.0, %v8724
        %v8726 = vpop.f32.mrf.mxu0
        %v8727 = vpop.f32.mrf.mxu0
        %v8728 = vpop.f32.mrf.mxu0
        %8729 = vdwg.mxu0
        %v8730 = vadd.f32 %v8620, %v8725
        %s8731 = sadd.s32 %s7963, 70
        %s8732 = scalar_lea.vmem [#allocation3], %s8731
        %v8733 = vld [vmem:[%s8732] sm:$0x3]
        %v8734 = vpack.c.bf16 %v8733, %v8733
        %s8735 = scalar_lea.vmem %s362, 448 [#allocation14]
        %v8736 = vld [vmem:[%s8735] sm:$0xf]
        %v8737 = vld [vmem:[%s8735 + $0x4] sm:$0xf]
        %v8738 = vld [vmem:[%s8735 + $0x8] sm:$0xf]
        %v8739 = vld [vmem:[%s8735 + $0xc] sm:$0xf]
        %v8740 = vld [vmem:[%s8735 + $0x10] sm:$0xf]
        %v8741 = vld [vmem:[%s8735 + $0x14] sm:$0xf]
        %v8742 = vld [vmem:[%s8735 + $0x18] sm:$0xf]
        %v8743 = vld [vmem:[%s8735 + $0x1c] sm:$0xf]
        %v8744 = vld [vmem:[%s8735 + $0x20] sm:$0xf]
        %v8745 = vld [vmem:[%s8735 + $0x24] sm:$0xf]
        %v8746 = vld [vmem:[%s8735 + $0x28] sm:$0xf]
        %v8747 = vld [vmem:[%s8735 + $0x2c] sm:$0xf]
        %v8748 = vld [vmem:[%s8735 + $0x30] sm:$0xf]
        %v8749 = vld [vmem:[%s8735 + $0x34] sm:$0xf]
        %v8750 = vld [vmem:[%s8735 + $0x38] sm:$0xf]
        %v8751 = vld [vmem:[%s8735 + $0x3c] sm:$0xf]
        %v8768 = vunpack.c.l.b16 %v8736
        %v8769 = vunpack.c.l.b16 %v8737
        %v8770 = vunpack.c.l.b16 %v8738
        %v8771 = vunpack.c.l.b16 %v8739
        %v8772 = vunpack.c.l.b16 %v8740
        %v8773 = vunpack.c.l.b16 %v8741
        %v8774 = vunpack.c.l.b16 %v8742
        %v8775 = vunpack.c.l.b16 %v8743
        %v8776 = vunpack.c.l.b16 %v8744
        %v8777 = vunpack.c.l.b16 %v8745
        %v8778 = vunpack.c.l.b16 %v8746
        %v8779 = vunpack.c.l.b16 %v8747
        %v8780 = vunpack.c.l.b16 %v8748
        %v8781 = vunpack.c.l.b16 %v8749
        %v8782 = vunpack.c.l.b16 %v8750
        %v8783 = vunpack.c.l.b16 %v8751
        %v8784 = vpack.c.b16 %v8769, %v8768
        %v8785 = vpack.c.b16 %v8771, %v8770
        %v8786 = vpack.c.b16 %v8773, %v8772
        %v8787 = vpack.c.b16 %v8775, %v8774
        %v8788 = vpack.c.b16 %v8777, %v8776
        %v8789 = vpack.c.b16 %v8779, %v8778
        %v8790 = vpack.c.b16 %v8781, %v8780
        %v8791 = vpack.c.b16 %v8783, %v8782
        %8800 = vmatprep.subr.bf16.mxu0 0
        %8801 = vmatpush1.bf16.msra.mxu0 %v8791
        %8802 = vmatprep.subr.bf16.mxu0 0
        %8803 = vmatpush1.bf16.msra.mxu0 %v8790
        %8804 = vmatprep.subr.bf16.mxu0 0
        %8805 = vmatpush1.bf16.msra.mxu0 %v8789
        %8806 = vmatprep.subr.bf16.mxu0 0
        %8807 = vmatpush1.bf16.msra.mxu0 %v8788
        %8808 = vmatprep.subr.bf16.mxu0 0
        %8809 = vmatpush1.bf16.msra.mxu0 %v8787
        %8810 = vmatprep.subr.bf16.mxu0 0
        %8811 = vmatpush1.bf16.msra.mxu0 %v8786
        %8812 = vmatprep.subr.bf16.mxu0 0
        %8813 = vmatpush1.bf16.msra.mxu0 %v8785
        %8814 = vmatprep.subr.bf16.mxu0 0
        %8815 = vmatpush1.bf16.msra.mxu0 %v8784
        %8816 = vmatprep.subr.bf16.mxu0 0
        %8817 = vmatpush2.bf16.msra.mxu0 0
        %8818 = vmatprep.subr.bf16.mxu0 0
        %8819 = vmatpush2.bf16.msra.mxu0 0
        %8820 = vmatprep.subr.bf16.mxu0 0
        %8821 = vmatpush2.bf16.msra.mxu0 0
        %8822 = vmatprep.subr.bf16.mxu0 0
        %8823 = vmatpush2.bf16.msra.mxu0 0
        %8824 = vmatprep.subr.bf16.mxu0 0
        %8825 = vmatpush2.bf16.msra.mxu0 0
        %8826 = vmatprep.subr.bf16.mxu0 0
        %8827 = vmatpush2.bf16.msra.mxu0 0
        %8828 = vmatprep.subr.bf16.mxu0 0
        %8829 = vmatpush2.bf16.msra.mxu0 0
        %8830 = vmatprep.subr.bf16.mxu0 0
        %8831 = vmatpush2.bf16.msra.mxu0 0
        %8832 = vmatprep.mubr.bf16.mxu0 0
        %8833 = vmatmul.mubr.bf16.gmra.mxu0 %v8734
        %v8834 = vpop.f32.mrf.mxu0
        %v8835 = vadd.f32 0.0, %v8834
        %v8836 = vpop.f32.mrf.mxu0
        %v8837 = vpop.f32.mrf.mxu0
        %v8838 = vpop.f32.mrf.mxu0
        %8839 = vdwg.mxu0
        %v8840 = vadd.f32 %v8730, %v8835
        %s8841 = sadd.s32 %s7963, 72
        %s8842 = scalar_lea.vmem [#allocation3], %s8841
        %v8843 = vld [vmem:[%s8842] sm:$0x3]
        %v8844 = vpack.c.bf16 %v8843, %v8843
        %s8845 = scalar_lea.vmem %s362, 512 [#allocation14]
        %v8846 = vld [vmem:[%s8845] sm:$0xf]
        %v8847 = vld [vmem:[%s8845 + $0x4] sm:$0xf]
        %v8848 = vld [vmem:[%s8845 + $0x8] sm:$0xf]
        %v8849 = vld [vmem:[%s8845 + $0xc] sm:$0xf]
        %v8850 = vld [vmem:[%s8845 + $0x10] sm:$0xf]
        %v8851 = vld [vmem:[%s8845 + $0x14] sm:$0xf]
        %v8852 = vld [vmem:[%s8845 + $0x18] sm:$0xf]
        %v8853 = vld [vmem:[%s8845 + $0x1c] sm:$0xf]
        %v8854 = vld [vmem:[%s8845 + $0x20] sm:$0xf]
        %v8855 = vld [vmem:[%s8845 + $0x24] sm:$0xf]
        %v8856 = vld [vmem:[%s8845 + $0x28] sm:$0xf]
        %v8857 = vld [vmem:[%s8845 + $0x2c] sm:$0xf]
        %v8858 = vld [vmem:[%s8845 + $0x30] sm:$0xf]
        %v8859 = vld [vmem:[%s8845 + $0x34] sm:$0xf]
        %v8860 = vld [vmem:[%s8845 + $0x38] sm:$0xf]
        %v8861 = vld [vmem:[%s8845 + $0x3c] sm:$0xf]
        %v8878 = vunpack.c.l.b16 %v8846
        %v8879 = vunpack.c.l.b16 %v8847
        %v8880 = vunpack.c.l.b16 %v8848
        %v8881 = vunpack.c.l.b16 %v8849
        %v8882 = vunpack.c.l.b16 %v8850
        %v8883 = vunpack.c.l.b16 %v8851
        %v8884 = vunpack.c.l.b16 %v8852
        %v8885 = vunpack.c.l.b16 %v8853
        %v8886 = vunpack.c.l.b16 %v8854
        %v8887 = vunpack.c.l.b16 %v8855
        %v8888 = vunpack.c.l.b16 %v8856
        %v8889 = vunpack.c.l.b16 %v8857
        %v8890 = vunpack.c.l.b16 %v8858
        %v8891 = vunpack.c.l.b16 %v8859
        %v8892 = vunpack.c.l.b16 %v8860
        %v8893 = vunpack.c.l.b16 %v8861
        %v8894 = vpack.c.b16 %v8879, %v8878
        %v8895 = vpack.c.b16 %v8881, %v8880
        %v8896 = vpack.c.b16 %v8883, %v8882
        %v8897 = vpack.c.b16 %v8885, %v8884
        %v8898 = vpack.c.b16 %v8887, %v8886
        %v8899 = vpack.c.b16 %v8889, %v8888
        %v8900 = vpack.c.b16 %v8891, %v8890
        %v8901 = vpack.c.b16 %v8893, %v8892
        %8910 = vmatprep.subr.bf16.mxu0 0
        %8911 = vmatpush1.bf16.msra.mxu0 %v8901
        %8912 = vmatprep.subr.bf16.mxu0 0
        %8913 = vmatpush1.bf16.msra.mxu0 %v8900
        %8914 = vmatprep.subr.bf16.mxu0 0
        %8915 = vmatpush1.bf16.msra.mxu0 %v8899
        %8916 = vmatprep.subr.bf16.mxu0 0
        %8917 = vmatpush1.bf16.msra.mxu0 %v8898
        %8918 = vmatprep.subr.bf16.mxu0 0
        %8919 = vmatpush1.bf16.msra.mxu0 %v8897
        %8920 = vmatprep.subr.bf16.mxu0 0
        %8921 = vmatpush1.bf16.msra.mxu0 %v8896
        %8922 = vmatprep.subr.bf16.mxu0 0
        %8923 = vmatpush1.bf16.msra.mxu0 %v8895
        %8924 = vmatprep.subr.bf16.mxu0 0
        %8925 = vmatpush1.bf16.msra.mxu0 %v8894
        %8926 = vmatprep.subr.bf16.mxu0 0
        %8927 = vmatpush2.bf16.msra.mxu0 0
        %8928 = vmatprep.subr.bf16.mxu0 0
        %8929 = vmatpush2.bf16.msra.mxu0 0
        %8930 = vmatprep.subr.bf16.mxu0 0
        %8931 = vmatpush2.bf16.msra.mxu0 0
        %8932 = vmatprep.subr.bf16.mxu0 0
        %8933 = vmatpush2.bf16.msra.mxu0 0
        %8934 = vmatprep.subr.bf16.mxu0 0
        %8935 = vmatpush2.bf16.msra.mxu0 0
        %8936 = vmatprep.subr.bf16.mxu0 0
        %8937 = vmatpush2.bf16.msra.mxu0 0
        %8938 = vmatprep.subr.bf16.mxu0 0
        %8939 = vmatpush2.bf16.msra.mxu0 0
        %8940 = vmatprep.subr.bf16.mxu0 0
        %8941 = vmatpush2.bf16.msra.mxu0 0
        %8942 = vmatprep.mubr.bf16.mxu0 0
        %8943 = vmatmul.mubr.bf16.gmra.mxu0 %v8844
        %v8944 = vpop.f32.mrf.mxu0
        %v8945 = vadd.f32 0.0, %v8944
        %v8946 = vpop.f32.mrf.mxu0
        %v8947 = vpop.f32.mrf.mxu0
        %v8948 = vpop.f32.mrf.mxu0
        %8949 = vdwg.mxu0
        %v8950 = vadd.f32 %v8840, %v8945
        %s8951 = sadd.s32 %s7963, 82
        %s8952 = scalar_lea.vmem [#allocation3], %s8951
        %v8953 = vld [vmem:[%s8952] sm:$0x3]
        %v8954 = vpack.c.bf16 %v8953, %v8953
        %s8955 = scalar_lea.vmem %s362, 576 [#allocation14]
        %v8956 = vld [vmem:[%s8955] sm:$0xf]
        %v8957 = vld [vmem:[%s8955 + $0x4] sm:$0xf]
        %v8958 = vld [vmem:[%s8955 + $0x8] sm:$0xf]
        %v8959 = vld [vmem:[%s8955 + $0xc] sm:$0xf]
        %v8960 = vld [vmem:[%s8955 + $0x10] sm:$0xf]
        %v8961 = vld [vmem:[%s8955 + $0x14] sm:$0xf]
        %v8962 = vld [vmem:[%s8955 + $0x18] sm:$0xf]
        %v8963 = vld [vmem:[%s8955 + $0x1c] sm:$0xf]
        %v8964 = vld [vmem:[%s8955 + $0x20] sm:$0xf]
        %v8965 = vld [vmem:[%s8955 + $0x24] sm:$0xf]
        %v8966 = vld [vmem:[%s8955 + $0x28] sm:$0xf]
        %v8967 = vld [vmem:[%s8955 + $0x2c] sm:$0xf]
        %v8968 = vld [vmem:[%s8955 + $0x30] sm:$0xf]
        %v8969 = vld [vmem:[%s8955 + $0x34] sm:$0xf]
        %v8970 = vld [vmem:[%s8955 + $0x38] sm:$0xf]
        %v8971 = vld [vmem:[%s8955 + $0x3c] sm:$0xf]
        %v8988 = vunpack.c.l.b16 %v8956
        %v8989 = vunpack.c.l.b16 %v8957
        %v8990 = vunpack.c.l.b16 %v8958
        %v8991 = vunpack.c.l.b16 %v8959
        %v8992 = vunpack.c.l.b16 %v8960
        %v8993 = vunpack.c.l.b16 %v8961
        %v8994 = vunpack.c.l.b16 %v8962
        %v8995 = vunpack.c.l.b16 %v8963
        %v8996 = vunpack.c.l.b16 %v8964
        %v8997 = vunpack.c.l.b16 %v8965
        %v8998 = vunpack.c.l.b16 %v8966
        %v8999 = vunpack.c.l.b16 %v8967
        %v9000 = vunpack.c.l.b16 %v8968
        %v9001 = vunpack.c.l.b16 %v8969
        %v9002 = vunpack.c.l.b16 %v8970
        %v9003 = vunpack.c.l.b16 %v8971
        %v9004 = vpack.c.b16 %v8989, %v8988
        %v9005 = vpack.c.b16 %v8991, %v8990
        %v9006 = vpack.c.b16 %v8993, %v8992
        %v9007 = vpack.c.b16 %v8995, %v8994
        %v9008 = vpack.c.b16 %v8997, %v8996
        %v9009 = vpack.c.b16 %v8999, %v8998
        %v9010 = vpack.c.b16 %v9001, %v9000
        %v9011 = vpack.c.b16 %v9003, %v9002
        %9020 = vmatprep.subr.bf16.mxu0 0
        %9021 = vmatpush1.bf16.msra.mxu0 %v9011
        %9022 = vmatprep.subr.bf16.mxu0 0
        %9023 = vmatpush1.bf16.msra.mxu0 %v9010
        %9024 = vmatprep.subr.bf16.mxu0 0
        %9025 = vmatpush1.bf16.msra.mxu0 %v9009
        %9026 = vmatprep.subr.bf16.mxu0 0
        %9027 = vmatpush1.bf16.msra.mxu0 %v9008
        %9028 = vmatprep.subr.bf16.mxu0 0
        %9029 = vmatpush1.bf16.msra.mxu0 %v9007
        %9030 = vmatprep.subr.bf16.mxu0 0
        %9031 = vmatpush1.bf16.msra.mxu0 %v9006
        %9032 = vmatprep.subr.bf16.mxu0 0
        %9033 = vmatpush1.bf16.msra.mxu0 %v9005
        %9034 = vmatprep.subr.bf16.mxu0 0
        %9035 = vmatpush1.bf16.msra.mxu0 %v9004
        %9036 = vmatprep.subr.bf16.mxu0 0
        %9037 = vmatpush2.bf16.msra.mxu0 0
        %9038 = vmatprep.subr.bf16.mxu0 0
        %9039 = vmatpush2.bf16.msra.mxu0 0
        %9040 = vmatprep.subr.bf16.mxu0 0
        %9041 = vmatpush2.bf16.msra.mxu0 0
        %9042 = vmatprep.subr.bf16.mxu0 0
        %9043 = vmatpush2.bf16.msra.mxu0 0
        %9044 = vmatprep.subr.bf16.mxu0 0
        %9045 = vmatpush2.bf16.msra.mxu0 0
        %9046 = vmatprep.subr.bf16.mxu0 0
        %9047 = vmatpush2.bf16.msra.mxu0 0
        %9048 = vmatprep.subr.bf16.mxu0 0
        %9049 = vmatpush2.bf16.msra.mxu0 0
        %9050 = vmatprep.subr.bf16.mxu0 0
        %9051 = vmatpush2.bf16.msra.mxu0 0
        %9052 = vmatprep.mubr.bf16.mxu0 0
        %9053 = vmatmul.mubr.bf16.gmra.mxu0 %v8954
        %v9054 = vpop.f32.mrf.mxu0
        %v9055 = vadd.f32 0.0, %v9054
        %v9056 = vpop.f32.mrf.mxu0
        %v9057 = vpop.f32.mrf.mxu0
        %v9058 = vpop.f32.mrf.mxu0
        %9059 = vdwg.mxu0
        %v9060 = vadd.f32 %v8950, %v9055
        %s9061 = sadd.s32 %s7963, 84
        %s9062 = scalar_lea.vmem [#allocation3], %s9061
        %v9063 = vld [vmem:[%s9062] sm:$0x3]
        %v9064 = vpack.c.bf16 %v9063, %v9063
        %s9065 = scalar_lea.vmem %s362, 640 [#allocation14]
        %v9066 = vld [vmem:[%s9065] sm:$0xf]
        %v9067 = vld [vmem:[%s9065 + $0x4] sm:$0xf]
        %v9068 = vld [vmem:[%s9065 + $0x8] sm:$0xf]
        %v9069 = vld [vmem:[%s9065 + $0xc] sm:$0xf]
        %v9070 = vld [vmem:[%s9065 + $0x10] sm:$0xf]
        %v9071 = vld [vmem:[%s9065 + $0x14] sm:$0xf]
        %v9072 = vld [vmem:[%s9065 + $0x18] sm:$0xf]
        %v9073 = vld [vmem:[%s9065 + $0x1c] sm:$0xf]
        %v9074 = vld [vmem:[%s9065 + $0x20] sm:$0xf]
        %v9075 = vld [vmem:[%s9065 + $0x24] sm:$0xf]
        %v9076 = vld [vmem:[%s9065 + $0x28] sm:$0xf]
        %v9077 = vld [vmem:[%s9065 + $0x2c] sm:$0xf]
        %v9078 = vld [vmem:[%s9065 + $0x30] sm:$0xf]
        %v9079 = vld [vmem:[%s9065 + $0x34] sm:$0xf]
        %v9080 = vld [vmem:[%s9065 + $0x38] sm:$0xf]
        %v9081 = vld [vmem:[%s9065 + $0x3c] sm:$0xf]
        %v9098 = vunpack.c.l.b16 %v9066
        %v9099 = vunpack.c.l.b16 %v9067
        %v9100 = vunpack.c.l.b16 %v9068
        %v9101 = vunpack.c.l.b16 %v9069
        %v9102 = vunpack.c.l.b16 %v9070
        %v9103 = vunpack.c.l.b16 %v9071
        %v9104 = vunpack.c.l.b16 %v9072
        %v9105 = vunpack.c.l.b16 %v9073
        %v9106 = vunpack.c.l.b16 %v9074
        %v9107 = vunpack.c.l.b16 %v9075
        %v9108 = vunpack.c.l.b16 %v9076
        %v9109 = vunpack.c.l.b16 %v9077
        %v9110 = vunpack.c.l.b16 %v9078
        %v9111 = vunpack.c.l.b16 %v9079
        %v9112 = vunpack.c.l.b16 %v9080
        %v9113 = vunpack.c.l.b16 %v9081
        %v9114 = vpack.c.b16 %v9099, %v9098
        %v9115 = vpack.c.b16 %v9101, %v9100
        %v9116 = vpack.c.b16 %v9103, %v9102
        %v9117 = vpack.c.b16 %v9105, %v9104
        %v9118 = vpack.c.b16 %v9107, %v9106
        %v9119 = vpack.c.b16 %v9109, %v9108
        %v9120 = vpack.c.b16 %v9111, %v9110
        %v9121 = vpack.c.b16 %v9113, %v9112
        %9130 = vmatprep.subr.bf16.mxu0 0
        %9131 = vmatpush1.bf16.msra.mxu0 %v9121
        %9132 = vmatprep.subr.bf16.mxu0 0
        %9133 = vmatpush1.bf16.msra.mxu0 %v9120
        %9134 = vmatprep.subr.bf16.mxu0 0
        %9135 = vmatpush1.bf16.msra.mxu0 %v9119
        %9136 = vmatprep.subr.bf16.mxu0 0
        %9137 = vmatpush1.bf16.msra.mxu0 %v9118
        %9138 = vmatprep.subr.bf16.mxu0 0
        %9139 = vmatpush1.bf16.msra.mxu0 %v9117
        %9140 = vmatprep.subr.bf16.mxu0 0
        %9141 = vmatpush1.bf16.msra.mxu0 %v9116
        %9142 = vmatprep.subr.bf16.mxu0 0
        %9143 = vmatpush1.bf16.msra.mxu0 %v9115
        %9144 = vmatprep.subr.bf16.mxu0 0
        %9145 = vmatpush1.bf16.msra.mxu0 %v9114
        %9146 = vmatprep.subr.bf16.mxu0 0
        %9147 = vmatpush2.bf16.msra.mxu0 0
        %9148 = vmatprep.subr.bf16.mxu0 0
        %9149 = vmatpush2.bf16.msra.mxu0 0
        %9150 = vmatprep.subr.bf16.mxu0 0
        %9151 = vmatpush2.bf16.msra.mxu0 0
        %9152 = vmatprep.subr.bf16.mxu0 0
        %9153 = vmatpush2.bf16.msra.mxu0 0
        %9154 = vmatprep.subr.bf16.mxu0 0
        %9155 = vmatpush2.bf16.msra.mxu0 0
        %9156 = vmatprep.subr.bf16.mxu0 0
        %9157 = vmatpush2.bf16.msra.mxu0 0
        %9158 = vmatprep.subr.bf16.mxu0 0
        %9159 = vmatpush2.bf16.msra.mxu0 0
        %9160 = vmatprep.subr.bf16.mxu0 0
        %9161 = vmatpush2.bf16.msra.mxu0 0
        %9162 = vmatprep.mubr.bf16.mxu0 0
        %9163 = vmatmul.mubr.bf16.gmra.mxu0 %v9064
        %v9164 = vpop.f32.mrf.mxu0
        %v9165 = vadd.f32 0.0, %v9164
        %v9166 = vpop.f32.mrf.mxu0
        %v9167 = vpop.f32.mrf.mxu0
        %v9168 = vpop.f32.mrf.mxu0
        %9169 = vdwg.mxu0
        %v9170 = vadd.f32 %v9060, %v9165
        %s9171 = sadd.s32 %s7963, 86
        %s9172 = scalar_lea.vmem [#allocation3], %s9171
        %v9173 = vld [vmem:[%s9172] sm:$0x3]
        %v9174 = vpack.c.bf16 %v9173, %v9173
        %s9175 = scalar_lea.vmem %s362, 704 [#allocation14]
        %v9176 = vld [vmem:[%s9175] sm:$0xf]
        %v9177 = vld [vmem:[%s9175 + $0x4] sm:$0xf]
        %v9178 = vld [vmem:[%s9175 + $0x8] sm:$0xf]
        %v9179 = vld [vmem:[%s9175 + $0xc] sm:$0xf]
        %v9180 = vld [vmem:[%s9175 + $0x10] sm:$0xf]
        %v9181 = vld [vmem:[%s9175 + $0x14] sm:$0xf]
        %v9182 = vld [vmem:[%s9175 + $0x18] sm:$0xf]
        %v9183 = vld [vmem:[%s9175 + $0x1c] sm:$0xf]
        %v9184 = vld [vmem:[%s9175 + $0x20] sm:$0xf]
        %v9185 = vld [vmem:[%s9175 + $0x24] sm:$0xf]
        %v9186 = vld [vmem:[%s9175 + $0x28] sm:$0xf]
        %v9187 = vld [vmem:[%s9175 + $0x2c] sm:$0xf]
        %v9188 = vld [vmem:[%s9175 + $0x30] sm:$0xf]
        %v9189 = vld [vmem:[%s9175 + $0x34] sm:$0xf]
        %v9190 = vld [vmem:[%s9175 + $0x38] sm:$0xf]
        %v9191 = vld [vmem:[%s9175 + $0x3c] sm:$0xf]
        %v9208 = vunpack.c.l.b16 %v9176
        %v9209 = vunpack.c.l.b16 %v9177
        %v9210 = vunpack.c.l.b16 %v9178
        %v9211 = vunpack.c.l.b16 %v9179
        %v9212 = vunpack.c.l.b16 %v9180
        %v9213 = vunpack.c.l.b16 %v9181
        %v9214 = vunpack.c.l.b16 %v9182
        %v9215 = vunpack.c.l.b16 %v9183
        %v9216 = vunpack.c.l.b16 %v9184
        %v9217 = vunpack.c.l.b16 %v9185
        %v9218 = vunpack.c.l.b16 %v9186
        %v9219 = vunpack.c.l.b16 %v9187
        %v9220 = vunpack.c.l.b16 %v9188
        %v9221 = vunpack.c.l.b16 %v9189
        %v9222 = vunpack.c.l.b16 %v9190
        %v9223 = vunpack.c.l.b16 %v9191
        %v9224 = vpack.c.b16 %v9209, %v9208
        %v9225 = vpack.c.b16 %v9211, %v9210
        %v9226 = vpack.c.b16 %v9213, %v9212
        %v9227 = vpack.c.b16 %v9215, %v9214
        %v9228 = vpack.c.b16 %v9217, %v9216
        %v9229 = vpack.c.b16 %v9219, %v9218
        %v9230 = vpack.c.b16 %v9221, %v9220
        %v9231 = vpack.c.b16 %v9223, %v9222
        %9240 = vmatprep.subr.bf16.mxu0 0
        %9241 = vmatpush1.bf16.msra.mxu0 %v9231
        %9242 = vmatprep.subr.bf16.mxu0 0
        %9243 = vmatpush1.bf16.msra.mxu0 %v9230
        %9244 = vmatprep.subr.bf16.mxu0 0
        %9245 = vmatpush1.bf16.msra.mxu0 %v9229
        %9246 = vmatprep.subr.bf16.mxu0 0
        %9247 = vmatpush1.bf16.msra.mxu0 %v9228
        %9248 = vmatprep.subr.bf16.mxu0 0
        %9249 = vmatpush1.bf16.msra.mxu0 %v9227
        %9250 = vmatprep.subr.bf16.mxu0 0
        %9251 = vmatpush1.bf16.msra.mxu0 %v9226
        %9252 = vmatprep.subr.bf16.mxu0 0
        %9253 = vmatpush1.bf16.msra.mxu0 %v9225
        %9254 = vmatprep.subr.bf16.mxu0 0
        %9255 = vmatpush1.bf16.msra.mxu0 %v9224
        %9256 = vmatprep.subr.bf16.mxu0 0
        %9257 = vmatpush2.bf16.msra.mxu0 0
        %9258 = vmatprep.subr.bf16.mxu0 0
        %9259 = vmatpush2.bf16.msra.mxu0 0
        %9260 = vmatprep.subr.bf16.mxu0 0
        %9261 = vmatpush2.bf16.msra.mxu0 0
        %9262 = vmatprep.subr.bf16.mxu0 0
        %9263 = vmatpush2.bf16.msra.mxu0 0
        %9264 = vmatprep.subr.bf16.mxu0 0
        %9265 = vmatpush2.bf16.msra.mxu0 0
        %9266 = vmatprep.subr.bf16.mxu0 0
        %9267 = vmatpush2.bf16.msra.mxu0 0
        %9268 = vmatprep.subr.bf16.mxu0 0
        %9269 = vmatpush2.bf16.msra.mxu0 0
        %9270 = vmatprep.subr.bf16.mxu0 0
        %9271 = vmatpush2.bf16.msra.mxu0 0
        %9272 = vmatprep.mubr.bf16.mxu0 0
        %9273 = vmatmul.mubr.bf16.gmra.mxu0 %v9174
        %v9274 = vpop.f32.mrf.mxu0
        %v9275 = vadd.f32 0.0, %v9274
        %v9276 = vpop.f32.mrf.mxu0
        %v9277 = vpop.f32.mrf.mxu0
        %v9278 = vpop.f32.mrf.mxu0
        %9279 = vdwg.mxu0
        %v9280 = vadd.f32 %v9170, %v9275
        %s9281 = sadd.s32 %s7963, 88
        %s9282 = scalar_lea.vmem [#allocation3], %s9281
        %v9283 = vld [vmem:[%s9282] sm:$0x3]
        %v9284 = vpack.c.bf16 %v9283, %v9283
        %s9285 = scalar_lea.vmem %s362, 768 [#allocation14]
        %v9286 = vld [vmem:[%s9285] sm:$0xf]
        %v9287 = vld [vmem:[%s9285 + $0x4] sm:$0xf]
        %v9288 = vld [vmem:[%s9285 + $0x8] sm:$0xf]
        %v9289 = vld [vmem:[%s9285 + $0xc] sm:$0xf]
        %v9290 = vld [vmem:[%s9285 + $0x10] sm:$0xf]
        %v9291 = vld [vmem:[%s9285 + $0x14] sm:$0xf]
        %v9292 = vld [vmem:[%s9285 + $0x18] sm:$0xf]
        %v9293 = vld [vmem:[%s9285 + $0x1c] sm:$0xf]
        %v9294 = vld [vmem:[%s9285 + $0x20] sm:$0xf]
        %v9295 = vld [vmem:[%s9285 + $0x24] sm:$0xf]
        %v9296 = vld [vmem:[%s9285 + $0x28] sm:$0xf]
        %v9297 = vld [vmem:[%s9285 + $0x2c] sm:$0xf]
        %v9298 = vld [vmem:[%s9285 + $0x30] sm:$0xf]
        %v9299 = vld [vmem:[%s9285 + $0x34] sm:$0xf]
        %v9300 = vld [vmem:[%s9285 + $0x38] sm:$0xf]
        %v9301 = vld [vmem:[%s9285 + $0x3c] sm:$0xf]
        %v9318 = vunpack.c.l.b16 %v9286
        %v9319 = vunpack.c.l.b16 %v9287
        %v9320 = vunpack.c.l.b16 %v9288
        %v9321 = vunpack.c.l.b16 %v9289
        %v9322 = vunpack.c.l.b16 %v9290
        %v9323 = vunpack.c.l.b16 %v9291
        %v9324 = vunpack.c.l.b16 %v9292
        %v9325 = vunpack.c.l.b16 %v9293
        %v9326 = vunpack.c.l.b16 %v9294
        %v9327 = vunpack.c.l.b16 %v9295
        %v9328 = vunpack.c.l.b16 %v9296
        %v9329 = vunpack.c.l.b16 %v9297
        %v9330 = vunpack.c.l.b16 %v9298
        %v9331 = vunpack.c.l.b16 %v9299
        %v9332 = vunpack.c.l.b16 %v9300
        %v9333 = vunpack.c.l.b16 %v9301
        %v9334 = vpack.c.b16 %v9319, %v9318
        %v9335 = vpack.c.b16 %v9321, %v9320
        %v9336 = vpack.c.b16 %v9323, %v9322
        %v9337 = vpack.c.b16 %v9325, %v9324
        %v9338 = vpack.c.b16 %v9327, %v9326
        %v9339 = vpack.c.b16 %v9329, %v9328
        %v9340 = vpack.c.b16 %v9331, %v9330
        %v9341 = vpack.c.b16 %v9333, %v9332
        %9350 = vmatprep.subr.bf16.mxu0 0
        %9351 = vmatpush1.bf16.msra.mxu0 %v9341
        %9352 = vmatprep.subr.bf16.mxu0 0
        %9353 = vmatpush1.bf16.msra.mxu0 %v9340
        %9354 = vmatprep.subr.bf16.mxu0 0
        %9355 = vmatpush1.bf16.msra.mxu0 %v9339
        %9356 = vmatprep.subr.bf16.mxu0 0
        %9357 = vmatpush1.bf16.msra.mxu0 %v9338
        %9358 = vmatprep.subr.bf16.mxu0 0
        %9359 = vmatpush1.bf16.msra.mxu0 %v9337
        %9360 = vmatprep.subr.bf16.mxu0 0
        %9361 = vmatpush1.bf16.msra.mxu0 %v9336
        %9362 = vmatprep.subr.bf16.mxu0 0
        %9363 = vmatpush1.bf16.msra.mxu0 %v9335
        %9364 = vmatprep.subr.bf16.mxu0 0
        %9365 = vmatpush1.bf16.msra.mxu0 %v9334
        %9366 = vmatprep.subr.bf16.mxu0 0
        %9367 = vmatpush2.bf16.msra.mxu0 0
        %9368 = vmatprep.subr.bf16.mxu0 0
        %9369 = vmatpush2.bf16.msra.mxu0 0
        %9370 = vmatprep.subr.bf16.mxu0 0
        %9371 = vmatpush2.bf16.msra.mxu0 0
        %9372 = vmatprep.subr.bf16.mxu0 0
        %9373 = vmatpush2.bf16.msra.mxu0 0
        %9374 = vmatprep.subr.bf16.mxu0 0
        %9375 = vmatpush2.bf16.msra.mxu0 0
        %9376 = vmatprep.subr.bf16.mxu0 0
        %9377 = vmatpush2.bf16.msra.mxu0 0
        %9378 = vmatprep.subr.bf16.mxu0 0
        %9379 = vmatpush2.bf16.msra.mxu0 0
        %9380 = vmatprep.subr.bf16.mxu0 0
        %9381 = vmatpush2.bf16.msra.mxu0 0
        %9382 = vmatprep.mubr.bf16.mxu0 0
        %9383 = vmatmul.mubr.bf16.gmra.mxu0 %v9284
        %v9384 = vpop.f32.mrf.mxu0
        %v9385 = vadd.f32 0.0, %v9384
        %v9386 = vpop.f32.mrf.mxu0
        %v9387 = vpop.f32.mrf.mxu0
        %v9388 = vpop.f32.mrf.mxu0
        %9389 = vdwg.mxu0
        %v9390 = vadd.f32 %v9280, %v9385
        %s9391 = sadd.s32 %s7963, 90
        %s9392 = scalar_lea.vmem [#allocation3], %s9391
        %v9393 = vld [vmem:[%s9392] sm:$0x3]
        %v9394 = vpack.c.bf16 %v9393, %v9393
        %s9395 = scalar_lea.vmem %s362, 832 [#allocation14]
        %v9396 = vld [vmem:[%s9395] sm:$0xf]
        %v9397 = vld [vmem:[%s9395 + $0x4] sm:$0xf]
        %v9398 = vld [vmem:[%s9395 + $0x8] sm:$0xf]
        %v9399 = vld [vmem:[%s9395 + $0xc] sm:$0xf]
        %v9400 = vld [vmem:[%s9395 + $0x10] sm:$0xf]
        %v9401 = vld [vmem:[%s9395 + $0x14] sm:$0xf]
        %v9402 = vld [vmem:[%s9395 + $0x18] sm:$0xf]
        %v9403 = vld [vmem:[%s9395 + $0x1c] sm:$0xf]
        %v9404 = vld [vmem:[%s9395 + $0x20] sm:$0xf]
        %v9405 = vld [vmem:[%s9395 + $0x24] sm:$0xf]
        %v9406 = vld [vmem:[%s9395 + $0x28] sm:$0xf]
        %v9407 = vld [vmem:[%s9395 + $0x2c] sm:$0xf]
        %v9408 = vld [vmem:[%s9395 + $0x30] sm:$0xf]
        %v9409 = vld [vmem:[%s9395 + $0x34] sm:$0xf]
        %v9410 = vld [vmem:[%s9395 + $0x38] sm:$0xf]
        %v9411 = vld [vmem:[%s9395 + $0x3c] sm:$0xf]
        %v9428 = vunpack.c.l.b16 %v9396
        %v9429 = vunpack.c.l.b16 %v9397
        %v9430 = vunpack.c.l.b16 %v9398
        %v9431 = vunpack.c.l.b16 %v9399
        %v9432 = vunpack.c.l.b16 %v9400
        %v9433 = vunpack.c.l.b16 %v9401
        %v9434 = vunpack.c.l.b16 %v9402
        %v9435 = vunpack.c.l.b16 %v9403
        %v9436 = vunpack.c.l.b16 %v9404
        %v9437 = vunpack.c.l.b16 %v9405
        %v9438 = vunpack.c.l.b16 %v9406
        %v9439 = vunpack.c.l.b16 %v9407
        %v9440 = vunpack.c.l.b16 %v9408
        %v9441 = vunpack.c.l.b16 %v9409
        %v9442 = vunpack.c.l.b16 %v9410
        %v9443 = vunpack.c.l.b16 %v9411
        %v9444 = vpack.c.b16 %v9429, %v9428
        %v9445 = vpack.c.b16 %v9431, %v9430
        %v9446 = vpack.c.b16 %v9433, %v9432
        %v9447 = vpack.c.b16 %v9435, %v9434
        %v9448 = vpack.c.b16 %v9437, %v9436
        %v9449 = vpack.c.b16 %v9439, %v9438
        %v9450 = vpack.c.b16 %v9441, %v9440
        %v9451 = vpack.c.b16 %v9443, %v9442
        %9460 = vmatprep.subr.bf16.mxu0 0
        %9461 = vmatpush1.bf16.msra.mxu0 %v9451
        %9462 = vmatprep.subr.bf16.mxu0 0
        %9463 = vmatpush1.bf16.msra.mxu0 %v9450
        %9464 = vmatprep.subr.bf16.mxu0 0
        %9465 = vmatpush1.bf16.msra.mxu0 %v9449
        %9466 = vmatprep.subr.bf16.mxu0 0
        %9467 = vmatpush1.bf16.msra.mxu0 %v9448
        %9468 = vmatprep.subr.bf16.mxu0 0
        %9469 = vmatpush1.bf16.msra.mxu0 %v9447
        %9470 = vmatprep.subr.bf16.mxu0 0
        %9471 = vmatpush1.bf16.msra.mxu0 %v9446
        %9472 = vmatprep.subr.bf16.mxu0 0
        %9473 = vmatpush1.bf16.msra.mxu0 %v9445
        %9474 = vmatprep.subr.bf16.mxu0 0
        %9475 = vmatpush1.bf16.msra.mxu0 %v9444
        %9476 = vmatprep.subr.bf16.mxu0 0
        %9477 = vmatpush2.bf16.msra.mxu0 0
        %9478 = vmatprep.subr.bf16.mxu0 0
        %9479 = vmatpush2.bf16.msra.mxu0 0
        %9480 = vmatprep.subr.bf16.mxu0 0
        %9481 = vmatpush2.bf16.msra.mxu0 0
        %9482 = vmatprep.subr.bf16.mxu0 0
        %9483 = vmatpush2.bf16.msra.mxu0 0
        %9484 = vmatprep.subr.bf16.mxu0 0
        %9485 = vmatpush2.bf16.msra.mxu0 0
        %9486 = vmatprep.subr.bf16.mxu0 0
        %9487 = vmatpush2.bf16.msra.mxu0 0
        %9488 = vmatprep.subr.bf16.mxu0 0
        %9489 = vmatpush2.bf16.msra.mxu0 0
        %9490 = vmatprep.subr.bf16.mxu0 0
        %9491 = vmatpush2.bf16.msra.mxu0 0
        %9492 = vmatprep.mubr.bf16.mxu0 0
        %9493 = vmatmul.mubr.bf16.gmra.mxu0 %v9394
        %v9494 = vpop.f32.mrf.mxu0
        %v9495 = vadd.f32 0.0, %v9494
        %v9496 = vpop.f32.mrf.mxu0
        %v9497 = vpop.f32.mrf.mxu0
        %v9498 = vpop.f32.mrf.mxu0
        %9499 = vdwg.mxu0
        %v9500 = vadd.f32 %v9390, %v9495
        %s9501 = sadd.s32 %s7963, 92
        %s9502 = scalar_lea.vmem [#allocation3], %s9501
        %v9503 = vld [vmem:[%s9502] sm:$0x3]
        %v9504 = vpack.c.bf16 %v9503, %v9503
        %s9505 = scalar_lea.vmem %s362, 896 [#allocation14]
        %v9506 = vld [vmem:[%s9505] sm:$0xf]
        %v9507 = vld [vmem:[%s9505 + $0x4] sm:$0xf]
        %v9508 = vld [vmem:[%s9505 + $0x8] sm:$0xf]
        %v9509 = vld [vmem:[%s9505 + $0xc] sm:$0xf]
        %v9510 = vld [vmem:[%s9505 + $0x10] sm:$0xf]
        %v9511 = vld [vmem:[%s9505 + $0x14] sm:$0xf]
        %v9512 = vld [vmem:[%s9505 + $0x18] sm:$0xf]
        %v9513 = vld [vmem:[%s9505 + $0x1c] sm:$0xf]
        %v9514 = vld [vmem:[%s9505 + $0x20] sm:$0xf]
        %v9515 = vld [vmem:[%s9505 + $0x24] sm:$0xf]
        %v9516 = vld [vmem:[%s9505 + $0x28] sm:$0xf]
        %v9517 = vld [vmem:[%s9505 + $0x2c] sm:$0xf]
        %v9518 = vld [vmem:[%s9505 + $0x30] sm:$0xf]
        %v9519 = vld [vmem:[%s9505 + $0x34] sm:$0xf]
        %v9520 = vld [vmem:[%s9505 + $0x38] sm:$0xf]
        %v9521 = vld [vmem:[%s9505 + $0x3c] sm:$0xf]
        %v9538 = vunpack.c.l.b16 %v9506
        %v9539 = vunpack.c.l.b16 %v9507
        %v9540 = vunpack.c.l.b16 %v9508
        %v9541 = vunpack.c.l.b16 %v9509
        %v9542 = vunpack.c.l.b16 %v9510
        %v9543 = vunpack.c.l.b16 %v9511
        %v9544 = vunpack.c.l.b16 %v9512
        %v9545 = vunpack.c.l.b16 %v9513
        %v9546 = vunpack.c.l.b16 %v9514
        %v9547 = vunpack.c.l.b16 %v9515
        %v9548 = vunpack.c.l.b16 %v9516
        %v9549 = vunpack.c.l.b16 %v9517
        %v9550 = vunpack.c.l.b16 %v9518
        %v9551 = vunpack.c.l.b16 %v9519
        %v9552 = vunpack.c.l.b16 %v9520
        %v9553 = vunpack.c.l.b16 %v9521
        %v9554 = vpack.c.b16 %v9539, %v9538
        %v9555 = vpack.c.b16 %v9541, %v9540
        %v9556 = vpack.c.b16 %v9543, %v9542
        %v9557 = vpack.c.b16 %v9545, %v9544
        %v9558 = vpack.c.b16 %v9547, %v9546
        %v9559 = vpack.c.b16 %v9549, %v9548
        %v9560 = vpack.c.b16 %v9551, %v9550
        %v9561 = vpack.c.b16 %v9553, %v9552
        %9570 = vmatprep.subr.bf16.mxu0 0
        %9571 = vmatpush1.bf16.msra.mxu0 %v9561
        %9572 = vmatprep.subr.bf16.mxu0 0
        %9573 = vmatpush1.bf16.msra.mxu0 %v9560
        %9574 = vmatprep.subr.bf16.mxu0 0
        %9575 = vmatpush1.bf16.msra.mxu0 %v9559
        %9576 = vmatprep.subr.bf16.mxu0 0
        %9577 = vmatpush1.bf16.msra.mxu0 %v9558
        %9578 = vmatprep.subr.bf16.mxu0 0
        %9579 = vmatpush1.bf16.msra.mxu0 %v9557
        %9580 = vmatprep.subr.bf16.mxu0 0
        %9581 = vmatpush1.bf16.msra.mxu0 %v9556
        %9582 = vmatprep.subr.bf16.mxu0 0
        %9583 = vmatpush1.bf16.msra.mxu0 %v9555
        %9584 = vmatprep.subr.bf16.mxu0 0
        %9585 = vmatpush1.bf16.msra.mxu0 %v9554
        %9586 = vmatprep.subr.bf16.mxu0 0
        %9587 = vmatpush2.bf16.msra.mxu0 0
        %9588 = vmatprep.subr.bf16.mxu0 0
        %9589 = vmatpush2.bf16.msra.mxu0 0
        %9590 = vmatprep.subr.bf16.mxu0 0
        %9591 = vmatpush2.bf16.msra.mxu0 0
        %9592 = vmatprep.subr.bf16.mxu0 0
        %9593 = vmatpush2.bf16.msra.mxu0 0
        %9594 = vmatprep.subr.bf16.mxu0 0
        %9595 = vmatpush2.bf16.msra.mxu0 0
        %9596 = vmatprep.subr.bf16.mxu0 0
        %9597 = vmatpush2.bf16.msra.mxu0 0
        %9598 = vmatprep.subr.bf16.mxu0 0
        %9599 = vmatpush2.bf16.msra.mxu0 0
        %9600 = vmatprep.subr.bf16.mxu0 0
        %9601 = vmatpush2.bf16.msra.mxu0 0
        %9602 = vmatprep.mubr.bf16.mxu0 0
        %9603 = vmatmul.mubr.bf16.gmra.mxu0 %v9504
        %v9604 = vpop.f32.mrf.mxu0
        %v9605 = vadd.f32 0.0, %v9604
        %v9606 = vpop.f32.mrf.mxu0
        %v9607 = vpop.f32.mrf.mxu0
        %v9608 = vpop.f32.mrf.mxu0
        %9609 = vdwg.mxu0
        %v9610 = vadd.f32 %v9500, %v9605
        %s9611 = sadd.s32 %s7963, 94
        %s9612 = scalar_lea.vmem [#allocation3], %s9611
        %v9613 = vld [vmem:[%s9612] sm:$0x3]
        %v9614 = vpack.c.bf16 %v9613, %v9613
        %s9615 = scalar_lea.vmem %s362, 960 [#allocation14]
        %v9616 = vld [vmem:[%s9615] sm:$0xf]
        %v9617 = vld [vmem:[%s9615 + $0x4] sm:$0xf]
        %v9618 = vld [vmem:[%s9615 + $0x8] sm:$0xf]
        %v9619 = vld [vmem:[%s9615 + $0xc] sm:$0xf]
        %v9620 = vld [vmem:[%s9615 + $0x10] sm:$0xf]
        %v9621 = vld [vmem:[%s9615 + $0x14] sm:$0xf]
        %v9622 = vld [vmem:[%s9615 + $0x18] sm:$0xf]
        %v9623 = vld [vmem:[%s9615 + $0x1c] sm:$0xf]
        %v9624 = vld [vmem:[%s9615 + $0x20] sm:$0xf]
        %v9625 = vld [vmem:[%s9615 + $0x24] sm:$0xf]
        %v9626 = vld [vmem:[%s9615 + $0x28] sm:$0xf]
        %v9627 = vld [vmem:[%s9615 + $0x2c] sm:$0xf]
        %v9628 = vld [vmem:[%s9615 + $0x30] sm:$0xf]
        %v9629 = vld [vmem:[%s9615 + $0x34] sm:$0xf]
        %v9630 = vld [vmem:[%s9615 + $0x38] sm:$0xf]
        %v9631 = vld [vmem:[%s9615 + $0x3c] sm:$0xf]
        %v9648 = vunpack.c.l.b16 %v9616
        %v9649 = vunpack.c.l.b16 %v9617
        %v9650 = vunpack.c.l.b16 %v9618
        %v9651 = vunpack.c.l.b16 %v9619
        %v9652 = vunpack.c.l.b16 %v9620
        %v9653 = vunpack.c.l.b16 %v9621
        %v9654 = vunpack.c.l.b16 %v9622
        %v9655 = vunpack.c.l.b16 %v9623
        %v9656 = vunpack.c.l.b16 %v9624
        %v9657 = vunpack.c.l.b16 %v9625
        %v9658 = vunpack.c.l.b16 %v9626
        %v9659 = vunpack.c.l.b16 %v9627
        %v9660 = vunpack.c.l.b16 %v9628
        %v9661 = vunpack.c.l.b16 %v9629
        %v9662 = vunpack.c.l.b16 %v9630
        %v9663 = vunpack.c.l.b16 %v9631
        %v9664 = vpack.c.b16 %v9649, %v9648
        %v9665 = vpack.c.b16 %v9651, %v9650
        %v9666 = vpack.c.b16 %v9653, %v9652
        %v9667 = vpack.c.b16 %v9655, %v9654
        %v9668 = vpack.c.b16 %v9657, %v9656
        %v9669 = vpack.c.b16 %v9659, %v9658
        %v9670 = vpack.c.b16 %v9661, %v9660
        %v9671 = vpack.c.b16 %v9663, %v9662
        %9680 = vmatprep.subr.bf16.mxu0 0
        %9681 = vmatpush1.bf16.msra.mxu0 %v9671
        %9682 = vmatprep.subr.bf16.mxu0 0
        %9683 = vmatpush1.bf16.msra.mxu0 %v9670
        %9684 = vmatprep.subr.bf16.mxu0 0
        %9685 = vmatpush1.bf16.msra.mxu0 %v9669
        %9686 = vmatprep.subr.bf16.mxu0 0
        %9687 = vmatpush1.bf16.msra.mxu0 %v9668
        %9688 = vmatprep.subr.bf16.mxu0 0
        %9689 = vmatpush1.bf16.msra.mxu0 %v9667
        %9690 = vmatprep.subr.bf16.mxu0 0
        %9691 = vmatpush1.bf16.msra.mxu0 %v9666
        %9692 = vmatprep.subr.bf16.mxu0 0
        %9693 = vmatpush1.bf16.msra.mxu0 %v9665
        %9694 = vmatprep.subr.bf16.mxu0 0
        %9695 = vmatpush1.bf16.msra.mxu0 %v9664
        %9696 = vmatprep.subr.bf16.mxu0 0
        %9697 = vmatpush2.bf16.msra.mxu0 0
        %9698 = vmatprep.subr.bf16.mxu0 0
        %9699 = vmatpush2.bf16.msra.mxu0 0
        %9700 = vmatprep.subr.bf16.mxu0 0
        %9701 = vmatpush2.bf16.msra.mxu0 0
        %9702 = vmatprep.subr.bf16.mxu0 0
        %9703 = vmatpush2.bf16.msra.mxu0 0
        %9704 = vmatprep.subr.bf16.mxu0 0
        %9705 = vmatpush2.bf16.msra.mxu0 0
        %9706 = vmatprep.subr.bf16.mxu0 0
        %9707 = vmatpush2.bf16.msra.mxu0 0
        %9708 = vmatprep.subr.bf16.mxu0 0
        %9709 = vmatpush2.bf16.msra.mxu0 0
        %9710 = vmatprep.subr.bf16.mxu0 0
        %9711 = vmatpush2.bf16.msra.mxu0 0
        %9712 = vmatprep.mubr.bf16.mxu0 0
        %9713 = vmatmul.mubr.bf16.gmra.mxu0 %v9614
        %v9714 = vpop.f32.mrf.mxu0
        %v9715 = vadd.f32 0.0, %v9714
        %v9716 = vpop.f32.mrf.mxu0
        %v9717 = vpop.f32.mrf.mxu0
        %v9718 = vpop.f32.mrf.mxu0
        %9719 = vdwg.mxu0
        %v9720 = vadd.f32 %v9610, %v9715
        %s9721 = sadd.s32 %s7963, 96
        %s9722 = scalar_lea.vmem [#allocation3], %s9721
        %v9723 = vld [vmem:[%s9722] sm:$0x3]
        %v9724 = vpack.c.bf16 %v9723, %v9723
        %s9725 = scalar_lea.vmem %s362, 1024 [#allocation14]
        %v9726 = vld [vmem:[%s9725] sm:$0xf]
        %v9727 = vld [vmem:[%s9725 + $0x4] sm:$0xf]
        %v9728 = vld [vmem:[%s9725 + $0x8] sm:$0xf]
        %v9729 = vld [vmem:[%s9725 + $0xc] sm:$0xf]
        %v9730 = vld [vmem:[%s9725 + $0x10] sm:$0xf]
        %v9731 = vld [vmem:[%s9725 + $0x14] sm:$0xf]
        %v9732 = vld [vmem:[%s9725 + $0x18] sm:$0xf]
        %v9733 = vld [vmem:[%s9725 + $0x1c] sm:$0xf]
        %v9734 = vld [vmem:[%s9725 + $0x20] sm:$0xf]
        %v9735 = vld [vmem:[%s9725 + $0x24] sm:$0xf]
        %v9736 = vld [vmem:[%s9725 + $0x28] sm:$0xf]
        %v9737 = vld [vmem:[%s9725 + $0x2c] sm:$0xf]
        %v9738 = vld [vmem:[%s9725 + $0x30] sm:$0xf]
        %v9739 = vld [vmem:[%s9725 + $0x34] sm:$0xf]
        %v9740 = vld [vmem:[%s9725 + $0x38] sm:$0xf]
        %v9741 = vld [vmem:[%s9725 + $0x3c] sm:$0xf]
        %v9758 = vunpack.c.l.b16 %v9726
        %v9759 = vunpack.c.l.b16 %v9727
        %v9760 = vunpack.c.l.b16 %v9728
        %v9761 = vunpack.c.l.b16 %v9729
        %v9762 = vunpack.c.l.b16 %v9730
        %v9763 = vunpack.c.l.b16 %v9731
        %v9764 = vunpack.c.l.b16 %v9732
        %v9765 = vunpack.c.l.b16 %v9733
        %v9766 = vunpack.c.l.b16 %v9734
        %v9767 = vunpack.c.l.b16 %v9735
        %v9768 = vunpack.c.l.b16 %v9736
        %v9769 = vunpack.c.l.b16 %v9737
        %v9770 = vunpack.c.l.b16 %v9738
        %v9771 = vunpack.c.l.b16 %v9739
        %v9772 = vunpack.c.l.b16 %v9740
        %v9773 = vunpack.c.l.b16 %v9741
        %v9774 = vpack.c.b16 %v9759, %v9758
        %v9775 = vpack.c.b16 %v9761, %v9760
        %v9776 = vpack.c.b16 %v9763, %v9762
        %v9777 = vpack.c.b16 %v9765, %v9764
        %v9778 = vpack.c.b16 %v9767, %v9766
        %v9779 = vpack.c.b16 %v9769, %v9768
        %v9780 = vpack.c.b16 %v9771, %v9770
        %v9781 = vpack.c.b16 %v9773, %v9772
        %9790 = vmatprep.subr.bf16.mxu0 0
        %9791 = vmatpush1.bf16.msra.mxu0 %v9781
        %9792 = vmatprep.subr.bf16.mxu0 0
        %9793 = vmatpush1.bf16.msra.mxu0 %v9780
        %9794 = vmatprep.subr.bf16.mxu0 0
        %9795 = vmatpush1.bf16.msra.mxu0 %v9779
        %9796 = vmatprep.subr.bf16.mxu0 0
        %9797 = vmatpush1.bf16.msra.mxu0 %v9778
        %9798 = vmatprep.subr.bf16.mxu0 0
        %9799 = vmatpush1.bf16.msra.mxu0 %v9777
        %9800 = vmatprep.subr.bf16.mxu0 0
        %9801 = vmatpush1.bf16.msra.mxu0 %v9776
        %9802 = vmatprep.subr.bf16.mxu0 0
        %9803 = vmatpush1.bf16.msra.mxu0 %v9775
        %9804 = vmatprep.subr.bf16.mxu0 0
        %9805 = vmatpush1.bf16.msra.mxu0 %v9774
        %9806 = vmatprep.subr.bf16.mxu0 0
        %9807 = vmatpush2.bf16.msra.mxu0 0
        %9808 = vmatprep.subr.bf16.mxu0 0
        %9809 = vmatpush2.bf16.msra.mxu0 0
        %9810 = vmatprep.subr.bf16.mxu0 0
        %9811 = vmatpush2.bf16.msra.mxu0 0
        %9812 = vmatprep.subr.bf16.mxu0 0
        %9813 = vmatpush2.bf16.msra.mxu0 0
        %9814 = vmatprep.subr.bf16.mxu0 0
        %9815 = vmatpush2.bf16.msra.mxu0 0
        %9816 = vmatprep.subr.bf16.mxu0 0
        %9817 = vmatpush2.bf16.msra.mxu0 0
        %9818 = vmatprep.subr.bf16.mxu0 0
        %9819 = vmatpush2.bf16.msra.mxu0 0
        %9820 = vmatprep.subr.bf16.mxu0 0
        %9821 = vmatpush2.bf16.msra.mxu0 0
        %9822 = vmatprep.mubr.bf16.mxu0 0
        %9823 = vmatmul.mubr.bf16.gmra.mxu0 %v9724
        %v9824 = vpop.f32.mrf.mxu0
        %v9825 = vadd.f32 0.0, %v9824
        %v9826 = vpop.f32.mrf.mxu0
        %v9827 = vpop.f32.mrf.mxu0
        %v9828 = vpop.f32.mrf.mxu0
        %9829 = vdwg.mxu0
        %v9830 = vadd.f32 %v9720, %v9825
        %s9831 = sadd.s32 %s7963, 98
        %s9832 = scalar_lea.vmem [#allocation3], %s9831
        %v9833 = vld [vmem:[%s9832] sm:$0x3]
        %v9834 = vpack.c.bf16 %v9833, %v9833
        %s9835 = scalar_lea.vmem %s362, 1088 [#allocation14]
        %v9836 = vld [vmem:[%s9835] sm:$0xf]
        %v9837 = vld [vmem:[%s9835 + $0x4] sm:$0xf]
        %v9838 = vld [vmem:[%s9835 + $0x8] sm:$0xf]
        %v9839 = vld [vmem:[%s9835 + $0xc] sm:$0xf]
        %v9840 = vld [vmem:[%s9835 + $0x10] sm:$0xf]
        %v9841 = vld [vmem:[%s9835 + $0x14] sm:$0xf]
        %v9842 = vld [vmem:[%s9835 + $0x18] sm:$0xf]
        %v9843 = vld [vmem:[%s9835 + $0x1c] sm:$0xf]
        %v9844 = vld [vmem:[%s9835 + $0x20] sm:$0xf]
        %v9845 = vld [vmem:[%s9835 + $0x24] sm:$0xf]
        %v9846 = vld [vmem:[%s9835 + $0x28] sm:$0xf]
        %v9847 = vld [vmem:[%s9835 + $0x2c] sm:$0xf]
        %v9848 = vld [vmem:[%s9835 + $0x30] sm:$0xf]
        %v9849 = vld [vmem:[%s9835 + $0x34] sm:$0xf]
        %v9850 = vld [vmem:[%s9835 + $0x38] sm:$0xf]
        %v9851 = vld [vmem:[%s9835 + $0x3c] sm:$0xf]
        %v9868 = vunpack.c.l.b16 %v9836
        %v9869 = vunpack.c.l.b16 %v9837
        %v9870 = vunpack.c.l.b16 %v9838
        %v9871 = vunpack.c.l.b16 %v9839
        %v9872 = vunpack.c.l.b16 %v9840
        %v9873 = vunpack.c.l.b16 %v9841
        %v9874 = vunpack.c.l.b16 %v9842
        %v9875 = vunpack.c.l.b16 %v9843
        %v9876 = vunpack.c.l.b16 %v9844
        %v9877 = vunpack.c.l.b16 %v9845
        %v9878 = vunpack.c.l.b16 %v9846
        %v9879 = vunpack.c.l.b16 %v9847
        %v9880 = vunpack.c.l.b16 %v9848
        %v9881 = vunpack.c.l.b16 %v9849
        %v9882 = vunpack.c.l.b16 %v9850
        %v9883 = vunpack.c.l.b16 %v9851
        %v9884 = vpack.c.b16 %v9869, %v9868
        %v9885 = vpack.c.b16 %v9871, %v9870
        %v9886 = vpack.c.b16 %v9873, %v9872
        %v9887 = vpack.c.b16 %v9875, %v9874
        %v9888 = vpack.c.b16 %v9877, %v9876
        %v9889 = vpack.c.b16 %v9879, %v9878
        %v9890 = vpack.c.b16 %v9881, %v9880
        %v9891 = vpack.c.b16 %v9883, %v9882
        %9900 = vmatprep.subr.bf16.mxu0 0
        %9901 = vmatpush1.bf16.msra.mxu0 %v9891
        %9902 = vmatprep.subr.bf16.mxu0 0
        %9903 = vmatpush1.bf16.msra.mxu0 %v9890
        %9904 = vmatprep.subr.bf16.mxu0 0
        %9905 = vmatpush1.bf16.msra.mxu0 %v9889
        %9906 = vmatprep.subr.bf16.mxu0 0
        %9907 = vmatpush1.bf16.msra.mxu0 %v9888
        %9908 = vmatprep.subr.bf16.mxu0 0
        %9909 = vmatpush1.bf16.msra.mxu0 %v9887
        %9910 = vmatprep.subr.bf16.mxu0 0
        %9911 = vmatpush1.bf16.msra.mxu0 %v9886
        %9912 = vmatprep.subr.bf16.mxu0 0
        %9913 = vmatpush1.bf16.msra.mxu0 %v9885
        %9914 = vmatprep.subr.bf16.mxu0 0
        %9915 = vmatpush1.bf16.msra.mxu0 %v9884
        %9916 = vmatprep.subr.bf16.mxu0 0
        %9917 = vmatpush2.bf16.msra.mxu0 0
        %9918 = vmatprep.subr.bf16.mxu0 0
        %9919 = vmatpush2.bf16.msra.mxu0 0
        %9920 = vmatprep.subr.bf16.mxu0 0
        %9921 = vmatpush2.bf16.msra.mxu0 0
        %9922 = vmatprep.subr.bf16.mxu0 0
        %9923 = vmatpush2.bf16.msra.mxu0 0
        %9924 = vmatprep.subr.bf16.mxu0 0
        %9925 = vmatpush2.bf16.msra.mxu0 0
        %9926 = vmatprep.subr.bf16.mxu0 0
        %9927 = vmatpush2.bf16.msra.mxu0 0
        %9928 = vmatprep.subr.bf16.mxu0 0
        %9929 = vmatpush2.bf16.msra.mxu0 0
        %9930 = vmatprep.subr.bf16.mxu0 0
        %9931 = vmatpush2.bf16.msra.mxu0 0
        %9932 = vmatprep.mubr.bf16.mxu0 0
        %9933 = vmatmul.mubr.bf16.gmra.mxu0 %v9834
        %v9934 = vpop.f32.mrf.mxu0
        %v9935 = vadd.f32 0.0, %v9934
        %v9936 = vpop.f32.mrf.mxu0
        %v9937 = vpop.f32.mrf.mxu0
        %v9938 = vpop.f32.mrf.mxu0
        %9939 = vdwg.mxu0
        %v9940 = vadd.f32 %v9830, %v9935
        %s9941 = sadd.s32 %s7963, 108
        %s9942 = scalar_lea.vmem [#allocation3], %s9941
        %v9943 = vld [vmem:[%s9942] sm:$0x3]
        %v9944 = vpack.c.bf16 %v9943, %v9943
        %s9945 = scalar_lea.vmem %s362, 1152 [#allocation14]
        %v9946 = vld [vmem:[%s9945] sm:$0xf]
        %v9947 = vld [vmem:[%s9945 + $0x4] sm:$0xf]
        %v9948 = vld [vmem:[%s9945 + $0x8] sm:$0xf]
        %v9949 = vld [vmem:[%s9945 + $0xc] sm:$0xf]
        %v9950 = vld [vmem:[%s9945 + $0x10] sm:$0xf]
        %v9951 = vld [vmem:[%s9945 + $0x14] sm:$0xf]
        %v9952 = vld [vmem:[%s9945 + $0x18] sm:$0xf]
        %v9953 = vld [vmem:[%s9945 + $0x1c] sm:$0xf]
        %v9954 = vld [vmem:[%s9945 + $0x20] sm:$0xf]
        %v9955 = vld [vmem:[%s9945 + $0x24] sm:$0xf]
        %v9956 = vld [vmem:[%s9945 + $0x28] sm:$0xf]
        %v9957 = vld [vmem:[%s9945 + $0x2c] sm:$0xf]
        %v9958 = vld [vmem:[%s9945 + $0x30] sm:$0xf]
        %v9959 = vld [vmem:[%s9945 + $0x34] sm:$0xf]
        %v9960 = vld [vmem:[%s9945 + $0x38] sm:$0xf]
        %v9961 = vld [vmem:[%s9945 + $0x3c] sm:$0xf]
        %v9978 = vunpack.c.l.b16 %v9946
        %v9979 = vunpack.c.l.b16 %v9947
        %v9980 = vunpack.c.l.b16 %v9948
        %v9981 = vunpack.c.l.b16 %v9949
        %v9982 = vunpack.c.l.b16 %v9950
        %v9983 = vunpack.c.l.b16 %v9951
        %v9984 = vunpack.c.l.b16 %v9952
        %v9985 = vunpack.c.l.b16 %v9953
        %v9986 = vunpack.c.l.b16 %v9954
        %v9987 = vunpack.c.l.b16 %v9955
        %v9988 = vunpack.c.l.b16 %v9956
        %v9989 = vunpack.c.l.b16 %v9957
        %v9990 = vunpack.c.l.b16 %v9958
        %v9991 = vunpack.c.l.b16 %v9959
        %v9992 = vunpack.c.l.b16 %v9960
        %v9993 = vunpack.c.l.b16 %v9961
        %v9994 = vpack.c.b16 %v9979, %v9978
        %v9995 = vpack.c.b16 %v9981, %v9980
        %v9996 = vpack.c.b16 %v9983, %v9982
        %v9997 = vpack.c.b16 %v9985, %v9984
        %v9998 = vpack.c.b16 %v9987, %v9986
        %v9999 = vpack.c.b16 %v9989, %v9988
        %v10000 = vpack.c.b16 %v9991, %v9990
        %v10001 = vpack.c.b16 %v9993, %v9992
        %10010 = vmatprep.subr.bf16.mxu0 0
        %10011 = vmatpush1.bf16.msra.mxu0 %v10001
        %10012 = vmatprep.subr.bf16.mxu0 0
        %10013 = vmatpush1.bf16.msra.mxu0 %v10000
        %10014 = vmatprep.subr.bf16.mxu0 0
        %10015 = vmatpush1.bf16.msra.mxu0 %v9999
        %10016 = vmatprep.subr.bf16.mxu0 0
        %10017 = vmatpush1.bf16.msra.mxu0 %v9998
        %10018 = vmatprep.subr.bf16.mxu0 0
        %10019 = vmatpush1.bf16.msra.mxu0 %v9997
        %10020 = vmatprep.subr.bf16.mxu0 0
        %10021 = vmatpush1.bf16.msra.mxu0 %v9996
        %10022 = vmatprep.subr.bf16.mxu0 0
        %10023 = vmatpush1.bf16.msra.mxu0 %v9995
        %10024 = vmatprep.subr.bf16.mxu0 0
        %10025 = vmatpush1.bf16.msra.mxu0 %v9994
        %10026 = vmatprep.subr.bf16.mxu0 0
        %10027 = vmatpush2.bf16.msra.mxu0 0
        %10028 = vmatprep.subr.bf16.mxu0 0
        %10029 = vmatpush2.bf16.msra.mxu0 0
        %10030 = vmatprep.subr.bf16.mxu0 0
        %10031 = vmatpush2.bf16.msra.mxu0 0
        %10032 = vmatprep.subr.bf16.mxu0 0
        %10033 = vmatpush2.bf16.msra.mxu0 0
        %10034 = vmatprep.subr.bf16.mxu0 0
        %10035 = vmatpush2.bf16.msra.mxu0 0
        %10036 = vmatprep.subr.bf16.mxu0 0
        %10037 = vmatpush2.bf16.msra.mxu0 0
        %10038 = vmatprep.subr.bf16.mxu0 0
        %10039 = vmatpush2.bf16.msra.mxu0 0
        %10040 = vmatprep.subr.bf16.mxu0 0
        %10041 = vmatpush2.bf16.msra.mxu0 0
        %10042 = vmatprep.mubr.bf16.mxu0 0
        %10043 = vmatmul.mubr.bf16.gmra.mxu0 %v9944
        %v10044 = vpop.f32.mrf.mxu0
        %v10045 = vadd.f32 0.0, %v10044
        %v10046 = vpop.f32.mrf.mxu0
        %v10047 = vpop.f32.mrf.mxu0
        %v10048 = vpop.f32.mrf.mxu0
        %10049 = vdwg.mxu0
        %v10050 = vadd.f32 %v9940, %v10045
        %s10051 = sadd.s32 %s7963, 110
        %s10052 = scalar_lea.vmem [#allocation3], %s10051
        %v10053 = vld [vmem:[%s10052] sm:$0x3]
        %v10054 = vpack.c.bf16 %v10053, %v10053
        %s10055 = scalar_lea.vmem %s362, 1216 [#allocation14]
        %v10056 = vld [vmem:[%s10055] sm:$0xf]
        %v10057 = vld [vmem:[%s10055 + $0x4] sm:$0xf]
        %v10058 = vld [vmem:[%s10055 + $0x8] sm:$0xf]
        %v10059 = vld [vmem:[%s10055 + $0xc] sm:$0xf]
        %v10060 = vld [vmem:[%s10055 + $0x10] sm:$0xf]
        %v10061 = vld [vmem:[%s10055 + $0x14] sm:$0xf]
        %v10062 = vld [vmem:[%s10055 + $0x18] sm:$0xf]
        %v10063 = vld [vmem:[%s10055 + $0x1c] sm:$0xf]
        %v10064 = vld [vmem:[%s10055 + $0x20] sm:$0xf]
        %v10065 = vld [vmem:[%s10055 + $0x24] sm:$0xf]
        %v10066 = vld [vmem:[%s10055 + $0x28] sm:$0xf]
        %v10067 = vld [vmem:[%s10055 + $0x2c] sm:$0xf]
        %v10068 = vld [vmem:[%s10055 + $0x30] sm:$0xf]
        %v10069 = vld [vmem:[%s10055 + $0x34] sm:$0xf]
        %v10070 = vld [vmem:[%s10055 + $0x38] sm:$0xf]
        %v10071 = vld [vmem:[%s10055 + $0x3c] sm:$0xf]
        %v10088 = vunpack.c.l.b16 %v10056
        %v10089 = vunpack.c.l.b16 %v10057
        %v10090 = vunpack.c.l.b16 %v10058
        %v10091 = vunpack.c.l.b16 %v10059
        %v10092 = vunpack.c.l.b16 %v10060
        %v10093 = vunpack.c.l.b16 %v10061
        %v10094 = vunpack.c.l.b16 %v10062
        %v10095 = vunpack.c.l.b16 %v10063
        %v10096 = vunpack.c.l.b16 %v10064
        %v10097 = vunpack.c.l.b16 %v10065
        %v10098 = vunpack.c.l.b16 %v10066
        %v10099 = vunpack.c.l.b16 %v10067
        %v10100 = vunpack.c.l.b16 %v10068
        %v10101 = vunpack.c.l.b16 %v10069
        %v10102 = vunpack.c.l.b16 %v10070
        %v10103 = vunpack.c.l.b16 %v10071
        %v10104 = vpack.c.b16 %v10089, %v10088
        %v10105 = vpack.c.b16 %v10091, %v10090
        %v10106 = vpack.c.b16 %v10093, %v10092
        %v10107 = vpack.c.b16 %v10095, %v10094
        %v10108 = vpack.c.b16 %v10097, %v10096
        %v10109 = vpack.c.b16 %v10099, %v10098
        %v10110 = vpack.c.b16 %v10101, %v10100
        %v10111 = vpack.c.b16 %v10103, %v10102
        %10120 = vmatprep.subr.bf16.mxu0 0
        %10121 = vmatpush1.bf16.msra.mxu0 %v10111
        %10122 = vmatprep.subr.bf16.mxu0 0
        %10123 = vmatpush1.bf16.msra.mxu0 %v10110
        %10124 = vmatprep.subr.bf16.mxu0 0
        %10125 = vmatpush1.bf16.msra.mxu0 %v10109
        %10126 = vmatprep.subr.bf16.mxu0 0
        %10127 = vmatpush1.bf16.msra.mxu0 %v10108
        %10128 = vmatprep.subr.bf16.mxu0 0
        %10129 = vmatpush1.bf16.msra.mxu0 %v10107
        %10130 = vmatprep.subr.bf16.mxu0 0
        %10131 = vmatpush1.bf16.msra.mxu0 %v10106
        %10132 = vmatprep.subr.bf16.mxu0 0
        %10133 = vmatpush1.bf16.msra.mxu0 %v10105
        %10134 = vmatprep.subr.bf16.mxu0 0
        %10135 = vmatpush1.bf16.msra.mxu0 %v10104
        %10136 = vmatprep.subr.bf16.mxu0 0
        %10137 = vmatpush2.bf16.msra.mxu0 0
        %10138 = vmatprep.subr.bf16.mxu0 0
        %10139 = vmatpush2.bf16.msra.mxu0 0
        %10140 = vmatprep.subr.bf16.mxu0 0
        %10141 = vmatpush2.bf16.msra.mxu0 0
        %10142 = vmatprep.subr.bf16.mxu0 0
        %10143 = vmatpush2.bf16.msra.mxu0 0
        %10144 = vmatprep.subr.bf16.mxu0 0
        %10145 = vmatpush2.bf16.msra.mxu0 0
        %10146 = vmatprep.subr.bf16.mxu0 0
        %10147 = vmatpush2.bf16.msra.mxu0 0
        %10148 = vmatprep.subr.bf16.mxu0 0
        %10149 = vmatpush2.bf16.msra.mxu0 0
        %10150 = vmatprep.subr.bf16.mxu0 0
        %10151 = vmatpush2.bf16.msra.mxu0 0
        %10152 = vmatprep.mubr.bf16.mxu0 0
        %10153 = vmatmul.mubr.bf16.gmra.mxu0 %v10054
        %v10154 = vpop.f32.mrf.mxu0
        %v10155 = vadd.f32 0.0, %v10154
        %v10156 = vpop.f32.mrf.mxu0
        %v10157 = vpop.f32.mrf.mxu0
        %v10158 = vpop.f32.mrf.mxu0
        %10159 = vdwg.mxu0
        %v10160 = vadd.f32 %v10050, %v10155
        %s10161 = sadd.s32 %s7963, 112
        %s10162 = scalar_lea.vmem [#allocation3], %s10161
        %v10163 = vld [vmem:[%s10162] sm:$0x3]
        %v10164 = vpack.c.bf16 %v10163, %v10163
        %s10165 = scalar_lea.vmem %s362, 1280 [#allocation14]
        %v10166 = vld [vmem:[%s10165] sm:$0xf]
        %v10167 = vld [vmem:[%s10165 + $0x4] sm:$0xf]
        %v10168 = vld [vmem:[%s10165 + $0x8] sm:$0xf]
        %v10169 = vld [vmem:[%s10165 + $0xc] sm:$0xf]
        %v10170 = vld [vmem:[%s10165 + $0x10] sm:$0xf]
        %v10171 = vld [vmem:[%s10165 + $0x14] sm:$0xf]
        %v10172 = vld [vmem:[%s10165 + $0x18] sm:$0xf]
        %v10173 = vld [vmem:[%s10165 + $0x1c] sm:$0xf]
        %v10174 = vld [vmem:[%s10165 + $0x20] sm:$0xf]
        %v10175 = vld [vmem:[%s10165 + $0x24] sm:$0xf]
        %v10176 = vld [vmem:[%s10165 + $0x28] sm:$0xf]
        %v10177 = vld [vmem:[%s10165 + $0x2c] sm:$0xf]
        %v10178 = vld [vmem:[%s10165 + $0x30] sm:$0xf]
        %v10179 = vld [vmem:[%s10165 + $0x34] sm:$0xf]
        %v10180 = vld [vmem:[%s10165 + $0x38] sm:$0xf]
        %v10181 = vld [vmem:[%s10165 + $0x3c] sm:$0xf]
        %v10198 = vunpack.c.l.b16 %v10166
        %v10199 = vunpack.c.l.b16 %v10167
        %v10200 = vunpack.c.l.b16 %v10168
        %v10201 = vunpack.c.l.b16 %v10169
        %v10202 = vunpack.c.l.b16 %v10170
        %v10203 = vunpack.c.l.b16 %v10171
        %v10204 = vunpack.c.l.b16 %v10172
        %v10205 = vunpack.c.l.b16 %v10173
        %v10206 = vunpack.c.l.b16 %v10174
        %v10207 = vunpack.c.l.b16 %v10175
        %v10208 = vunpack.c.l.b16 %v10176
        %v10209 = vunpack.c.l.b16 %v10177
        %v10210 = vunpack.c.l.b16 %v10178
        %v10211 = vunpack.c.l.b16 %v10179
        %v10212 = vunpack.c.l.b16 %v10180
        %v10213 = vunpack.c.l.b16 %v10181
        %v10214 = vpack.c.b16 %v10199, %v10198
        %v10215 = vpack.c.b16 %v10201, %v10200
        %v10216 = vpack.c.b16 %v10203, %v10202
        %v10217 = vpack.c.b16 %v10205, %v10204
        %v10218 = vpack.c.b16 %v10207, %v10206
        %v10219 = vpack.c.b16 %v10209, %v10208
        %v10220 = vpack.c.b16 %v10211, %v10210
        %v10221 = vpack.c.b16 %v10213, %v10212
        %10230 = vmatprep.subr.bf16.mxu0 0
        %10231 = vmatpush1.bf16.msra.mxu0 %v10221
        %10232 = vmatprep.subr.bf16.mxu0 0
        %10233 = vmatpush1.bf16.msra.mxu0 %v10220
        %10234 = vmatprep.subr.bf16.mxu0 0
        %10235 = vmatpush1.bf16.msra.mxu0 %v10219
        %10236 = vmatprep.subr.bf16.mxu0 0
        %10237 = vmatpush1.bf16.msra.mxu0 %v10218
        %10238 = vmatprep.subr.bf16.mxu0 0
        %10239 = vmatpush1.bf16.msra.mxu0 %v10217
        %10240 = vmatprep.subr.bf16.mxu0 0
        %10241 = vmatpush1.bf16.msra.mxu0 %v10216
        %10242 = vmatprep.subr.bf16.mxu0 0
        %10243 = vmatpush1.bf16.msra.mxu0 %v10215
        %10244 = vmatprep.subr.bf16.mxu0 0
        %10245 = vmatpush1.bf16.msra.mxu0 %v10214
        %10246 = vmatprep.subr.bf16.mxu0 0
        %10247 = vmatpush2.bf16.msra.mxu0 0
        %10248 = vmatprep.subr.bf16.mxu0 0
        %10249 = vmatpush2.bf16.msra.mxu0 0
        %10250 = vmatprep.subr.bf16.mxu0 0
        %10251 = vmatpush2.bf16.msra.mxu0 0
        %10252 = vmatprep.subr.bf16.mxu0 0
        %10253 = vmatpush2.bf16.msra.mxu0 0
        %10254 = vmatprep.subr.bf16.mxu0 0
        %10255 = vmatpush2.bf16.msra.mxu0 0
        %10256 = vmatprep.subr.bf16.mxu0 0
        %10257 = vmatpush2.bf16.msra.mxu0 0
        %10258 = vmatprep.subr.bf16.mxu0 0
        %10259 = vmatpush2.bf16.msra.mxu0 0
        %10260 = vmatprep.subr.bf16.mxu0 0
        %10261 = vmatpush2.bf16.msra.mxu0 0
        %10262 = vmatprep.mubr.bf16.mxu0 0
        %10263 = vmatmul.mubr.bf16.gmra.mxu0 %v10164
        %v10264 = vpop.f32.mrf.mxu0
        %v10265 = vadd.f32 0.0, %v10264
        %v10266 = vpop.f32.mrf.mxu0
        %v10267 = vpop.f32.mrf.mxu0
        %v10268 = vpop.f32.mrf.mxu0
        %10269 = vdwg.mxu0
        %v10270 = vadd.f32 %v10160, %v10265
        %s10271 = sadd.s32 %s7963, 114
        %s10272 = scalar_lea.vmem [#allocation3], %s10271
        %v10273 = vld [vmem:[%s10272] sm:$0x3]
        %v10274 = vpack.c.bf16 %v10273, %v10273
        %s10275 = scalar_lea.vmem %s362, 1344 [#allocation14]
        %v10276 = vld [vmem:[%s10275] sm:$0xf]
        %v10277 = vld [vmem:[%s10275 + $0x4] sm:$0xf]
        %v10278 = vld [vmem:[%s10275 + $0x8] sm:$0xf]
        %v10279 = vld [vmem:[%s10275 + $0xc] sm:$0xf]
        %v10280 = vld [vmem:[%s10275 + $0x10] sm:$0xf]
        %v10281 = vld [vmem:[%s10275 + $0x14] sm:$0xf]
        %v10282 = vld [vmem:[%s10275 + $0x18] sm:$0xf]
        %v10283 = vld [vmem:[%s10275 + $0x1c] sm:$0xf]
        %v10284 = vld [vmem:[%s10275 + $0x20] sm:$0xf]
        %v10285 = vld [vmem:[%s10275 + $0x24] sm:$0xf]
        %v10286 = vld [vmem:[%s10275 + $0x28] sm:$0xf]
        %v10287 = vld [vmem:[%s10275 + $0x2c] sm:$0xf]
        %v10288 = vld [vmem:[%s10275 + $0x30] sm:$0xf]
        %v10289 = vld [vmem:[%s10275 + $0x34] sm:$0xf]
        %v10290 = vld [vmem:[%s10275 + $0x38] sm:$0xf]
        %v10291 = vld [vmem:[%s10275 + $0x3c] sm:$0xf]
        %v10308 = vunpack.c.l.b16 %v10276
        %v10309 = vunpack.c.l.b16 %v10277
        %v10310 = vunpack.c.l.b16 %v10278
        %v10311 = vunpack.c.l.b16 %v10279
        %v10312 = vunpack.c.l.b16 %v10280
        %v10313 = vunpack.c.l.b16 %v10281
        %v10314 = vunpack.c.l.b16 %v10282
        %v10315 = vunpack.c.l.b16 %v10283
        %v10316 = vunpack.c.l.b16 %v10284
        %v10317 = vunpack.c.l.b16 %v10285
        %v10318 = vunpack.c.l.b16 %v10286
        %v10319 = vunpack.c.l.b16 %v10287
        %v10320 = vunpack.c.l.b16 %v10288
        %v10321 = vunpack.c.l.b16 %v10289
        %v10322 = vunpack.c.l.b16 %v10290
        %v10323 = vunpack.c.l.b16 %v10291
        %v10324 = vpack.c.b16 %v10309, %v10308
        %v10325 = vpack.c.b16 %v10311, %v10310
        %v10326 = vpack.c.b16 %v10313, %v10312
        %v10327 = vpack.c.b16 %v10315, %v10314
        %v10328 = vpack.c.b16 %v10317, %v10316
        %v10329 = vpack.c.b16 %v10319, %v10318
        %v10330 = vpack.c.b16 %v10321, %v10320
        %v10331 = vpack.c.b16 %v10323, %v10322
        %10340 = vmatprep.subr.bf16.mxu0 0
        %10341 = vmatpush1.bf16.msra.mxu0 %v10331
        %10342 = vmatprep.subr.bf16.mxu0 0
        %10343 = vmatpush1.bf16.msra.mxu0 %v10330
        %10344 = vmatprep.subr.bf16.mxu0 0
        %10345 = vmatpush1.bf16.msra.mxu0 %v10329
        %10346 = vmatprep.subr.bf16.mxu0 0
        %10347 = vmatpush1.bf16.msra.mxu0 %v10328
        %10348 = vmatprep.subr.bf16.mxu0 0
        %10349 = vmatpush1.bf16.msra.mxu0 %v10327
        %10350 = vmatprep.subr.bf16.mxu0 0
        %10351 = vmatpush1.bf16.msra.mxu0 %v10326
        %10352 = vmatprep.subr.bf16.mxu0 0
        %10353 = vmatpush1.bf16.msra.mxu0 %v10325
        %10354 = vmatprep.subr.bf16.mxu0 0
        %10355 = vmatpush1.bf16.msra.mxu0 %v10324
        %10356 = vmatprep.subr.bf16.mxu0 0
        %10357 = vmatpush2.bf16.msra.mxu0 0
        %10358 = vmatprep.subr.bf16.mxu0 0
        %10359 = vmatpush2.bf16.msra.mxu0 0
        %10360 = vmatprep.subr.bf16.mxu0 0
        %10361 = vmatpush2.bf16.msra.mxu0 0
        %10362 = vmatprep.subr.bf16.mxu0 0
        %10363 = vmatpush2.bf16.msra.mxu0 0
        %10364 = vmatprep.subr.bf16.mxu0 0
        %10365 = vmatpush2.bf16.msra.mxu0 0
        %10366 = vmatprep.subr.bf16.mxu0 0
        %10367 = vmatpush2.bf16.msra.mxu0 0
        %10368 = vmatprep.subr.bf16.mxu0 0
        %10369 = vmatpush2.bf16.msra.mxu0 0
        %10370 = vmatprep.subr.bf16.mxu0 0
        %10371 = vmatpush2.bf16.msra.mxu0 0
        %10372 = vmatprep.mubr.bf16.mxu0 0
        %10373 = vmatmul.mubr.bf16.gmra.mxu0 %v10274
        %v10374 = vpop.f32.mrf.mxu0
        %v10375 = vadd.f32 0.0, %v10374
        %v10376 = vpop.f32.mrf.mxu0
        %v10377 = vpop.f32.mrf.mxu0
        %v10378 = vpop.f32.mrf.mxu0
        %10379 = vdwg.mxu0
        %v10380 = vadd.f32 %v10270, %v10375
        %s10381 = sadd.s32 %s7963, 116
        %s10382 = scalar_lea.vmem [#allocation3], %s10381
        %v10383 = vld [vmem:[%s10382] sm:$0x3]
        %v10384 = vpack.c.bf16 %v10383, %v10383
        %s10385 = scalar_lea.vmem %s362, 1408 [#allocation14]
        %v10386 = vld [vmem:[%s10385] sm:$0xf]
        %v10387 = vld [vmem:[%s10385 + $0x4] sm:$0xf]
        %v10388 = vld [vmem:[%s10385 + $0x8] sm:$0xf]
        %v10389 = vld [vmem:[%s10385 + $0xc] sm:$0xf]
        %v10390 = vld [vmem:[%s10385 + $0x10] sm:$0xf]
        %v10391 = vld [vmem:[%s10385 + $0x14] sm:$0xf]
        %v10392 = vld [vmem:[%s10385 + $0x18] sm:$0xf]
        %v10393 = vld [vmem:[%s10385 + $0x1c] sm:$0xf]
        %v10394 = vld [vmem:[%s10385 + $0x20] sm:$0xf]
        %v10395 = vld [vmem:[%s10385 + $0x24] sm:$0xf]
        %v10396 = vld [vmem:[%s10385 + $0x28] sm:$0xf]
        %v10397 = vld [vmem:[%s10385 + $0x2c] sm:$0xf]
        %v10398 = vld [vmem:[%s10385 + $0x30] sm:$0xf]
        %v10399 = vld [vmem:[%s10385 + $0x34] sm:$0xf]
        %v10400 = vld [vmem:[%s10385 + $0x38] sm:$0xf]
        %v10401 = vld [vmem:[%s10385 + $0x3c] sm:$0xf]
        %v10418 = vunpack.c.l.b16 %v10386
        %v10419 = vunpack.c.l.b16 %v10387
        %v10420 = vunpack.c.l.b16 %v10388
        %v10421 = vunpack.c.l.b16 %v10389
        %v10422 = vunpack.c.l.b16 %v10390
        %v10423 = vunpack.c.l.b16 %v10391
        %v10424 = vunpack.c.l.b16 %v10392
        %v10425 = vunpack.c.l.b16 %v10393
        %v10426 = vunpack.c.l.b16 %v10394
        %v10427 = vunpack.c.l.b16 %v10395
        %v10428 = vunpack.c.l.b16 %v10396
        %v10429 = vunpack.c.l.b16 %v10397
        %v10430 = vunpack.c.l.b16 %v10398
        %v10431 = vunpack.c.l.b16 %v10399
        %v10432 = vunpack.c.l.b16 %v10400
        %v10433 = vunpack.c.l.b16 %v10401
        %v10434 = vpack.c.b16 %v10419, %v10418
        %v10435 = vpack.c.b16 %v10421, %v10420
        %v10436 = vpack.c.b16 %v10423, %v10422
        %v10437 = vpack.c.b16 %v10425, %v10424
        %v10438 = vpack.c.b16 %v10427, %v10426
        %v10439 = vpack.c.b16 %v10429, %v10428
        %v10440 = vpack.c.b16 %v10431, %v10430
        %v10441 = vpack.c.b16 %v10433, %v10432
        %10450 = vmatprep.subr.bf16.mxu0 0
        %10451 = vmatpush1.bf16.msra.mxu0 %v10441
        %10452 = vmatprep.subr.bf16.mxu0 0
        %10453 = vmatpush1.bf16.msra.mxu0 %v10440
        %10454 = vmatprep.subr.bf16.mxu0 0
        %10455 = vmatpush1.bf16.msra.mxu0 %v10439
        %10456 = vmatprep.subr.bf16.mxu0 0
        %10457 = vmatpush1.bf16.msra.mxu0 %v10438
        %10458 = vmatprep.subr.bf16.mxu0 0
        %10459 = vmatpush1.bf16.msra.mxu0 %v10437
        %10460 = vmatprep.subr.bf16.mxu0 0
        %10461 = vmatpush1.bf16.msra.mxu0 %v10436
        %10462 = vmatprep.subr.bf16.mxu0 0
        %10463 = vmatpush1.bf16.msra.mxu0 %v10435
        %10464 = vmatprep.subr.bf16.mxu0 0
        %10465 = vmatpush1.bf16.msra.mxu0 %v10434
        %10466 = vmatprep.subr.bf16.mxu0 0
        %10467 = vmatpush2.bf16.msra.mxu0 0
        %10468 = vmatprep.subr.bf16.mxu0 0
        %10469 = vmatpush2.bf16.msra.mxu0 0
        %10470 = vmatprep.subr.bf16.mxu0 0
        %10471 = vmatpush2.bf16.msra.mxu0 0
        %10472 = vmatprep.subr.bf16.mxu0 0
        %10473 = vmatpush2.bf16.msra.mxu0 0
        %10474 = vmatprep.subr.bf16.mxu0 0
        %10475 = vmatpush2.bf16.msra.mxu0 0
        %10476 = vmatprep.subr.bf16.mxu0 0
        %10477 = vmatpush2.bf16.msra.mxu0 0
        %10478 = vmatprep.subr.bf16.mxu0 0
        %10479 = vmatpush2.bf16.msra.mxu0 0
        %10480 = vmatprep.subr.bf16.mxu0 0
        %10481 = vmatpush2.bf16.msra.mxu0 0
        %10482 = vmatprep.mubr.bf16.mxu0 0
        %10483 = vmatmul.mubr.bf16.gmra.mxu0 %v10384
        %v10484 = vpop.f32.mrf.mxu0
        %v10485 = vadd.f32 0.0, %v10484
        %v10486 = vpop.f32.mrf.mxu0
        %v10487 = vpop.f32.mrf.mxu0
        %v10488 = vpop.f32.mrf.mxu0
        %10489 = vdwg.mxu0
        %v10490 = vadd.f32 %v10380, %v10485
        %s10491 = sadd.s32 %s7963, 118
        %s10492 = scalar_lea.vmem [#allocation3], %s10491
        %v10493 = vld [vmem:[%s10492] sm:$0x3]
        %v10494 = vpack.c.bf16 %v10493, %v10493
        %s10495 = scalar_lea.vmem %s362, 1472 [#allocation14]
        %v10496 = vld [vmem:[%s10495] sm:$0xf]
        %v10497 = vld [vmem:[%s10495 + $0x4] sm:$0xf]
        %v10498 = vld [vmem:[%s10495 + $0x8] sm:$0xf]
        %v10499 = vld [vmem:[%s10495 + $0xc] sm:$0xf]
        %v10500 = vld [vmem:[%s10495 + $0x10] sm:$0xf]
        %v10501 = vld [vmem:[%s10495 + $0x14] sm:$0xf]
        %v10502 = vld [vmem:[%s10495 + $0x18] sm:$0xf]
        %v10503 = vld [vmem:[%s10495 + $0x1c] sm:$0xf]
        %v10504 = vld [vmem:[%s10495 + $0x20] sm:$0xf]
        %v10505 = vld [vmem:[%s10495 + $0x24] sm:$0xf]
        %v10506 = vld [vmem:[%s10495 + $0x28] sm:$0xf]
        %v10507 = vld [vmem:[%s10495 + $0x2c] sm:$0xf]
        %v10508 = vld [vmem:[%s10495 + $0x30] sm:$0xf]
        %v10509 = vld [vmem:[%s10495 + $0x34] sm:$0xf]
        %v10510 = vld [vmem:[%s10495 + $0x38] sm:$0xf]
        %v10511 = vld [vmem:[%s10495 + $0x3c] sm:$0xf]
        %v10528 = vunpack.c.l.b16 %v10496
        %v10529 = vunpack.c.l.b16 %v10497
        %v10530 = vunpack.c.l.b16 %v10498
        %v10531 = vunpack.c.l.b16 %v10499
        %v10532 = vunpack.c.l.b16 %v10500
        %v10533 = vunpack.c.l.b16 %v10501
        %v10534 = vunpack.c.l.b16 %v10502
        %v10535 = vunpack.c.l.b16 %v10503
        %v10536 = vunpack.c.l.b16 %v10504
        %v10537 = vunpack.c.l.b16 %v10505
        %v10538 = vunpack.c.l.b16 %v10506
        %v10539 = vunpack.c.l.b16 %v10507
        %v10540 = vunpack.c.l.b16 %v10508
        %v10541 = vunpack.c.l.b16 %v10509
        %v10542 = vunpack.c.l.b16 %v10510
        %v10543 = vunpack.c.l.b16 %v10511
        %v10544 = vpack.c.b16 %v10529, %v10528
        %v10545 = vpack.c.b16 %v10531, %v10530
        %v10546 = vpack.c.b16 %v10533, %v10532
        %v10547 = vpack.c.b16 %v10535, %v10534
        %v10548 = vpack.c.b16 %v10537, %v10536
        %v10549 = vpack.c.b16 %v10539, %v10538
        %v10550 = vpack.c.b16 %v10541, %v10540
        %v10551 = vpack.c.b16 %v10543, %v10542
        %10560 = vmatprep.subr.bf16.mxu0 0
        %10561 = vmatpush1.bf16.msra.mxu0 %v10551
        %10562 = vmatprep.subr.bf16.mxu0 0
        %10563 = vmatpush1.bf16.msra.mxu0 %v10550
        %10564 = vmatprep.subr.bf16.mxu0 0
        %10565 = vmatpush1.bf16.msra.mxu0 %v10549
        %10566 = vmatprep.subr.bf16.mxu0 0
        %10567 = vmatpush1.bf16.msra.mxu0 %v10548
        %10568 = vmatprep.subr.bf16.mxu0 0
        %10569 = vmatpush1.bf16.msra.mxu0 %v10547
        %10570 = vmatprep.subr.bf16.mxu0 0
        %10571 = vmatpush1.bf16.msra.mxu0 %v10546
        %10572 = vmatprep.subr.bf16.mxu0 0
        %10573 = vmatpush1.bf16.msra.mxu0 %v10545
        %10574 = vmatprep.subr.bf16.mxu0 0
        %10575 = vmatpush1.bf16.msra.mxu0 %v10544
        %10576 = vmatprep.subr.bf16.mxu0 0
        %10577 = vmatpush2.bf16.msra.mxu0 0
        %10578 = vmatprep.subr.bf16.mxu0 0
        %10579 = vmatpush2.bf16.msra.mxu0 0
        %10580 = vmatprep.subr.bf16.mxu0 0
        %10581 = vmatpush2.bf16.msra.mxu0 0
        %10582 = vmatprep.subr.bf16.mxu0 0
        %10583 = vmatpush2.bf16.msra.mxu0 0
        %10584 = vmatprep.subr.bf16.mxu0 0
        %10585 = vmatpush2.bf16.msra.mxu0 0
        %10586 = vmatprep.subr.bf16.mxu0 0
        %10587 = vmatpush2.bf16.msra.mxu0 0
        %10588 = vmatprep.subr.bf16.mxu0 0
        %10589 = vmatpush2.bf16.msra.mxu0 0
        %10590 = vmatprep.subr.bf16.mxu0 0
        %10591 = vmatpush2.bf16.msra.mxu0 0
        %10592 = vmatprep.mubr.bf16.mxu0 0
        %10593 = vmatmul.mubr.bf16.gmra.mxu0 %v10494
        %v10594 = vpop.f32.mrf.mxu0
        %v10595 = vadd.f32 0.0, %v10594
        %v10596 = vpop.f32.mrf.mxu0
        %v10597 = vpop.f32.mrf.mxu0
        %v10598 = vpop.f32.mrf.mxu0
        %10599 = vdwg.mxu0
        %v10600 = vadd.f32 %v10490, %v10595
        %s10601 = sadd.s32 %s7963, 120
        %s10602 = scalar_lea.vmem [#allocation3], %s10601
        %v10603 = vld [vmem:[%s10602] sm:$0x3]
        %v10604 = vpack.c.bf16 %v10603, %v10603
        %s10605 = scalar_lea.vmem %s362, 1536 [#allocation14]
        %v10606 = vld [vmem:[%s10605] sm:$0xf]
        %v10607 = vld [vmem:[%s10605 + $0x4] sm:$0xf]
        %v10608 = vld [vmem:[%s10605 + $0x8] sm:$0xf]
        %v10609 = vld [vmem:[%s10605 + $0xc] sm:$0xf]
        %v10610 = vld [vmem:[%s10605 + $0x10] sm:$0xf]
        %v10611 = vld [vmem:[%s10605 + $0x14] sm:$0xf]
        %v10612 = vld [vmem:[%s10605 + $0x18] sm:$0xf]
        %v10613 = vld [vmem:[%s10605 + $0x1c] sm:$0xf]
        %v10614 = vld [vmem:[%s10605 + $0x20] sm:$0xf]
        %v10615 = vld [vmem:[%s10605 + $0x24] sm:$0xf]
        %v10616 = vld [vmem:[%s10605 + $0x28] sm:$0xf]
        %v10617 = vld [vmem:[%s10605 + $0x2c] sm:$0xf]
        %v10618 = vld [vmem:[%s10605 + $0x30] sm:$0xf]
        %v10619 = vld [vmem:[%s10605 + $0x34] sm:$0xf]
        %v10620 = vld [vmem:[%s10605 + $0x38] sm:$0xf]
        %v10621 = vld [vmem:[%s10605 + $0x3c] sm:$0xf]
        %v10638 = vunpack.c.l.b16 %v10606
        %v10639 = vunpack.c.l.b16 %v10607
        %v10640 = vunpack.c.l.b16 %v10608
        %v10641 = vunpack.c.l.b16 %v10609
        %v10642 = vunpack.c.l.b16 %v10610
        %v10643 = vunpack.c.l.b16 %v10611
        %v10644 = vunpack.c.l.b16 %v10612
        %v10645 = vunpack.c.l.b16 %v10613
        %v10646 = vunpack.c.l.b16 %v10614
        %v10647 = vunpack.c.l.b16 %v10615
        %v10648 = vunpack.c.l.b16 %v10616
        %v10649 = vunpack.c.l.b16 %v10617
        %v10650 = vunpack.c.l.b16 %v10618
        %v10651 = vunpack.c.l.b16 %v10619
        %v10652 = vunpack.c.l.b16 %v10620
        %v10653 = vunpack.c.l.b16 %v10621
        %v10654 = vpack.c.b16 %v10639, %v10638
        %v10655 = vpack.c.b16 %v10641, %v10640
        %v10656 = vpack.c.b16 %v10643, %v10642
        %v10657 = vpack.c.b16 %v10645, %v10644
        %v10658 = vpack.c.b16 %v10647, %v10646
        %v10659 = vpack.c.b16 %v10649, %v10648
        %v10660 = vpack.c.b16 %v10651, %v10650
        %v10661 = vpack.c.b16 %v10653, %v10652
        %10670 = vmatprep.subr.bf16.mxu0 0
        %10671 = vmatpush1.bf16.msra.mxu0 %v10661
        %10672 = vmatprep.subr.bf16.mxu0 0
        %10673 = vmatpush1.bf16.msra.mxu0 %v10660
        %10674 = vmatprep.subr.bf16.mxu0 0
        %10675 = vmatpush1.bf16.msra.mxu0 %v10659
        %10676 = vmatprep.subr.bf16.mxu0 0
        %10677 = vmatpush1.bf16.msra.mxu0 %v10658
        %10678 = vmatprep.subr.bf16.mxu0 0
        %10679 = vmatpush1.bf16.msra.mxu0 %v10657
        %10680 = vmatprep.subr.bf16.mxu0 0
        %10681 = vmatpush1.bf16.msra.mxu0 %v10656
        %10682 = vmatprep.subr.bf16.mxu0 0
        %10683 = vmatpush1.bf16.msra.mxu0 %v10655
        %10684 = vmatprep.subr.bf16.mxu0 0
        %10685 = vmatpush1.bf16.msra.mxu0 %v10654
        %10686 = vmatprep.subr.bf16.mxu0 0
        %10687 = vmatpush2.bf16.msra.mxu0 0
        %10688 = vmatprep.subr.bf16.mxu0 0
        %10689 = vmatpush2.bf16.msra.mxu0 0
        %10690 = vmatprep.subr.bf16.mxu0 0
        %10691 = vmatpush2.bf16.msra.mxu0 0
        %10692 = vmatprep.subr.bf16.mxu0 0
        %10693 = vmatpush2.bf16.msra.mxu0 0
        %10694 = vmatprep.subr.bf16.mxu0 0
        %10695 = vmatpush2.bf16.msra.mxu0 0
        %10696 = vmatprep.subr.bf16.mxu0 0
        %10697 = vmatpush2.bf16.msra.mxu0 0
        %10698 = vmatprep.subr.bf16.mxu0 0
        %10699 = vmatpush2.bf16.msra.mxu0 0
        %10700 = vmatprep.subr.bf16.mxu0 0
        %10701 = vmatpush2.bf16.msra.mxu0 0
        %10702 = vmatprep.mubr.bf16.mxu0 0
        %10703 = vmatmul.mubr.bf16.gmra.mxu0 %v10604
        %v10704 = vpop.f32.mrf.mxu0
        %v10705 = vadd.f32 0.0, %v10704
        %v10706 = vpop.f32.mrf.mxu0
        %v10707 = vpop.f32.mrf.mxu0
        %v10708 = vpop.f32.mrf.mxu0
        %10709 = vdwg.mxu0
        %v10710 = vadd.f32 %v10600, %v10705
        %s10711 = sadd.s32 %s7963, 122
        %s10712 = scalar_lea.vmem [#allocation3], %s10711
        %v10713 = vld [vmem:[%s10712] sm:$0x3]
        %v10714 = vpack.c.bf16 %v10713, %v10713
        %s10715 = scalar_lea.vmem %s362, 1600 [#allocation14]
        %v10716 = vld [vmem:[%s10715] sm:$0xf]
        %v10717 = vld [vmem:[%s10715 + $0x4] sm:$0xf]
        %v10718 = vld [vmem:[%s10715 + $0x8] sm:$0xf]
        %v10719 = vld [vmem:[%s10715 + $0xc] sm:$0xf]
        %v10720 = vld [vmem:[%s10715 + $0x10] sm:$0xf]
        %v10721 = vld [vmem:[%s10715 + $0x14] sm:$0xf]
        %v10722 = vld [vmem:[%s10715 + $0x18] sm:$0xf]
        %v10723 = vld [vmem:[%s10715 + $0x1c] sm:$0xf]
        %v10724 = vld [vmem:[%s10715 + $0x20] sm:$0xf]
        %v10725 = vld [vmem:[%s10715 + $0x24] sm:$0xf]
        %v10726 = vld [vmem:[%s10715 + $0x28] sm:$0xf]
        %v10727 = vld [vmem:[%s10715 + $0x2c] sm:$0xf]
        %v10728 = vld [vmem:[%s10715 + $0x30] sm:$0xf]
        %v10729 = vld [vmem:[%s10715 + $0x34] sm:$0xf]
        %v10730 = vld [vmem:[%s10715 + $0x38] sm:$0xf]
        %v10731 = vld [vmem:[%s10715 + $0x3c] sm:$0xf]
        %v10748 = vunpack.c.l.b16 %v10716
        %v10749 = vunpack.c.l.b16 %v10717
        %v10750 = vunpack.c.l.b16 %v10718
        %v10751 = vunpack.c.l.b16 %v10719
        %v10752 = vunpack.c.l.b16 %v10720
        %v10753 = vunpack.c.l.b16 %v10721
        %v10754 = vunpack.c.l.b16 %v10722
        %v10755 = vunpack.c.l.b16 %v10723
        %v10756 = vunpack.c.l.b16 %v10724
        %v10757 = vunpack.c.l.b16 %v10725
        %v10758 = vunpack.c.l.b16 %v10726
        %v10759 = vunpack.c.l.b16 %v10727
        %v10760 = vunpack.c.l.b16 %v10728
        %v10761 = vunpack.c.l.b16 %v10729
        %v10762 = vunpack.c.l.b16 %v10730
        %v10763 = vunpack.c.l.b16 %v10731
        %v10764 = vpack.c.b16 %v10749, %v10748
        %v10765 = vpack.c.b16 %v10751, %v10750
        %v10766 = vpack.c.b16 %v10753, %v10752
        %v10767 = vpack.c.b16 %v10755, %v10754
        %v10768 = vpack.c.b16 %v10757, %v10756
        %v10769 = vpack.c.b16 %v10759, %v10758
        %v10770 = vpack.c.b16 %v10761, %v10760
        %v10771 = vpack.c.b16 %v10763, %v10762
        %10780 = vmatprep.subr.bf16.mxu0 0
        %10781 = vmatpush1.bf16.msra.mxu0 %v10771
        %10782 = vmatprep.subr.bf16.mxu0 0
        %10783 = vmatpush1.bf16.msra.mxu0 %v10770
        %10784 = vmatprep.subr.bf16.mxu0 0
        %10785 = vmatpush1.bf16.msra.mxu0 %v10769
        %10786 = vmatprep.subr.bf16.mxu0 0
        %10787 = vmatpush1.bf16.msra.mxu0 %v10768
        %10788 = vmatprep.subr.bf16.mxu0 0
        %10789 = vmatpush1.bf16.msra.mxu0 %v10767
        %10790 = vmatprep.subr.bf16.mxu0 0
        %10791 = vmatpush1.bf16.msra.mxu0 %v10766
        %10792 = vmatprep.subr.bf16.mxu0 0
        %10793 = vmatpush1.bf16.msra.mxu0 %v10765
        %10794 = vmatprep.subr.bf16.mxu0 0
        %10795 = vmatpush1.bf16.msra.mxu0 %v10764
        %10796 = vmatprep.subr.bf16.mxu0 0
        %10797 = vmatpush2.bf16.msra.mxu0 0
        %10798 = vmatprep.subr.bf16.mxu0 0
        %10799 = vmatpush2.bf16.msra.mxu0 0
        %10800 = vmatprep.subr.bf16.mxu0 0
        %10801 = vmatpush2.bf16.msra.mxu0 0
        %10802 = vmatprep.subr.bf16.mxu0 0
        %10803 = vmatpush2.bf16.msra.mxu0 0
        %10804 = vmatprep.subr.bf16.mxu0 0
        %10805 = vmatpush2.bf16.msra.mxu0 0
        %10806 = vmatprep.subr.bf16.mxu0 0
        %10807 = vmatpush2.bf16.msra.mxu0 0
        %10808 = vmatprep.subr.bf16.mxu0 0
        %10809 = vmatpush2.bf16.msra.mxu0 0
        %10810 = vmatprep.subr.bf16.mxu0 0
        %10811 = vmatpush2.bf16.msra.mxu0 0
        %10812 = vmatprep.mubr.bf16.mxu0 0
        %10813 = vmatmul.mubr.bf16.gmra.mxu0 %v10714
        %v10814 = vpop.f32.mrf.mxu0
        %v10815 = vadd.f32 0.0, %v10814
        %v10816 = vpop.f32.mrf.mxu0
        %v10817 = vpop.f32.mrf.mxu0
        %v10818 = vpop.f32.mrf.mxu0
        %10819 = vdwg.mxu0
        %v10820 = vadd.f32 %v10710, %v10815
        %s10821 = sadd.s32 %s7963, 124
        %s10822 = scalar_lea.vmem [#allocation3], %s10821
        %v10823 = vld [vmem:[%s10822] sm:$0x3]
        %v10824 = vpack.c.bf16 %v10823, %v10823
        %s10825 = scalar_lea.vmem %s362, 1664 [#allocation14]
        %v10826 = vld [vmem:[%s10825] sm:$0xf]
        %v10827 = vld [vmem:[%s10825 + $0x4] sm:$0xf]
        %v10828 = vld [vmem:[%s10825 + $0x8] sm:$0xf]
        %v10829 = vld [vmem:[%s10825 + $0xc] sm:$0xf]
        %v10830 = vld [vmem:[%s10825 + $0x10] sm:$0xf]
        %v10831 = vld [vmem:[%s10825 + $0x14] sm:$0xf]
        %v10832 = vld [vmem:[%s10825 + $0x18] sm:$0xf]
        %v10833 = vld [vmem:[%s10825 + $0x1c] sm:$0xf]
        %v10834 = vld [vmem:[%s10825 + $0x20] sm:$0xf]
        %v10835 = vld [vmem:[%s10825 + $0x24] sm:$0xf]
        %v10836 = vld [vmem:[%s10825 + $0x28] sm:$0xf]
        %v10837 = vld [vmem:[%s10825 + $0x2c] sm:$0xf]
        %v10838 = vld [vmem:[%s10825 + $0x30] sm:$0xf]
        %v10839 = vld [vmem:[%s10825 + $0x34] sm:$0xf]
        %v10840 = vld [vmem:[%s10825 + $0x38] sm:$0xf]
        %v10841 = vld [vmem:[%s10825 + $0x3c] sm:$0xf]
        %v10858 = vunpack.c.l.b16 %v10826
        %v10859 = vunpack.c.l.b16 %v10827
        %v10860 = vunpack.c.l.b16 %v10828
        %v10861 = vunpack.c.l.b16 %v10829
        %v10862 = vunpack.c.l.b16 %v10830
        %v10863 = vunpack.c.l.b16 %v10831
        %v10864 = vunpack.c.l.b16 %v10832
        %v10865 = vunpack.c.l.b16 %v10833
        %v10866 = vunpack.c.l.b16 %v10834
        %v10867 = vunpack.c.l.b16 %v10835
        %v10868 = vunpack.c.l.b16 %v10836
        %v10869 = vunpack.c.l.b16 %v10837
        %v10870 = vunpack.c.l.b16 %v10838
        %v10871 = vunpack.c.l.b16 %v10839
        %v10872 = vunpack.c.l.b16 %v10840
        %v10873 = vunpack.c.l.b16 %v10841
        %v10874 = vpack.c.b16 %v10859, %v10858
        %v10875 = vpack.c.b16 %v10861, %v10860
        %v10876 = vpack.c.b16 %v10863, %v10862
        %v10877 = vpack.c.b16 %v10865, %v10864
        %v10878 = vpack.c.b16 %v10867, %v10866
        %v10879 = vpack.c.b16 %v10869, %v10868
        %v10880 = vpack.c.b16 %v10871, %v10870
        %v10881 = vpack.c.b16 %v10873, %v10872
        %10890 = vmatprep.subr.bf16.mxu0 0
        %10891 = vmatpush1.bf16.msra.mxu0 %v10881
        %10892 = vmatprep.subr.bf16.mxu0 0
        %10893 = vmatpush1.bf16.msra.mxu0 %v10880
        %10894 = vmatprep.subr.bf16.mxu0 0
        %10895 = vmatpush1.bf16.msra.mxu0 %v10879
        %10896 = vmatprep.subr.bf16.mxu0 0
        %10897 = vmatpush1.bf16.msra.mxu0 %v10878
        %10898 = vmatprep.subr.bf16.mxu0 0
        %10899 = vmatpush1.bf16.msra.mxu0 %v10877
        %10900 = vmatprep.subr.bf16.mxu0 0
        %10901 = vmatpush1.bf16.msra.mxu0 %v10876
        %10902 = vmatprep.subr.bf16.mxu0 0
        %10903 = vmatpush1.bf16.msra.mxu0 %v10875
        %10904 = vmatprep.subr.bf16.mxu0 0
        %10905 = vmatpush1.bf16.msra.mxu0 %v10874
        %10906 = vmatprep.subr.bf16.mxu0 0
        %10907 = vmatpush2.bf16.msra.mxu0 0
        %10908 = vmatprep.subr.bf16.mxu0 0
        %10909 = vmatpush2.bf16.msra.mxu0 0
        %10910 = vmatprep.subr.bf16.mxu0 0
        %10911 = vmatpush2.bf16.msra.mxu0 0
        %10912 = vmatprep.subr.bf16.mxu0 0
        %10913 = vmatpush2.bf16.msra.mxu0 0
        %10914 = vmatprep.subr.bf16.mxu0 0
        %10915 = vmatpush2.bf16.msra.mxu0 0
        %10916 = vmatprep.subr.bf16.mxu0 0
        %10917 = vmatpush2.bf16.msra.mxu0 0
        %10918 = vmatprep.subr.bf16.mxu0 0
        %10919 = vmatpush2.bf16.msra.mxu0 0
        %10920 = vmatprep.subr.bf16.mxu0 0
        %10921 = vmatpush2.bf16.msra.mxu0 0
        %10922 = vmatprep.mubr.bf16.mxu0 0
        %10923 = vmatmul.mubr.bf16.gmra.mxu0 %v10824
        %v10924 = vpop.f32.mrf.mxu0
        %v10925 = vadd.f32 0.0, %v10924
        %v10926 = vpop.f32.mrf.mxu0
        %v10927 = vpop.f32.mrf.mxu0
        %v10928 = vpop.f32.mrf.mxu0
        %10929 = vdwg.mxu0
        %v10930 = vadd.f32 %v10820, %v10925
        %v10931 = vld [vmem:[#allocation4] sm:$0x3]
        %v10932 = vadd.f32 %v10931, %v10930
        %10933 = vst [vmem:[#allocation4] sm:$0x3] %v10932
        %p10934 = scmp.eq.s32.totalorder %s26, 2
        // Predicated region
        $region85: #{dqn_forward.1} parent=51 // pred_check
          %p10935 = pneg %p10934
        $region86: #{dqn_forward.1} parent=51 // pred_check_branch
          %10937 = sbr.rel (%p10935) target = $region88
        $region87: #{dqn_forward.1} parent=51 // pred_region
          %v10938 = vld [vmem:[#allocation4] sm:$0x3]
          %vm10939 = vcmask 1041408
          %v10940 = vsel %vm10939, %v10938, -inf
          %10941 = vmax.xlane.f32.xlu0 %v10940
          %v10942 = vpop.xlane.xlu0 %10941
          %v10943 = vsub.f32 %v10938, %v10942
          %v10944 = vmul.f32 %v10943, 1.442695
          %v10945 = vpow.pop %v10944
          %v10946 = vsel %vm10939, %v10945, 0.0
          %10947 = vadd.xlane.f32.xlu0 %v10946
          %v10948 = vpop.xlane.xlu0 %10947
          %v10949 = vrcp.pop %v10948
          %v10950 = vmul.f32 %v10945, %v10949
          %10951 = vst [vmem:[#allocation17] sm:$0x3] %v10950
        $region88: #{dqn_forward.1} parent=51 // pred_fallthru
          _
        // Predicated region
        $region89: #{dqn_forward.1} parent=51 // pred_check
          %p10952 = pneg %p212
        $region90: #{dqn_forward.1} parent=51 // pred_check_branch
          %10954 = sbr.rel (%p10952) target = $region92
        $region91: #{dqn_forward.1} parent=51 // pred_region
          %s10956 = ssub.s32 32, 32
          %10957 = vsyncadd [#allocation7], %s10956
          %s10959 = sshll.u32 [#allocation17], 4
          %s10960 = int_to_ptr.vmem [resolvable:$true] %s10959
          %10962 = dma.vmem_to_hbm [thread:$0]  %s10960, 32, %s8, [#allocation7]
        $region92: #{dqn_forward.1} parent=51 // pred_fallthru
          _
        // Predicated region
        $region93: #{dqn_forward.1} parent=51 // pred_check
          %p10963 = pneg %p212
        $region94: #{dqn_forward.1} parent=51 // pred_check_branch
          %10965 = sbr.rel (%p10963) target = $region96
        $region95: #{dqn_forward.1} parent=51 // pred_region
          %10966 = dma.done [#allocation7], 32
        $region96: #{dqn_forward.1} parent=51 // pred_fallthru
          _
      $region52: #{dqn_forward.1} parent=5 // pred_fallthru
        _
      %p10967 = scmp.le.s32.totalorder 2, %s21
      // Predicated region
      $region97: #{dqn_forward.1} parent=5 // pred_check
        %p10968 = pneg %p10967
      $region98: #{dqn_forward.1} parent=5 // pred_check_branch
        %10970 = sbr.rel (%p10968) target = $region100
      $region99: #{dqn_forward.1} parent=5 // pred_region
        %s10971 = ssub.s32 %s21, 2
      $region100: #{dqn_forward.1} parent=5 // pred_fallthru
        _
    $region6: #{dqn_forward.1} parent=1 // loop_footer
      %s25 = sadd.s32 1, %s21
    $region7: #{dqn_forward.1} parent=1 // loop_footer_branch
      %20 = sbr.rel target = $region3
    $region8: #{dqn_forward.1} parent=1 // loop_exit
      _
    %10972 = vsyncpa [#allocation6], 1
    %s10973 = scalar_lea.sflag [#allocation6], 1
    %10974 = vsyncpa %s10973, 1
    %10975 = vsyncpa [#allocation9], 1
    %10976 = vsyncpa [#allocation12], 1
    %10977 = vsyncpa [#allocation15], 1
    %s10978 = scalar_lea.sflag [#allocation15], 1
    %10979 = vsyncpa %s10978, 1
    %10980 = vsyncpa [#allocation7], 1
    %s10981 = scalar_lea.sflag [#allocation7], 1
    %10982 = vsyncpa %s10981, 1

</llo_original>
